<compile_context>
chip_gen: v7x
topology: tpu7x:2x2x1
jax: 0.10.0
libtpu: 0.0.40
codegen_flags: <defaults>
</compile_context>

<pallas_src>
import jax
import jax.numpy as jnp
from jax import lax
from jax.experimental import pallas as pl
from jax.experimental.pallas import tpu as pltpu

LANE = 128      # pad channel / hidden dims to multiples of this (lane width)
SUBLANE = 8     # pad batch to multiples of this (f32 sublane height)

_COMPILER_PARAMS = pltpu.CompilerParams(
    dimension_semantics=("arbitrary",),
    vmem_limit_bytes=32 * 1024 * 1024,
)


def _round_up(n, m):
    return ((n + m - 1) // m) * m


def _full_spec(shape):
    n = len(shape)
    return pl.BlockSpec(shape, lambda i, _n=n: (0,) * _n)


# ------------------- conv1 + relu + conv2 + relu (fused) -------------------

def _conv_stack_kernel(x_ref, w1_ref, b1_ref, w2_ref, b2_ref, o_ref):
    # x_ref : (L, Bp, Ep) f32  -- time-major embedded input
    # w1_ref: (3*Ep, Hp) bf16 (im2col layout), b1_ref: (1, Hp) f32
    # w2_ref: (3*Hp, Hp) bf16,                 b2_ref: (1, Hp) f32
    # o_ref : (L*Bp, Hp) bf16 -- time-major conv2 output (row = t*Bp + b)
    L, Bp, _ = x_ref.shape
    Hp = o_ref.shape[1]

    def conv3_relu(x, w_ref, b_ref, cin):
        # zero-pad along time in VMEM (padding=1), then im2col -> one matmul
        zrow = jnp.zeros((1, Bp, cin), jnp.bfloat16)
        xp = jnp.concatenate([zrow, x, zrow], axis=0)                  # (L+2, Bp, Cin)
        x3 = jnp.concatenate([xp[0:L], xp[1:L + 1], xp[2:L + 2]],
                             axis=-1).reshape(L * Bp, 3 * cin)          # (L*Bp, 3Cin)
        y = jnp.dot(x3, w_ref[...], preferred_element_type=jnp.float32) + b_ref[...]
        return jnp.maximum(y, 0.0)

    Ep = x_ref.shape[2]
    h1 = conv3_relu(x_ref[...].astype(jnp.bfloat16), w1_ref, b1_ref, Ep)
    h1 = h1.astype(jnp.bfloat16).reshape(L, Bp, Hp)
    h2 = conv3_relu(h1, w2_ref, b2_ref, Hp)
    o_ref[...] = h2.astype(jnp.bfloat16)


def conv_stack(emb_lbe, w1, b1, w2, b2):
    """emb_lbe: (L, Bp, Ep) f32 time-major -> (L*Bp, Hp) bf16 time-major."""
    L, Bp, Ep = emb_lbe.shape
    Hp = w1.shape[1]
    return pl.pallas_call(
        _conv_stack_kernel,
        out_shape=jax.ShapeDtypeStruct((L * Bp, Hp), jnp.bfloat16),
        grid=(1,),
        in_specs=[_full_spec((L, Bp, Ep)),
                  _full_spec((3 * Ep, Hp)), _full_spec((1, Hp)),
                  _full_spec((3 * Hp, Hp)), _full_spec((1, Hp))],
        out_specs=_full_spec((L * Bp, Hp)),
        compiler_params=_COMPILER_PARAMS,
    )(emb_lbe, w1, b1, w2, b2)


# --------------------------- GRU cell (shared) ------------------------------

def _gru_cell(gx, gh, h, Hp):
    r = jax.nn.sigmoid(gx[:, 0:Hp] + gh[:, 0:Hp])
    z = jax.nn.sigmoid(gx[:, Hp:2 * Hp] + gh[:, Hp:2 * Hp])
    n = jnp.tanh(gx[:, 2 * Hp:3 * Hp] + r * gh[:, 2 * Hp:3 * Hp])
    return (1.0 - z) * n + z * h


# ------------------ GRU layer 0 (bidirectional, sequence out) ---------------

def bigru_seq_layer(x2d, h0_f, h0_r, wih, bih, whh_f, bhh_f, whh_r, bhh_r, L, Bp):
    """One bidirectional GRU layer; returns the full output sequence
    (L*Bp, 2*Hp) f32, time-major rows (t*Bp + b); fwd in cols [0:Hp],
    rev in cols [Hp:2Hp] (both at natural time index t)."""
    I = x2d.shape[1]
    Hp = whh_f.shape[0]
    LB = L * Bp

    def kernel(x_ref, h0f_ref, h0r_ref, wih_ref, bih_ref,
               whhf_ref, bhhf_ref, whhr_ref, bhhr_ref, out_ref, gx_scr):
        # Hoisted input projection for BOTH directions: one MXU matmul.
        gx_scr[...] = jnp.dot(x_ref[...].astype(jnp.bfloat16), wih_ref[...],
                              preferred_element_type=jnp.float32) + bih_ref[...]
        whhf, whhr = whhf_ref[...], whhr_ref[...]
        bhhf, bhhr = bhhf_ref[...], bhhr_ref[...]

        def step(s, carry):
            h_f, h_r = carry                              # (Bp, Hp) f32, in vregs
            gh_f = jnp.dot(h_f.astype(jnp.bfloat16), whhf,
                           preferred_element_type=jnp.float32) + bhhf
            gh_r = jnp.dot(h_r.astype(jnp.bfloat16), whhr,
                           preferred_element_type=jnp.float32) + bhhr
            row_f = pl.multiple_of(s * Bp, SUBLANE)
            row_r = pl.multiple_of((L - 1 - s) * Bp, SUBLANE)
            gxf = gx_scr[pl.ds(row_f, Bp), 0:3 * Hp]
            gxr = gx_scr[pl.ds(row_r, Bp), 3 * Hp:6 * Hp]
            h_f_new = _gru_cell(gxf, gh_f, h_f, Hp)
            h_r_new = _gru_cell(gxr, gh_r, h_r, Hp)
            # Lane-dense, sublane-aligned (Bp, Hp) stores.
            out_ref[pl.ds(row_f, Bp), 0:Hp] = h_f_new
            out_ref[pl.ds(row_r, Bp), Hp:2 * Hp] = h_r_new
            return (h_f_new, h_r_new)

        lax.fori_loop(0, L, step, (h0f_ref[...], h0r_ref[...]),
                      unroll=bool(L <= 16))

    return pl.pallas_call(
        kernel,
        out_shape=jax.ShapeDtypeStruct((LB, 2 * Hp), jnp.float32),
        grid=(1,),
        in_specs=[_full_spec((LB, I)), _full_spec((Bp, Hp)), _full_spec((Bp, Hp)),
                  _full_spec((I, 6 * Hp)), _full_spec((1, 6 * Hp)),
                  _full_spec((Hp, 3 * Hp)), _full_spec((1, 3 * Hp)),
                  _full_spec((Hp, 3 * Hp)), _full_spec((1, 3 * Hp))],
        out_specs=_full_spec((LB, 2 * Hp)),
        scratch_shapes=[pltpu.VMEM((LB, 6 * Hp), jnp.float32)],
        compiler_params=_COMPILER_PARAMS,
    )(x2d, h0_f, h0_r, wih, bih, whh_f, bhh_f, whh_r, bhh_r)


# -------------- GRU layer 1 (bidirectional) fused with the head -------------

def bigru_head_layer(x2d, h0_f, h0_r, wih, bih, whh_f, bhh_f, whh_r, bhh_r,
                     g2h_w, g2h_b, h2o_w, h2o_b, L, Bp):
    """Second bidirectional GRU layer fused with gru2hidden+tanh+hidden2out+
    sigmoid. x2d is the layer-0 output sequence; layer-0 final hiddens are
    recovered from it in-kernel. Returns (Bp, 1) f32 probabilities."""
    I = x2d.shape[1]
    Hp = whh_f.shape[0]
    LB = L * Bp

    def kernel(x_ref, h0f_ref, h0r_ref, wih_ref, bih_ref,
               whhf_ref, bhhf_ref, whhr_ref, bhhr_ref,
               w1_ref, b1_ref, w2_ref, b2_ref, o_ref, gx_scr):
        gx_scr[...] = jnp.dot(x_ref[...].astype(jnp.bfloat16), wih_ref[...],
                              preferred_element_type=jnp.float32) + bih_ref[...]
        whhf, whhr = whhf_ref[...], whhr_ref[...]
        bhhf, bhhr = bhhf_ref[...], bhhr_ref[...]

        def step(s, carry):
            h_f, h_r = carry
            gh_f = jnp.dot(h_f.astype(jnp.bfloat16), whhf,
                           preferred_element_type=jnp.float32) + bhhf
            gh_r = jnp.dot(h_r.astype(jnp.bfloat16), whhr,
                           preferred_element_type=jnp.float32) + bhhr
            row_f = pl.multiple_of(s * Bp, SUBLANE)
            row_r = pl.multiple_of((L - 1 - s) * Bp, SUBLANE)
            gxf = gx_scr[pl.ds(row_f, Bp), 0:3 * Hp]
            gxr = gx_scr[pl.ds(row_r, Bp), 3 * Hp:6 * Hp]
            return (_gru_cell(gxf, gh_f, h_f, Hp), _gru_cell(gxr, gh_r, h_r, Hp))

        h1_f, h1_r = lax.fori_loop(0, L, step, (h0f_ref[...], h0r_ref[...]),
                                   unroll=bool(L <= 16))

        # Layer-0 final hiddens straight from the layer-0 output sequence.
        h0_fin_f = x_ref[pl.ds((L - 1) * Bp, Bp), 0:Hp]
        h0_fin_r = x_ref[pl.ds(0, Bp), Hp:2 * Hp]
        # hidden.permute(1,0,2).view(B, 4H) -> [l0_fwd | l0_rev | l1_fwd | l1_rev]
        h_cat = jnp.concatenate([h0_fin_f, h0_fin_r, h1_f, h1_r], axis=-1)  # (Bp, 4Hp)

        t = jnp.tanh(jnp.dot(h_cat.astype(jnp.bfloat16), w1_ref[...],
                             preferred_element_type=jnp.float32) + b1_ref[...])
        # TODO(synk): dropout_linear (p=0.2) omitted -- eval/inference semantics.
        logit = jnp.sum(t * w2_ref[...], axis=-1, keepdims=True) + b2_ref[...]
        o_ref[...] = jax.nn.sigmoid(logit)

    return pl.pallas_call(
        kernel,
        out_shape=jax.ShapeDtypeStruct((Bp, 1), jnp.float32),
        grid=(1,),
        in_specs=[_full_spec((LB, I)), _full_spec((Bp, Hp)), _full_spec((Bp, Hp)),
                  _full_spec((I, 6 * Hp)), _full_spec((1, 6 * Hp)),
                  _full_spec((Hp, 3 * Hp)), _full_spec((1, 3 * Hp)),
                  _full_spec((Hp, 3 * Hp)), _full_spec((1, 3 * Hp)),
                  _full_spec((4 * Hp, Hp)), _full_spec((1, Hp)),
                  _full_spec((1, Hp)), _full_spec((1, 1))],
        out_specs=_full_spec((Bp, 1)),
        scratch_shapes=[pltpu.VMEM((LB, 6 * Hp), jnp.float32)],
        compiler_params=_COMPILER_PARAMS,
    )(x2d, h0_f, h0_r, wih, bih, whh_f, bhh_f, whh_r, bhh_r,
      g2h_w, g2h_b, h2o_w, h2o_b)


# ---------------------- one-time parameter preparation ----------------------

def _pad_blocks_2d(m, blk, pad):
    """(nr*blk, nc*blk) block matrix -> (nr*pad, nc*pad); each block sits at the
    top-left of its padded slot, zeros elsewhere."""
    nr, nc = m.shape[0] // blk, m.shape[1] // blk
    out = jnp.zeros((nr, pad, nc, pad), m.dtype)
    out = out.at[:, :blk, :, :blk].set(m.reshape(nr, blk, nc, blk))
    return out.reshape(nr * pad, nc * pad)


def _pad_blocks_1d(v, blk, pad):
    nc = v.shape[0] // blk
    out = jnp.zeros((nc, pad), v.dtype)
    out = out.at[:, :blk].set(v.reshape(nc, blk))
    return out.reshape(1, nc * pad)


def prepare_params(p):
    """One-time prep: transposes, im2col conv layout, lane padding to 128 and
    bf16 casts -- keeps forward() free of XLA-level relayouts."""
    f32, bf16 = jnp.float32, jnp.bfloat16
    E = p["emb"].shape[1]
    H = p["conv1_w"].shape[0]
    Ep = _round_up(E, LANE)
    Hp = _round_up(H, LANE)

    prep = {}
    prep["emb"] = jnp.zeros((p["emb"].shape[0], Ep), f32).at[:, :E].set(
        p["emb"].astype(f32))

    def conv_im2col(w, b, cin, cinp, cout, coutp):
        wt = jnp.transpose(w, (2, 1, 0)).astype(f32)                    # (3, Cin, Cout)
        wp = jnp.zeros((3, cinp, coutp), f32).at[:, :cin, :cout].set(wt)
        bp = jnp.zeros((1, coutp), f32).at[0, :cout].set(b.astype(f32))
        return wp.reshape(3 * cinp, coutp).astype(bf16), bp

    prep["conv1_w"], prep["conv1_b"] = conv_im2col(p["conv1_w"], p["conv1_b"],
                                                   E, Ep, H, Hp)
    prep["conv2_w"], prep["conv2_b"] = conv_im2col(p["conv2_w"], p["conv2_b"],
                                                   H, Hp, H, Hp)

    for layer, (f, r) in enumerate([("l0", "l0r"), ("l1", "l1r")]):
        wih = jnp.concatenate([p[f"gru_wih_{f}"].T, p[f"gru_wih_{r}"].T], axis=1)
        bih = jnp.concatenate([p[f"gru_bih_{f}"], p[f"gru_bih_{r}"]])
        prep[f"gru{layer}_wih"] = _pad_blocks_2d(wih.astype(f32), H, Hp).astype(bf16)
        prep[f"gru{layer}_bih"] = _pad_blocks_1d(bih.astype(f32), H, Hp)
        for d, name in (("f", f), ("r", r)):
            prep[f"gru{layer}_whh_{d}"] = _pad_blocks_2d(
                p[f"gru_whh_{name}"].T.astype(f32), H, Hp).astype(bf16)   # (Hp, 3Hp)
            prep[f"gru{layer}_bhh_{d}"] = _pad_blocks_1d(
                p[f"gru_bhh_{name}"].astype(f32), H, Hp)                  # (1, 3Hp)

    prep["g2h_w"] = _pad_blocks_2d(p["g2h_w"].T.astype(f32), H, Hp).astype(bf16)  # (4Hp,Hp)
    prep["g2h_b"] = _pad_blocks_1d(p["g2h_b"].astype(f32), H, Hp)                 # (1, Hp)
    prep["h2o_w"] = _pad_blocks_1d(p["h2o_w"].reshape(-1).astype(f32), H, Hp)     # (1, Hp)
    prep["h2o_b"] = p["h2o_b"].reshape(1, 1).astype(f32)
    return prep


# --------------------------------- forward ----------------------------------

def forward(prep, tokens, hidden0):
    """tokens: (B, L) int32; hidden0: (4, B, H) f32 (== Discriminator.init_hidden)."""
    B, L = tokens.shape
    H = hidden0.shape[-1]
    Ep = prep["emb"].shape[1]
    Hp = prep["conv1_b"].shape[1]
    Bp = _round_up(B, SUBLANE)

    # Pad batch once at the (tiny) token level; lookup directly into
    # time-major (L, Bp, Ep) layout so no activation transpose is ever needed.
    tok_p = jnp.zeros((Bp, L), tokens.dtype).at[:B, :].set(tokens)
    emb = jnp.take(prep["emb"], tok_p.T, axis=0)                       # (L, Bp, Ep)
    h0 = jnp.zeros((4, Bp, Hp), jnp.float32).at[:, :B, :H].set(hidden0)

    # conv1 + relu + conv2 + relu + time-major re-layout: one kernel.
    x0 = conv_stack(emb, prep["conv1_w"], prep["conv1_b"],
                    prep["conv2_w"], prep["conv2_b"])                  # (L*Bp, Hp) bf16

    # GRU layer 0: packed (L*Bp, 2Hp) sequence, no inter-layer concat in XLA.
    # TODO(synk): inter-layer GRU dropout (p=0.2) omitted -- eval semantics.
    out01 = bigru_seq_layer(x0, h0[0], h0[1],
                            prep["gru0_wih"], prep["gru0_bih"],
                            prep["gru0_whh_f"], prep["gru0_bhh_f"],
                            prep["gru0_whh_r"], prep["gru0_bhh_r"], L, Bp)

    # GRU layer 1 + gru2hidden + tanh + hidden2out + sigmoid, one kernel.
    out = bigru_head_layer(out01, h0[2], h0[3],
                           prep["gru1_wih"], prep["gru1_bih"],
                           prep["gru1_whh_f"], prep["gru1_bhh_f"],
                           prep["gru1_whh_r"], prep["gru1_bhh_r"],
                           prep["g2h_w"], prep["g2h_b"],
                           prep["h2o_w"], prep["h2o_b"], L, Bp)        # (Bp, 1)
    return out[:B]


# --------------------------- torch-layout params ----------------------------

def init_params(key, vocab, E, H):
    keys = iter(jax.random.split(key, 32))

    def nrm(shape, scale=0.1):
        return (scale * jax.random.normal(next(keys), shape)).astype(jnp.float32)

    p = {}
    p["emb"] = nrm((vocab, E))
    p["conv1_w"] = nrm((H, E, 3)); p["conv1_b"] = nrm((H,))
    p["conv2_w"] = nrm((H, H, 3)); p["conv2_b"] = nrm((H,))
    for name, inp in [("l0", H), ("l0r", H), ("l1", 2 * H), ("l1r", 2 * H)]:
        p[f"gru_wih_{name}"] = nrm((3 * H, inp))
        p[f"gru_whh_{name}"] = nrm((3 * H, H))
        p[f"gru_bih_{name}"] = nrm((3 * H,))
        p[f"gru_bhh_{name}"] = nrm((3 * H,))
    p["g2h_w"] = nrm((H, 4 * H)); p["g2h_b"] = nrm((H,))
    p["h2o_w"] = nrm((1, H));     p["h2o_b"] = nrm((1,))
    return p


if __name__ == "__main__":
    V, E, H, L, B = 10, 8, 16, 8, 2    # vocab, embedding_dim, hidden_dim, max_seq_len, batch
    key = jax.random.PRNGKey(0)
    pkey, tkey = jax.random.split(key)
    params = init_params(pkey, V, E, H)
    prep = prepare_params(params)      # one-time: transposes / padding / bf16 casts
    tokens = jax.random.randint(tkey, (B, L), 0, V, dtype=jnp.int32)
    hidden0 = jnp.zeros((2 * 2 * 1, B, H), jnp.float32)   # == Discriminator.init_hidden

    out = jax.jit(forward)(prep, tokens, hidden0)
    out = jax.block_until_ready(out)
    assert out.shape == (B, 1) and out.dtype == jnp.float32
    assert bool(jnp.all(jnp.isfinite(out))) and bool(jnp.all((out >= 0) & (out <= 1)))
    print("KERNEL_OK")
</pallas_src>

<mosaic_0001>
module attributes {stable_mosaic.version = 11 : i64} {
  func.func @kernel(%arg0: i32, %arg1: memref<64x256xf32, #tpu.memory_space<vmem>>, %arg2: memref<8x128xf32, #tpu.memory_space<vmem>>, %arg3: memref<8x128xf32, #tpu.memory_space<vmem>>, %arg4: memref<256x768xbf16, #tpu.memory_space<vmem>>, %arg5: memref<1x768xf32, #tpu.memory_space<vmem>>, %arg6: memref<128x384xbf16, #tpu.memory_space<vmem>>, %arg7: memref<1x384xf32, #tpu.memory_space<vmem>>, %arg8: memref<128x384xbf16, #tpu.memory_space<vmem>>, %arg9: memref<1x384xf32, #tpu.memory_space<vmem>>, %arg10: memref<512x128xbf16, #tpu.memory_space<vmem>>, %arg11: memref<1x128xf32, #tpu.memory_space<vmem>>, %arg12: memref<1x128xf32, #tpu.memory_space<vmem>>, %arg13: memref<1x1xf32, #tpu.memory_space<vmem>>, %arg14: memref<8x1xf32, #tpu.memory_space<vmem>>, %arg15: memref<64x768xf32, #tpu.memory_space<vmem>>) attributes {dimension_semantics = [#tpu.dimension_semantics<arbitrary>], iteration_bounds = array<i64: 1>, scalar_prefetch = 0 : i64, scratch_operands = 1 : i64, tpu.core_type = #tpu.core_type<tc>, window_params = [{pipeline_mode = #tpu.pipeline_mode<synchronous>, transform_indices = @transform_0, window_bounds = array<i64: 64, 256>}, {pipeline_mode = #tpu.pipeline_mode<synchronous>, transform_indices = @transform_1, window_bounds = array<i64: 8, 128>}, {pipeline_mode = #tpu.pipeline_mode<synchronous>, transform_indices = @transform_2, window_bounds = array<i64: 8, 128>}, {pipeline_mode = #tpu.pipeline_mode<synchronous>, transform_indices = @transform_3, window_bounds = array<i64: 256, 768>}, {pipeline_mode = #tpu.pipeline_mode<synchronous>, transform_indices = @transform_4, window_bounds = array<i64: 1, 768>}, {pipeline_mode = #tpu.pipeline_mode<synchronous>, transform_indices = @transform_5, window_bounds = array<i64: 128, 384>}, {pipeline_mode = #tpu.pipeline_mode<synchronous>, transform_indices = @transform_6, window_bounds = array<i64: 1, 384>}, {pipeline_mode = #tpu.pipeline_mode<synchronous>, transform_indices = @transform_7, window_bounds = array<i64: 128, 384>}, {pipeline_mode = #tpu.pipeline_mode<synchronous>, transform_indices = @transform_8, window_bounds = array<i64: 1, 384>}, {pipeline_mode = #tpu.pipeline_mode<synchronous>, transform_indices = @transform_9, window_bounds = array<i64: 512, 128>}, {pipeline_mode = #tpu.pipeline_mode<synchronous>, transform_indices = @transform_10, window_bounds = array<i64: 1, 128>}, {pipeline_mode = #tpu.pipeline_mode<synchronous>, transform_indices = @transform_11, window_bounds = array<i64: 1, 128>}, {pipeline_mode = #tpu.pipeline_mode<synchronous>, transform_indices = @transform_12, window_bounds = array<i64: 1, 1>}, {pipeline_mode = #tpu.pipeline_mode<synchronous>, transform_indices = @transform_13, window_bounds = array<i64: 8, 1>}]} {
    %c0 = arith.constant 0 : index
    %c0_0 = arith.constant 0 : index
    %0 = vector.load %arg1[%c0, %c0_0] : memref<64x256xf32, #tpu.memory_space<vmem>>, vector<64x256xf32>
    %1 = arith.truncf %0 : vector<64x256xf32> to vector<64x256xbf16>
    %c0_1 = arith.constant 0 : index
    %c0_2 = arith.constant 0 : index
    %2 = vector.load %arg4[%c0_1, %c0_2] : memref<256x768xbf16, #tpu.memory_space<vmem>>, vector<256x768xbf16>
    %cst = arith.constant dense<0.000000e+00> : vector<64x768xf32>
    %3 = tpu.matmul %1, %2, %cst {dimension_numbers = #tpu.dot_dimension_numbers<[1], [0], [0], [1], [0, 0, 1, 1], [], []>} : vector<64x256xbf16>, vector<256x768xbf16>, vector<64x768xf32> -> vector<64x768xf32>
    %c0_3 = arith.constant 0 : index
    %c0_4 = arith.constant 0 : index
    %4 = vector.load %arg5[%c0_3, %c0_4] : memref<1x768xf32, #tpu.memory_space<vmem>>, vector<1x768xf32>
    %5 = vector.broadcast %4 : vector<1x768xf32> to vector<64x768xf32>
    %6 = arith.addf %3, %5 : vector<64x768xf32>
    %c0_5 = arith.constant 0 : index
    %c0_6 = arith.constant 0 : index
    %7 = vector.load %arg15[%c0_5, %c0_6] : memref<64x768xf32, #tpu.memory_space<vmem>>, vector<64x768xf32>
    tpu.vector_store %arg15[%c0_5, %c0_6], %6 {strides = array<i32>} : memref<64x768xf32, #tpu.memory_space<vmem>>, vector<64x768xf32>,
    %c0_7 = arith.constant 0 : index
    %c0_8 = arith.constant 0 : index
    %8 = vector.load %arg6[%c0_7, %c0_8] : memref<128x384xbf16, #tpu.memory_space<vmem>>, vector<128x384xbf16>
    %c0_9 = arith.constant 0 : index
    %c0_10 = arith.constant 0 : index
    %9 = vector.load %arg8[%c0_9, %c0_10] : memref<128x384xbf16, #tpu.memory_space<vmem>>, vector<128x384xbf16>
    %c0_11 = arith.constant 0 : index
    %c0_12 = arith.constant 0 : index
    %10 = vector.load %arg7[%c0_11, %c0_12] : memref<1x384xf32, #tpu.memory_space<vmem>>, vector<1x384xf32>
    %c0_13 = arith.constant 0 : index
    %c0_14 = arith.constant 0 : index
    %11 = vector.load %arg9[%c0_13, %c0_14] : memref<1x384xf32, #tpu.memory_space<vmem>>, vector<1x384xf32>
    %c0_15 = arith.constant 0 : index
    %c0_16 = arith.constant 0 : index
    %12 = vector.load %arg2[%c0_15, %c0_16] : memref<8x128xf32, #tpu.memory_space<vmem>>, vector<8x128xf32>
    %c0_17 = arith.constant 0 : index
    %c0_18 = arith.constant 0 : index
    %13 = vector.load %arg3[%c0_17, %c0_18] : memref<8x128xf32, #tpu.memory_space<vmem>>, vector<8x128xf32>
    %c0_i32 = arith.constant 0 : i32
    %14 = arith.truncf %12 : vector<8x128xf32> to vector<8x128xbf16>
    %cst_19 = arith.constant dense<0.000000e+00> : vector<8x384xf32>
    %15 = tpu.matmul %14, %8, %cst_19 {dimension_numbers = #tpu.dot_dimension_numbers<[1], [0], [0], [1], [0, 0, 1, 1], [], []>} : vector<8x128xbf16>, vector<128x384xbf16>, vector<8x384xf32> -> vector<8x384xf32>
    %16 = vector.broadcast %10 : vector<1x384xf32> to vector<8x384xf32>
    %17 = arith.addf %15, %16 : vector<8x384xf32>
    %18 = arith.truncf %13 : vector<8x128xf32> to vector<8x128xbf16>
    %cst_20 = arith.constant dense<0.000000e+00> : vector<8x384xf32>
    %19 = tpu.matmul %18, %9, %cst_20 {dimension_numbers = #tpu.dot_dimension_numbers<[1], [0], [0], [1], [0, 0, 1, 1], [], []>} : vector<8x128xbf16>, vector<128x384xbf16>, vector<8x384xf32> -> vector<8x384xf32>
    %20 = vector.broadcast %11 : vector<1x384xf32> to vector<8x384xf32>
    %21 = arith.addf %19, %20 : vector<8x384xf32>
    %c8_i32 = arith.constant 8 : i32
    %22 = arith.muli %c0_i32, %c8_i32 : i32
    %23 = tpu.assume_multiple %22, 8 : i32
    %c7_i32 = arith.constant 7 : i32
    %24 = arith.subi %c7_i32, %c0_i32 : i32
    %c8_i32_21 = arith.constant 8 : i32
    %25 = arith.muli %24, %c8_i32_21 : i32
    %26 = tpu.assume_multiple %25, 8 : i32
    %27 = arith.index_cast %23 : i32 to index
    %c0_22 = arith.constant 0 : index
    %28 = vector.load %arg15[%27, %c0_22] : memref<64x768xf32, #tpu.memory_space<vmem>>, vector<8x384xf32>
    %29 = arith.index_cast %26 : i32 to index
    %c384 = arith.constant 384 : index
    %30 = vector.load %arg15[%29, %c384] : memref<64x768xf32, #tpu.memory_space<vmem>>, vector<8x384xf32>
    %31 = vector.extract_strided_slice %28 {offsets = [0, 0], sizes = [8, 128], strides = [1, 1]} : vector<8x384xf32> to vector<8x128xf32>
    %32 = vector.extract_strided_slice %17 {offsets = [0, 0], sizes = [8, 128], strides = [1, 1]} : vector<8x384xf32> to vector<8x128xf32>
    %33 = arith.addf %31, %32 : vector<8x128xf32>
    %34 = arith.negf %33 : vector<8x128xf32>
    %35 = math.exp %34 : vector<8x128xf32>
    %cst_23 = arith.constant 1.000000e+00 : f32
    %36 = vector.broadcast %cst_23 : f32 to vector<8x128xf32>
    %37 = arith.addf %36, %35 : vector<8x128xf32>
    %38 = arith.divf %36, %37 : vector<8x128xf32>
    %39 = vector.extract_strided_slice %28 {offsets = [0, 128], sizes = [8, 128], strides = [1, 1]} : vector<8x384xf32> to vector<8x128xf32>
    %40 = vector.extract_strided_slice %17 {offsets = [0, 128], sizes = [8, 128], strides = [1, 1]} : vector<8x384xf32> to vector<8x128xf32>
    %41 = arith.addf %39, %40 : vector<8x128xf32>
    %42 = arith.negf %41 : vector<8x128xf32>
    %43 = math.exp %42 : vector<8x128xf32>
    %cst_24 = arith.constant 1.000000e+00 : f32
    %44 = vector.broadcast %cst_24 : f32 to vector<8x128xf32>
    %45 = arith.addf %44, %43 : vector<8x128xf32>
    %46 = arith.divf %44, %45 : vector<8x128xf32>
    %47 = vector.extract_strided_slice %28 {offsets = [0, 256], sizes = [8, 128], strides = [1, 1]} : vector<8x384xf32> to vector<8x128xf32>
    %48 = vector.extract_strided_slice %17 {offsets = [0, 256], sizes = [8, 128], strides = [1, 1]} : vector<8x384xf32> to vector<8x128xf32>
    %49 = arith.mulf %38, %48 : vector<8x128xf32>
    %50 = arith.addf %47, %49 : vector<8x128xf32>
    %51 = math.tanh %50 : vector<8x128xf32>
    %cst_25 = arith.constant 1.000000e+00 : f32
    %52 = vector.broadcast %cst_25 : f32 to vector<8x128xf32>
    %53 = arith.subf %52, %46 : vector<8x128xf32>
    %54 = arith.mulf %53, %51 : vector<8x128xf32>
    %55 = arith.mulf %46, %12 : vector<8x128xf32>
    %56 = arith.addf %54, %55 : vector<8x128xf32>
    %57 = vector.extract_strided_slice %30 {offsets = [0, 0], sizes = [8, 128], strides = [1, 1]} : vector<8x384xf32> to vector<8x128xf32>
    %58 = vector.extract_strided_slice %21 {offsets = [0, 0], sizes = [8, 128], strides = [1, 1]} : vector<8x384xf32> to vector<8x128xf32>
    %59 = arith.addf %57, %58 : vector<8x128xf32>
    %60 = arith.negf %59 : vector<8x128xf32>
    %61 = math.exp %60 : vector<8x128xf32>
    %cst_26 = arith.constant 1.000000e+00 : f32
    %62 = vector.broadcast %cst_26 : f32 to vector<8x128xf32>
    %63 = arith.addf %62, %61 : vector<8x128xf32>
    %64 = arith.divf %62, %63 : vector<8x128xf32>
    %65 = vector.extract_strided_slice %30 {offsets = [0, 128], sizes = [8, 128], strides = [1, 1]} : vector<8x384xf32> to vector<8x128xf32>
    %66 = vector.extract_strided_slice %21 {offsets = [0, 128], sizes = [8, 128], strides = [1, 1]} : vector<8x384xf32> to vector<8x128xf32>
    %67 = arith.addf %65, %66 : vector<8x128xf32>
    %68 = arith.negf %67 : vector<8x128xf32>
    %69 = math.exp %68 : vector<8x128xf32>
    %cst_27 = arith.constant 1.000000e+00 : f32
    %70 = vector.broadcast %cst_27 : f32 to vector<8x128xf32>
    %71 = arith.addf %70, %69 : vector<8x128xf32>
    %72 = arith.divf %70, %71 : vector<8x128xf32>
    %73 = vector.extract_strided_slice %30 {offsets = [0, 256], sizes = [8, 128], strides = [1, 1]} : vector<8x384xf32> to vector<8x128xf32>
    %74 = vector.extract_strided_slice %21 {offsets = [0, 256], sizes = [8, 128], strides = [1, 1]} : vector<8x384xf32> to vector<8x128xf32>
    %75 = arith.mulf %64, %74 : vector<8x128xf32>
    %76 = arith.addf %73, %75 : vector<8x128xf32>
    %77 = math.tanh %76 : vector<8x128xf32>
    %cst_28 = arith.constant 1.000000e+00 : f32
    %78 = vector.broadcast %cst_28 : f32 to vector<8x128xf32>
    %79 = arith.subf %78, %72 : vector<8x128xf32>
    %80 = arith.mulf %79, %77 : vector<8x128xf32>
    %81 = arith.mulf %72, %13 : vector<8x128xf32>
    %82 = arith.addf %80, %81 : vector<8x128xf32>
    %c1_i32 = arith.constant 1 : i32
    %83 = arith.truncf %56 : vector<8x128xf32> to vector<8x128xbf16>
    %cst_29 = arith.constant dense<0.000000e+00> : vector<8x384xf32>
    %84 = tpu.matmul %83, %8, %cst_29 {dimension_numbers = #tpu.dot_dimension_numbers<[1], [0], [0], [1], [0, 0, 1, 1], [], []>} : vector<8x128xbf16>, vector<128x384xbf16>, vector<8x384xf32> -> vector<8x384xf32>
    %85 = vector.broadcast %10 : vector<1x384xf32> to vector<8x384xf32>
    %86 = arith.addf %84, %85 : vector<8x384xf32>
    %87 = arith.truncf %82 : vector<8x128xf32> to vector<8x128xbf16>
    %cst_30 = arith.constant dense<0.000000e+00> : vector<8x384xf32>
    %88 = tpu.matmul %87, %9, %cst_30 {dimension_numbers = #tpu.dot_dimension_numbers<[1], [0], [0], [1], [0, 0, 1, 1], [], []>} : vector<8x128xbf16>, vector<128x384xbf16>, vector<8x384xf32> -> vector<8x384xf32>
    %89 = vector.broadcast %11 : vector<1x384xf32> to vector<8x384xf32>
    %90 = arith.addf %88, %89 : vector<8x384xf32>
    %c8_i32_31 = arith.constant 8 : i32
    %91 = arith.muli %c1_i32, %c8_i32_31 : i32
    %92 = tpu.assume_multiple %91, 8 : i32
    %c7_i32_32 = arith.constant 7 : i32
    %93 = arith.subi %c7_i32_32, %c1_i32 : i32
    %c8_i32_33 = arith.constant 8 : i32
    %94 = arith.muli %93, %c8_i32_33 : i32
    %95 = tpu.assume_multiple %94, 8 : i32
    %96 = arith.index_cast %92 : i32 to index
    %c0_34 = arith.constant 0 : index
    %97 = vector.load %arg15[%96, %c0_34] : memref<64x768xf32, #tpu.memory_space<vmem>>, vector<8x384xf32>
    %98 = arith.index_cast %95 : i32 to index
    %c384_35 = arith.constant 384 : index
    %99 = vector.load %arg15[%98, %c384_35] : memref<64x768xf32, #tpu.memory_space<vmem>>, vector<8x384xf32>
    %100 = vector.extract_strided_slice %97 {offsets = [0, 0], sizes = [8, 128], strides = [1, 1]} : vector<8x384xf32> to vector<8x128xf32>
    %101 = vector.extract_strided_slice %86 {offsets = [0, 0], sizes = [8, 128], strides = [1, 1]} : vector<8x384xf32> to vector<8x128xf32>
    %102 = arith.addf %100, %101 : vector<8x128xf32>
    %103 = arith.negf %102 : vector<8x128xf32>
    %104 = math.exp %103 : vector<8x128xf32>
    %cst_36 = arith.constant 1.000000e+00 : f32
    %105 = vector.broadcast %cst_36 : f32 to vector<8x128xf32>
    %106 = arith.addf %105, %104 : vector<8x128xf32>
    %107 = arith.divf %105, %106 : vector<8x128xf32>
    %108 = vector.extract_strided_slice %97 {offsets = [0, 128], sizes = [8, 128], strides = [1, 1]} : vector<8x384xf32> to vector<8x128xf32>
    %109 = vector.extract_strided_slice %86 {offsets = [0, 128], sizes = [8, 128], strides = [1, 1]} : vector<8x384xf32> to vector<8x128xf32>
    %110 = arith.addf %108, %109 : vector<8x128xf32>
    %111 = arith.negf %110 : vector<8x128xf32>
    %112 = math.exp %111 : vector<8x128xf32>
    %cst_37 = arith.constant 1.000000e+00 : f32
    %113 = vector.broadcast %cst_37 : f32 to vector<8x128xf32>
    %114 = arith.addf %113, %112 : vector<8x128xf32>
    %115 = arith.divf %113, %114 : vector<8x128xf32>
    %116 = vector.extract_strided_slice %97 {offsets = [0, 256], sizes = [8, 128], strides = [1, 1]} : vector<8x384xf32> to vector<8x128xf32>
    %117 = vector.extract_strided_slice %86 {offsets = [0, 256], sizes = [8, 128], strides = [1, 1]} : vector<8x384xf32> to vector<8x128xf32>
    %118 = arith.mulf %107, %117 : vector<8x128xf32>
    %119 = arith.addf %116, %118 : vector<8x128xf32>
    %120 = math.tanh %119 : vector<8x128xf32>
    %cst_38 = arith.constant 1.000000e+00 : f32
    %121 = vector.broadcast %cst_38 : f32 to vector<8x128xf32>
    %122 = arith.subf %121, %115 : vector<8x128xf32>
    %123 = arith.mulf %122, %120 : vector<8x128xf32>
    %124 = arith.mulf %115, %56 : vector<8x128xf32>
    %125 = arith.addf %123, %124 : vector<8x128xf32>
    %126 = vector.extract_strided_slice %99 {offsets = [0, 0], sizes = [8, 128], strides = [1, 1]} : vector<8x384xf32> to vector<8x128xf32>
    %127 = vector.extract_strided_slice %90 {offsets = [0, 0], sizes = [8, 128], strides = [1, 1]} : vector<8x384xf32> to vector<8x128xf32>
    %128 = arith.addf %126, %127 : vector<8x128xf32>
    %129 = arith.negf %128 : vector<8x128xf32>
    %130 = math.exp %129 : vector<8x128xf32>
    %cst_39 = arith.constant 1.000000e+00 : f32
    %131 = vector.broadcast %cst_39 : f32 to vector<8x128xf32>
    %132 = arith.addf %131, %130 : vector<8x128xf32>
    %133 = arith.divf %131, %132 : vector<8x128xf32>
    %134 = vector.extract_strided_slice %99 {offsets = [0, 128], sizes = [8, 128], strides = [1, 1]} : vector<8x384xf32> to vector<8x128xf32>
    %135 = vector.extract_strided_slice %90 {offsets = [0, 128], sizes = [8, 128], strides = [1, 1]} : vector<8x384xf32> to vector<8x128xf32>
    %136 = arith.addf %134, %135 : vector<8x128xf32>
    %137 = arith.negf %136 : vector<8x128xf32>
    %138 = math.exp %137 : vector<8x128xf32>
    %cst_40 = arith.constant 1.000000e+00 : f32
    %139 = vector.broadcast %cst_40 : f32 to vector<8x128xf32>
    %140 = arith.addf %139, %138 : vector<8x128xf32>
    %141 = arith.divf %139, %140 : vector<8x128xf32>
    %142 = vector.extract_strided_slice %99 {offsets = [0, 256], sizes = [8, 128], strides = [1, 1]} : vector<8x384xf32> to vector<8x128xf32>
    %143 = vector.extract_strided_slice %90 {offsets = [0, 256], sizes = [8, 128], strides = [1, 1]} : vector<8x384xf32> to vector<8x128xf32>
    %144 = arith.mulf %133, %143 : vector<8x128xf32>
    %145 = arith.addf %142, %144 : vector<8x128xf32>
    %146 = math.tanh %145 : vector<8x128xf32>
    %cst_41 = arith.constant 1.000000e+00 : f32
    %147 = vector.broadcast %cst_41 : f32 to vector<8x128xf32>
    %148 = arith.subf %147, %141 : vector<8x128xf32>
    %149 = arith.mulf %148, %146 : vector<8x128xf32>
    %150 = arith.mulf %141, %82 : vector<8x128xf32>
    %151 = arith.addf %149, %150 : vector<8x128xf32>
    %c2_i32 = arith.constant 2 : i32
    %152 = arith.truncf %125 : vector<8x128xf32> to vector<8x128xbf16>
    %cst_42 = arith.constant dense<0.000000e+00> : vector<8x384xf32>
    %153 = tpu.matmul %152, %8, %cst_42 {dimension_numbers = #tpu.dot_dimension_numbers<[1], [0], [0], [1], [0, 0, 1, 1], [], []>} : vector<8x128xbf16>, vector<128x384xbf16>, vector<8x384xf32> -> vector<8x384xf32>
    %154 = vector.broadcast %10 : vector<1x384xf32> to vector<8x384xf32>
    %155 = arith.addf %153, %154 : vector<8x384xf32>
    %156 = arith.truncf %151 : vector<8x128xf32> to vector<8x128xbf16>
    %cst_43 = arith.constant dense<0.000000e+00> : vector<8x384xf32>
    %157 = tpu.matmul %156, %9, %cst_43 {dimension_numbers = #tpu.dot_dimension_numbers<[1], [0], [0], [1], [0, 0, 1, 1], [], []>} : vector<8x128xbf16>, vector<128x384xbf16>, vector<8x384xf32> -> vector<8x384xf32>
    %158 = vector.broadcast %11 : vector<1x384xf32> to vector<8x384xf32>
    %159 = arith.addf %157, %158 : vector<8x384xf32>
    %c8_i32_44 = arith.constant 8 : i32
    %160 = arith.muli %c2_i32, %c8_i32_44 : i32
    %161 = tpu.assume_multiple %160, 8 : i32
    %c7_i32_45 = arith.constant 7 : i32
    %162 = arith.subi %c7_i32_45, %c2_i32 : i32
    %c8_i32_46 = arith.constant 8 : i32
    %163 = arith.muli %162, %c8_i32_46 : i32
    %164 = tpu.assume_multiple %163, 8 : i32
    %165 = arith.index_cast %161 : i32 to index
    %c0_47 = arith.constant 0 : index
    %166 = vector.load %arg15[%165, %c0_47] : memref<64x768xf32, #tpu.memory_space<vmem>>, vector<8x384xf32>
    %167 = arith.index_cast %164 : i32 to index
    %c384_48 = arith.constant 384 : index
    %168 = vector.load %arg15[%167, %c384_48] : memref<64x768xf32, #tpu.memory_space<vmem>>, vector<8x384xf32>
    %169 = vector.extract_strided_slice %166 {offsets = [0, 0], sizes = [8, 128], strides = [1, 1]} : vector<8x384xf32> to vector<8x128xf32>
    %170 = vector.extract_strided_slice %155 {offsets = [0, 0], sizes = [8, 128], strides = [1, 1]} : vector<8x384xf32> to vector<8x128xf32>
    %171 = arith.addf %169, %170 : vector<8x128xf32>
    %172 = arith.negf %171 : vector<8x128xf32>
    %173 = math.exp %172 : vector<8x128xf32>
    %cst_49 = arith.constant 1.000000e+00 : f32
    %174 = vector.broadcast %cst_49 : f32 to vector<8x128xf32>
    %175 = arith.addf %174, %173 : vector<8x128xf32>
    %176 = arith.divf %174, %175 : vector<8x128xf32>
    %177 = vector.extract_strided_slice %166 {offsets = [0, 128], sizes = [8, 128], strides = [1, 1]} : vector<8x384xf32> to vector<8x128xf32>
    %178 = vector.extract_strided_slice %155 {offsets = [0, 128], sizes = [8, 128], strides = [1, 1]} : vector<8x384xf32> to vector<8x128xf32>
    %179 = arith.addf %177, %178 : vector<8x128xf32>
    %180 = arith.negf %179 : vector<8x128xf32>
    %181 = math.exp %180 : vector<8x128xf32>
    %cst_50 = arith.constant 1.000000e+00 : f32
    %182 = vector.broadcast %cst_50 : f32 to vector<8x128xf32>
    %183 = arith.addf %182, %181 : vector<8x128xf32>
    %184 = arith.divf %182, %183 : vector<8x128xf32>
    %185 = vector.extract_strided_slice %166 {offsets = [0, 256], sizes = [8, 128], strides = [1, 1]} : vector<8x384xf32> to vector<8x128xf32>
    %186 = vector.extract_strided_slice %155 {offsets = [0, 256], sizes = [8, 128], strides = [1, 1]} : vector<8x384xf32> to vector<8x128xf32>
    %187 = arith.mulf %176, %186 : vector<8x128xf32>
    %188 = arith.addf %185, %187 : vector<8x128xf32>
    %189 = math.tanh %188 : vector<8x128xf32>
    %cst_51 = arith.constant 1.000000e+00 : f32
    %190 = vector.broadcast %cst_51 : f32 to vector<8x128xf32>
    %191 = arith.subf %190, %184 : vector<8x128xf32>
    %192 = arith.mulf %191, %189 : vector<8x128xf32>
    %193 = arith.mulf %184, %125 : vector<8x128xf32>
    %194 = arith.addf %192, %193 : vector<8x128xf32>
    %195 = vector.extract_strided_slice %168 {offsets = [0, 0], sizes = [8, 128], strides = [1, 1]} : vector<8x384xf32> to vector<8x128xf32>
    %196 = vector.extract_strided_slice %159 {offsets = [0, 0], sizes = [8, 128], strides = [1, 1]} : vector<8x384xf32> to vector<8x128xf32>
    %197 = arith.addf %195, %196 : vector<8x128xf32>
    %198 = arith.negf %197 : vector<8x128xf32>
    %199 = math.exp %198 : vector<8x128xf32>
    %cst_52 = arith.constant 1.000000e+00 : f32
    %200 = vector.broadcast %cst_52 : f32 to vector<8x128xf32>
    %201 = arith.addf %200, %199 : vector<8x128xf32>
    %202 = arith.divf %200, %201 : vector<8x128xf32>
    %203 = vector.extract_strided_slice %168 {offsets = [0, 128], sizes = [8, 128], strides = [1, 1]} : vector<8x384xf32> to vector<8x128xf32>
    %204 = vector.extract_strided_slice %159 {offsets = [0, 128], sizes = [8, 128], strides = [1, 1]} : vector<8x384xf32> to vector<8x128xf32>
    %205 = arith.addf %203, %204 : vector<8x128xf32>
    %206 = arith.negf %205 : vector<8x128xf32>
    %207 = math.exp %206 : vector<8x128xf32>
    %cst_53 = arith.constant 1.000000e+00 : f32
    %208 = vector.broadcast %cst_53 : f32 to vector<8x128xf32>
    %209 = arith.addf %208, %207 : vector<8x128xf32>
    %210 = arith.divf %208, %209 : vector<8x128xf32>
    %211 = vector.extract_strided_slice %168 {offsets = [0, 256], sizes = [8, 128], strides = [1, 1]} : vector<8x384xf32> to vector<8x128xf32>
    %212 = vector.extract_strided_slice %159 {offsets = [0, 256], sizes = [8, 128], strides = [1, 1]} : vector<8x384xf32> to vector<8x128xf32>
    %213 = arith.mulf %202, %212 : vector<8x128xf32>
    %214 = arith.addf %211, %213 : vector<8x128xf32>
    %215 = math.tanh %214 : vector<8x128xf32>
    %cst_54 = arith.constant 1.000000e+00 : f32
    %216 = vector.broadcast %cst_54 : f32 to vector<8x128xf32>
    %217 = arith.subf %216, %210 : vector<8x128xf32>
    %218 = arith.mulf %217, %215 : vector<8x128xf32>
    %219 = arith.mulf %210, %151 : vector<8x128xf32>
    %220 = arith.addf %218, %219 : vector<8x128xf32>
    %c3_i32 = arith.constant 3 : i32
    %221 = arith.truncf %194 : vector<8x128xf32> to vector<8x128xbf16>
    %cst_55 = arith.constant dense<0.000000e+00> : vector<8x384xf32>
    %222 = tpu.matmul %221, %8, %cst_55 {dimension_numbers = #tpu.dot_dimension_numbers<[1], [0], [0], [1], [0, 0, 1, 1], [], []>} : vector<8x128xbf16>, vector<128x384xbf16>, vector<8x384xf32> -> vector<8x384xf32>
    %223 = vector.broadcast %10 : vector<1x384xf32> to vector<8x384xf32>
    %224 = arith.addf %222, %223 : vector<8x384xf32>
    %225 = arith.truncf %220 : vector<8x128xf32> to vector<8x128xbf16>
    %cst_56 = arith.constant dense<0.000000e+00> : vector<8x384xf32>
    %226 = tpu.matmul %225, %9, %cst_56 {dimension_numbers = #tpu.dot_dimension_numbers<[1], [0], [0], [1], [0, 0, 1, 1], [], []>} : vector<8x128xbf16>, vector<128x384xbf16>, vector<8x384xf32> -> vector<8x384xf32>
    %227 = vector.broadcast %11 : vector<1x384xf32> to vector<8x384xf32>
    %228 = arith.addf %226, %227 : vector<8x384xf32>
    %c8_i32_57 = arith.constant 8 : i32
    %229 = arith.muli %c3_i32, %c8_i32_57 : i32
    %230 = tpu.assume_multiple %229, 8 : i32
    %c7_i32_58 = arith.constant 7 : i32
    %231 = arith.subi %c7_i32_58, %c3_i32 : i32
    %c8_i32_59 = arith.constant 8 : i32
    %232 = arith.muli %231, %c8_i32_59 : i32
    %233 = tpu.assume_multiple %232, 8 : i32
    %234 = arith.index_cast %230 : i32 to index
    %c0_60 = arith.constant 0 : index
    %235 = vector.load %arg15[%234, %c0_60] : memref<64x768xf32, #tpu.memory_space<vmem>>, vector<8x384xf32>
    %236 = arith.index_cast %233 : i32 to index
    %c384_61 = arith.constant 384 : index
    %237 = vector.load %arg15[%236, %c384_61] : memref<64x768xf32, #tpu.memory_space<vmem>>, vector<8x384xf32>
    %238 = vector.extract_strided_slice %235 {offsets = [0, 0], sizes = [8, 128], strides = [1, 1]} : vector<8x384xf32> to vector<8x128xf32>
    %239 = vector.extract_strided_slice %224 {offsets = [0, 0], sizes = [8, 128], strides = [1, 1]} : vector<8x384xf32> to vector<8x128xf32>
    %240 = arith.addf %238, %239 : vector<8x128xf32>
    %241 = arith.negf %240 : vector<8x128xf32>
    %242 = math.exp %241 : vector<8x128xf32>
    %cst_62 = arith.constant 1.000000e+00 : f32
    %243 = vector.broadcast %cst_62 : f32 to vector<8x128xf32>
    %244 = arith.addf %243, %242 : vector<8x128xf32>
    %245 = arith.divf %243, %244 : vector<8x128xf32>
    %246 = vector.extract_strided_slice %235 {offsets = [0, 128], sizes = [8, 128], strides = [1, 1]} : vector<8x384xf32> to vector<8x128xf32>
    %247 = vector.extract_strided_slice %224 {offsets = [0, 128], sizes = [8, 128], strides = [1, 1]} : vector<8x384xf32> to vector<8x128xf32>
    %248 = arith.addf %246, %247 : vector<8x128xf32>
    %249 = arith.negf %248 : vector<8x128xf32>
    %250 = math.exp %249 : vector<8x128xf32>
    %cst_63 = arith.constant 1.000000e+00 : f32
    %251 = vector.broadcast %cst_63 : f32 to vector<8x128xf32>
    %252 = arith.addf %251, %250 : vector<8x128xf32>
    %253 = arith.divf %251, %252 : vector<8x128xf32>
    %254 = vector.extract_strided_slice %235 {offsets = [0, 256], sizes = [8, 128], strides = [1, 1]} : vector<8x384xf32> to vector<8x128xf32>
    %255 = vector.extract_strided_slice %224 {offsets = [0, 256], sizes = [8, 128], strides = [1, 1]} : vector<8x384xf32> to vector<8x128xf32>
    %256 = arith.mulf %245, %255 : vector<8x128xf32>
    %257 = arith.addf %254, %256 : vector<8x128xf32>
    %258 = math.tanh %257 : vector<8x128xf32>
    %cst_64 = arith.constant 1.000000e+00 : f32
    %259 = vector.broadcast %cst_64 : f32 to vector<8x128xf32>
    %260 = arith.subf %259, %253 : vector<8x128xf32>
    %261 = arith.mulf %260, %258 : vector<8x128xf32>
    %262 = arith.mulf %253, %194 : vector<8x128xf32>
    %263 = arith.addf %261, %262 : vector<8x128xf32>
    %264 = vector.extract_strided_slice %237 {offsets = [0, 0], sizes = [8, 128], strides = [1, 1]} : vector<8x384xf32> to vector<8x128xf32>
    %265 = vector.extract_strided_slice %228 {offsets = [0, 0], sizes = [8, 128], strides = [1, 1]} : vector<8x384xf32> to vector<8x128xf32>
    %266 = arith.addf %264, %265 : vector<8x128xf32>
    %267 = arith.negf %266 : vector<8x128xf32>
    %268 = math.exp %267 : vector<8x128xf32>
    %cst_65 = arith.constant 1.000000e+00 : f32
    %269 = vector.broadcast %cst_65 : f32 to vector<8x128xf32>
    %270 = arith.addf %269, %268 : vector<8x128xf32>
    %271 = arith.divf %269, %270 : vector<8x128xf32>
    %272 = vector.extract_strided_slice %237 {offsets = [0, 128], sizes = [8, 128], strides = [1, 1]} : vector<8x384xf32> to vector<8x128xf32>
    %273 = vector.extract_strided_slice %228 {offsets = [0, 128], sizes = [8, 128], strides = [1, 1]} : vector<8x384xf32> to vector<8x128xf32>
    %274 = arith.addf %272, %273 : vector<8x128xf32>
    %275 = arith.negf %274 : vector<8x128xf32>
    %276 = math.exp %275 : vector<8x128xf32>
    %cst_66 = arith.constant 1.000000e+00 : f32
    %277 = vector.broadcast %cst_66 : f32 to vector<8x128xf32>
    %278 = arith.addf %277, %276 : vector<8x128xf32>
    %279 = arith.divf %277, %278 : vector<8x128xf32>
    %280 = vector.extract_strided_slice %237 {offsets = [0, 256], sizes = [8, 128], strides = [1, 1]} : vector<8x384xf32> to vector<8x128xf32>
    %281 = vector.extract_strided_slice %228 {offsets = [0, 256], sizes = [8, 128], strides = [1, 1]} : vector<8x384xf32> to vector<8x128xf32>
    %282 = arith.mulf %271, %281 : vector<8x128xf32>
    %283 = arith.addf %280, %282 : vector<8x128xf32>
    %284 = math.tanh %283 : vector<8x128xf32>
    %cst_67 = arith.constant 1.000000e+00 : f32
    %285 = vector.broadcast %cst_67 : f32 to vector<8x128xf32>
    %286 = arith.subf %285, %279 : vector<8x128xf32>
    %287 = arith.mulf %286, %284 : vector<8x128xf32>
    %288 = arith.mulf %279, %220 : vector<8x128xf32>
    %289 = arith.addf %287, %288 : vector<8x128xf32>
    %c4_i32 = arith.constant 4 : i32
    %290 = arith.truncf %263 : vector<8x128xf32> to vector<8x128xbf16>
    %cst_68 = arith.constant dense<0.000000e+00> : vector<8x384xf32>
    %291 = tpu.matmul %290, %8, %cst_68 {dimension_numbers = #tpu.dot_dimension_numbers<[1], [0], [0], [1], [0, 0, 1, 1], [], []>} : vector<8x128xbf16>, vector<128x384xbf16>, vector<8x384xf32> -> vector<8x384xf32>
    %292 = vector.broadcast %10 : vector<1x384xf32> to vector<8x384xf32>
    %293 = arith.addf %291, %292 : vector<8x384xf32>
    %294 = arith.truncf %289 : vector<8x128xf32> to vector<8x128xbf16>
    %cst_69 = arith.constant dense<0.000000e+00> : vector<8x384xf32>
    %295 = tpu.matmul %294, %9, %cst_69 {dimension_numbers = #tpu.dot_dimension_numbers<[1], [0], [0], [1], [0, 0, 1, 1], [], []>} : vector<8x128xbf16>, vector<128x384xbf16>, vector<8x384xf32> -> vector<8x384xf32>
    %296 = vector.broadcast %11 : vector<1x384xf32> to vector<8x384xf32>
    %297 = arith.addf %295, %296 : vector<8x384xf32>
    %c8_i32_70 = arith.constant 8 : i32
    %298 = arith.muli %c4_i32, %c8_i32_70 : i32
    %299 = tpu.assume_multiple %298, 8 : i32
    %c7_i32_71 = arith.constant 7 : i32
    %300 = arith.subi %c7_i32_71, %c4_i32 : i32
    %c8_i32_72 = arith.constant 8 : i32
    %301 = arith.muli %300, %c8_i32_72 : i32
    %302 = tpu.assume_multiple %301, 8 : i32
    %303 = arith.index_cast %299 : i32 to index
    %c0_73 = arith.constant 0 : index
    %304 = vector.load %arg15[%303, %c0_73] : memref<64x768xf32, #tpu.memory_space<vmem>>, vector<8x384xf32>
    %305 = arith.index_cast %302 : i32 to index
    %c384_74 = arith.constant 384 : index
    %306 = vector.load %arg15[%305, %c384_74] : memref<64x768xf32, #tpu.memory_space<vmem>>, vector<8x384xf32>
    %307 = vector.extract_strided_slice %304 {offsets = [0, 0], sizes = [8, 128], strides = [1, 1]} : vector<8x384xf32> to vector<8x128xf32>
    %308 = vector.extract_strided_slice %293 {offsets = [0, 0], sizes = [8, 128], strides = [1, 1]} : vector<8x384xf32> to vector<8x128xf32>
    %309 = arith.addf %307, %308 : vector<8x128xf32>
    %310 = arith.negf %309 : vector<8x128xf32>
    %311 = math.exp %310 : vector<8x128xf32>
    %cst_75 = arith.constant 1.000000e+00 : f32
    %312 = vector.broadcast %cst_75 : f32 to vector<8x128xf32>
    %313 = arith.addf %312, %311 : vector<8x128xf32>
    %314 = arith.divf %312, %313 : vector<8x128xf32>
    %315 = vector.extract_strided_slice %304 {offsets = [0, 128], sizes = [8, 128], strides = [1, 1]} : vector<8x384xf32> to vector<8x128xf32>
    %316 = vector.extract_strided_slice %293 {offsets = [0, 128], sizes = [8, 128], strides = [1, 1]} : vector<8x384xf32> to vector<8x128xf32>
    %317 = arith.addf %315, %316 : vector<8x128xf32>
    %318 = arith.negf %317 : vector<8x128xf32>
    %319 = math.exp %318 : vector<8x128xf32>
    %cst_76 = arith.constant 1.000000e+00 : f32
    %320 = vector.broadcast %cst_76 : f32 to vector<8x128xf32>
    %321 = arith.addf %320, %319 : vector<8x128xf32>
    %322 = arith.divf %320, %321 : vector<8x128xf32>
    %323 = vector.extract_strided_slice %304 {offsets = [0, 256], sizes = [8, 128], strides = [1, 1]} : vector<8x384xf32> to vector<8x128xf32>
    %324 = vector.extract_strided_slice %293 {offsets = [0, 256], sizes = [8, 128], strides = [1, 1]} : vector<8x384xf32> to vector<8x128xf32>
    %325 = arith.mulf %314, %324 : vector<8x128xf32>
    %326 = arith.addf %323, %325 : vector<8x128xf32>
    %327 = math.tanh %326 : vector<8x128xf32>
    %cst_77 = arith.constant 1.000000e+00 : f32
    %328 = vector.broadcast %cst_77 : f32 to vector<8x128xf32>
    %329 = arith.subf %328, %322 : vector<8x128xf32>
    %330 = arith.mulf %329, %327 : vector<8x128xf32>
    %331 = arith.mulf %322, %263 : vector<8x128xf32>
    %332 = arith.addf %330, %331 : vector<8x128xf32>
    %333 = vector.extract_strided_slice %306 {offsets = [0, 0], sizes = [8, 128], strides = [1, 1]} : vector<8x384xf32> to vector<8x128xf32>
    %334 = vector.extract_strided_slice %297 {offsets = [0, 0], sizes = [8, 128], strides = [1, 1]} : vector<8x384xf32> to vector<8x128xf32>
    %335 = arith.addf %333, %334 : vector<8x128xf32>
    %336 = arith.negf %335 : vector<8x128xf32>
    %337 = math.exp %336 : vector<8x128xf32>
    %cst_78 = arith.constant 1.000000e+00 : f32
    %338 = vector.broadcast %cst_78 : f32 to vector<8x128xf32>
    %339 = arith.addf %338, %337 : vector<8x128xf32>
    %340 = arith.divf %338, %339 : vector<8x128xf32>
    %341 = vector.extract_strided_slice %306 {offsets = [0, 128], sizes = [8, 128], strides = [1, 1]} : vector<8x384xf32> to vector<8x128xf32>
    %342 = vector.extract_strided_slice %297 {offsets = [0, 128], sizes = [8, 128], strides = [1, 1]} : vector<8x384xf32> to vector<8x128xf32>
    %343 = arith.addf %341, %342 : vector<8x128xf32>
    %344 = arith.negf %343 : vector<8x128xf32>
    %345 = math.exp %344 : vector<8x128xf32>
    %cst_79 = arith.constant 1.000000e+00 : f32
    %346 = vector.broadcast %cst_79 : f32 to vector<8x128xf32>
    %347 = arith.addf %346, %345 : vector<8x128xf32>
    %348 = arith.divf %346, %347 : vector<8x128xf32>
    %349 = vector.extract_strided_slice %306 {offsets = [0, 256], sizes = [8, 128], strides = [1, 1]} : vector<8x384xf32> to vector<8x128xf32>
    %350 = vector.extract_strided_slice %297 {offsets = [0, 256], sizes = [8, 128], strides = [1, 1]} : vector<8x384xf32> to vector<8x128xf32>
    %351 = arith.mulf %340, %350 : vector<8x128xf32>
    %352 = arith.addf %349, %351 : vector<8x128xf32>
    %353 = math.tanh %352 : vector<8x128xf32>
    %cst_80 = arith.constant 1.000000e+00 : f32
    %354 = vector.broadcast %cst_80 : f32 to vector<8x128xf32>
    %355 = arith.subf %354, %348 : vector<8x128xf32>
    %356 = arith.mulf %355, %353 : vector<8x128xf32>
    %357 = arith.mulf %348, %289 : vector<8x128xf32>
    %358 = arith.addf %356, %357 : vector<8x128xf32>
    %c5_i32 = arith.constant 5 : i32
    %359 = arith.truncf %332 : vector<8x128xf32> to vector<8x128xbf16>
    %cst_81 = arith.constant dense<0.000000e+00> : vector<8x384xf32>
    %360 = tpu.matmul %359, %8, %cst_81 {dimension_numbers = #tpu.dot_dimension_numbers<[1], [0], [0], [1], [0, 0, 1, 1], [], []>} : vector<8x128xbf16>, vector<128x384xbf16>, vector<8x384xf32> -> vector<8x384xf32>
    %361 = vector.broadcast %10 : vector<1x384xf32> to vector<8x384xf32>
    %362 = arith.addf %360, %361 : vector<8x384xf32>
    %363 = arith.truncf %358 : vector<8x128xf32> to vector<8x128xbf16>
    %cst_82 = arith.constant dense<0.000000e+00> : vector<8x384xf32>
    %364 = tpu.matmul %363, %9, %cst_82 {dimension_numbers = #tpu.dot_dimension_numbers<[1], [0], [0], [1], [0, 0, 1, 1], [], []>} : vector<8x128xbf16>, vector<128x384xbf16>, vector<8x384xf32> -> vector<8x384xf32>
    %365 = vector.broadcast %11 : vector<1x384xf32> to vector<8x384xf32>
    %366 = arith.addf %364, %365 : vector<8x384xf32>
    %c8_i32_83 = arith.constant 8 : i32
    %367 = arith.muli %c5_i32, %c8_i32_83 : i32
    %368 = tpu.assume_multiple %367, 8 : i32
    %c7_i32_84 = arith.constant 7 : i32
    %369 = arith.subi %c7_i32_84, %c5_i32 : i32
    %c8_i32_85 = arith.constant 8 : i32
    %370 = arith.muli %369, %c8_i32_85 : i32
    %371 = tpu.assume_multiple %370, 8 : i32
    %372 = arith.index_cast %368 : i32 to index
    %c0_86 = arith.constant 0 : index
    %373 = vector.load %arg15[%372, %c0_86] : memref<64x768xf32, #tpu.memory_space<vmem>>, vector<8x384xf32>
    %374 = arith.index_cast %371 : i32 to index
    %c384_87 = arith.constant 384 : index
    %375 = vector.load %arg15[%374, %c384_87] : memref<64x768xf32, #tpu.memory_space<vmem>>, vector<8x384xf32>
    %376 = vector.extract_strided_slice %373 {offsets = [0, 0], sizes = [8, 128], strides = [1, 1]} : vector<8x384xf32> to vector<8x128xf32>
    %377 = vector.extract_strided_slice %362 {offsets = [0, 0], sizes = [8, 128], strides = [1, 1]} : vector<8x384xf32> to vector<8x128xf32>
    %378 = arith.addf %376, %377 : vector<8x128xf32>
    %379 = arith.negf %378 : vector<8x128xf32>
    %380 = math.exp %379 : vector<8x128xf32>
    %cst_88 = arith.constant 1.000000e+00 : f32
    %381 = vector.broadcast %cst_88 : f32 to vector<8x128xf32>
    %382 = arith.addf %381, %380 : vector<8x128xf32>
    %383 = arith.divf %381, %382 : vector<8x128xf32>
    %384 = vector.extract_strided_slice %373 {offsets = [0, 128], sizes = [8, 128], strides = [1, 1]} : vector<8x384xf32> to vector<8x128xf32>
    %385 = vector.extract_strided_slice %362 {offsets = [0, 128], sizes = [8, 128], strides = [1, 1]} : vector<8x384xf32> to vector<8x128xf32>
    %386 = arith.addf %384, %385 : vector<8x128xf32>
    %387 = arith.negf %386 : vector<8x128xf32>
    %388 = math.exp %387 : vector<8x128xf32>
    %cst_89 = arith.constant 1.000000e+00 : f32
    %389 = vector.broadcast %cst_89 : f32 to vector<8x128xf32>
    %390 = arith.addf %389, %388 : vector<8x128xf32>
    %391 = arith.divf %389, %390 : vector<8x128xf32>
    %392 = vector.extract_strided_slice %373 {offsets = [0, 256], sizes = [8, 128], strides = [1, 1]} : vector<8x384xf32> to vector<8x128xf32>
    %393 = vector.extract_strided_slice %362 {offsets = [0, 256], sizes = [8, 128], strides = [1, 1]} : vector<8x384xf32> to vector<8x128xf32>
    %394 = arith.mulf %383, %393 : vector<8x128xf32>
    %395 = arith.addf %392, %394 : vector<8x128xf32>
    %396 = math.tanh %395 : vector<8x128xf32>
    %cst_90 = arith.constant 1.000000e+00 : f32
    %397 = vector.broadcast %cst_90 : f32 to vector<8x128xf32>
    %398 = arith.subf %397, %391 : vector<8x128xf32>
    %399 = arith.mulf %398, %396 : vector<8x128xf32>
    %400 = arith.mulf %391, %332 : vector<8x128xf32>
    %401 = arith.addf %399, %400 : vector<8x128xf32>
    %402 = vector.extract_strided_slice %375 {offsets = [0, 0], sizes = [8, 128], strides = [1, 1]} : vector<8x384xf32> to vector<8x128xf32>
    %403 = vector.extract_strided_slice %366 {offsets = [0, 0], sizes = [8, 128], strides = [1, 1]} : vector<8x384xf32> to vector<8x128xf32>
    %404 = arith.addf %402, %403 : vector<8x128xf32>
    %405 = arith.negf %404 : vector<8x128xf32>
    %406 = math.exp %405 : vector<8x128xf32>
    %cst_91 = arith.constant 1.000000e+00 : f32
    %407 = vector.broadcast %cst_91 : f32 to vector<8x128xf32>
    %408 = arith.addf %407, %406 : vector<8x128xf32>
    %409 = arith.divf %407, %408 : vector<8x128xf32>
    %410 = vector.extract_strided_slice %375 {offsets = [0, 128], sizes = [8, 128], strides = [1, 1]} : vector<8x384xf32> to vector<8x128xf32>
    %411 = vector.extract_strided_slice %366 {offsets = [0, 128], sizes = [8, 128], strides = [1, 1]} : vector<8x384xf32> to vector<8x128xf32>
    %412 = arith.addf %410, %411 : vector<8x128xf32>
    %413 = arith.negf %412 : vector<8x128xf32>
    %414 = math.exp %413 : vector<8x128xf32>
    %cst_92 = arith.constant 1.000000e+00 : f32
    %415 = vector.broadcast %cst_92 : f32 to vector<8x128xf32>
    %416 = arith.addf %415, %414 : vector<8x128xf32>
    %417 = arith.divf %415, %416 : vector<8x128xf32>
    %418 = vector.extract_strided_slice %375 {offsets = [0, 256], sizes = [8, 128], strides = [1, 1]} : vector<8x384xf32> to vector<8x128xf32>
    %419 = vector.extract_strided_slice %366 {offsets = [0, 256], sizes = [8, 128], strides = [1, 1]} : vector<8x384xf32> to vector<8x128xf32>
    %420 = arith.mulf %409, %419 : vector<8x128xf32>
    %421 = arith.addf %418, %420 : vector<8x128xf32>
    %422 = math.tanh %421 : vector<8x128xf32>
    %cst_93 = arith.constant 1.000000e+00 : f32
    %423 = vector.broadcast %cst_93 : f32 to vector<8x128xf32>
    %424 = arith.subf %423, %417 : vector<8x128xf32>
    %425 = arith.mulf %424, %422 : vector<8x128xf32>
    %426 = arith.mulf %417, %358 : vector<8x128xf32>
    %427 = arith.addf %425, %426 : vector<8x128xf32>
    %c6_i32 = arith.constant 6 : i32
    %428 = arith.truncf %401 : vector<8x128xf32> to vector<8x128xbf16>
    %cst_94 = arith.constant dense<0.000000e+00> : vector<8x384xf32>
    %429 = tpu.matmul %428, %8, %cst_94 {dimension_numbers = #tpu.dot_dimension_numbers<[1], [0], [0], [1], [0, 0, 1, 1], [], []>} : vector<8x128xbf16>, vector<128x384xbf16>, vector<8x384xf32> -> vector<8x384xf32>
    %430 = vector.broadcast %10 : vector<1x384xf32> to vector<8x384xf32>
    %431 = arith.addf %429, %430 : vector<8x384xf32>
    %432 = arith.truncf %427 : vector<8x128xf32> to vector<8x128xbf16>
    %cst_95 = arith.constant dense<0.000000e+00> : vector<8x384xf32>
    %433 = tpu.matmul %432, %9, %cst_95 {dimension_numbers = #tpu.dot_dimension_numbers<[1], [0], [0], [1], [0, 0, 1, 1], [], []>} : vector<8x128xbf16>, vector<128x384xbf16>, vector<8x384xf32> -> vector<8x384xf32>
    %434 = vector.broadcast %11 : vector<1x384xf32> to vector<8x384xf32>
    %435 = arith.addf %433, %434 : vector<8x384xf32>
    %c8_i32_96 = arith.constant 8 : i32
    %436 = arith.muli %c6_i32, %c8_i32_96 : i32
    %437 = tpu.assume_multiple %436, 8 : i32
    %c7_i32_97 = arith.constant 7 : i32
    %438 = arith.subi %c7_i32_97, %c6_i32 : i32
    %c8_i32_98 = arith.constant 8 : i32
    %439 = arith.muli %438, %c8_i32_98 : i32
    %440 = tpu.assume_multiple %439, 8 : i32
    %441 = arith.index_cast %437 : i32 to index
    %c0_99 = arith.constant 0 : index
    %442 = vector.load %arg15[%441, %c0_99] : memref<64x768xf32, #tpu.memory_space<vmem>>, vector<8x384xf32>
    %443 = arith.index_cast %440 : i32 to index
    %c384_100 = arith.constant 384 : index
    %444 = vector.load %arg15[%443, %c384_100] : memref<64x768xf32, #tpu.memory_space<vmem>>, vector<8x384xf32>
    %445 = vector.extract_strided_slice %442 {offsets = [0, 0], sizes = [8, 128], strides = [1, 1]} : vector<8x384xf32> to vector<8x128xf32>
    %446 = vector.extract_strided_slice %431 {offsets = [0, 0], sizes = [8, 128], strides = [1, 1]} : vector<8x384xf32> to vector<8x128xf32>
    %447 = arith.addf %445, %446 : vector<8x128xf32>
    %448 = arith.negf %447 : vector<8x128xf32>
    %449 = math.exp %448 : vector<8x128xf32>
    %cst_101 = arith.constant 1.000000e+00 : f32
    %450 = vector.broadcast %cst_101 : f32 to vector<8x128xf32>
    %451 = arith.addf %450, %449 : vector<8x128xf32>
    %452 = arith.divf %450, %451 : vector<8x128xf32>
    %453 = vector.extract_strided_slice %442 {offsets = [0, 128], sizes = [8, 128], strides = [1, 1]} : vector<8x384xf32> to vector<8x128xf32>
    %454 = vector.extract_strided_slice %431 {offsets = [0, 128], sizes = [8, 128], strides = [1, 1]} : vector<8x384xf32> to vector<8x128xf32>
    %455 = arith.addf %453, %454 : vector<8x128xf32>
    %456 = arith.negf %455 : vector<8x128xf32>
    %457 = math.exp %456 : vector<8x128xf32>
    %cst_102 = arith.constant 1.000000e+00 : f32
    %458 = vector.broadcast %cst_102 : f32 to vector<8x128xf32>
    %459 = arith.addf %458, %457 : vector<8x128xf32>
    %460 = arith.divf %458, %459 : vector<8x128xf32>
    %461 = vector.extract_strided_slice %442 {offsets = [0, 256], sizes = [8, 128], strides = [1, 1]} : vector<8x384xf32> to vector<8x128xf32>
    %462 = vector.extract_strided_slice %431 {offsets = [0, 256], sizes = [8, 128], strides = [1, 1]} : vector<8x384xf32> to vector<8x128xf32>
    %463 = arith.mulf %452, %462 : vector<8x128xf32>
    %464 = arith.addf %461, %463 : vector<8x128xf32>
    %465 = math.tanh %464 : vector<8x128xf32>
    %cst_103 = arith.constant 1.000000e+00 : f32
    %466 = vector.broadcast %cst_103 : f32 to vector<8x128xf32>
    %467 = arith.subf %466, %460 : vector<8x128xf32>
    %468 = arith.mulf %467, %465 : vector<8x128xf32>
    %469 = arith.mulf %460, %401 : vector<8x128xf32>
    %470 = arith.addf %468, %469 : vector<8x128xf32>
    %471 = vector.extract_strided_slice %444 {offsets = [0, 0], sizes = [8, 128], strides = [1, 1]} : vector<8x384xf32> to vector<8x128xf32>
    %472 = vector.extract_strided_slice %435 {offsets = [0, 0], sizes = [8, 128], strides = [1, 1]} : vector<8x384xf32> to vector<8x128xf32>
    %473 = arith.addf %471, %472 : vector<8x128xf32>
    %474 = arith.negf %473 : vector<8x128xf32>
    %475 = math.exp %474 : vector<8x128xf32>
    %cst_104 = arith.constant 1.000000e+00 : f32
    %476 = vector.broadcast %cst_104 : f32 to vector<8x128xf32>
    %477 = arith.addf %476, %475 : vector<8x128xf32>
    %478 = arith.divf %476, %477 : vector<8x128xf32>
    %479 = vector.extract_strided_slice %444 {offsets = [0, 128], sizes = [8, 128], strides = [1, 1]} : vector<8x384xf32> to vector<8x128xf32>
    %480 = vector.extract_strided_slice %435 {offsets = [0, 128], sizes = [8, 128], strides = [1, 1]} : vector<8x384xf32> to vector<8x128xf32>
    %481 = arith.addf %479, %480 : vector<8x128xf32>
    %482 = arith.negf %481 : vector<8x128xf32>
    %483 = math.exp %482 : vector<8x128xf32>
    %cst_105 = arith.constant 1.000000e+00 : f32
    %484 = vector.broadcast %cst_105 : f32 to vector<8x128xf32>
    %485 = arith.addf %484, %483 : vector<8x128xf32>
    %486 = arith.divf %484, %485 : vector<8x128xf32>
    %487 = vector.extract_strided_slice %444 {offsets = [0, 256], sizes = [8, 128], strides = [1, 1]} : vector<8x384xf32> to vector<8x128xf32>
    %488 = vector.extract_strided_slice %435 {offsets = [0, 256], sizes = [8, 128], strides = [1, 1]} : vector<8x384xf32> to vector<8x128xf32>
    %489 = arith.mulf %478, %488 : vector<8x128xf32>
    %490 = arith.addf %487, %489 : vector<8x128xf32>
    %491 = math.tanh %490 : vector<8x128xf32>
    %cst_106 = arith.constant 1.000000e+00 : f32
    %492 = vector.broadcast %cst_106 : f32 to vector<8x128xf32>
    %493 = arith.subf %492, %486 : vector<8x128xf32>
    %494 = arith.mulf %493, %491 : vector<8x128xf32>
    %495 = arith.mulf %486, %427 : vector<8x128xf32>
    %496 = arith.addf %494, %495 : vector<8x128xf32>
    %c7_i32_107 = arith.constant 7 : i32
    %497 = arith.truncf %470 : vector<8x128xf32> to vector<8x128xbf16>
    %cst_108 = arith.constant dense<0.000000e+00> : vector<8x384xf32>
    %498 = tpu.matmul %497, %8, %cst_108 {dimension_numbers = #tpu.dot_dimension_numbers<[1], [0], [0], [1], [0, 0, 1, 1], [], []>} : vector<8x128xbf16>, vector<128x384xbf16>, vector<8x384xf32> -> vector<8x384xf32>
    %499 = vector.broadcast %10 : vector<1x384xf32> to vector<8x384xf32>
    %500 = arith.addf %498, %499 : vector<8x384xf32>
    %501 = arith.truncf %496 : vector<8x128xf32> to vector<8x128xbf16>
    %cst_109 = arith.constant dense<0.000000e+00> : vector<8x384xf32>
    %502 = tpu.matmul %501, %9, %cst_109 {dimension_numbers = #tpu.dot_dimension_numbers<[1], [0], [0], [1], [0, 0, 1, 1], [], []>} : vector<8x128xbf16>, vector<128x384xbf16>, vector<8x384xf32> -> vector<8x384xf32>
    %503 = vector.broadcast %11 : vector<1x384xf32> to vector<8x384xf32>
    %504 = arith.addf %502, %503 : vector<8x384xf32>
    %c8_i32_110 = arith.constant 8 : i32
    %505 = arith.muli %c7_i32_107, %c8_i32_110 : i32
    %506 = tpu.assume_multiple %505, 8 : i32
    %c7_i32_111 = arith.constant 7 : i32
    %507 = arith.subi %c7_i32_111, %c7_i32_107 : i32
    %c8_i32_112 = arith.constant 8 : i32
    %508 = arith.muli %507, %c8_i32_112 : i32
    %509 = tpu.assume_multiple %508, 8 : i32
    %510 = arith.index_cast %506 : i32 to index
    %c0_113 = arith.constant 0 : index
    %511 = vector.load %arg15[%510, %c0_113] : memref<64x768xf32, #tpu.memory_space<vmem>>, vector<8x384xf32>
    %512 = arith.index_cast %509 : i32 to index
    %c384_114 = arith.constant 384 : index
    %513 = vector.load %arg15[%512, %c384_114] : memref<64x768xf32, #tpu.memory_space<vmem>>, vector<8x384xf32>
    %514 = vector.extract_strided_slice %511 {offsets = [0, 0], sizes = [8, 128], strides = [1, 1]} : vector<8x384xf32> to vector<8x128xf32>
    %515 = vector.extract_strided_slice %500 {offsets = [0, 0], sizes = [8, 128], strides = [1, 1]} : vector<8x384xf32> to vector<8x128xf32>
    %516 = arith.addf %514, %515 : vector<8x128xf32>
    %517 = arith.negf %516 : vector<8x128xf32>
    %518 = math.exp %517 : vector<8x128xf32>
    %cst_115 = arith.constant 1.000000e+00 : f32
    %519 = vector.broadcast %cst_115 : f32 to vector<8x128xf32>
    %520 = arith.addf %519, %518 : vector<8x128xf32>
    %521 = arith.divf %519, %520 : vector<8x128xf32>
    %522 = vector.extract_strided_slice %511 {offsets = [0, 128], sizes = [8, 128], strides = [1, 1]} : vector<8x384xf32> to vector<8x128xf32>
    %523 = vector.extract_strided_slice %500 {offsets = [0, 128], sizes = [8, 128], strides = [1, 1]} : vector<8x384xf32> to vector<8x128xf32>
    %524 = arith.addf %522, %523 : vector<8x128xf32>
    %525 = arith.negf %524 : vector<8x128xf32>
    %526 = math.exp %525 : vector<8x128xf32>
    %cst_116 = arith.constant 1.000000e+00 : f32
    %527 = vector.broadcast %cst_116 : f32 to vector<8x128xf32>
    %528 = arith.addf %527, %526 : vector<8x128xf32>
    %529 = arith.divf %527, %528 : vector<8x128xf32>
    %530 = vector.extract_strided_slice %511 {offsets = [0, 256], sizes = [8, 128], strides = [1, 1]} : vector<8x384xf32> to vector<8x128xf32>
    %531 = vector.extract_strided_slice %500 {offsets = [0, 256], sizes = [8, 128], strides = [1, 1]} : vector<8x384xf32> to vector<8x128xf32>
    %532 = arith.mulf %521, %531 : vector<8x128xf32>
    %533 = arith.addf %530, %532 : vector<8x128xf32>
    %534 = math.tanh %533 : vector<8x128xf32>
    %cst_117 = arith.constant 1.000000e+00 : f32
    %535 = vector.broadcast %cst_117 : f32 to vector<8x128xf32>
    %536 = arith.subf %535, %529 : vector<8x128xf32>
    %537 = arith.mulf %536, %534 : vector<8x128xf32>
    %538 = arith.mulf %529, %470 : vector<8x128xf32>
    %539 = arith.addf %537, %538 : vector<8x128xf32>
    %540 = vector.extract_strided_slice %513 {offsets = [0, 0], sizes = [8, 128], strides = [1, 1]} : vector<8x384xf32> to vector<8x128xf32>
    %541 = vector.extract_strided_slice %504 {offsets = [0, 0], sizes = [8, 128], strides = [1, 1]} : vector<8x384xf32> to vector<8x128xf32>
    %542 = arith.addf %540, %541 : vector<8x128xf32>
    %543 = arith.negf %542 : vector<8x128xf32>
    %544 = math.exp %543 : vector<8x128xf32>
    %cst_118 = arith.constant 1.000000e+00 : f32
    %545 = vector.broadcast %cst_118 : f32 to vector<8x128xf32>
    %546 = arith.addf %545, %544 : vector<8x128xf32>
    %547 = arith.divf %545, %546 : vector<8x128xf32>
    %548 = vector.extract_strided_slice %513 {offsets = [0, 128], sizes = [8, 128], strides = [1, 1]} : vector<8x384xf32> to vector<8x128xf32>
    %549 = vector.extract_strided_slice %504 {offsets = [0, 128], sizes = [8, 128], strides = [1, 1]} : vector<8x384xf32> to vector<8x128xf32>
    %550 = arith.addf %548, %549 : vector<8x128xf32>
    %551 = arith.negf %550 : vector<8x128xf32>
    %552 = math.exp %551 : vector<8x128xf32>
    %cst_119 = arith.constant 1.000000e+00 : f32
    %553 = vector.broadcast %cst_119 : f32 to vector<8x128xf32>
    %554 = arith.addf %553, %552 : vector<8x128xf32>
    %555 = arith.divf %553, %554 : vector<8x128xf32>
    %556 = vector.extract_strided_slice %513 {offsets = [0, 256], sizes = [8, 128], strides = [1, 1]} : vector<8x384xf32> to vector<8x128xf32>
    %557 = vector.extract_strided_slice %504 {offsets = [0, 256], sizes = [8, 128], strides = [1, 1]} : vector<8x384xf32> to vector<8x128xf32>
    %558 = arith.mulf %547, %557 : vector<8x128xf32>
    %559 = arith.addf %556, %558 : vector<8x128xf32>
    %560 = math.tanh %559 : vector<8x128xf32>
    %cst_120 = arith.constant 1.000000e+00 : f32
    %561 = vector.broadcast %cst_120 : f32 to vector<8x128xf32>
    %562 = arith.subf %561, %555 : vector<8x128xf32>
    %563 = arith.mulf %562, %560 : vector<8x128xf32>
    %564 = arith.mulf %555, %496 : vector<8x128xf32>
    %565 = arith.addf %563, %564 : vector<8x128xf32>
    %c8_i32_121 = arith.constant 8 : i32
    %c56 = arith.constant 56 : index
    %c0_122 = arith.constant 0 : index
    %566 = vector.load %arg1[%c56, %c0_122] : memref<64x256xf32, #tpu.memory_space<vmem>>, vector<8x128xf32>
    %c0_123 = arith.constant 0 : index
    %c128 = arith.constant 128 : index
    %567 = vector.load %arg1[%c0_123, %c128] : memref<64x256xf32, #tpu.memory_space<vmem>>, vector<8x128xf32>
    %568 = tpu.concatenate %566, %567, %539, %565 in 1 : vector<8x128xf32>, vector<8x128xf32>, vector<8x128xf32>, vector<8x128xf32> -> vector<8x512xf32>
    %569 = arith.truncf %568 : vector<8x512xf32> to vector<8x512xbf16>
    %c0_124 = arith.constant 0 : index
    %c0_125 = arith.constant 0 : index
    %570 = vector.load %arg10[%c0_124, %c0_125] : memref<512x128xbf16, #tpu.memory_space<vmem>>, vector<512x128xbf16>
    %cst_126 = arith.constant dense<0.000000e+00> : vector<8x128xf32>
    %571 = tpu.matmul %569, %570, %cst_126 {dimension_numbers = #tpu.dot_dimension_numbers<[1], [0], [0], [1], [0, 0, 1, 1], [], []>} : vector<8x512xbf16>, vector<512x128xbf16>, vector<8x128xf32> -> vector<8x128xf32>
    %c0_127 = arith.constant 0 : index
    %c0_128 = arith.constant 0 : index
    %572 = vector.load %arg11[%c0_127, %c0_128] : memref<1x128xf32, #tpu.memory_space<vmem>>, vector<1x128xf32>
    %573 = vector.broadcast %572 : vector<1x128xf32> to vector<8x128xf32>
    %574 = arith.addf %571, %573 : vector<8x128xf32>
    %575 = math.tanh %574 : vector<8x128xf32>
    %c0_129 = arith.constant 0 : index
    %c0_130 = arith.constant 0 : index
    %576 = vector.load %arg12[%c0_129, %c0_130] : memref<1x128xf32, #tpu.memory_space<vmem>>, vector<1x128xf32>
    %577 = vector.broadcast %576 : vector<1x128xf32> to vector<8x128xf32>
    %578 = arith.mulf %575, %577 : vector<8x128xf32>
    %cst_131 = arith.constant dense<0.000000e+00> : vector<8xf32>
    %579 = vector.multi_reduction <add>, %578, %cst_131 [1] : vector<8x128xf32> to vector<8xf32>
    %580 = vector.shape_cast %579 : vector<8xf32> to vector<8x1xf32>
    %c0_132 = arith.constant 0 : index
    %c0_133 = arith.constant 0 : index
    %581 = vector.load %arg13[%c0_132, %c0_133] : memref<1x1xf32, #tpu.memory_space<vmem>>, vector<1x1xf32>
    %582 = vector.broadcast %581 : vector<1x1xf32> to vector<8x1xf32>
    %583 = arith.addf %580, %582 : vector<8x1xf32>
    %584 = arith.negf %583 : vector<8x1xf32>
    %585 = math.exp %584 : vector<8x1xf32>
    %cst_134 = arith.constant 1.000000e+00 : f32
    %586 = vector.broadcast %cst_134 : f32 to vector<8x1xf32>
    %587 = arith.addf %586, %585 : vector<8x1xf32>
    %588 = arith.divf %586, %587 : vector<8x1xf32>
    %c0_135 = arith.constant 0 : index
    %c0_136 = arith.constant 0 : index
    %589 = vector.load %arg14[%c0_135, %c0_136] : memref<8x1xf32, #tpu.memory_space<vmem>>, vector<8x1xf32>
    tpu.vector_store %arg14[%c0_135, %c0_136], %588 {strides = array<i32>} : memref<8x1xf32, #tpu.memory_space<vmem>>, vector<8x1xf32>,
    return
  }
  func.func @transform_0(%arg0: i32) -> (i32, i32) {
    %c0_i32 = arith.constant 0 : i32
    %c0_i32_0 = arith.constant 0 : i32
    %c0_i32_1 = arith.constant 0 : i32
    return %c0_i32, %c0_i32_0 : i32, i32
  }
  func.func @transform_1(%arg0: i32) -> (i32, i32) {
    %c0_i32 = arith.constant 0 : i32
    %c0_i32_0 = arith.constant 0 : i32
    %c0_i32_1 = arith.constant 0 : i32
    return %c0_i32, %c0_i32_0 : i32, i32
  }
  func.func @transform_2(%arg0: i32) -> (i32, i32) {
    %c0_i32 = arith.constant 0 : i32
    %c0_i32_0 = arith.constant 0 : i32
    %c0_i32_1 = arith.constant 0 : i32
    return %c0_i32, %c0_i32_0 : i32, i32
  }
  func.func @transform_3(%arg0: i32) -> (i32, i32) {
    %c0_i32 = arith.constant 0 : i32
    %c0_i32_0 = arith.constant 0 : i32
    %c0_i32_1 = arith.constant 0 : i32
    return %c0_i32, %c0_i32_0 : i32, i32
  }
  func.func @transform_4(%arg0: i32) -> (i32, i32) {
    %c0_i32 = arith.constant 0 : i32
    %c0_i32_0 = arith.constant 0 : i32
    %c0_i32_1 = arith.constant 0 : i32
    return %c0_i32, %c0_i32_0 : i32, i32
  }
  func.func @transform_5(%arg0: i32) -> (i32, i32) {
    %c0_i32 = arith.constant 0 : i32
    %c0_i32_0 = arith.constant 0 : i32
    %c0_i32_1 = arith.constant 0 : i32
    return %c0_i32, %c0_i32_0 : i32, i32
  }
  func.func @transform_6(%arg0: i32) -> (i32, i32) {
    %c0_i32 = arith.constant 0 : i32
    %c0_i32_0 = arith.constant 0 : i32
    %c0_i32_1 = arith.constant 0 : i32
    return %c0_i32, %c0_i32_0 : i32, i32
  }
  func.func @transform_7(%arg0: i32) -> (i32, i32) {
    %c0_i32 = arith.constant 0 : i32
    %c0_i32_0 = arith.constant 0 : i32
    %c0_i32_1 = arith.constant 0 : i32
    return %c0_i32, %c0_i32_0 : i32, i32
  }
  func.func @transform_8(%arg0: i32) -> (i32, i32) {
    %c0_i32 = arith.constant 0 : i32
    %c0_i32_0 = arith.constant 0 : i32
    %c0_i32_1 = arith.constant 0 : i32
    return %c0_i32, %c0_i32_0 : i32, i32
  }
  func.func @transform_9(%arg0: i32) -> (i32, i32) {
    %c0_i32 = arith.constant 0 : i32
    %c0_i32_0 = arith.constant 0 : i32
    %c0_i32_1 = arith.constant 0 : i32
    return %c0_i32, %c0_i32_0 : i32, i32
  }
  func.func @transform_10(%arg0: i32) -> (i32, i32) {
    %c0_i32 = arith.constant 0 : i32
    %c0_i32_0 = arith.constant 0 : i32
    %c0_i32_1 = arith.constant 0 : i32
    return %c0_i32, %c0_i32_0 : i32, i32
  }
  func.func @transform_11(%arg0: i32) -> (i32, i32) {
    %c0_i32 = arith.constant 0 : i32
    %c0_i32_0 = arith.constant 0 : i32
    %c0_i32_1 = arith.constant 0 : i32
    return %c0_i32, %c0_i32_0 : i32, i32
  }
  func.func @transform_12(%arg0: i32) -> (i32, i32) {
    %c0_i32 = arith.constant 0 : i32
    %c0_i32_0 = arith.constant 0 : i32
    %c0_i32_1 = arith.constant 0 : i32
    return %c0_i32, %c0_i32_0 : i32, i32
  }
  func.func @transform_13(%arg0: i32) -> (i32, i32) {
    %c0_i32 = arith.constant 0 : i32
    %c0_i32_0 = arith.constant 0 : i32
    %c0_i32_1 = arith.constant 0 : i32
    return %c0_i32, %c0_i32_0 : i32, i32
  }
}

module attributes {stable_mosaic.version = 11 : i64} {
  func.func @_conv_stack_kernel(%arg0: i32, %arg1: memref<8x8x128xf32, #tpu.memory_space<vmem>>, %arg2: memref<384x128xbf16, #tpu.memory_space<vmem>>, %arg3: memref<1x128xf32, #tpu.memory_space<vmem>>, %arg4: memref<384x128xbf16, #tpu.memory_space<vmem>>, %arg5: memref<1x128xf32, #tpu.memory_space<vmem>>, %arg6: memref<64x128xbf16, #tpu.memory_space<vmem>>) attributes {dimension_semantics = [#tpu.dimension_semantics<arbitrary>], iteration_bounds = array<i64: 1>, scalar_prefetch = 0 : i64, scratch_operands = 0 : i64, tpu.core_type = #tpu.core_type<tc>, window_params = [{pipeline_mode = #tpu.pipeline_mode<synchronous>, transform_indices = @transform_0, window_bounds = array<i64: 8, 8, 128>}, {pipeline_mode = #tpu.pipeline_mode<synchronous>, transform_indices = @transform_1, window_bounds = array<i64: 384, 128>}, {pipeline_mode = #tpu.pipeline_mode<synchronous>, transform_indices = @transform_2, window_bounds = array<i64: 1, 128>}, {pipeline_mode = #tpu.pipeline_mode<synchronous>, transform_indices = @transform_3, window_bounds = array<i64: 384, 128>}, {pipeline_mode = #tpu.pipeline_mode<synchronous>, transform_indices = @transform_4, window_bounds = array<i64: 1, 128>}, {pipeline_mode = #tpu.pipeline_mode<synchronous>, transform_indices = @transform_5, window_bounds = array<i64: 64, 128>}]} {
    %c0 = arith.constant 0 : index
    %c0_0 = arith.constant 0 : index
    %c0_1 = arith.constant 0 : index
    %0 = vector.load %arg1[%c0, %c0_0, %c0_1] : memref<8x8x128xf32, #tpu.memory_space<vmem>>, vector<8x8x128xf32>
    %1 = arith.truncf %0 : vector<8x8x128xf32> to vector<8x8x128xbf16>
    %cst = arith.constant 0.000000e+00 : bf16
    %2 = vector.broadcast %cst : bf16 to vector<1x8x128xbf16>
    %3 = tpu.concatenate %2, %1, %2 in 0 : vector<1x8x128xbf16>, vector<8x8x128xbf16>, vector<1x8x128xbf16> -> vector<10x8x128xbf16>
    %4 = vector.extract_strided_slice %3 {offsets = [0, 0, 0], sizes = [8, 8, 128], strides = [1, 1, 1]} : vector<10x8x128xbf16> to vector<8x8x128xbf16>
    %5 = vector.extract_strided_slice %3 {offsets = [1, 0, 0], sizes = [8, 8, 128], strides = [1, 1, 1]} : vector<10x8x128xbf16> to vector<8x8x128xbf16>
    %6 = vector.extract_strided_slice %3 {offsets = [2, 0, 0], sizes = [8, 8, 128], strides = [1, 1, 1]} : vector<10x8x128xbf16> to vector<8x8x128xbf16>
    %7 = tpu.concatenate %4, %5, %6 in 2 : vector<8x8x128xbf16>, vector<8x8x128xbf16>, vector<8x8x128xbf16> -> vector<8x8x384xbf16>
    %8 = vector.shape_cast %7 : vector<8x8x384xbf16> to vector<64x384xbf16>
    %c0_2 = arith.constant 0 : index
    %c0_3 = arith.constant 0 : index
    %9 = vector.load %arg2[%c0_2, %c0_3] : memref<384x128xbf16, #tpu.memory_space<vmem>>, vector<384x128xbf16>
    %cst_4 = arith.constant dense<0.000000e+00> : vector<64x128xf32>
    %10 = tpu.matmul %8, %9, %cst_4 {dimension_numbers = #tpu.dot_dimension_numbers<[1], [0], [0], [1], [0, 0, 1, 1], [], []>} : vector<64x384xbf16>, vector<384x128xbf16>, vector<64x128xf32> -> vector<64x128xf32>
    %c0_5 = arith.constant 0 : index
    %c0_6 = arith.constant 0 : index
    %11 = vector.load %arg3[%c0_5, %c0_6] : memref<1x128xf32, #tpu.memory_space<vmem>>, vector<1x128xf32>
    %12 = vector.broadcast %11 : vector<1x128xf32> to vector<64x128xf32>
    %13 = arith.addf %10, %12 : vector<64x128xf32>
    %cst_7 = arith.constant 0.000000e+00 : f32
    %14 = vector.broadcast %cst_7 : f32 to vector<64x128xf32>
    %15 = arith.maximumf %13, %14 : vector<64x128xf32>
    %16 = arith.truncf %15 : vector<64x128xf32> to vector<64x128xbf16>
    %17 = vector.shape_cast %16 : vector<64x128xbf16> to vector<8x8x128xbf16>
    %cst_8 = arith.constant 0.000000e+00 : bf16
    %18 = vector.broadcast %cst_8 : bf16 to vector<1x8x128xbf16>
    %19 = tpu.concatenate %18, %17, %18 in 0 : vector<1x8x128xbf16>, vector<8x8x128xbf16>, vector<1x8x128xbf16> -> vector<10x8x128xbf16>
    %20 = vector.extract_strided_slice %19 {offsets = [0, 0, 0], sizes = [8, 8, 128], strides = [1, 1, 1]} : vector<10x8x128xbf16> to vector<8x8x128xbf16>
    %21 = vector.extract_strided_slice %19 {offsets = [1, 0, 0], sizes = [8, 8, 128], strides = [1, 1, 1]} : vector<10x8x128xbf16> to vector<8x8x128xbf16>
    %22 = vector.extract_strided_slice %19 {offsets = [2, 0, 0], sizes = [8, 8, 128], strides = [1, 1, 1]} : vector<10x8x128xbf16> to vector<8x8x128xbf16>
    %23 = tpu.concatenate %20, %21, %22 in 2 : vector<8x8x128xbf16>, vector<8x8x128xbf16>, vector<8x8x128xbf16> -> vector<8x8x384xbf16>
    %24 = vector.shape_cast %23 : vector<8x8x384xbf16> to vector<64x384xbf16>
    %c0_9 = arith.constant 0 : index
    %c0_10 = arith.constant 0 : index
    %25 = vector.load %arg4[%c0_9, %c0_10] : memref<384x128xbf16, #tpu.memory_space<vmem>>, vector<384x128xbf16>
    %cst_11 = arith.constant dense<0.000000e+00> : vector<64x128xf32>
    %26 = tpu.matmul %24, %25, %cst_11 {dimension_numbers = #tpu.dot_dimension_numbers<[1], [0], [0], [1], [0, 0, 1, 1], [], []>} : vector<64x384xbf16>, vector<384x128xbf16>, vector<64x128xf32> -> vector<64x128xf32>
    %c0_12 = arith.constant 0 : index
    %c0_13 = arith.constant 0 : index
    %27 = vector.load %arg5[%c0_12, %c0_13] : memref<1x128xf32, #tpu.memory_space<vmem>>, vector<1x128xf32>
    %28 = vector.broadcast %27 : vector<1x128xf32> to vector<64x128xf32>
    %29 = arith.addf %26, %28 : vector<64x128xf32>
    %cst_14 = arith.constant 0.000000e+00 : f32
    %30 = vector.broadcast %cst_14 : f32 to vector<64x128xf32>
    %31 = arith.maximumf %29, %30 : vector<64x128xf32>
    %32 = arith.truncf %31 : vector<64x128xf32> to vector<64x128xbf16>
    %c0_15 = arith.constant 0 : index
    %c0_16 = arith.constant 0 : index
    %33 = vector.load %arg6[%c0_15, %c0_16] : memref<64x128xbf16, #tpu.memory_space<vmem>>, vector<64x128xbf16>
    tpu.vector_store %arg6[%c0_15, %c0_16], %32 {strides = array<i32>} : memref<64x128xbf16, #tpu.memory_space<vmem>>, vector<64x128xbf16>,
    return
  }
  func.func @transform_0(%arg0: i32) -> (i32, i32, i32) {
    %c0_i32 = arith.constant 0 : i32
    %c0_i32_0 = arith.constant 0 : i32
    %c0_i32_1 = arith.constant 0 : i32
    %c0_i32_2 = arith.constant 0 : i32
    return %c0_i32, %c0_i32_0, %c0_i32_1 : i32, i32, i32
  }
  func.func @transform_1(%arg0: i32) -> (i32, i32) {
    %c0_i32 = arith.constant 0 : i32
    %c0_i32_0 = arith.constant 0 : i32
    %c0_i32_1 = arith.constant 0 : i32
    return %c0_i32, %c0_i32_0 : i32, i32
  }
  func.func @transform_2(%arg0: i32) -> (i32, i32) {
    %c0_i32 = arith.constant 0 : i32
    %c0_i32_0 = arith.constant 0 : i32
    %c0_i32_1 = arith.constant 0 : i32
    return %c0_i32, %c0_i32_0 : i32, i32
  }
  func.func @transform_3(%arg0: i32) -> (i32, i32) {
    %c0_i32 = arith.constant 0 : i32
    %c0_i32_0 = arith.constant 0 : i32
    %c0_i32_1 = arith.constant 0 : i32
    return %c0_i32, %c0_i32_0 : i32, i32
  }
  func.func @transform_4(%arg0: i32) -> (i32, i32) {
    %c0_i32 = arith.constant 0 : i32
    %c0_i32_0 = arith.constant 0 : i32
    %c0_i32_1 = arith.constant 0 : i32
    return %c0_i32, %c0_i32_0 : i32, i32
  }
  func.func @transform_5(%arg0: i32) -> (i32, i32) {
    %c0_i32 = arith.constant 0 : i32
    %c0_i32_0 = arith.constant 0 : i32
    %c0_i32_1 = arith.constant 0 : i32
    return %c0_i32, %c0_i32_0 : i32, i32
  }
}

module attributes {stable_mosaic.version = 11 : i64} {
  func.func @kernel(%arg0: i32, %arg1: memref<64x128xbf16, #tpu.memory_space<vmem>>, %arg2: memref<8x128xf32, #tpu.memory_space<vmem>>, %arg3: memref<8x128xf32, #tpu.memory_space<vmem>>, %arg4: memref<128x768xbf16, #tpu.memory_space<vmem>>, %arg5: memref<1x768xf32, #tpu.memory_space<vmem>>, %arg6: memref<128x384xbf16, #tpu.memory_space<vmem>>, %arg7: memref<1x384xf32, #tpu.memory_space<vmem>>, %arg8: memref<128x384xbf16, #tpu.memory_space<vmem>>, %arg9: memref<1x384xf32, #tpu.memory_space<vmem>>, %arg10: memref<64x256xf32, #tpu.memory_space<vmem>>, %arg11: memref<64x768xf32, #tpu.memory_space<vmem>>) attributes {dimension_semantics = [#tpu.dimension_semantics<arbitrary>], iteration_bounds = array<i64: 1>, scalar_prefetch = 0 : i64, scratch_operands = 1 : i64, tpu.core_type = #tpu.core_type<tc>, window_params = [{pipeline_mode = #tpu.pipeline_mode<synchronous>, transform_indices = @transform_0, window_bounds = array<i64: 64, 128>}, {pipeline_mode = #tpu.pipeline_mode<synchronous>, transform_indices = @transform_1, window_bounds = array<i64: 8, 128>}, {pipeline_mode = #tpu.pipeline_mode<synchronous>, transform_indices = @transform_2, window_bounds = array<i64: 8, 128>}, {pipeline_mode = #tpu.pipeline_mode<synchronous>, transform_indices = @transform_3, window_bounds = array<i64: 128, 768>}, {pipeline_mode = #tpu.pipeline_mode<synchronous>, transform_indices = @transform_4, window_bounds = array<i64: 1, 768>}, {pipeline_mode = #tpu.pipeline_mode<synchronous>, transform_indices = @transform_5, window_bounds = array<i64: 128, 384>}, {pipeline_mode = #tpu.pipeline_mode<synchronous>, transform_indices = @transform_6, window_bounds = array<i64: 1, 384>}, {pipeline_mode = #tpu.pipeline_mode<synchronous>, transform_indices = @transform_7, window_bounds = array<i64: 128, 384>}, {pipeline_mode = #tpu.pipeline_mode<synchronous>, transform_indices = @transform_8, window_bounds = array<i64: 1, 384>}, {pipeline_mode = #tpu.pipeline_mode<synchronous>, transform_indices = @transform_9, window_bounds = array<i64: 64, 256>}]} {
    %c0 = arith.constant 0 : index
    %c0_0 = arith.constant 0 : index
    %0 = vector.load %arg1[%c0, %c0_0] : memref<64x128xbf16, #tpu.memory_space<vmem>>, vector<64x128xbf16>
    %c0_1 = arith.constant 0 : index
    %c0_2 = arith.constant 0 : index
    %1 = vector.load %arg4[%c0_1, %c0_2] : memref<128x768xbf16, #tpu.memory_space<vmem>>, vector<128x768xbf16>
    %cst = arith.constant dense<0.000000e+00> : vector<64x768xf32>
    %2 = tpu.matmul %0, %1, %cst {dimension_numbers = #tpu.dot_dimension_numbers<[1], [0], [0], [1], [0, 0, 1, 1], [], []>} : vector<64x128xbf16>, vector<128x768xbf16>, vector<64x768xf32> -> vector<64x768xf32>
    %c0_3 = arith.constant 0 : index
    %c0_4 = arith.constant 0 : index
    %3 = vector.load %arg5[%c0_3, %c0_4] : memref<1x768xf32, #tpu.memory_space<vmem>>, vector<1x768xf32>
    %4 = vector.broadcast %3 : vector<1x768xf32> to vector<64x768xf32>
    %5 = arith.addf %2, %4 : vector<64x768xf32>
    %c0_5 = arith.constant 0 : index
    %c0_6 = arith.constant 0 : index
    %6 = vector.load %arg11[%c0_5, %c0_6] : memref<64x768xf32, #tpu.memory_space<vmem>>, vector<64x768xf32>
    tpu.vector_store %arg11[%c0_5, %c0_6], %5 {strides = array<i32>} : memref<64x768xf32, #tpu.memory_space<vmem>>, vector<64x768xf32>,
    %c0_7 = arith.constant 0 : index
    %c0_8 = arith.constant 0 : index
    %7 = vector.load %arg6[%c0_7, %c0_8] : memref<128x384xbf16, #tpu.memory_space<vmem>>, vector<128x384xbf16>
    %c0_9 = arith.constant 0 : index
    %c0_10 = arith.constant 0 : index
    %8 = vector.load %arg8[%c0_9, %c0_10] : memref<128x384xbf16, #tpu.memory_space<vmem>>, vector<128x384xbf16>
    %c0_11 = arith.constant 0 : index
    %c0_12 = arith.constant 0 : index
    %9 = vector.load %arg7[%c0_11, %c0_12] : memref<1x384xf32, #tpu.memory_space<vmem>>, vector<1x384xf32>
    %c0_13 = arith.constant 0 : index
    %c0_14 = arith.constant 0 : index
    %10 = vector.load %arg9[%c0_13, %c0_14] : memref<1x384xf32, #tpu.memory_space<vmem>>, vector<1x384xf32>
    %c0_15 = arith.constant 0 : index
    %c0_16 = arith.constant 0 : index
    %11 = vector.load %arg2[%c0_15, %c0_16] : memref<8x128xf32, #tpu.memory_space<vmem>>, vector<8x128xf32>
    %c0_17 = arith.constant 0 : index
    %c0_18 = arith.constant 0 : index
    %12 = vector.load %arg3[%c0_17, %c0_18] : memref<8x128xf32, #tpu.memory_space<vmem>>, vector<8x128xf32>
    %c0_i32 = arith.constant 0 : i32
    %13 = arith.truncf %11 : vector<8x128xf32> to vector<8x128xbf16>
    %cst_19 = arith.constant dense<0.000000e+00> : vector<8x384xf32>
    %14 = tpu.matmul %13, %7, %cst_19 {dimension_numbers = #tpu.dot_dimension_numbers<[1], [0], [0], [1], [0, 0, 1, 1], [], []>} : vector<8x128xbf16>, vector<128x384xbf16>, vector<8x384xf32> -> vector<8x384xf32>
    %15 = vector.broadcast %9 : vector<1x384xf32> to vector<8x384xf32>
    %16 = arith.addf %14, %15 : vector<8x384xf32>
    %17 = arith.truncf %12 : vector<8x128xf32> to vector<8x128xbf16>
    %cst_20 = arith.constant dense<0.000000e+00> : vector<8x384xf32>
    %18 = tpu.matmul %17, %8, %cst_20 {dimension_numbers = #tpu.dot_dimension_numbers<[1], [0], [0], [1], [0, 0, 1, 1], [], []>} : vector<8x128xbf16>, vector<128x384xbf16>, vector<8x384xf32> -> vector<8x384xf32>
    %19 = vector.broadcast %10 : vector<1x384xf32> to vector<8x384xf32>
    %20 = arith.addf %18, %19 : vector<8x384xf32>
    %c8_i32 = arith.constant 8 : i32
    %21 = arith.muli %c0_i32, %c8_i32 : i32
    %22 = tpu.assume_multiple %21, 8 : i32
    %c7_i32 = arith.constant 7 : i32
    %23 = arith.subi %c7_i32, %c0_i32 : i32
    %c8_i32_21 = arith.constant 8 : i32
    %24 = arith.muli %23, %c8_i32_21 : i32
    %25 = tpu.assume_multiple %24, 8 : i32
    %26 = arith.index_cast %22 : i32 to index
    %c0_22 = arith.constant 0 : index
    %27 = vector.load %arg11[%26, %c0_22] : memref<64x768xf32, #tpu.memory_space<vmem>>, vector<8x384xf32>
    %28 = arith.index_cast %25 : i32 to index
    %c384 = arith.constant 384 : index
    %29 = vector.load %arg11[%28, %c384] : memref<64x768xf32, #tpu.memory_space<vmem>>, vector<8x384xf32>
    %30 = vector.extract_strided_slice %27 {offsets = [0, 0], sizes = [8, 128], strides = [1, 1]} : vector<8x384xf32> to vector<8x128xf32>
    %31 = vector.extract_strided_slice %16 {offsets = [0, 0], sizes = [8, 128], strides = [1, 1]} : vector<8x384xf32> to vector<8x128xf32>
    %32 = arith.addf %30, %31 : vector<8x128xf32>
    %33 = arith.negf %32 : vector<8x128xf32>
    %34 = math.exp %33 : vector<8x128xf32>
    %cst_23 = arith.constant 1.000000e+00 : f32
    %35 = vector.broadcast %cst_23 : f32 to vector<8x128xf32>
    %36 = arith.addf %35, %34 : vector<8x128xf32>
    %37 = arith.divf %35, %36 : vector<8x128xf32>
    %38 = vector.extract_strided_slice %27 {offsets = [0, 128], sizes = [8, 128], strides = [1, 1]} : vector<8x384xf32> to vector<8x128xf32>
    %39 = vector.extract_strided_slice %16 {offsets = [0, 128], sizes = [8, 128], strides = [1, 1]} : vector<8x384xf32> to vector<8x128xf32>
    %40 = arith.addf %38, %39 : vector<8x128xf32>
    %41 = arith.negf %40 : vector<8x128xf32>
    %42 = math.exp %41 : vector<8x128xf32>
    %cst_24 = arith.constant 1.000000e+00 : f32
    %43 = vector.broadcast %cst_24 : f32 to vector<8x128xf32>
    %44 = arith.addf %43, %42 : vector<8x128xf32>
    %45 = arith.divf %43, %44 : vector<8x128xf32>
    %46 = vector.extract_strided_slice %27 {offsets = [0, 256], sizes = [8, 128], strides = [1, 1]} : vector<8x384xf32> to vector<8x128xf32>
    %47 = vector.extract_strided_slice %16 {offsets = [0, 256], sizes = [8, 128], strides = [1, 1]} : vector<8x384xf32> to vector<8x128xf32>
    %48 = arith.mulf %37, %47 : vector<8x128xf32>
    %49 = arith.addf %46, %48 : vector<8x128xf32>
    %50 = math.tanh %49 : vector<8x128xf32>
    %cst_25 = arith.constant 1.000000e+00 : f32
    %51 = vector.broadcast %cst_25 : f32 to vector<8x128xf32>
    %52 = arith.subf %51, %45 : vector<8x128xf32>
    %53 = arith.mulf %52, %50 : vector<8x128xf32>
    %54 = arith.mulf %45, %11 : vector<8x128xf32>
    %55 = arith.addf %53, %54 : vector<8x128xf32>
    %56 = vector.extract_strided_slice %29 {offsets = [0, 0], sizes = [8, 128], strides = [1, 1]} : vector<8x384xf32> to vector<8x128xf32>
    %57 = vector.extract_strided_slice %20 {offsets = [0, 0], sizes = [8, 128], strides = [1, 1]} : vector<8x384xf32> to vector<8x128xf32>
    %58 = arith.addf %56, %57 : vector<8x128xf32>
    %59 = arith.negf %58 : vector<8x128xf32>
    %60 = math.exp %59 : vector<8x128xf32>
    %cst_26 = arith.constant 1.000000e+00 : f32
    %61 = vector.broadcast %cst_26 : f32 to vector<8x128xf32>
    %62 = arith.addf %61, %60 : vector<8x128xf32>
    %63 = arith.divf %61, %62 : vector<8x128xf32>
    %64 = vector.extract_strided_slice %29 {offsets = [0, 128], sizes = [8, 128], strides = [1, 1]} : vector<8x384xf32> to vector<8x128xf32>
    %65 = vector.extract_strided_slice %20 {offsets = [0, 128], sizes = [8, 128], strides = [1, 1]} : vector<8x384xf32> to vector<8x128xf32>
    %66 = arith.addf %64, %65 : vector<8x128xf32>
    %67 = arith.negf %66 : vector<8x128xf32>
    %68 = math.exp %67 : vector<8x128xf32>
    %cst_27 = arith.constant 1.000000e+00 : f32
    %69 = vector.broadcast %cst_27 : f32 to vector<8x128xf32>
    %70 = arith.addf %69, %68 : vector<8x128xf32>
    %71 = arith.divf %69, %70 : vector<8x128xf32>
    %72 = vector.extract_strided_slice %29 {offsets = [0, 256], sizes = [8, 128], strides = [1, 1]} : vector<8x384xf32> to vector<8x128xf32>
    %73 = vector.extract_strided_slice %20 {offsets = [0, 256], sizes = [8, 128], strides = [1, 1]} : vector<8x384xf32> to vector<8x128xf32>
    %74 = arith.mulf %63, %73 : vector<8x128xf32>
    %75 = arith.addf %72, %74 : vector<8x128xf32>
    %76 = math.tanh %75 : vector<8x128xf32>
    %cst_28 = arith.constant 1.000000e+00 : f32
    %77 = vector.broadcast %cst_28 : f32 to vector<8x128xf32>
    %78 = arith.subf %77, %71 : vector<8x128xf32>
    %79 = arith.mulf %78, %76 : vector<8x128xf32>
    %80 = arith.mulf %71, %12 : vector<8x128xf32>
    %81 = arith.addf %79, %80 : vector<8x128xf32>
    %82 = arith.index_cast %22 : i32 to index
    %c0_29 = arith.constant 0 : index
    %83 = vector.load %arg10[%82, %c0_29] : memref<64x256xf32, #tpu.memory_space<vmem>>, vector<8x128xf32>
    tpu.vector_store %arg10[%82, %c0_29], %55 {strides = array<i32>} : memref<64x256xf32, #tpu.memory_space<vmem>>, vector<8x128xf32>,
    %84 = arith.index_cast %25 : i32 to index
    %c128 = arith.constant 128 : index
    %85 = vector.load %arg10[%84, %c128] : memref<64x256xf32, #tpu.memory_space<vmem>>, vector<8x128xf32>
    tpu.vector_store %arg10[%84, %c128], %81 {strides = array<i32>} : memref<64x256xf32, #tpu.memory_space<vmem>>, vector<8x128xf32>,
    %c1_i32 = arith.constant 1 : i32
    %86 = arith.truncf %55 : vector<8x128xf32> to vector<8x128xbf16>
    %cst_30 = arith.constant dense<0.000000e+00> : vector<8x384xf32>
    %87 = tpu.matmul %86, %7, %cst_30 {dimension_numbers = #tpu.dot_dimension_numbers<[1], [0], [0], [1], [0, 0, 1, 1], [], []>} : vector<8x128xbf16>, vector<128x384xbf16>, vector<8x384xf32> -> vector<8x384xf32>
    %88 = vector.broadcast %9 : vector<1x384xf32> to vector<8x384xf32>
    %89 = arith.addf %87, %88 : vector<8x384xf32>
    %90 = arith.truncf %81 : vector<8x128xf32> to vector<8x128xbf16>
    %cst_31 = arith.constant dense<0.000000e+00> : vector<8x384xf32>
    %91 = tpu.matmul %90, %8, %cst_31 {dimension_numbers = #tpu.dot_dimension_numbers<[1], [0], [0], [1], [0, 0, 1, 1], [], []>} : vector<8x128xbf16>, vector<128x384xbf16>, vector<8x384xf32> -> vector<8x384xf32>
    %92 = vector.broadcast %10 : vector<1x384xf32> to vector<8x384xf32>
    %93 = arith.addf %91, %92 : vector<8x384xf32>
    %c8_i32_32 = arith.constant 8 : i32
    %94 = arith.muli %c1_i32, %c8_i32_32 : i32
    %95 = tpu.assume_multiple %94, 8 : i32
    %c7_i32_33 = arith.constant 7 : i32
    %96 = arith.subi %c7_i32_33, %c1_i32 : i32
    %c8_i32_34 = arith.constant 8 : i32
    %97 = arith.muli %96, %c8_i32_34 : i32
    %98 = tpu.assume_multiple %97, 8 : i32
    %99 = arith.index_cast %95 : i32 to index
    %c0_35 = arith.constant 0 : index
    %100 = vector.load %arg11[%99, %c0_35] : memref<64x768xf32, #tpu.memory_space<vmem>>, vector<8x384xf32>
    %101 = arith.index_cast %98 : i32 to index
    %c384_36 = arith.constant 384 : index
    %102 = vector.load %arg11[%101, %c384_36] : memref<64x768xf32, #tpu.memory_space<vmem>>, vector<8x384xf32>
    %103 = vector.extract_strided_slice %100 {offsets = [0, 0], sizes = [8, 128], strides = [1, 1]} : vector<8x384xf32> to vector<8x128xf32>
    %104 = vector.extract_strided_slice %89 {offsets = [0, 0], sizes = [8, 128], strides = [1, 1]} : vector<8x384xf32> to vector<8x128xf32>
    %105 = arith.addf %103, %104 : vector<8x128xf32>
    %106 = arith.negf %105 : vector<8x128xf32>
    %107 = math.exp %106 : vector<8x128xf32>
    %cst_37 = arith.constant 1.000000e+00 : f32
    %108 = vector.broadcast %cst_37 : f32 to vector<8x128xf32>
    %109 = arith.addf %108, %107 : vector<8x128xf32>
    %110 = arith.divf %108, %109 : vector<8x128xf32>
    %111 = vector.extract_strided_slice %100 {offsets = [0, 128], sizes = [8, 128], strides = [1, 1]} : vector<8x384xf32> to vector<8x128xf32>
    %112 = vector.extract_strided_slice %89 {offsets = [0, 128], sizes = [8, 128], strides = [1, 1]} : vector<8x384xf32> to vector<8x128xf32>
    %113 = arith.addf %111, %112 : vector<8x128xf32>
    %114 = arith.negf %113 : vector<8x128xf32>
    %115 = math.exp %114 : vector<8x128xf32>
    %cst_38 = arith.constant 1.000000e+00 : f32
    %116 = vector.broadcast %cst_38 : f32 to vector<8x128xf32>
    %117 = arith.addf %116, %115 : vector<8x128xf32>
    %118 = arith.divf %116, %117 : vector<8x128xf32>
    %119 = vector.extract_strided_slice %100 {offsets = [0, 256], sizes = [8, 128], strides = [1, 1]} : vector<8x384xf32> to vector<8x128xf32>
    %120 = vector.extract_strided_slice %89 {offsets = [0, 256], sizes = [8, 128], strides = [1, 1]} : vector<8x384xf32> to vector<8x128xf32>
    %121 = arith.mulf %110, %120 : vector<8x128xf32>
    %122 = arith.addf %119, %121 : vector<8x128xf32>
    %123 = math.tanh %122 : vector<8x128xf32>
    %cst_39 = arith.constant 1.000000e+00 : f32
    %124 = vector.broadcast %cst_39 : f32 to vector<8x128xf32>
    %125 = arith.subf %124, %118 : vector<8x128xf32>
    %126 = arith.mulf %125, %123 : vector<8x128xf32>
    %127 = arith.mulf %118, %55 : vector<8x128xf32>
    %128 = arith.addf %126, %127 : vector<8x128xf32>
    %129 = vector.extract_strided_slice %102 {offsets = [0, 0], sizes = [8, 128], strides = [1, 1]} : vector<8x384xf32> to vector<8x128xf32>
    %130 = vector.extract_strided_slice %93 {offsets = [0, 0], sizes = [8, 128], strides = [1, 1]} : vector<8x384xf32> to vector<8x128xf32>
    %131 = arith.addf %129, %130 : vector<8x128xf32>
    %132 = arith.negf %131 : vector<8x128xf32>
    %133 = math.exp %132 : vector<8x128xf32>
    %cst_40 = arith.constant 1.000000e+00 : f32
    %134 = vector.broadcast %cst_40 : f32 to vector<8x128xf32>
    %135 = arith.addf %134, %133 : vector<8x128xf32>
    %136 = arith.divf %134, %135 : vector<8x128xf32>
    %137 = vector.extract_strided_slice %102 {offsets = [0, 128], sizes = [8, 128], strides = [1, 1]} : vector<8x384xf32> to vector<8x128xf32>
    %138 = vector.extract_strided_slice %93 {offsets = [0, 128], sizes = [8, 128], strides = [1, 1]} : vector<8x384xf32> to vector<8x128xf32>
    %139 = arith.addf %137, %138 : vector<8x128xf32>
    %140 = arith.negf %139 : vector<8x128xf32>
    %141 = math.exp %140 : vector<8x128xf32>
    %cst_41 = arith.constant 1.000000e+00 : f32
    %142 = vector.broadcast %cst_41 : f32 to vector<8x128xf32>
    %143 = arith.addf %142, %141 : vector<8x128xf32>
    %144 = arith.divf %142, %143 : vector<8x128xf32>
    %145 = vector.extract_strided_slice %102 {offsets = [0, 256], sizes = [8, 128], strides = [1, 1]} : vector<8x384xf32> to vector<8x128xf32>
    %146 = vector.extract_strided_slice %93 {offsets = [0, 256], sizes = [8, 128], strides = [1, 1]} : vector<8x384xf32> to vector<8x128xf32>
    %147 = arith.mulf %136, %146 : vector<8x128xf32>
    %148 = arith.addf %145, %147 : vector<8x128xf32>
    %149 = math.tanh %148 : vector<8x128xf32>
    %cst_42 = arith.constant 1.000000e+00 : f32
    %150 = vector.broadcast %cst_42 : f32 to vector<8x128xf32>
    %151 = arith.subf %150, %144 : vector<8x128xf32>
    %152 = arith.mulf %151, %149 : vector<8x128xf32>
    %153 = arith.mulf %144, %81 : vector<8x128xf32>
    %154 = arith.addf %152, %153 : vector<8x128xf32>
    %155 = arith.index_cast %95 : i32 to index
    %c0_43 = arith.constant 0 : index
    %156 = vector.load %arg10[%155, %c0_43] : memref<64x256xf32, #tpu.memory_space<vmem>>, vector<8x128xf32>
    tpu.vector_store %arg10[%155, %c0_43], %128 {strides = array<i32>} : memref<64x256xf32, #tpu.memory_space<vmem>>, vector<8x128xf32>,
    %157 = arith.index_cast %98 : i32 to index
    %c128_44 = arith.constant 128 : index
    %158 = vector.load %arg10[%157, %c128_44] : memref<64x256xf32, #tpu.memory_space<vmem>>, vector<8x128xf32>
    tpu.vector_store %arg10[%157, %c128_44], %154 {strides = array<i32>} : memref<64x256xf32, #tpu.memory_space<vmem>>, vector<8x128xf32>,
    %c2_i32 = arith.constant 2 : i32
    %159 = arith.truncf %128 : vector<8x128xf32> to vector<8x128xbf16>
    %cst_45 = arith.constant dense<0.000000e+00> : vector<8x384xf32>
    %160 = tpu.matmul %159, %7, %cst_45 {dimension_numbers = #tpu.dot_dimension_numbers<[1], [0], [0], [1], [0, 0, 1, 1], [], []>} : vector<8x128xbf16>, vector<128x384xbf16>, vector<8x384xf32> -> vector<8x384xf32>
    %161 = vector.broadcast %9 : vector<1x384xf32> to vector<8x384xf32>
    %162 = arith.addf %160, %161 : vector<8x384xf32>
    %163 = arith.truncf %154 : vector<8x128xf32> to vector<8x128xbf16>
    %cst_46 = arith.constant dense<0.000000e+00> : vector<8x384xf32>
    %164 = tpu.matmul %163, %8, %cst_46 {dimension_numbers = #tpu.dot_dimension_numbers<[1], [0], [0], [1], [0, 0, 1, 1], [], []>} : vector<8x128xbf16>, vector<128x384xbf16>, vector<8x384xf32> -> vector<8x384xf32>
    %165 = vector.broadcast %10 : vector<1x384xf32> to vector<8x384xf32>
    %166 = arith.addf %164, %165 : vector<8x384xf32>
    %c8_i32_47 = arith.constant 8 : i32
    %167 = arith.muli %c2_i32, %c8_i32_47 : i32
    %168 = tpu.assume_multiple %167, 8 : i32
    %c7_i32_48 = arith.constant 7 : i32
    %169 = arith.subi %c7_i32_48, %c2_i32 : i32
    %c8_i32_49 = arith.constant 8 : i32
    %170 = arith.muli %169, %c8_i32_49 : i32
    %171 = tpu.assume_multiple %170, 8 : i32
    %172 = arith.index_cast %168 : i32 to index
    %c0_50 = arith.constant 0 : index
    %173 = vector.load %arg11[%172, %c0_50] : memref<64x768xf32, #tpu.memory_space<vmem>>, vector<8x384xf32>
    %174 = arith.index_cast %171 : i32 to index
    %c384_51 = arith.constant 384 : index
    %175 = vector.load %arg11[%174, %c384_51] : memref<64x768xf32, #tpu.memory_space<vmem>>, vector<8x384xf32>
    %176 = vector.extract_strided_slice %173 {offsets = [0, 0], sizes = [8, 128], strides = [1, 1]} : vector<8x384xf32> to vector<8x128xf32>
    %177 = vector.extract_strided_slice %162 {offsets = [0, 0], sizes = [8, 128], strides = [1, 1]} : vector<8x384xf32> to vector<8x128xf32>
    %178 = arith.addf %176, %177 : vector<8x128xf32>
    %179 = arith.negf %178 : vector<8x128xf32>
    %180 = math.exp %179 : vector<8x128xf32>
    %cst_52 = arith.constant 1.000000e+00 : f32
    %181 = vector.broadcast %cst_52 : f32 to vector<8x128xf32>
    %182 = arith.addf %181, %180 : vector<8x128xf32>
    %183 = arith.divf %181, %182 : vector<8x128xf32>
    %184 = vector.extract_strided_slice %173 {offsets = [0, 128], sizes = [8, 128], strides = [1, 1]} : vector<8x384xf32> to vector<8x128xf32>
    %185 = vector.extract_strided_slice %162 {offsets = [0, 128], sizes = [8, 128], strides = [1, 1]} : vector<8x384xf32> to vector<8x128xf32>
    %186 = arith.addf %184, %185 : vector<8x128xf32>
    %187 = arith.negf %186 : vector<8x128xf32>
    %188 = math.exp %187 : vector<8x128xf32>
    %cst_53 = arith.constant 1.000000e+00 : f32
    %189 = vector.broadcast %cst_53 : f32 to vector<8x128xf32>
    %190 = arith.addf %189, %188 : vector<8x128xf32>
    %191 = arith.divf %189, %190 : vector<8x128xf32>
    %192 = vector.extract_strided_slice %173 {offsets = [0, 256], sizes = [8, 128], strides = [1, 1]} : vector<8x384xf32> to vector<8x128xf32>
    %193 = vector.extract_strided_slice %162 {offsets = [0, 256], sizes = [8, 128], strides = [1, 1]} : vector<8x384xf32> to vector<8x128xf32>
    %194 = arith.mulf %183, %193 : vector<8x128xf32>
    %195 = arith.addf %192, %194 : vector<8x128xf32>
    %196 = math.tanh %195 : vector<8x128xf32>
    %cst_54 = arith.constant 1.000000e+00 : f32
    %197 = vector.broadcast %cst_54 : f32 to vector<8x128xf32>
    %198 = arith.subf %197, %191 : vector<8x128xf32>
    %199 = arith.mulf %198, %196 : vector<8x128xf32>
    %200 = arith.mulf %191, %128 : vector<8x128xf32>
    %201 = arith.addf %199, %200 : vector<8x128xf32>
    %202 = vector.extract_strided_slice %175 {offsets = [0, 0], sizes = [8, 128], strides = [1, 1]} : vector<8x384xf32> to vector<8x128xf32>
    %203 = vector.extract_strided_slice %166 {offsets = [0, 0], sizes = [8, 128], strides = [1, 1]} : vector<8x384xf32> to vector<8x128xf32>
    %204 = arith.addf %202, %203 : vector<8x128xf32>
    %205 = arith.negf %204 : vector<8x128xf32>
    %206 = math.exp %205 : vector<8x128xf32>
    %cst_55 = arith.constant 1.000000e+00 : f32
    %207 = vector.broadcast %cst_55 : f32 to vector<8x128xf32>
    %208 = arith.addf %207, %206 : vector<8x128xf32>
    %209 = arith.divf %207, %208 : vector<8x128xf32>
    %210 = vector.extract_strided_slice %175 {offsets = [0, 128], sizes = [8, 128], strides = [1, 1]} : vector<8x384xf32> to vector<8x128xf32>
    %211 = vector.extract_strided_slice %166 {offsets = [0, 128], sizes = [8, 128], strides = [1, 1]} : vector<8x384xf32> to vector<8x128xf32>
    %212 = arith.addf %210, %211 : vector<8x128xf32>
    %213 = arith.negf %212 : vector<8x128xf32>
    %214 = math.exp %213 : vector<8x128xf32>
    %cst_56 = arith.constant 1.000000e+00 : f32
    %215 = vector.broadcast %cst_56 : f32 to vector<8x128xf32>
    %216 = arith.addf %215, %214 : vector<8x128xf32>
    %217 = arith.divf %215, %216 : vector<8x128xf32>
    %218 = vector.extract_strided_slice %175 {offsets = [0, 256], sizes = [8, 128], strides = [1, 1]} : vector<8x384xf32> to vector<8x128xf32>
    %219 = vector.extract_strided_slice %166 {offsets = [0, 256], sizes = [8, 128], strides = [1, 1]} : vector<8x384xf32> to vector<8x128xf32>
    %220 = arith.mulf %209, %219 : vector<8x128xf32>
    %221 = arith.addf %218, %220 : vector<8x128xf32>
    %222 = math.tanh %221 : vector<8x128xf32>
    %cst_57 = arith.constant 1.000000e+00 : f32
    %223 = vector.broadcast %cst_57 : f32 to vector<8x128xf32>
    %224 = arith.subf %223, %217 : vector<8x128xf32>
    %225 = arith.mulf %224, %222 : vector<8x128xf32>
    %226 = arith.mulf %217, %154 : vector<8x128xf32>
    %227 = arith.addf %225, %226 : vector<8x128xf32>
    %228 = arith.index_cast %168 : i32 to index
    %c0_58 = arith.constant 0 : index
    %229 = vector.load %arg10[%228, %c0_58] : memref<64x256xf32, #tpu.memory_space<vmem>>, vector<8x128xf32>
    tpu.vector_store %arg10[%228, %c0_58], %201 {strides = array<i32>} : memref<64x256xf32, #tpu.memory_space<vmem>>, vector<8x128xf32>,
    %230 = arith.index_cast %171 : i32 to index
    %c128_59 = arith.constant 128 : index
    %231 = vector.load %arg10[%230, %c128_59] : memref<64x256xf32, #tpu.memory_space<vmem>>, vector<8x128xf32>
    tpu.vector_store %arg10[%230, %c128_59], %227 {strides = array<i32>} : memref<64x256xf32, #tpu.memory_space<vmem>>, vector<8x128xf32>,
    %c3_i32 = arith.constant 3 : i32
    %232 = arith.truncf %201 : vector<8x128xf32> to vector<8x128xbf16>
    %cst_60 = arith.constant dense<0.000000e+00> : vector<8x384xf32>
    %233 = tpu.matmul %232, %7, %cst_60 {dimension_numbers = #tpu.dot_dimension_numbers<[1], [0], [0], [1], [0, 0, 1, 1], [], []>} : vector<8x128xbf16>, vector<128x384xbf16>, vector<8x384xf32> -> vector<8x384xf32>
    %234 = vector.broadcast %9 : vector<1x384xf32> to vector<8x384xf32>
    %235 = arith.addf %233, %234 : vector<8x384xf32>
    %236 = arith.truncf %227 : vector<8x128xf32> to vector<8x128xbf16>
    %cst_61 = arith.constant dense<0.000000e+00> : vector<8x384xf32>
    %237 = tpu.matmul %236, %8, %cst_61 {dimension_numbers = #tpu.dot_dimension_numbers<[1], [0], [0], [1], [0, 0, 1, 1], [], []>} : vector<8x128xbf16>, vector<128x384xbf16>, vector<8x384xf32> -> vector<8x384xf32>
    %238 = vector.broadcast %10 : vector<1x384xf32> to vector<8x384xf32>
    %239 = arith.addf %237, %238 : vector<8x384xf32>
    %c8_i32_62 = arith.constant 8 : i32
    %240 = arith.muli %c3_i32, %c8_i32_62 : i32
    %241 = tpu.assume_multiple %240, 8 : i32
    %c7_i32_63 = arith.constant 7 : i32
    %242 = arith.subi %c7_i32_63, %c3_i32 : i32
    %c8_i32_64 = arith.constant 8 : i32
    %243 = arith.muli %242, %c8_i32_64 : i32
    %244 = tpu.assume_multiple %243, 8 : i32
    %245 = arith.index_cast %241 : i32 to index
    %c0_65 = arith.constant 0 : index
    %246 = vector.load %arg11[%245, %c0_65] : memref<64x768xf32, #tpu.memory_space<vmem>>, vector<8x384xf32>
    %247 = arith.index_cast %244 : i32 to index
    %c384_66 = arith.constant 384 : index
    %248 = vector.load %arg11[%247, %c384_66] : memref<64x768xf32, #tpu.memory_space<vmem>>, vector<8x384xf32>
    %249 = vector.extract_strided_slice %246 {offsets = [0, 0], sizes = [8, 128], strides = [1, 1]} : vector<8x384xf32> to vector<8x128xf32>
    %250 = vector.extract_strided_slice %235 {offsets = [0, 0], sizes = [8, 128], strides = [1, 1]} : vector<8x384xf32> to vector<8x128xf32>
    %251 = arith.addf %249, %250 : vector<8x128xf32>
    %252 = arith.negf %251 : vector<8x128xf32>
    %253 = math.exp %252 : vector<8x128xf32>
    %cst_67 = arith.constant 1.000000e+00 : f32
    %254 = vector.broadcast %cst_67 : f32 to vector<8x128xf32>
    %255 = arith.addf %254, %253 : vector<8x128xf32>
    %256 = arith.divf %254, %255 : vector<8x128xf32>
    %257 = vector.extract_strided_slice %246 {offsets = [0, 128], sizes = [8, 128], strides = [1, 1]} : vector<8x384xf32> to vector<8x128xf32>
    %258 = vector.extract_strided_slice %235 {offsets = [0, 128], sizes = [8, 128], strides = [1, 1]} : vector<8x384xf32> to vector<8x128xf32>
    %259 = arith.addf %257, %258 : vector<8x128xf32>
    %260 = arith.negf %259 : vector<8x128xf32>
    %261 = math.exp %260 : vector<8x128xf32>
    %cst_68 = arith.constant 1.000000e+00 : f32
    %262 = vector.broadcast %cst_68 : f32 to vector<8x128xf32>
    %263 = arith.addf %262, %261 : vector<8x128xf32>
    %264 = arith.divf %262, %263 : vector<8x128xf32>
    %265 = vector.extract_strided_slice %246 {offsets = [0, 256], sizes = [8, 128], strides = [1, 1]} : vector<8x384xf32> to vector<8x128xf32>
    %266 = vector.extract_strided_slice %235 {offsets = [0, 256], sizes = [8, 128], strides = [1, 1]} : vector<8x384xf32> to vector<8x128xf32>
    %267 = arith.mulf %256, %266 : vector<8x128xf32>
    %268 = arith.addf %265, %267 : vector<8x128xf32>
    %269 = math.tanh %268 : vector<8x128xf32>
    %cst_69 = arith.constant 1.000000e+00 : f32
    %270 = vector.broadcast %cst_69 : f32 to vector<8x128xf32>
    %271 = arith.subf %270, %264 : vector<8x128xf32>
    %272 = arith.mulf %271, %269 : vector<8x128xf32>
    %273 = arith.mulf %264, %201 : vector<8x128xf32>
    %274 = arith.addf %272, %273 : vector<8x128xf32>
    %275 = vector.extract_strided_slice %248 {offsets = [0, 0], sizes = [8, 128], strides = [1, 1]} : vector<8x384xf32> to vector<8x128xf32>
    %276 = vector.extract_strided_slice %239 {offsets = [0, 0], sizes = [8, 128], strides = [1, 1]} : vector<8x384xf32> to vector<8x128xf32>
    %277 = arith.addf %275, %276 : vector<8x128xf32>
    %278 = arith.negf %277 : vector<8x128xf32>
    %279 = math.exp %278 : vector<8x128xf32>
    %cst_70 = arith.constant 1.000000e+00 : f32
    %280 = vector.broadcast %cst_70 : f32 to vector<8x128xf32>
    %281 = arith.addf %280, %279 : vector<8x128xf32>
    %282 = arith.divf %280, %281 : vector<8x128xf32>
    %283 = vector.extract_strided_slice %248 {offsets = [0, 128], sizes = [8, 128], strides = [1, 1]} : vector<8x384xf32> to vector<8x128xf32>
    %284 = vector.extract_strided_slice %239 {offsets = [0, 128], sizes = [8, 128], strides = [1, 1]} : vector<8x384xf32> to vector<8x128xf32>
    %285 = arith.addf %283, %284 : vector<8x128xf32>
    %286 = arith.negf %285 : vector<8x128xf32>
    %287 = math.exp %286 : vector<8x128xf32>
    %cst_71 = arith.constant 1.000000e+00 : f32
    %288 = vector.broadcast %cst_71 : f32 to vector<8x128xf32>
    %289 = arith.addf %288, %287 : vector<8x128xf32>
    %290 = arith.divf %288, %289 : vector<8x128xf32>
    %291 = vector.extract_strided_slice %248 {offsets = [0, 256], sizes = [8, 128], strides = [1, 1]} : vector<8x384xf32> to vector<8x128xf32>
    %292 = vector.extract_strided_slice %239 {offsets = [0, 256], sizes = [8, 128], strides = [1, 1]} : vector<8x384xf32> to vector<8x128xf32>
    %293 = arith.mulf %282, %292 : vector<8x128xf32>
    %294 = arith.addf %291, %293 : vector<8x128xf32>
    %295 = math.tanh %294 : vector<8x128xf32>
    %cst_72 = arith.constant 1.000000e+00 : f32
    %296 = vector.broadcast %cst_72 : f32 to vector<8x128xf32>
    %297 = arith.subf %296, %290 : vector<8x128xf32>
    %298 = arith.mulf %297, %295 : vector<8x128xf32>
    %299 = arith.mulf %290, %227 : vector<8x128xf32>
    %300 = arith.addf %298, %299 : vector<8x128xf32>
    %301 = arith.index_cast %241 : i32 to index
    %c0_73 = arith.constant 0 : index
    %302 = vector.load %arg10[%301, %c0_73] : memref<64x256xf32, #tpu.memory_space<vmem>>, vector<8x128xf32>
    tpu.vector_store %arg10[%301, %c0_73], %274 {strides = array<i32>} : memref<64x256xf32, #tpu.memory_space<vmem>>, vector<8x128xf32>,
    %303 = arith.index_cast %244 : i32 to index
    %c128_74 = arith.constant 128 : index
    %304 = vector.load %arg10[%303, %c128_74] : memref<64x256xf32, #tpu.memory_space<vmem>>, vector<8x128xf32>
    tpu.vector_store %arg10[%303, %c128_74], %300 {strides = array<i32>} : memref<64x256xf32, #tpu.memory_space<vmem>>, vector<8x128xf32>,
    %c4_i32 = arith.constant 4 : i32
    %305 = arith.truncf %274 : vector<8x128xf32> to vector<8x128xbf16>
    %cst_75 = arith.constant dense<0.000000e+00> : vector<8x384xf32>
    %306 = tpu.matmul %305, %7, %cst_75 {dimension_numbers = #tpu.dot_dimension_numbers<[1], [0], [0], [1], [0, 0, 1, 1], [], []>} : vector<8x128xbf16>, vector<128x384xbf16>, vector<8x384xf32> -> vector<8x384xf32>
    %307 = vector.broadcast %9 : vector<1x384xf32> to vector<8x384xf32>
    %308 = arith.addf %306, %307 : vector<8x384xf32>
    %309 = arith.truncf %300 : vector<8x128xf32> to vector<8x128xbf16>
    %cst_76 = arith.constant dense<0.000000e+00> : vector<8x384xf32>
    %310 = tpu.matmul %309, %8, %cst_76 {dimension_numbers = #tpu.dot_dimension_numbers<[1], [0], [0], [1], [0, 0, 1, 1], [], []>} : vector<8x128xbf16>, vector<128x384xbf16>, vector<8x384xf32> -> vector<8x384xf32>
    %311 = vector.broadcast %10 : vector<1x384xf32> to vector<8x384xf32>
    %312 = arith.addf %310, %311 : vector<8x384xf32>
    %c8_i32_77 = arith.constant 8 : i32
    %313 = arith.muli %c4_i32, %c8_i32_77 : i32
    %314 = tpu.assume_multiple %313, 8 : i32
    %c7_i32_78 = arith.constant 7 : i32
    %315 = arith.subi %c7_i32_78, %c4_i32 : i32
    %c8_i32_79 = arith.constant 8 : i32
    %316 = arith.muli %315, %c8_i32_79 : i32
    %317 = tpu.assume_multiple %316, 8 : i32
    %318 = arith.index_cast %314 : i32 to index
    %c0_80 = arith.constant 0 : index
    %319 = vector.load %arg11[%318, %c0_80] : memref<64x768xf32, #tpu.memory_space<vmem>>, vector<8x384xf32>
    %320 = arith.index_cast %317 : i32 to index
    %c384_81 = arith.constant 384 : index
    %321 = vector.load %arg11[%320, %c384_81] : memref<64x768xf32, #tpu.memory_space<vmem>>, vector<8x384xf32>
    %322 = vector.extract_strided_slice %319 {offsets = [0, 0], sizes = [8, 128], strides = [1, 1]} : vector<8x384xf32> to vector<8x128xf32>
    %323 = vector.extract_strided_slice %308 {offsets = [0, 0], sizes = [8, 128], strides = [1, 1]} : vector<8x384xf32> to vector<8x128xf32>
    %324 = arith.addf %322, %323 : vector<8x128xf32>
    %325 = arith.negf %324 : vector<8x128xf32>
    %326 = math.exp %325 : vector<8x128xf32>
    %cst_82 = arith.constant 1.000000e+00 : f32
    %327 = vector.broadcast %cst_82 : f32 to vector<8x128xf32>
    %328 = arith.addf %327, %326 : vector<8x128xf32>
    %329 = arith.divf %327, %328 : vector<8x128xf32>
    %330 = vector.extract_strided_slice %319 {offsets = [0, 128], sizes = [8, 128], strides = [1, 1]} : vector<8x384xf32> to vector<8x128xf32>
    %331 = vector.extract_strided_slice %308 {offsets = [0, 128], sizes = [8, 128], strides = [1, 1]} : vector<8x384xf32> to vector<8x128xf32>
    %332 = arith.addf %330, %331 : vector<8x128xf32>
    %333 = arith.negf %332 : vector<8x128xf32>
    %334 = math.exp %333 : vector<8x128xf32>
    %cst_83 = arith.constant 1.000000e+00 : f32
    %335 = vector.broadcast %cst_83 : f32 to vector<8x128xf32>
    %336 = arith.addf %335, %334 : vector<8x128xf32>
    %337 = arith.divf %335, %336 : vector<8x128xf32>
    %338 = vector.extract_strided_slice %319 {offsets = [0, 256], sizes = [8, 128], strides = [1, 1]} : vector<8x384xf32> to vector<8x128xf32>
    %339 = vector.extract_strided_slice %308 {offsets = [0, 256], sizes = [8, 128], strides = [1, 1]} : vector<8x384xf32> to vector<8x128xf32>
    %340 = arith.mulf %329, %339 : vector<8x128xf32>
    %341 = arith.addf %338, %340 : vector<8x128xf32>
    %342 = math.tanh %341 : vector<8x128xf32>
    %cst_84 = arith.constant 1.000000e+00 : f32
    %343 = vector.broadcast %cst_84 : f32 to vector<8x128xf32>
    %344 = arith.subf %343, %337 : vector<8x128xf32>
    %345 = arith.mulf %344, %342 : vector<8x128xf32>
    %346 = arith.mulf %337, %274 : vector<8x128xf32>
    %347 = arith.addf %345, %346 : vector<8x128xf32>
    %348 = vector.extract_strided_slice %321 {offsets = [0, 0], sizes = [8, 128], strides = [1, 1]} : vector<8x384xf32> to vector<8x128xf32>
    %349 = vector.extract_strided_slice %312 {offsets = [0, 0], sizes = [8, 128], strides = [1, 1]} : vector<8x384xf32> to vector<8x128xf32>
    %350 = arith.addf %348, %349 : vector<8x128xf32>
    %351 = arith.negf %350 : vector<8x128xf32>
    %352 = math.exp %351 : vector<8x128xf32>
    %cst_85 = arith.constant 1.000000e+00 : f32
    %353 = vector.broadcast %cst_85 : f32 to vector<8x128xf32>
    %354 = arith.addf %353, %352 : vector<8x128xf32>
    %355 = arith.divf %353, %354 : vector<8x128xf32>
    %356 = vector.extract_strided_slice %321 {offsets = [0, 128], sizes = [8, 128], strides = [1, 1]} : vector<8x384xf32> to vector<8x128xf32>
    %357 = vector.extract_strided_slice %312 {offsets = [0, 128], sizes = [8, 128], strides = [1, 1]} : vector<8x384xf32> to vector<8x128xf32>
    %358 = arith.addf %356, %357 : vector<8x128xf32>
    %359 = arith.negf %358 : vector<8x128xf32>
    %360 = math.exp %359 : vector<8x128xf32>
    %cst_86 = arith.constant 1.000000e+00 : f32
    %361 = vector.broadcast %cst_86 : f32 to vector<8x128xf32>
    %362 = arith.addf %361, %360 : vector<8x128xf32>
    %363 = arith.divf %361, %362 : vector<8x128xf32>
    %364 = vector.extract_strided_slice %321 {offsets = [0, 256], sizes = [8, 128], strides = [1, 1]} : vector<8x384xf32> to vector<8x128xf32>
    %365 = vector.extract_strided_slice %312 {offsets = [0, 256], sizes = [8, 128], strides = [1, 1]} : vector<8x384xf32> to vector<8x128xf32>
    %366 = arith.mulf %355, %365 : vector<8x128xf32>
    %367 = arith.addf %364, %366 : vector<8x128xf32>
    %368 = math.tanh %367 : vector<8x128xf32>
    %cst_87 = arith.constant 1.000000e+00 : f32
    %369 = vector.broadcast %cst_87 : f32 to vector<8x128xf32>
    %370 = arith.subf %369, %363 : vector<8x128xf32>
    %371 = arith.mulf %370, %368 : vector<8x128xf32>
    %372 = arith.mulf %363, %300 : vector<8x128xf32>
    %373 = arith.addf %371, %372 : vector<8x128xf32>
    %374 = arith.index_cast %314 : i32 to index
    %c0_88 = arith.constant 0 : index
    %375 = vector.load %arg10[%374, %c0_88] : memref<64x256xf32, #tpu.memory_space<vmem>>, vector<8x128xf32>
    tpu.vector_store %arg10[%374, %c0_88], %347 {strides = array<i32>} : memref<64x256xf32, #tpu.memory_space<vmem>>, vector<8x128xf32>,
    %376 = arith.index_cast %317 : i32 to index
    %c128_89 = arith.constant 128 : index
    %377 = vector.load %arg10[%376, %c128_89] : memref<64x256xf32, #tpu.memory_space<vmem>>, vector<8x128xf32>
    tpu.vector_store %arg10[%376, %c128_89], %373 {strides = array<i32>} : memref<64x256xf32, #tpu.memory_space<vmem>>, vector<8x128xf32>,
    %c5_i32 = arith.constant 5 : i32
    %378 = arith.truncf %347 : vector<8x128xf32> to vector<8x128xbf16>
    %cst_90 = arith.constant dense<0.000000e+00> : vector<8x384xf32>
    %379 = tpu.matmul %378, %7, %cst_90 {dimension_numbers = #tpu.dot_dimension_numbers<[1], [0], [0], [1], [0, 0, 1, 1], [], []>} : vector<8x128xbf16>, vector<128x384xbf16>, vector<8x384xf32> -> vector<8x384xf32>
    %380 = vector.broadcast %9 : vector<1x384xf32> to vector<8x384xf32>
    %381 = arith.addf %379, %380 : vector<8x384xf32>
    %382 = arith.truncf %373 : vector<8x128xf32> to vector<8x128xbf16>
    %cst_91 = arith.constant dense<0.000000e+00> : vector<8x384xf32>
    %383 = tpu.matmul %382, %8, %cst_91 {dimension_numbers = #tpu.dot_dimension_numbers<[1], [0], [0], [1], [0, 0, 1, 1], [], []>} : vector<8x128xbf16>, vector<128x384xbf16>, vector<8x384xf32> -> vector<8x384xf32>
    %384 = vector.broadcast %10 : vector<1x384xf32> to vector<8x384xf32>
    %385 = arith.addf %383, %384 : vector<8x384xf32>
    %c8_i32_92 = arith.constant 8 : i32
    %386 = arith.muli %c5_i32, %c8_i32_92 : i32
    %387 = tpu.assume_multiple %386, 8 : i32
    %c7_i32_93 = arith.constant 7 : i32
    %388 = arith.subi %c7_i32_93, %c5_i32 : i32
    %c8_i32_94 = arith.constant 8 : i32
    %389 = arith.muli %388, %c8_i32_94 : i32
    %390 = tpu.assume_multiple %389, 8 : i32
    %391 = arith.index_cast %387 : i32 to index
    %c0_95 = arith.constant 0 : index
    %392 = vector.load %arg11[%391, %c0_95] : memref<64x768xf32, #tpu.memory_space<vmem>>, vector<8x384xf32>
    %393 = arith.index_cast %390 : i32 to index
    %c384_96 = arith.constant 384 : index
    %394 = vector.load %arg11[%393, %c384_96] : memref<64x768xf32, #tpu.memory_space<vmem>>, vector<8x384xf32>
    %395 = vector.extract_strided_slice %392 {offsets = [0, 0], sizes = [8, 128], strides = [1, 1]} : vector<8x384xf32> to vector<8x128xf32>
    %396 = vector.extract_strided_slice %381 {offsets = [0, 0], sizes = [8, 128], strides = [1, 1]} : vector<8x384xf32> to vector<8x128xf32>
    %397 = arith.addf %395, %396 : vector<8x128xf32>
    %398 = arith.negf %397 : vector<8x128xf32>
    %399 = math.exp %398 : vector<8x128xf32>
    %cst_97 = arith.constant 1.000000e+00 : f32
    %400 = vector.broadcast %cst_97 : f32 to vector<8x128xf32>
    %401 = arith.addf %400, %399 : vector<8x128xf32>
    %402 = arith.divf %400, %401 : vector<8x128xf32>
    %403 = vector.extract_strided_slice %392 {offsets = [0, 128], sizes = [8, 128], strides = [1, 1]} : vector<8x384xf32> to vector<8x128xf32>
    %404 = vector.extract_strided_slice %381 {offsets = [0, 128], sizes = [8, 128], strides = [1, 1]} : vector<8x384xf32> to vector<8x128xf32>
    %405 = arith.addf %403, %404 : vector<8x128xf32>
    %406 = arith.negf %405 : vector<8x128xf32>
    %407 = math.exp %406 : vector<8x128xf32>
    %cst_98 = arith.constant 1.000000e+00 : f32
    %408 = vector.broadcast %cst_98 : f32 to vector<8x128xf32>
    %409 = arith.addf %408, %407 : vector<8x128xf32>
    %410 = arith.divf %408, %409 : vector<8x128xf32>
    %411 = vector.extract_strided_slice %392 {offsets = [0, 256], sizes = [8, 128], strides = [1, 1]} : vector<8x384xf32> to vector<8x128xf32>
    %412 = vector.extract_strided_slice %381 {offsets = [0, 256], sizes = [8, 128], strides = [1, 1]} : vector<8x384xf32> to vector<8x128xf32>
    %413 = arith.mulf %402, %412 : vector<8x128xf32>
    %414 = arith.addf %411, %413 : vector<8x128xf32>
    %415 = math.tanh %414 : vector<8x128xf32>
    %cst_99 = arith.constant 1.000000e+00 : f32
    %416 = vector.broadcast %cst_99 : f32 to vector<8x128xf32>
    %417 = arith.subf %416, %410 : vector<8x128xf32>
    %418 = arith.mulf %417, %415 : vector<8x128xf32>
    %419 = arith.mulf %410, %347 : vector<8x128xf32>
    %420 = arith.addf %418, %419 : vector<8x128xf32>
    %421 = vector.extract_strided_slice %394 {offsets = [0, 0], sizes = [8, 128], strides = [1, 1]} : vector<8x384xf32> to vector<8x128xf32>
    %422 = vector.extract_strided_slice %385 {offsets = [0, 0], sizes = [8, 128], strides = [1, 1]} : vector<8x384xf32> to vector<8x128xf32>
    %423 = arith.addf %421, %422 : vector<8x128xf32>
    %424 = arith.negf %423 : vector<8x128xf32>
    %425 = math.exp %424 : vector<8x128xf32>
    %cst_100 = arith.constant 1.000000e+00 : f32
    %426 = vector.broadcast %cst_100 : f32 to vector<8x128xf32>
    %427 = arith.addf %426, %425 : vector<8x128xf32>
    %428 = arith.divf %426, %427 : vector<8x128xf32>
    %429 = vector.extract_strided_slice %394 {offsets = [0, 128], sizes = [8, 128], strides = [1, 1]} : vector<8x384xf32> to vector<8x128xf32>
    %430 = vector.extract_strided_slice %385 {offsets = [0, 128], sizes = [8, 128], strides = [1, 1]} : vector<8x384xf32> to vector<8x128xf32>
    %431 = arith.addf %429, %430 : vector<8x128xf32>
    %432 = arith.negf %431 : vector<8x128xf32>
    %433 = math.exp %432 : vector<8x128xf32>
    %cst_101 = arith.constant 1.000000e+00 : f32
    %434 = vector.broadcast %cst_101 : f32 to vector<8x128xf32>
    %435 = arith.addf %434, %433 : vector<8x128xf32>
    %436 = arith.divf %434, %435 : vector<8x128xf32>
    %437 = vector.extract_strided_slice %394 {offsets = [0, 256], sizes = [8, 128], strides = [1, 1]} : vector<8x384xf32> to vector<8x128xf32>
    %438 = vector.extract_strided_slice %385 {offsets = [0, 256], sizes = [8, 128], strides = [1, 1]} : vector<8x384xf32> to vector<8x128xf32>
    %439 = arith.mulf %428, %438 : vector<8x128xf32>
    %440 = arith.addf %437, %439 : vector<8x128xf32>
    %441 = math.tanh %440 : vector<8x128xf32>
    %cst_102 = arith.constant 1.000000e+00 : f32
    %442 = vector.broadcast %cst_102 : f32 to vector<8x128xf32>
    %443 = arith.subf %442, %436 : vector<8x128xf32>
    %444 = arith.mulf %443, %441 : vector<8x128xf32>
    %445 = arith.mulf %436, %373 : vector<8x128xf32>
    %446 = arith.addf %444, %445 : vector<8x128xf32>
    %447 = arith.index_cast %387 : i32 to index
    %c0_103 = arith.constant 0 : index
    %448 = vector.load %arg10[%447, %c0_103] : memref<64x256xf32, #tpu.memory_space<vmem>>, vector<8x128xf32>
    tpu.vector_store %arg10[%447, %c0_103], %420 {strides = array<i32>} : memref<64x256xf32, #tpu.memory_space<vmem>>, vector<8x128xf32>,
    %449 = arith.index_cast %390 : i32 to index
    %c128_104 = arith.constant 128 : index
    %450 = vector.load %arg10[%449, %c128_104] : memref<64x256xf32, #tpu.memory_space<vmem>>, vector<8x128xf32>
    tpu.vector_store %arg10[%449, %c128_104], %446 {strides = array<i32>} : memref<64x256xf32, #tpu.memory_space<vmem>>, vector<8x128xf32>,
    %c6_i32 = arith.constant 6 : i32
    %451 = arith.truncf %420 : vector<8x128xf32> to vector<8x128xbf16>
    %cst_105 = arith.constant dense<0.000000e+00> : vector<8x384xf32>
    %452 = tpu.matmul %451, %7, %cst_105 {dimension_numbers = #tpu.dot_dimension_numbers<[1], [0], [0], [1], [0, 0, 1, 1], [], []>} : vector<8x128xbf16>, vector<128x384xbf16>, vector<8x384xf32> -> vector<8x384xf32>
    %453 = vector.broadcast %9 : vector<1x384xf32> to vector<8x384xf32>
    %454 = arith.addf %452, %453 : vector<8x384xf32>
    %455 = arith.truncf %446 : vector<8x128xf32> to vector<8x128xbf16>
    %cst_106 = arith.constant dense<0.000000e+00> : vector<8x384xf32>
    %456 = tpu.matmul %455, %8, %cst_106 {dimension_numbers = #tpu.dot_dimension_numbers<[1], [0], [0], [1], [0, 0, 1, 1], [], []>} : vector<8x128xbf16>, vector<128x384xbf16>, vector<8x384xf32> -> vector<8x384xf32>
    %457 = vector.broadcast %10 : vector<1x384xf32> to vector<8x384xf32>
    %458 = arith.addf %456, %457 : vector<8x384xf32>
    %c8_i32_107 = arith.constant 8 : i32
    %459 = arith.muli %c6_i32, %c8_i32_107 : i32
    %460 = tpu.assume_multiple %459, 8 : i32
    %c7_i32_108 = arith.constant 7 : i32
    %461 = arith.subi %c7_i32_108, %c6_i32 : i32
    %c8_i32_109 = arith.constant 8 : i32
    %462 = arith.muli %461, %c8_i32_109 : i32
    %463 = tpu.assume_multiple %462, 8 : i32
    %464 = arith.index_cast %460 : i32 to index
    %c0_110 = arith.constant 0 : index
    %465 = vector.load %arg11[%464, %c0_110] : memref<64x768xf32, #tpu.memory_space<vmem>>, vector<8x384xf32>
    %466 = arith.index_cast %463 : i32 to index
    %c384_111 = arith.constant 384 : index
    %467 = vector.load %arg11[%466, %c384_111] : memref<64x768xf32, #tpu.memory_space<vmem>>, vector<8x384xf32>
    %468 = vector.extract_strided_slice %465 {offsets = [0, 0], sizes = [8, 128], strides = [1, 1]} : vector<8x384xf32> to vector<8x128xf32>
    %469 = vector.extract_strided_slice %454 {offsets = [0, 0], sizes = [8, 128], strides = [1, 1]} : vector<8x384xf32> to vector<8x128xf32>
    %470 = arith.addf %468, %469 : vector<8x128xf32>
    %471 = arith.negf %470 : vector<8x128xf32>
    %472 = math.exp %471 : vector<8x128xf32>
    %cst_112 = arith.constant 1.000000e+00 : f32
    %473 = vector.broadcast %cst_112 : f32 to vector<8x128xf32>
    %474 = arith.addf %473, %472 : vector<8x128xf32>
    %475 = arith.divf %473, %474 : vector<8x128xf32>
    %476 = vector.extract_strided_slice %465 {offsets = [0, 128], sizes = [8, 128], strides = [1, 1]} : vector<8x384xf32> to vector<8x128xf32>
    %477 = vector.extract_strided_slice %454 {offsets = [0, 128], sizes = [8, 128], strides = [1, 1]} : vector<8x384xf32> to vector<8x128xf32>
    %478 = arith.addf %476, %477 : vector<8x128xf32>
    %479 = arith.negf %478 : vector<8x128xf32>
    %480 = math.exp %479 : vector<8x128xf32>
    %cst_113 = arith.constant 1.000000e+00 : f32
    %481 = vector.broadcast %cst_113 : f32 to vector<8x128xf32>
    %482 = arith.addf %481, %480 : vector<8x128xf32>
    %483 = arith.divf %481, %482 : vector<8x128xf32>
    %484 = vector.extract_strided_slice %465 {offsets = [0, 256], sizes = [8, 128], strides = [1, 1]} : vector<8x384xf32> to vector<8x128xf32>
    %485 = vector.extract_strided_slice %454 {offsets = [0, 256], sizes = [8, 128], strides = [1, 1]} : vector<8x384xf32> to vector<8x128xf32>
    %486 = arith.mulf %475, %485 : vector<8x128xf32>
    %487 = arith.addf %484, %486 : vector<8x128xf32>
    %488 = math.tanh %487 : vector<8x128xf32>
    %cst_114 = arith.constant 1.000000e+00 : f32
    %489 = vector.broadcast %cst_114 : f32 to vector<8x128xf32>
    %490 = arith.subf %489, %483 : vector<8x128xf32>
    %491 = arith.mulf %490, %488 : vector<8x128xf32>
    %492 = arith.mulf %483, %420 : vector<8x128xf32>
    %493 = arith.addf %491, %492 : vector<8x128xf32>
    %494 = vector.extract_strided_slice %467 {offsets = [0, 0], sizes = [8, 128], strides = [1, 1]} : vector<8x384xf32> to vector<8x128xf32>
    %495 = vector.extract_strided_slice %458 {offsets = [0, 0], sizes = [8, 128], strides = [1, 1]} : vector<8x384xf32> to vector<8x128xf32>
    %496 = arith.addf %494, %495 : vector<8x128xf32>
    %497 = arith.negf %496 : vector<8x128xf32>
    %498 = math.exp %497 : vector<8x128xf32>
    %cst_115 = arith.constant 1.000000e+00 : f32
    %499 = vector.broadcast %cst_115 : f32 to vector<8x128xf32>
    %500 = arith.addf %499, %498 : vector<8x128xf32>
    %501 = arith.divf %499, %500 : vector<8x128xf32>
    %502 = vector.extract_strided_slice %467 {offsets = [0, 128], sizes = [8, 128], strides = [1, 1]} : vector<8x384xf32> to vector<8x128xf32>
    %503 = vector.extract_strided_slice %458 {offsets = [0, 128], sizes = [8, 128], strides = [1, 1]} : vector<8x384xf32> to vector<8x128xf32>
    %504 = arith.addf %502, %503 : vector<8x128xf32>
    %505 = arith.negf %504 : vector<8x128xf32>
    %506 = math.exp %505 : vector<8x128xf32>
    %cst_116 = arith.constant 1.000000e+00 : f32
    %507 = vector.broadcast %cst_116 : f32 to vector<8x128xf32>
    %508 = arith.addf %507, %506 : vector<8x128xf32>
    %509 = arith.divf %507, %508 : vector<8x128xf32>
    %510 = vector.extract_strided_slice %467 {offsets = [0, 256], sizes = [8, 128], strides = [1, 1]} : vector<8x384xf32> to vector<8x128xf32>
    %511 = vector.extract_strided_slice %458 {offsets = [0, 256], sizes = [8, 128], strides = [1, 1]} : vector<8x384xf32> to vector<8x128xf32>
    %512 = arith.mulf %501, %511 : vector<8x128xf32>
    %513 = arith.addf %510, %512 : vector<8x128xf32>
    %514 = math.tanh %513 : vector<8x128xf32>
    %cst_117 = arith.constant 1.000000e+00 : f32
    %515 = vector.broadcast %cst_117 : f32 to vector<8x128xf32>
    %516 = arith.subf %515, %509 : vector<8x128xf32>
    %517 = arith.mulf %516, %514 : vector<8x128xf32>
    %518 = arith.mulf %509, %446 : vector<8x128xf32>
    %519 = arith.addf %517, %518 : vector<8x128xf32>
    %520 = arith.index_cast %460 : i32 to index
    %c0_118 = arith.constant 0 : index
    %521 = vector.load %arg10[%520, %c0_118] : memref<64x256xf32, #tpu.memory_space<vmem>>, vector<8x128xf32>
    tpu.vector_store %arg10[%520, %c0_118], %493 {strides = array<i32>} : memref<64x256xf32, #tpu.memory_space<vmem>>, vector<8x128xf32>,
    %522 = arith.index_cast %463 : i32 to index
    %c128_119 = arith.constant 128 : index
    %523 = vector.load %arg10[%522, %c128_119] : memref<64x256xf32, #tpu.memory_space<vmem>>, vector<8x128xf32>
    tpu.vector_store %arg10[%522, %c128_119], %519 {strides = array<i32>} : memref<64x256xf32, #tpu.memory_space<vmem>>, vector<8x128xf32>,
    %c7_i32_120 = arith.constant 7 : i32
    %524 = arith.truncf %493 : vector<8x128xf32> to vector<8x128xbf16>
    %cst_121 = arith.constant dense<0.000000e+00> : vector<8x384xf32>
    %525 = tpu.matmul %524, %7, %cst_121 {dimension_numbers = #tpu.dot_dimension_numbers<[1], [0], [0], [1], [0, 0, 1, 1], [], []>} : vector<8x128xbf16>, vector<128x384xbf16>, vector<8x384xf32> -> vector<8x384xf32>
    %526 = vector.broadcast %9 : vector<1x384xf32> to vector<8x384xf32>
    %527 = arith.addf %525, %526 : vector<8x384xf32>
    %528 = arith.truncf %519 : vector<8x128xf32> to vector<8x128xbf16>
    %cst_122 = arith.constant dense<0.000000e+00> : vector<8x384xf32>
    %529 = tpu.matmul %528, %8, %cst_122 {dimension_numbers = #tpu.dot_dimension_numbers<[1], [0], [0], [1], [0, 0, 1, 1], [], []>} : vector<8x128xbf16>, vector<128x384xbf16>, vector<8x384xf32> -> vector<8x384xf32>
    %530 = vector.broadcast %10 : vector<1x384xf32> to vector<8x384xf32>
    %531 = arith.addf %529, %530 : vector<8x384xf32>
    %c8_i32_123 = arith.constant 8 : i32
    %532 = arith.muli %c7_i32_120, %c8_i32_123 : i32
    %533 = tpu.assume_multiple %532, 8 : i32
    %c7_i32_124 = arith.constant 7 : i32
    %534 = arith.subi %c7_i32_124, %c7_i32_120 : i32
    %c8_i32_125 = arith.constant 8 : i32
    %535 = arith.muli %534, %c8_i32_125 : i32
    %536 = tpu.assume_multiple %535, 8 : i32
    %537 = arith.index_cast %533 : i32 to index
    %c0_126 = arith.constant 0 : index
    %538 = vector.load %arg11[%537, %c0_126] : memref<64x768xf32, #tpu.memory_space<vmem>>, vector<8x384xf32>
    %539 = arith.index_cast %536 : i32 to index
    %c384_127 = arith.constant 384 : index
    %540 = vector.load %arg11[%539, %c384_127] : memref<64x768xf32, #tpu.memory_space<vmem>>, vector<8x384xf32>
    %541 = vector.extract_strided_slice %538 {offsets = [0, 0], sizes = [8, 128], strides = [1, 1]} : vector<8x384xf32> to vector<8x128xf32>
    %542 = vector.extract_strided_slice %527 {offsets = [0, 0], sizes = [8, 128], strides = [1, 1]} : vector<8x384xf32> to vector<8x128xf32>
    %543 = arith.addf %541, %542 : vector<8x128xf32>
    %544 = arith.negf %543 : vector<8x128xf32>
    %545 = math.exp %544 : vector<8x128xf32>
    %cst_128 = arith.constant 1.000000e+00 : f32
    %546 = vector.broadcast %cst_128 : f32 to vector<8x128xf32>
    %547 = arith.addf %546, %545 : vector<8x128xf32>
    %548 = arith.divf %546, %547 : vector<8x128xf32>
    %549 = vector.extract_strided_slice %538 {offsets = [0, 128], sizes = [8, 128], strides = [1, 1]} : vector<8x384xf32> to vector<8x128xf32>
    %550 = vector.extract_strided_slice %527 {offsets = [0, 128], sizes = [8, 128], strides = [1, 1]} : vector<8x384xf32> to vector<8x128xf32>
    %551 = arith.addf %549, %550 : vector<8x128xf32>
    %552 = arith.negf %551 : vector<8x128xf32>
    %553 = math.exp %552 : vector<8x128xf32>
    %cst_129 = arith.constant 1.000000e+00 : f32
    %554 = vector.broadcast %cst_129 : f32 to vector<8x128xf32>
    %555 = arith.addf %554, %553 : vector<8x128xf32>
    %556 = arith.divf %554, %555 : vector<8x128xf32>
    %557 = vector.extract_strided_slice %538 {offsets = [0, 256], sizes = [8, 128], strides = [1, 1]} : vector<8x384xf32> to vector<8x128xf32>
    %558 = vector.extract_strided_slice %527 {offsets = [0, 256], sizes = [8, 128], strides = [1, 1]} : vector<8x384xf32> to vector<8x128xf32>
    %559 = arith.mulf %548, %558 : vector<8x128xf32>
    %560 = arith.addf %557, %559 : vector<8x128xf32>
    %561 = math.tanh %560 : vector<8x128xf32>
    %cst_130 = arith.constant 1.000000e+00 : f32
    %562 = vector.broadcast %cst_130 : f32 to vector<8x128xf32>
    %563 = arith.subf %562, %556 : vector<8x128xf32>
    %564 = arith.mulf %563, %561 : vector<8x128xf32>
    %565 = arith.mulf %556, %493 : vector<8x128xf32>
    %566 = arith.addf %564, %565 : vector<8x128xf32>
    %567 = vector.extract_strided_slice %540 {offsets = [0, 0], sizes = [8, 128], strides = [1, 1]} : vector<8x384xf32> to vector<8x128xf32>
    %568 = vector.extract_strided_slice %531 {offsets = [0, 0], sizes = [8, 128], strides = [1, 1]} : vector<8x384xf32> to vector<8x128xf32>
    %569 = arith.addf %567, %568 : vector<8x128xf32>
    %570 = arith.negf %569 : vector<8x128xf32>
    %571 = math.exp %570 : vector<8x128xf32>
    %cst_131 = arith.constant 1.000000e+00 : f32
    %572 = vector.broadcast %cst_131 : f32 to vector<8x128xf32>
    %573 = arith.addf %572, %571 : vector<8x128xf32>
    %574 = arith.divf %572, %573 : vector<8x128xf32>
    %575 = vector.extract_strided_slice %540 {offsets = [0, 128], sizes = [8, 128], strides = [1, 1]} : vector<8x384xf32> to vector<8x128xf32>
    %576 = vector.extract_strided_slice %531 {offsets = [0, 128], sizes = [8, 128], strides = [1, 1]} : vector<8x384xf32> to vector<8x128xf32>
    %577 = arith.addf %575, %576 : vector<8x128xf32>
    %578 = arith.negf %577 : vector<8x128xf32>
    %579 = math.exp %578 : vector<8x128xf32>
    %cst_132 = arith.constant 1.000000e+00 : f32
    %580 = vector.broadcast %cst_132 : f32 to vector<8x128xf32>
    %581 = arith.addf %580, %579 : vector<8x128xf32>
    %582 = arith.divf %580, %581 : vector<8x128xf32>
    %583 = vector.extract_strided_slice %540 {offsets = [0, 256], sizes = [8, 128], strides = [1, 1]} : vector<8x384xf32> to vector<8x128xf32>
    %584 = vector.extract_strided_slice %531 {offsets = [0, 256], sizes = [8, 128], strides = [1, 1]} : vector<8x384xf32> to vector<8x128xf32>
    %585 = arith.mulf %574, %584 : vector<8x128xf32>
    %586 = arith.addf %583, %585 : vector<8x128xf32>
    %587 = math.tanh %586 : vector<8x128xf32>
    %cst_133 = arith.constant 1.000000e+00 : f32
    %588 = vector.broadcast %cst_133 : f32 to vector<8x128xf32>
    %589 = arith.subf %588, %582 : vector<8x128xf32>
    %590 = arith.mulf %589, %587 : vector<8x128xf32>
    %591 = arith.mulf %582, %519 : vector<8x128xf32>
    %592 = arith.addf %590, %591 : vector<8x128xf32>
    %593 = arith.index_cast %533 : i32 to index
    %c0_134 = arith.constant 0 : index
    %594 = vector.load %arg10[%593, %c0_134] : memref<64x256xf32, #tpu.memory_space<vmem>>, vector<8x128xf32>
    tpu.vector_store %arg10[%593, %c0_134], %566 {strides = array<i32>} : memref<64x256xf32, #tpu.memory_space<vmem>>, vector<8x128xf32>,
    %595 = arith.index_cast %536 : i32 to index
    %c128_135 = arith.constant 128 : index
    %596 = vector.load %arg10[%595, %c128_135] : memref<64x256xf32, #tpu.memory_space<vmem>>, vector<8x128xf32>
    tpu.vector_store %arg10[%595, %c128_135], %592 {strides = array<i32>} : memref<64x256xf32, #tpu.memory_space<vmem>>, vector<8x128xf32>,
    %c8_i32_136 = arith.constant 8 : i32
    return
  }
  func.func @transform_0(%arg0: i32) -> (i32, i32) {
    %c0_i32 = arith.constant 0 : i32
    %c0_i32_0 = arith.constant 0 : i32
    %c0_i32_1 = arith.constant 0 : i32
    return %c0_i32, %c0_i32_0 : i32, i32
  }
  func.func @transform_1(%arg0: i32) -> (i32, i32) {
    %c0_i32 = arith.constant 0 : i32
    %c0_i32_0 = arith.constant 0 : i32
    %c0_i32_1 = arith.constant 0 : i32
    return %c0_i32, %c0_i32_0 : i32, i32
  }
  func.func @transform_2(%arg0: i32) -> (i32, i32) {
    %c0_i32 = arith.constant 0 : i32
    %c0_i32_0 = arith.constant 0 : i32
    %c0_i32_1 = arith.constant 0 : i32
    return %c0_i32, %c0_i32_0 : i32, i32
  }
  func.func @transform_3(%arg0: i32) -> (i32, i32) {
    %c0_i32 = arith.constant 0 : i32
    %c0_i32_0 = arith.constant 0 : i32
    %c0_i32_1 = arith.constant 0 : i32
    return %c0_i32, %c0_i32_0 : i32, i32
  }
  func.func @transform_4(%arg0: i32) -> (i32, i32) {
    %c0_i32 = arith.constant 0 : i32
    %c0_i32_0 = arith.constant 0 : i32
    %c0_i32_1 = arith.constant 0 : i32
    return %c0_i32, %c0_i32_0 : i32, i32
  }
  func.func @transform_5(%arg0: i32) -> (i32, i32) {
    %c0_i32 = arith.constant 0 : i32
    %c0_i32_0 = arith.constant 0 : i32
    %c0_i32_1 = arith.constant 0 : i32
    return %c0_i32, %c0_i32_0 : i32, i32
  }
  func.func @transform_6(%arg0: i32) -> (i32, i32) {
    %c0_i32 = arith.constant 0 : i32
    %c0_i32_0 = arith.constant 0 : i32
    %c0_i32_1 = arith.constant 0 : i32
    return %c0_i32, %c0_i32_0 : i32, i32
  }
  func.func @transform_7(%arg0: i32) -> (i32, i32) {
    %c0_i32 = arith.constant 0 : i32
    %c0_i32_0 = arith.constant 0 : i32
    %c0_i32_1 = arith.constant 0 : i32
    return %c0_i32, %c0_i32_0 : i32, i32
  }
  func.func @transform_8(%arg0: i32) -> (i32, i32) {
    %c0_i32 = arith.constant 0 : i32
    %c0_i32_0 = arith.constant 0 : i32
    %c0_i32_1 = arith.constant 0 : i32
    return %c0_i32, %c0_i32_0 : i32, i32
  }
  func.func @transform_9(%arg0: i32) -> (i32, i32) {
    %c0_i32 = arith.constant 0 : i32
    %c0_i32_0 = arith.constant 0 : i32
    %c0_i32_1 = arith.constant 0 : i32
    return %c0_i32, %c0_i32_0 : i32, i32
  }
}

</mosaic_0001>

<llo_original>
// kernel: forward.3
$region0: #{forward.3}
  #allocation0 [shape = 'u32[]', space=smem, size = 0x4, offset = 0x4, fixed_abs, tag = 'smem constant byte address 0x4 - core index']
  #allocation1 [shape = 'u32[144,128]{1,0:T(1,128)}', space=vmem, size = 0x12000, scoped, tag = 'internal scratch']
  %s0 = inlined_call_operand.vmem [shape: f32[8,8,128], index: 0, kind: input, shape index: {}]
  %s1 = inlined_call_operand.vmem [shape: bf16[384,128], index: 1, kind: input, shape index: {}]
  %s2 = inlined_call_operand.vmem [shape: f32[1,128], index: 2, kind: input, shape index: {}]
  %s3 = inlined_call_operand.vmem [shape: bf16[384,128], index: 3, kind: input, shape index: {}]
  %s4 = inlined_call_operand.vmem [shape: f32[1,128], index: 4, kind: input, shape index: {}]
  %s5 = inlined_call_operand.vmem [shape: bf16[64,128], index: 5, kind: output, shape index: {}]
  %s6 = sld [smem:[#allocation0]]
  $region30: #{forward.3} parent=0
    _
  %s8 = ssub.s32 1, %s6
  %s9 = scalar_select 0, %s8, %s6
  // Predicated region
  $region2: #{forward.3} parent=0 // pred_check
    _
  $region3: #{forward.3} parent=0 // pred_check_branch
    %11 = sbr.rel (0) target = $region5
  $region4: #{forward.3} parent=0 // pred_region
    _
  $region5: #{forward.3} parent=0 // pred_fallthru
    _
  // Predicated region
  $region6: #{forward.3} parent=0 // pred_check
    _
  $region7: #{forward.3} parent=0 // pred_check_branch
    %13 = sbr.rel (0) target = $region9
  $region8: #{forward.3} parent=0 // pred_region
    _
  $region9: #{forward.3} parent=0 // pred_fallthru
    _
  // Predicated region
  $region10: #{forward.3} parent=0 // pred_check
    _
  $region11: #{forward.3} parent=0 // pred_check_branch
    %15 = sbr.rel (0) target = $region13
  $region12: #{forward.3} parent=0 // pred_region
    _
  $region13: #{forward.3} parent=0 // pred_fallthru
    _
  // Predicated region
  $region14: #{forward.3} parent=0 // pred_check
    _
  $region15: #{forward.3} parent=0 // pred_check_branch
    %17 = sbr.rel (0) target = $region17
  $region16: #{forward.3} parent=0 // pred_region
    _
  $region17: #{forward.3} parent=0 // pred_fallthru
    _
  // Predicated region
  $region18: #{forward.3} parent=0 // pred_check
    _
  $region19: #{forward.3} parent=0 // pred_check_branch
    %19 = sbr.rel (0) target = $region21
  $region20: #{forward.3} parent=0 // pred_region
    _
  $region21: #{forward.3} parent=0 // pred_fallthru
    _
  %v21 = vld [vmem:[%s0] sm:$0xff]
  %v22 = vld [vmem:[%s0 + $0x8] sm:$0xff]
  %v23 = vld [vmem:[%s0 + $0x10] sm:$0xff]
  %v24 = vld [vmem:[%s0 + $0x18] sm:$0xff]
  %v25 = vld [vmem:[%s0 + $0x20] sm:$0xff]
  %v26 = vld [vmem:[%s0 + $0x28] sm:$0xff]
  %v27 = vld [vmem:[%s0 + $0x30] sm:$0xff]
  %v28 = vld [vmem:[%s0 + $0x38] sm:$0xff]
  %v29 = vpack.c.bf16 %v21, %v21
  %v30 = vpack.c.bf16 %v22, %v22
  %v31 = vpack.c.bf16 %v23, %v23
  %v32 = vpack.c.bf16 %v24, %v24
  %v33 = vpack.c.bf16 %v25, %v25
  %v34 = vpack.c.bf16 %v26, %v26
  %v35 = vpack.c.bf16 %v27, %v27
  %v36 = vpack.c.bf16 %v28, %v28
  %v46 = vunpack.c.l.b16 0
  %v47 = vunpack.c.l.b16 %v29
  %v48 = vunpack.c.l.b16 %v30
  %v49 = vunpack.c.l.b16 %v31
  %v50 = vunpack.c.l.b16 %v32
  %v51 = vunpack.c.l.b16 %v33
  %v52 = vunpack.c.l.b16 %v34
  %v53 = vunpack.c.l.b16 %v35
  %v54 = vunpack.c.l.b16 %v36
  %v55 = vld [vmem:[%s1] sm:$0xf]
  %v56 = vld [vmem:[%s1 + $0x4] sm:$0xf]
  %v57 = vld [vmem:[%s1 + $0x8] sm:$0xf]
  %v58 = vld [vmem:[%s1 + $0xc] sm:$0xf]
  %v59 = vld [vmem:[%s1 + $0x10] sm:$0xf]
  %v60 = vld [vmem:[%s1 + $0x14] sm:$0xf]
  %v61 = vld [vmem:[%s1 + $0x18] sm:$0xf]
  %v62 = vld [vmem:[%s1 + $0x1c] sm:$0xf]
  %v63 = vld [vmem:[%s1 + $0x20] sm:$0xf]
  %v64 = vld [vmem:[%s1 + $0x24] sm:$0xf]
  %v65 = vld [vmem:[%s1 + $0x28] sm:$0xf]
  %v66 = vld [vmem:[%s1 + $0x2c] sm:$0xf]
  %v67 = vld [vmem:[%s1 + $0x30] sm:$0xf]
  %v68 = vld [vmem:[%s1 + $0x34] sm:$0xf]
  %v69 = vld [vmem:[%s1 + $0x38] sm:$0xf]
  %v70 = vld [vmem:[%s1 + $0x3c] sm:$0xf]
  %v71 = vld [vmem:[%s1 + $0x40] sm:$0xf]
  %v72 = vld [vmem:[%s1 + $0x44] sm:$0xf]
  %v73 = vld [vmem:[%s1 + $0x48] sm:$0xf]
  %v74 = vld [vmem:[%s1 + $0x4c] sm:$0xf]
  %v75 = vld [vmem:[%s1 + $0x50] sm:$0xf]
  %v76 = vld [vmem:[%s1 + $0x54] sm:$0xf]
  %v77 = vld [vmem:[%s1 + $0x58] sm:$0xf]
  %v78 = vld [vmem:[%s1 + $0x5c] sm:$0xf]
  %v79 = vld [vmem:[%s1 + $0x60] sm:$0xf]
  %v80 = vld [vmem:[%s1 + $0x64] sm:$0xf]
  %v81 = vld [vmem:[%s1 + $0x68] sm:$0xf]
  %v82 = vld [vmem:[%s1 + $0x6c] sm:$0xf]
  %v83 = vld [vmem:[%s1 + $0x70] sm:$0xf]
  %v84 = vld [vmem:[%s1 + $0x74] sm:$0xf]
  %v85 = vld [vmem:[%s1 + $0x78] sm:$0xf]
  %v86 = vld [vmem:[%s1 + $0x7c] sm:$0xf]
  %v87 = vld [vmem:[%s1 + $0x80] sm:$0xf]
  %v88 = vld [vmem:[%s1 + $0x84] sm:$0xf]
  %v89 = vld [vmem:[%s1 + $0x88] sm:$0xf]
  %v90 = vld [vmem:[%s1 + $0x8c] sm:$0xf]
  %v91 = vld [vmem:[%s1 + $0x90] sm:$0xf]
  %v92 = vld [vmem:[%s1 + $0x94] sm:$0xf]
  %v93 = vld [vmem:[%s1 + $0x98] sm:$0xf]
  %v94 = vld [vmem:[%s1 + $0x9c] sm:$0xf]
  %v95 = vld [vmem:[%s1 + $0xa0] sm:$0xf]
  %v96 = vld [vmem:[%s1 + $0xa4] sm:$0xf]
  %v97 = vld [vmem:[%s1 + $0xa8] sm:$0xf]
  %v98 = vld [vmem:[%s1 + $0xac] sm:$0xf]
  %v99 = vld [vmem:[%s1 + $0xb0] sm:$0xf]
  %v100 = vld [vmem:[%s1 + $0xb4] sm:$0xf]
  %v101 = vld [vmem:[%s1 + $0xb8] sm:$0xf]
  %v102 = vld [vmem:[%s1 + $0xbc] sm:$0xf]
  %v103 = vld [vmem:[%s2] sm:$0x1]
  %v105 = vlaneseq
  %v106 = vshrl.u32 %v105, 7
  %v107 = vsub.s32 0, %v106
  %v108 = vrot.slane %v103, %v107
  %v110 = vpack.c.b16 %v47, %v46
  %v111 = vpack.c.b16 %v48, %v47
  %v112 = vpack.c.b16 %v49, %v48
  %v113 = vpack.c.b16 %v50, %v49
  %v114 = vpack.c.b16 %v51, %v50
  %v115 = vpack.c.b16 %v52, %v51
  %v116 = vpack.c.b16 %v53, %v52
  %v117 = vpack.c.b16 %v54, %v53
  %v118 = vpack.c.b16 %v46, %v54
  %v176 = vunpack.c.l.b16 %v55
  %v177 = vunpack.c.l.b16 %v56
  %v178 = vunpack.c.l.b16 %v57
  %v179 = vunpack.c.l.b16 %v58
  %v180 = vunpack.c.l.b16 %v59
  %v181 = vunpack.c.l.b16 %v60
  %v182 = vunpack.c.l.b16 %v61
  %v183 = vunpack.c.l.b16 %v62
  %v184 = vunpack.c.l.b16 %v63
  %v185 = vunpack.c.l.b16 %v64
  %v186 = vunpack.c.l.b16 %v65
  %v187 = vunpack.c.l.b16 %v66
  %v188 = vunpack.c.l.b16 %v67
  %v189 = vunpack.c.l.b16 %v68
  %v190 = vunpack.c.l.b16 %v69
  %v191 = vunpack.c.l.b16 %v70
  %v192 = vunpack.c.l.b16 %v71
  %v193 = vunpack.c.l.b16 %v72
  %v194 = vunpack.c.l.b16 %v73
  %v195 = vunpack.c.l.b16 %v74
  %v196 = vunpack.c.l.b16 %v75
  %v197 = vunpack.c.l.b16 %v76
  %v198 = vunpack.c.l.b16 %v77
  %v199 = vunpack.c.l.b16 %v78
  %v200 = vunpack.c.l.b16 %v79
  %v201 = vunpack.c.l.b16 %v80
  %v202 = vunpack.c.l.b16 %v81
  %v203 = vunpack.c.l.b16 %v82
  %v204 = vunpack.c.l.b16 %v83
  %v205 = vunpack.c.l.b16 %v84
  %v206 = vunpack.c.l.b16 %v85
  %v207 = vunpack.c.l.b16 %v86
  %v208 = vunpack.c.l.b16 %v87
  %v209 = vunpack.c.l.b16 %v88
  %v210 = vunpack.c.l.b16 %v89
  %v211 = vunpack.c.l.b16 %v90
  %v212 = vunpack.c.l.b16 %v91
  %v213 = vunpack.c.l.b16 %v92
  %v214 = vunpack.c.l.b16 %v93
  %v215 = vunpack.c.l.b16 %v94
  %v216 = vunpack.c.l.b16 %v95
  %v217 = vunpack.c.l.b16 %v96
  %v218 = vunpack.c.l.b16 %v97
  %v219 = vunpack.c.l.b16 %v98
  %v220 = vunpack.c.l.b16 %v99
  %v221 = vunpack.c.l.b16 %v100
  %v222 = vunpack.c.l.b16 %v101
  %v223 = vunpack.c.l.b16 %v102
  %v224 = vpack.c.b16 %v177, %v176
  %v225 = vpack.c.b16 %v179, %v178
  %v226 = vpack.c.b16 %v181, %v180
  %v227 = vpack.c.b16 %v183, %v182
  %v228 = vpack.c.b16 %v185, %v184
  %v229 = vpack.c.b16 %v187, %v186
  %v230 = vpack.c.b16 %v189, %v188
  %v231 = vpack.c.b16 %v191, %v190
  %v232 = vpack.c.b16 %v193, %v192
  %v233 = vpack.c.b16 %v195, %v194
  %v234 = vpack.c.b16 %v197, %v196
  %v235 = vpack.c.b16 %v199, %v198
  %v236 = vpack.c.b16 %v201, %v200
  %v237 = vpack.c.b16 %v203, %v202
  %v238 = vpack.c.b16 %v205, %v204
  %v239 = vpack.c.b16 %v207, %v206
  %v240 = vpack.c.b16 %v209, %v208
  %v241 = vpack.c.b16 %v211, %v210
  %v242 = vpack.c.b16 %v213, %v212
  %v243 = vpack.c.b16 %v215, %v214
  %v244 = vpack.c.b16 %v217, %v216
  %v245 = vpack.c.b16 %v219, %v218
  %v246 = vpack.c.b16 %v221, %v220
  %v247 = vpack.c.b16 %v223, %v222
  %272 = vmatprep.subr.bf16.mxu0 0
  %273 = vmatpush1.bf16.msra.mxu0 %v224
  %274 = vmatprep.subr.bf16.mxu0 0
  %275 = vmatpush1.bf16.msra.mxu0 %v225
  %276 = vmatprep.subr.bf16.mxu0 0
  %277 = vmatpush1.bf16.msra.mxu0 %v226
  %278 = vmatprep.subr.bf16.mxu0 0
  %279 = vmatpush1.bf16.msra.mxu0 %v227
  %280 = vmatprep.subr.bf16.mxu0 0
  %281 = vmatpush1.bf16.msra.mxu0 %v228
  %282 = vmatprep.subr.bf16.mxu0 0
  %283 = vmatpush1.bf16.msra.mxu0 %v229
  %284 = vmatprep.subr.bf16.mxu0 0
  %285 = vmatpush1.bf16.msra.mxu0 %v230
  %286 = vmatprep.subr.bf16.mxu0 0
  %287 = vmatpush1.bf16.msra.mxu0 %v231
  %288 = vmatprep.subr.bf16.mxu0 0
  %289 = vmatpush1.bf16.msra.mxu0 %v232
  %290 = vmatprep.subr.bf16.mxu0 0
  %291 = vmatpush1.bf16.msra.mxu0 %v233
  %292 = vmatprep.subr.bf16.mxu0 0
  %293 = vmatpush1.bf16.msra.mxu0 %v234
  %294 = vmatprep.subr.bf16.mxu0 0
  %295 = vmatpush1.bf16.msra.mxu0 %v235
  %296 = vmatprep.subr.bf16.mxu0 0
  %297 = vmatpush1.bf16.msra.mxu0 %v236
  %298 = vmatprep.subr.bf16.mxu0 0
  %299 = vmatpush1.bf16.msra.mxu0 %v237
  %300 = vmatprep.subr.bf16.mxu0 0
  %301 = vmatpush1.bf16.msra.mxu0 %v238
  %302 = vmatprep.subr.bf16.mxu0 0
  %303 = vmatpush1.bf16.msra.mxu0 %v239
  %304 = vmatprep.mubr.bf16.mxu0 %v111
  %305 = vmatmul.mubr.bf16.gmra.mrb[0].mxu0 %v110
  %v306 = vpop.f32.mrb[0].mxu0
  %v307 = vadd.f32 %v108, %v306
  %v308 = vpop.f32.mrb[0].mxu0
  %v309 = vpop.f32.mrb[0].mxu0
  %v310 = vadd.f32 %v108, %v309
  %v311 = vpop.f32.mrb[0].mxu0
  %312 = vmatprep.mubr.bf16.mxu0 %v113
  %313 = vmatmul.mubr.bf16.gmra.mrb[0].mxu0 %v112
  %v314 = vpop.f32.mrb[0].mxu0
  %v315 = vadd.f32 %v108, %v314
  %v316 = vpop.f32.mrb[0].mxu0
  %v317 = vpop.f32.mrb[0].mxu0
  %v318 = vadd.f32 %v108, %v317
  %v319 = vpop.f32.mrb[0].mxu0
  %320 = vmatprep.mubr.bf16.mxu0 %v115
  %321 = vmatmul.mubr.bf16.gmra.mrb[0].mxu0 %v114
  %v322 = vpop.f32.mrb[0].mxu0
  %v323 = vadd.f32 %v108, %v322
  %v324 = vpop.f32.mrb[0].mxu0
  %v325 = vpop.f32.mrb[0].mxu0
  %v326 = vadd.f32 %v108, %v325
  %v327 = vpop.f32.mrb[0].mxu0
  %328 = vmatprep.mubr.bf16.mxu0 %v117
  %329 = vmatmul.mubr.bf16.gmra.mrb[0].mxu0 %v116
  %v330 = vpop.f32.mrb[0].mxu0
  %v331 = vadd.f32 %v108, %v330
  %v332 = vpop.f32.mrb[0].mxu0
  %v333 = vpop.f32.mrb[0].mxu0
  %v334 = vadd.f32 %v108, %v333
  %v335 = vpop.f32.mrb[0].mxu0
  %336 = vdwg.mxu0
  %337 = vmatprep.subr.bf16.mxu0 0
  %338 = vmatpush1.bf16.msra.mxu0 %v240
  %339 = vmatprep.subr.bf16.mxu0 0
  %340 = vmatpush1.bf16.msra.mxu0 %v241
  %341 = vmatprep.subr.bf16.mxu0 0
  %342 = vmatpush1.bf16.msra.mxu0 %v242
  %343 = vmatprep.subr.bf16.mxu0 0
  %344 = vmatpush1.bf16.msra.mxu0 %v243
  %345 = vmatprep.subr.bf16.mxu0 0
  %346 = vmatpush1.bf16.msra.mxu0 %v244
  %347 = vmatprep.subr.bf16.mxu0 0
  %348 = vmatpush1.bf16.msra.mxu0 %v245
  %349 = vmatprep.subr.bf16.mxu0 0
  %350 = vmatpush1.bf16.msra.mxu0 %v246
  %351 = vmatprep.subr.bf16.mxu0 0
  %352 = vmatpush1.bf16.msra.mxu0 %v247
  %353 = vmatprep.subr.bf16.mxu0 0
  %354 = vmatpush1.bf16.msra.mxu0 0
  %355 = vmatprep.subr.bf16.mxu0 0
  %356 = vmatpush1.bf16.msra.mxu0 0
  %357 = vmatprep.subr.bf16.mxu0 0
  %358 = vmatpush1.bf16.msra.mxu0 0
  %359 = vmatprep.subr.bf16.mxu0 0
  %360 = vmatpush1.bf16.msra.mxu0 0
  %361 = vmatprep.subr.bf16.mxu0 0
  %362 = vmatpush1.bf16.msra.mxu0 0
  %363 = vmatprep.subr.bf16.mxu0 0
  %364 = vmatpush1.bf16.msra.mxu0 0
  %365 = vmatprep.subr.bf16.mxu0 0
  %366 = vmatpush1.bf16.msra.mxu0 0
  %367 = vmatprep.subr.bf16.mxu0 0
  %368 = vmatpush1.bf16.msra.mxu0 0
  %369 = vmatprep.mubr.bf16.mxu0 0
  %370 = vmatmul.mubr.bf16.gmra.mrb[0].mxu0 %v112
  %v371 = vpop.f32.mrb[0].mxu0
  %v372 = vadd.f32 %v307, %v371
  %v373 = vpop.f32.mrb[0].mxu0
  %v374 = vpop.f32.mrb[0].mxu0
  %v375 = vadd.f32 %v310, %v374
  %v376 = vpop.f32.mrb[0].mxu0
  %377 = vmatprep.mubr.bf16.mxu0 0
  %378 = vmatmul.mubr.bf16.gmra.mrb[0].mxu0 %v114
  %v379 = vpop.f32.mrb[0].mxu0
  %v380 = vadd.f32 %v315, %v379
  %v381 = vpop.f32.mrb[0].mxu0
  %v382 = vpop.f32.mrb[0].mxu0
  %v383 = vadd.f32 %v318, %v382
  %v384 = vpop.f32.mrb[0].mxu0
  %385 = vmatprep.mubr.bf16.mxu0 0
  %386 = vmatmul.mubr.bf16.gmra.mrb[0].mxu0 %v116
  %v387 = vpop.f32.mrb[0].mxu0
  %v388 = vadd.f32 %v323, %v387
  %v389 = vpop.f32.mrb[0].mxu0
  %v390 = vpop.f32.mrb[0].mxu0
  %v391 = vadd.f32 %v326, %v390
  %v392 = vpop.f32.mrb[0].mxu0
  %393 = vmatprep.mubr.bf16.mxu0 0
  %394 = vmatmul.mubr.bf16.gmra.mrb[0].mxu0 %v118
  %v395 = vpop.f32.mrb[0].mxu0
  %v396 = vadd.f32 %v331, %v395
  %v397 = vpop.f32.mrb[0].mxu0
  %v398 = vpop.f32.mrb[0].mxu0
  %v399 = vadd.f32 %v334, %v398
  %v400 = vpop.f32.mrb[0].mxu0
  %401 = vdwg.mxu0
  %v402 = vmax.f32 %v372, 0.0
  %v403 = vmax.f32 %v375, 0.0
  %v404 = vmax.f32 %v380, 0.0
  %v405 = vmax.f32 %v383, 0.0
  %v406 = vmax.f32 %v388, 0.0
  %v407 = vmax.f32 %v391, 0.0
  %v408 = vmax.f32 %v396, 0.0
  %v409 = vmax.f32 %v399, 0.0
  %v410 = vpack.c.bf16 %v403, %v402
  %v411 = vpack.c.bf16 %v405, %v404
  %v412 = vpack.c.bf16 %v407, %v406
  %v413 = vpack.c.bf16 %v409, %v408
  %v418 = vunpack.c.l.b16 %v410
  %v419 = vunpack.c.h.b16 %v410
  %v420 = vunpack.c.l.b16 %v411
  %v421 = vunpack.c.h.b16 %v411
  %v422 = vunpack.c.l.b16 %v412
  %v423 = vunpack.c.h.b16 %v412
  %v424 = vunpack.c.l.b16 %v413
  %v425 = vunpack.c.h.b16 %v413
  %v426 = vld [vmem:[%s3] sm:$0xf]
  %v427 = vld [vmem:[%s3 + $0x4] sm:$0xf]
  %v428 = vld [vmem:[%s3 + $0x8] sm:$0xf]
  %v429 = vld [vmem:[%s3 + $0xc] sm:$0xf]
  %v430 = vld [vmem:[%s3 + $0x10] sm:$0xf]
  %v431 = vld [vmem:[%s3 + $0x14] sm:$0xf]
  %v432 = vld [vmem:[%s3 + $0x18] sm:$0xf]
  %v433 = vld [vmem:[%s3 + $0x1c] sm:$0xf]
  %v434 = vld [vmem:[%s3 + $0x20] sm:$0xf]
  %v435 = vld [vmem:[%s3 + $0x24] sm:$0xf]
  %v436 = vld [vmem:[%s3 + $0x28] sm:$0xf]
  %v437 = vld [vmem:[%s3 + $0x2c] sm:$0xf]
  %v438 = vld [vmem:[%s3 + $0x30] sm:$0xf]
  %v439 = vld [vmem:[%s3 + $0x34] sm:$0xf]
  %v440 = vld [vmem:[%s3 + $0x38] sm:$0xf]
  %v441 = vld [vmem:[%s3 + $0x3c] sm:$0xf]
  %v442 = vld [vmem:[%s3 + $0x40] sm:$0xf]
  %v443 = vld [vmem:[%s3 + $0x44] sm:$0xf]
  %v444 = vld [vmem:[%s3 + $0x48] sm:$0xf]
  %v445 = vld [vmem:[%s3 + $0x4c] sm:$0xf]
  %v446 = vld [vmem:[%s3 + $0x50] sm:$0xf]
  %v447 = vld [vmem:[%s3 + $0x54] sm:$0xf]
  %v448 = vld [vmem:[%s3 + $0x58] sm:$0xf]
  %v449 = vld [vmem:[%s3 + $0x5c] sm:$0xf]
  %v450 = vld [vmem:[%s3 + $0x60] sm:$0xf]
  %v451 = vld [vmem:[%s3 + $0x64] sm:$0xf]
  %v452 = vld [vmem:[%s3 + $0x68] sm:$0xf]
  %v453 = vld [vmem:[%s3 + $0x6c] sm:$0xf]
  %v454 = vld [vmem:[%s3 + $0x70] sm:$0xf]
  %v455 = vld [vmem:[%s3 + $0x74] sm:$0xf]
  %v456 = vld [vmem:[%s3 + $0x78] sm:$0xf]
  %v457 = vld [vmem:[%s3 + $0x7c] sm:$0xf]
  %v458 = vld [vmem:[%s3 + $0x80] sm:$0xf]
  %v459 = vld [vmem:[%s3 + $0x84] sm:$0xf]
  %v460 = vld [vmem:[%s3 + $0x88] sm:$0xf]
  %v461 = vld [vmem:[%s3 + $0x8c] sm:$0xf]
  %v462 = vld [vmem:[%s3 + $0x90] sm:$0xf]
  %v463 = vld [vmem:[%s3 + $0x94] sm:$0xf]
  %v464 = vld [vmem:[%s3 + $0x98] sm:$0xf]
  %v465 = vld [vmem:[%s3 + $0x9c] sm:$0xf]
  %v466 = vld [vmem:[%s3 + $0xa0] sm:$0xf]
  %v467 = vld [vmem:[%s3 + $0xa4] sm:$0xf]
  %v468 = vld [vmem:[%s3 + $0xa8] sm:$0xf]
  %v469 = vld [vmem:[%s3 + $0xac] sm:$0xf]
  %v470 = vld [vmem:[%s3 + $0xb0] sm:$0xf]
  %v471 = vld [vmem:[%s3 + $0xb4] sm:$0xf]
  %v472 = vld [vmem:[%s3 + $0xb8] sm:$0xf]
  %v473 = vld [vmem:[%s3 + $0xbc] sm:$0xf]
  %v474 = vld [vmem:[%s4] sm:$0x1]
  %v476 = vlaneseq
  %v477 = vshrl.u32 %v476, 7
  %v478 = vsub.s32 0, %v477
  %v479 = vrot.slane %v474, %v478
  %v481 = vpack.c.b16 %v418, %v46
  %v482 = vpack.c.b16 %v419, %v418
  %v483 = vpack.c.b16 %v420, %v419
  %v484 = vpack.c.b16 %v421, %v420
  %v485 = vpack.c.b16 %v422, %v421
  %v486 = vpack.c.b16 %v423, %v422
  %v487 = vpack.c.b16 %v424, %v423
  %v488 = vpack.c.b16 %v425, %v424
  %v489 = vpack.c.b16 %v46, %v425
  %v547 = vunpack.c.l.b16 %v426
  %v548 = vunpack.c.l.b16 %v427
  %v549 = vunpack.c.l.b16 %v428
  %v550 = vunpack.c.l.b16 %v429
  %v551 = vunpack.c.l.b16 %v430
  %v552 = vunpack.c.l.b16 %v431
  %v553 = vunpack.c.l.b16 %v432
  %v554 = vunpack.c.l.b16 %v433
  %v555 = vunpack.c.l.b16 %v434
  %v556 = vunpack.c.l.b16 %v435
  %v557 = vunpack.c.l.b16 %v436
  %v558 = vunpack.c.l.b16 %v437
  %v559 = vunpack.c.l.b16 %v438
  %v560 = vunpack.c.l.b16 %v439
  %v561 = vunpack.c.l.b16 %v440
  %v562 = vunpack.c.l.b16 %v441
  %v563 = vunpack.c.l.b16 %v442
  %v564 = vunpack.c.l.b16 %v443
  %v565 = vunpack.c.l.b16 %v444
  %v566 = vunpack.c.l.b16 %v445
  %v567 = vunpack.c.l.b16 %v446
  %v568 = vunpack.c.l.b16 %v447
  %v569 = vunpack.c.l.b16 %v448
  %v570 = vunpack.c.l.b16 %v449
  %v571 = vunpack.c.l.b16 %v450
  %v572 = vunpack.c.l.b16 %v451
  %v573 = vunpack.c.l.b16 %v452
  %v574 = vunpack.c.l.b16 %v453
  %v575 = vunpack.c.l.b16 %v454
  %v576 = vunpack.c.l.b16 %v455
  %v577 = vunpack.c.l.b16 %v456
  %v578 = vunpack.c.l.b16 %v457
  %v579 = vunpack.c.l.b16 %v458
  %v580 = vunpack.c.l.b16 %v459
  %v581 = vunpack.c.l.b16 %v460
  %v582 = vunpack.c.l.b16 %v461
  %v583 = vunpack.c.l.b16 %v462
  %v584 = vunpack.c.l.b16 %v463
  %v585 = vunpack.c.l.b16 %v464
  %v586 = vunpack.c.l.b16 %v465
  %v587 = vunpack.c.l.b16 %v466
  %v588 = vunpack.c.l.b16 %v467
  %v589 = vunpack.c.l.b16 %v468
  %v590 = vunpack.c.l.b16 %v469
  %v591 = vunpack.c.l.b16 %v470
  %v592 = vunpack.c.l.b16 %v471
  %v593 = vunpack.c.l.b16 %v472
  %v594 = vunpack.c.l.b16 %v473
  %v595 = vpack.c.b16 %v548, %v547
  %v596 = vpack.c.b16 %v550, %v549
  %v597 = vpack.c.b16 %v552, %v551
  %v598 = vpack.c.b16 %v554, %v553
  %v599 = vpack.c.b16 %v556, %v555
  %v600 = vpack.c.b16 %v558, %v557
  %v601 = vpack.c.b16 %v560, %v559
  %v602 = vpack.c.b16 %v562, %v561
  %v603 = vpack.c.b16 %v564, %v563
  %v604 = vpack.c.b16 %v566, %v565
  %v605 = vpack.c.b16 %v568, %v567
  %v606 = vpack.c.b16 %v570, %v569
  %v607 = vpack.c.b16 %v572, %v571
  %v608 = vpack.c.b16 %v574, %v573
  %v609 = vpack.c.b16 %v576, %v575
  %v610 = vpack.c.b16 %v578, %v577
  %v611 = vpack.c.b16 %v580, %v579
  %v612 = vpack.c.b16 %v582, %v581
  %v613 = vpack.c.b16 %v584, %v583
  %v614 = vpack.c.b16 %v586, %v585
  %v615 = vpack.c.b16 %v588, %v587
  %v616 = vpack.c.b16 %v590, %v589
  %v617 = vpack.c.b16 %v592, %v591
  %v618 = vpack.c.b16 %v594, %v593
  %643 = vmatprep.subr.bf16.mxu0 0
  %644 = vmatpush1.bf16.msra.mxu0 %v595
  %645 = vmatprep.subr.bf16.mxu0 0
  %646 = vmatpush1.bf16.msra.mxu0 %v596
  %647 = vmatprep.subr.bf16.mxu0 0
  %648 = vmatpush1.bf16.msra.mxu0 %v597
  %649 = vmatprep.subr.bf16.mxu0 0
  %650 = vmatpush1.bf16.msra.mxu0 %v598
  %651 = vmatprep.subr.bf16.mxu0 0
  %652 = vmatpush1.bf16.msra.mxu0 %v599
  %653 = vmatprep.subr.bf16.mxu0 0
  %654 = vmatpush1.bf16.msra.mxu0 %v600
  %655 = vmatprep.subr.bf16.mxu0 0
  %656 = vmatpush1.bf16.msra.mxu0 %v601
  %657 = vmatprep.subr.bf16.mxu0 0
  %658 = vmatpush1.bf16.msra.mxu0 %v602
  %659 = vmatprep.subr.bf16.mxu0 0
  %660 = vmatpush1.bf16.msra.mxu0 %v603
  %661 = vmatprep.subr.bf16.mxu0 0
  %662 = vmatpush1.bf16.msra.mxu0 %v604
  %663 = vmatprep.subr.bf16.mxu0 0
  %664 = vmatpush1.bf16.msra.mxu0 %v605
  %665 = vmatprep.subr.bf16.mxu0 0
  %666 = vmatpush1.bf16.msra.mxu0 %v606
  %667 = vmatprep.subr.bf16.mxu0 0
  %668 = vmatpush1.bf16.msra.mxu0 %v607
  %669 = vmatprep.subr.bf16.mxu0 0
  %670 = vmatpush1.bf16.msra.mxu0 %v608
  %671 = vmatprep.subr.bf16.mxu0 0
  %672 = vmatpush1.bf16.msra.mxu0 %v609
  %673 = vmatprep.subr.bf16.mxu0 0
  %674 = vmatpush1.bf16.msra.mxu0 %v610
  %675 = vmatprep.mubr.bf16.mxu0 %v482
  %676 = vmatmul.mubr.bf16.gmra.mrb[0].mxu0 %v481
  %v677 = vpop.f32.mrb[0].mxu0
  %v678 = vadd.f32 %v479, %v677
  %v679 = vpop.f32.mrb[0].mxu0
  %v680 = vpop.f32.mrb[0].mxu0
  %v681 = vadd.f32 %v479, %v680
  %v682 = vpop.f32.mrb[0].mxu0
  %683 = vmatprep.mubr.bf16.mxu0 %v484
  %684 = vmatmul.mubr.bf16.gmra.mrb[0].mxu0 %v483
  %v685 = vpop.f32.mrb[0].mxu0
  %v686 = vadd.f32 %v479, %v685
  %v687 = vpop.f32.mrb[0].mxu0
  %v688 = vpop.f32.mrb[0].mxu0
  %v689 = vadd.f32 %v479, %v688
  %v690 = vpop.f32.mrb[0].mxu0
  %691 = vmatprep.mubr.bf16.mxu0 %v486
  %692 = vmatmul.mubr.bf16.gmra.mrb[0].mxu0 %v485
  %v693 = vpop.f32.mrb[0].mxu0
  %v694 = vadd.f32 %v479, %v693
  %v695 = vpop.f32.mrb[0].mxu0
  %v696 = vpop.f32.mrb[0].mxu0
  %v697 = vadd.f32 %v479, %v696
  %v698 = vpop.f32.mrb[0].mxu0
  %699 = vmatprep.mubr.bf16.mxu0 %v488
  %700 = vmatmul.mubr.bf16.gmra.mrb[0].mxu0 %v487
  %v701 = vpop.f32.mrb[0].mxu0
  %v702 = vadd.f32 %v479, %v701
  %v703 = vpop.f32.mrb[0].mxu0
  %v704 = vpop.f32.mrb[0].mxu0
  %v705 = vadd.f32 %v479, %v704
  %v706 = vpop.f32.mrb[0].mxu0
  %707 = vdwg.mxu0
  %708 = vmatprep.subr.bf16.mxu0 0
  %709 = vmatpush1.bf16.msra.mxu0 %v611
  %710 = vmatprep.subr.bf16.mxu0 0
  %711 = vmatpush1.bf16.msra.mxu0 %v612
  %712 = vmatprep.subr.bf16.mxu0 0
  %713 = vmatpush1.bf16.msra.mxu0 %v613
  %714 = vmatprep.subr.bf16.mxu0 0
  %715 = vmatpush1.bf16.msra.mxu0 %v614
  %716 = vmatprep.subr.bf16.mxu0 0
  %717 = vmatpush1.bf16.msra.mxu0 %v615
  %718 = vmatprep.subr.bf16.mxu0 0
  %719 = vmatpush1.bf16.msra.mxu0 %v616
  %720 = vmatprep.subr.bf16.mxu0 0
  %721 = vmatpush1.bf16.msra.mxu0 %v617
  %722 = vmatprep.subr.bf16.mxu0 0
  %723 = vmatpush1.bf16.msra.mxu0 %v618
  %724 = vmatprep.subr.bf16.mxu0 0
  %725 = vmatpush1.bf16.msra.mxu0 0
  %726 = vmatprep.subr.bf16.mxu0 0
  %727 = vmatpush1.bf16.msra.mxu0 0
  %728 = vmatprep.subr.bf16.mxu0 0
  %729 = vmatpush1.bf16.msra.mxu0 0
  %730 = vmatprep.subr.bf16.mxu0 0
  %731 = vmatpush1.bf16.msra.mxu0 0
  %732 = vmatprep.subr.bf16.mxu0 0
  %733 = vmatpush1.bf16.msra.mxu0 0
  %734 = vmatprep.subr.bf16.mxu0 0
  %735 = vmatpush1.bf16.msra.mxu0 0
  %736 = vmatprep.subr.bf16.mxu0 0
  %737 = vmatpush1.bf16.msra.mxu0 0
  %738 = vmatprep.subr.bf16.mxu0 0
  %739 = vmatpush1.bf16.msra.mxu0 0
  %740 = vmatprep.mubr.bf16.mxu0 0
  %741 = vmatmul.mubr.bf16.gmra.mrb[0].mxu0 %v483
  %v742 = vpop.f32.mrb[0].mxu0
  %v743 = vadd.f32 %v678, %v742
  %v744 = vpop.f32.mrb[0].mxu0
  %v745 = vpop.f32.mrb[0].mxu0
  %v746 = vadd.f32 %v681, %v745
  %v747 = vpop.f32.mrb[0].mxu0
  %748 = vmatprep.mubr.bf16.mxu0 0
  %749 = vmatmul.mubr.bf16.gmra.mrb[0].mxu0 %v485
  %v750 = vpop.f32.mrb[0].mxu0
  %v751 = vadd.f32 %v686, %v750
  %v752 = vpop.f32.mrb[0].mxu0
  %v753 = vpop.f32.mrb[0].mxu0
  %v754 = vadd.f32 %v689, %v753
  %v755 = vpop.f32.mrb[0].mxu0
  %756 = vmatprep.mubr.bf16.mxu0 0
  %757 = vmatmul.mubr.bf16.gmra.mrb[0].mxu0 %v487
  %v758 = vpop.f32.mrb[0].mxu0
  %v759 = vadd.f32 %v694, %v758
  %v760 = vpop.f32.mrb[0].mxu0
  %v761 = vpop.f32.mrb[0].mxu0
  %v762 = vadd.f32 %v697, %v761
  %v763 = vpop.f32.mrb[0].mxu0
  %764 = vmatprep.mubr.bf16.mxu0 0
  %765 = vmatmul.mubr.bf16.gmra.mrb[0].mxu0 %v489
  %v766 = vpop.f32.mrb[0].mxu0
  %v767 = vadd.f32 %v702, %v766
  %v768 = vpop.f32.mrb[0].mxu0
  %v769 = vpop.f32.mrb[0].mxu0
  %v770 = vadd.f32 %v705, %v769
  %v771 = vpop.f32.mrb[0].mxu0
  %772 = vdwg.mxu0
  %v773 = vmax.f32 %v743, 0.0
  %v774 = vmax.f32 %v746, 0.0
  %v775 = vmax.f32 %v751, 0.0
  %v776 = vmax.f32 %v754, 0.0
  %v777 = vmax.f32 %v759, 0.0
  %v778 = vmax.f32 %v762, 0.0
  %v779 = vmax.f32 %v767, 0.0
  %v780 = vmax.f32 %v770, 0.0
  %v781 = vpack.c.bf16 %v774, %v773
  %v782 = vpack.c.bf16 %v776, %v775
  %v783 = vpack.c.bf16 %v778, %v777
  %v784 = vpack.c.bf16 %v780, %v779
  %v789 = vunpack.c.l.b16 %v781
  %v790 = vunpack.c.h.b16 %v781
  %v791 = vunpack.c.l.b16 %v782
  %v792 = vunpack.c.h.b16 %v782
  %v793 = vunpack.c.l.b16 %v783
  %v794 = vunpack.c.h.b16 %v783
  %v795 = vunpack.c.l.b16 %v784
  %v796 = vunpack.c.h.b16 %v784
  %v797 = vpack.c.b16 %v789, %v789
  %v798 = vpack.c.b16 %v790, %v790
  %v799 = vpack.c.b16 %v791, %v791
  %v800 = vpack.c.b16 %v792, %v792
  %v801 = vpack.c.b16 %v793, %v793
  %v802 = vpack.c.b16 %v794, %v794
  %v803 = vpack.c.b16 %v795, %v795
  %v804 = vpack.c.b16 %v796, %v796
  %813 = vst [vmem:[%s5] sm:$0xf] %v797
  %814 = vst [vmem:[%s5 + $0x4] sm:$0xf] %v798
  %815 = vst [vmem:[%s5 + $0x8] sm:$0xf] %v799
  %816 = vst [vmem:[%s5 + $0xc] sm:$0xf] %v800
  %817 = vst [vmem:[%s5 + $0x10] sm:$0xf] %v801
  %818 = vst [vmem:[%s5 + $0x14] sm:$0xf] %v802
  %819 = vst [vmem:[%s5 + $0x18] sm:$0xf] %v803
  %820 = vst [vmem:[%s5 + $0x1c] sm:$0xf] %v804
  // Predicated region
  $region22: #{forward.3} parent=0 // pred_check
    _
  $region23: #{forward.3} parent=0 // pred_check_branch
    %822 = sbr.rel (0) target = $region25
  $region24: #{forward.3} parent=0 // pred_region
    _
  $region25: #{forward.3} parent=0 // pred_fallthru
    _
  // Predicated region
  $region26: #{forward.3} parent=0 // pred_check
    _
  $region27: #{forward.3} parent=0 // pred_check_branch
    %824 = sbr.rel (0) target = $region29
  $region28: #{forward.3} parent=0 // pred_region
    _
  $region29: #{forward.3} parent=0 // pred_fallthru
    _

// kernel: forward.5
$region0: #{forward.5}
  #allocation0 [shape = 'u32[]', space=smem, size = 0x4, offset = 0x4, fixed_abs, tag = 'smem constant byte address 0x4 - core index']
  #allocation1 [shape = 'u32[144,128]{1,0:T(1,128)}', space=vmem, size = 0x12000, scoped, tag = 'internal scratch']
  #allocation2 [shape = 'f32[64,768]{1,0:T(8,128)}', space=vmem, size = 0x30000, scoped, tag = 'scratch operand']
  #allocation3 [shape = 'f32[1,1]{1,0:T(1,128)S(1)}', space=vmem, size = 0x200, scoped, tag = 'scoped memory for forward.5']
  %s0 = inlined_call_operand.vmem [shape: f32[64,256], index: 0, kind: input, shape index: {}]
  %s1 = inlined_call_operand.vmem [shape: f32[8,128], index: 1, kind: input, shape index: {}]
  %s2 = inlined_call_operand.vmem [shape: f32[8,128], index: 2, kind: input, shape index: {}]
  %s3 = inlined_call_operand.vmem [shape: bf16[256,768], index: 3, kind: input, shape index: {}]
  %s4 = inlined_call_operand.vmem [shape: f32[1,768], index: 4, kind: input, shape index: {}]
  %s5 = inlined_call_operand.hbm [shape: bf16[128,384], index: 5, kind: input, shape index: {}]
  %s6 = inlined_call_operand.vmem [shape: f32[1,384], index: 6, kind: input, shape index: {}]
  %s7 = inlined_call_operand.hbm [shape: bf16[128,384], index: 7, kind: input, shape index: {}]
  %s8 = inlined_call_operand.vmem [shape: f32[1,384], index: 8, kind: input, shape index: {}]
  %s9 = inlined_call_operand.vmem [shape: bf16[512,128], index: 9, kind: input, shape index: {}]
  %s10 = inlined_call_operand.vmem [shape: f32[1,128], index: 10, kind: input, shape index: {}]
  %s11 = inlined_call_operand.vmem [shape: f32[1,128], index: 11, kind: input, shape index: {}]
  %s12 = inlined_call_operand.<no memory space> [shape: f32[1,1], index: 12, kind: input, shape index: {}]
  %s13 = inlined_call_operand.vmem [shape: f32[8,1], index: 13, kind: output, shape index: {}]
  %s14 = sld [smem:[#allocation0]]
  $region70: #{forward.5} parent=0
    _
  %s16 = ssub.s32 1, %s14
  %s17 = scalar_select 0, %s16, %s14
  %v18 = vstv %s12
  %19 = vst [vmem:[#allocation3] sm:$0x1] %v18
  $region1: #{forward.5} parent=0
    #allocation4 [shape = 'u8[98304]{0}', space=vmem, size = 0x18000, scoped, tag = 'input window, operand 5, single buffered']
    #allocation5 [shape = 's32[1]{0}', space=sflag, size = 0x4, scoped, tag = 'scoped memory for forward.5']
    #allocation6 [shape = 'u8[98304]{0}', space=vmem, size = 0x18000, scoped, tag = 'input window, operand 7, single buffered']
    #allocation7 [shape = 's32[1]{0}', space=sflag, size = 0x4, scoped, tag = 'scoped memory for forward.5']
    %20 = vsyncpa [#allocation5], 0
    %21 = vsyncpa [#allocation7], 0
    // Predicated region
    $region2: #{forward.5} parent=1 // pred_check
      _
    $region3: #{forward.5} parent=1 // pred_check_branch
      %23 = sbr.rel (0) target = $region5
    $region4: #{forward.5} parent=1 // pred_region
      _
    $region5: #{forward.5} parent=1 // pred_fallthru
      _
    // Predicated region
    $region6: #{forward.5} parent=1 // pred_check
      _
    $region7: #{forward.5} parent=1 // pred_check_branch
      %25 = sbr.rel (0) target = $region9
    $region8: #{forward.5} parent=1 // pred_region
      _
    $region9: #{forward.5} parent=1 // pred_fallthru
      _
    // Predicated region
    $region10: #{forward.5} parent=1 // pred_check
      _
    $region11: #{forward.5} parent=1 // pred_check_branch
      %27 = sbr.rel (0) target = $region13
    $region12: #{forward.5} parent=1 // pred_region
      _
    $region13: #{forward.5} parent=1 // pred_fallthru
      _
    // Predicated region
    $region14: #{forward.5} parent=1 // pred_check
      _
    $region15: #{forward.5} parent=1 // pred_check_branch
      %29 = sbr.rel (0) target = $region17
    $region16: #{forward.5} parent=1 // pred_region
      _
    $region17: #{forward.5} parent=1 // pred_fallthru
      _
    // Predicated region
    $region18: #{forward.5} parent=1 // pred_check
      _
    $region19: #{forward.5} parent=1 // pred_check_branch
      %31 = sbr.rel (0) target = $region21
    $region20: #{forward.5} parent=1 // pred_region
      _
    $region21: #{forward.5} parent=1 // pred_fallthru
      _
    // Predicated region
    $region22: #{forward.5} parent=1 // pred_check
      _
    $region23: #{forward.5} parent=1 // pred_check_branch
      %33 = sbr.rel (0) target = $region25
    $region24: #{forward.5} parent=1 // pred_region
      %s35 = ssub.s32 3072, 3072
      %36 = vsyncadd [#allocation5], %s35
      %s37 = sshll.u32 [#allocation4], 4
      %s38 = int_to_ptr.vmem [resolvable:$true] %s37
      %43 = dma.hbm_to_vmem [thread:$0]  %s5, 3072, %s38, [#allocation5], 192, 192, 12
    $region25: #{forward.5} parent=1 // pred_fallthru
      _
    // Predicated region
    $region26: #{forward.5} parent=1 // pred_check
      _
    $region27: #{forward.5} parent=1 // pred_check_branch
      %45 = sbr.rel (0) target = $region29
    $region28: #{forward.5} parent=1 // pred_region
      _
    $region29: #{forward.5} parent=1 // pred_fallthru
      _
    // Predicated region
    $region30: #{forward.5} parent=1 // pred_check
      _
    $region31: #{forward.5} parent=1 // pred_check_branch
      %47 = sbr.rel (0) target = $region33
    $region32: #{forward.5} parent=1 // pred_region
      %s49 = ssub.s32 3072, 3072
      %50 = vsyncadd [#allocation7], %s49
      %s51 = sshll.u32 [#allocation6], 4
      %s52 = int_to_ptr.vmem [resolvable:$true] %s51
      %57 = dma.hbm_to_vmem [thread:$0]  %s7, 3072, %s52, [#allocation7], 192, 192, 12
    $region33: #{forward.5} parent=1 // pred_fallthru
      _
    // Predicated region
    $region34: #{forward.5} parent=1 // pred_check
      _
    $region35: #{forward.5} parent=1 // pred_check_branch
      %59 = sbr.rel (0) target = $region37
    $region36: #{forward.5} parent=1 // pred_region
      _
    $region37: #{forward.5} parent=1 // pred_fallthru
      _
    // Predicated region
    $region38: #{forward.5} parent=1 // pred_check
      _
    $region39: #{forward.5} parent=1 // pred_check_branch
      %61 = sbr.rel (0) target = $region41
    $region40: #{forward.5} parent=1 // pred_region
      _
    $region41: #{forward.5} parent=1 // pred_fallthru
      _
    // Predicated region
    $region42: #{forward.5} parent=1 // pred_check
      _
    $region43: #{forward.5} parent=1 // pred_check_branch
      %63 = sbr.rel (0) target = $region45
    $region44: #{forward.5} parent=1 // pred_region
      _
    $region45: #{forward.5} parent=1 // pred_fallthru
      _
    // Predicated region
    $region46: #{forward.5} parent=1 // pred_check
      _
    $region47: #{forward.5} parent=1 // pred_check_branch
      %65 = sbr.rel (0) target = $region49
    $region48: #{forward.5} parent=1 // pred_region
      _
    $region49: #{forward.5} parent=1 // pred_fallthru
      _
    // Predicated region
    $region50: #{forward.5} parent=1 // pred_check
      _
    $region51: #{forward.5} parent=1 // pred_check_branch
      %67 = sbr.rel (0) target = $region53
    $region52: #{forward.5} parent=1 // pred_region
      _
    $region53: #{forward.5} parent=1 // pred_fallthru
      _
    // Predicated region
    $region54: #{forward.5} parent=1 // pred_check
      _
    $region55: #{forward.5} parent=1 // pred_check_branch
      %69 = sbr.rel (0) target = $region57
    $region56: #{forward.5} parent=1 // pred_region
      %70 = dma.done [#allocation5], 3072
    $region57: #{forward.5} parent=1 // pred_fallthru
      _
    // Predicated region
    $region58: #{forward.5} parent=1 // pred_check
      _
    $region59: #{forward.5} parent=1 // pred_check_branch
      %72 = sbr.rel (0) target = $region61
    $region60: #{forward.5} parent=1 // pred_region
      %73 = dma.done [#allocation7], 3072
    $region61: #{forward.5} parent=1 // pred_fallthru
      _
    %v75 = vld [vmem:[%s0] sm:$0xff]
    %v76 = vld [vmem:[%s0 + $0x8] sm:$0xff]
    %v77 = vld [vmem:[%s0 + $0x10] sm:$0xff]
    %v78 = vld [vmem:[%s0 + $0x18] sm:$0xff]
    %v79 = vld [vmem:[%s0 + $0x20] sm:$0xff]
    %v80 = vld [vmem:[%s0 + $0x28] sm:$0xff]
    %v81 = vld [vmem:[%s0 + $0x30] sm:$0xff]
    %v82 = vld [vmem:[%s0 + $0x38] sm:$0xff]
    %v83 = vld [vmem:[%s0 + $0x40] sm:$0xff]
    %v84 = vld [vmem:[%s0 + $0x48] sm:$0xff]
    %v85 = vld [vmem:[%s0 + $0x50] sm:$0xff]
    %v86 = vld [vmem:[%s0 + $0x58] sm:$0xff]
    %v87 = vld [vmem:[%s0 + $0x60] sm:$0xff]
    %v88 = vld [vmem:[%s0 + $0x68] sm:$0xff]
    %v89 = vld [vmem:[%s0 + $0x70] sm:$0xff]
    %v90 = vld [vmem:[%s0 + $0x78] sm:$0xff]
    %v91 = vpack.c.bf16 %v77, %v75
    %v92 = vpack.c.bf16 %v78, %v76
    %v93 = vpack.c.bf16 %v81, %v79
    %v94 = vpack.c.bf16 %v82, %v80
    %v95 = vpack.c.bf16 %v85, %v83
    %v96 = vpack.c.bf16 %v86, %v84
    %v97 = vpack.c.bf16 %v89, %v87
    %v98 = vpack.c.bf16 %v90, %v88
    %v99 = vld [vmem:[%s3] sm:$0xff]
    %v100 = vld [vmem:[%s3 + $0x8] sm:$0xff]
    %v101 = vld [vmem:[%s3 + $0x10] sm:$0xff]
    %v102 = vld [vmem:[%s3 + $0x18] sm:$0xff]
    %v103 = vld [vmem:[%s3 + $0x20] sm:$0xff]
    %v104 = vld [vmem:[%s3 + $0x28] sm:$0xff]
    %v105 = vld [vmem:[%s3 + $0x30] sm:$0xff]
    %v106 = vld [vmem:[%s3 + $0x38] sm:$0xff]
    %v107 = vld [vmem:[%s3 + $0x40] sm:$0xff]
    %v108 = vld [vmem:[%s3 + $0x48] sm:$0xff]
    %v109 = vld [vmem:[%s3 + $0x50] sm:$0xff]
    %v110 = vld [vmem:[%s3 + $0x58] sm:$0xff]
    %v111 = vld [vmem:[%s3 + $0x60] sm:$0xff]
    %v112 = vld [vmem:[%s3 + $0x68] sm:$0xff]
    %v113 = vld [vmem:[%s3 + $0x70] sm:$0xff]
    %v114 = vld [vmem:[%s3 + $0x78] sm:$0xff]
    %v115 = vld [vmem:[%s3 + $0x80] sm:$0xff]
    %v116 = vld [vmem:[%s3 + $0x88] sm:$0xff]
    %v117 = vld [vmem:[%s3 + $0x90] sm:$0xff]
    %v118 = vld [vmem:[%s3 + $0x98] sm:$0xff]
    %v119 = vld [vmem:[%s3 + $0xa0] sm:$0xff]
    %v120 = vld [vmem:[%s3 + $0xa8] sm:$0xff]
    %v121 = vld [vmem:[%s3 + $0xb0] sm:$0xff]
    %v122 = vld [vmem:[%s3 + $0xb8] sm:$0xff]
    %v123 = vld [vmem:[%s3 + $0xc0] sm:$0xff]
    %v124 = vld [vmem:[%s3 + $0xc8] sm:$0xff]
    %v125 = vld [vmem:[%s3 + $0xd0] sm:$0xff]
    %v126 = vld [vmem:[%s3 + $0xd8] sm:$0xff]
    %v127 = vld [vmem:[%s3 + $0xe0] sm:$0xff]
    %v128 = vld [vmem:[%s3 + $0xe8] sm:$0xff]
    %v129 = vld [vmem:[%s3 + $0xf0] sm:$0xff]
    %v130 = vld [vmem:[%s3 + $0xf8] sm:$0xff]
    %v131 = vld [vmem:[%s3 + $0x100] sm:$0xff]
    %v132 = vld [vmem:[%s3 + $0x108] sm:$0xff]
    %v133 = vld [vmem:[%s3 + $0x110] sm:$0xff]
    %v134 = vld [vmem:[%s3 + $0x118] sm:$0xff]
    %v135 = vld [vmem:[%s3 + $0x120] sm:$0xff]
    %v136 = vld [vmem:[%s3 + $0x128] sm:$0xff]
    %v137 = vld [vmem:[%s3 + $0x130] sm:$0xff]
    %v138 = vld [vmem:[%s3 + $0x138] sm:$0xff]
    %v139 = vld [vmem:[%s3 + $0x140] sm:$0xff]
    %v140 = vld [vmem:[%s3 + $0x148] sm:$0xff]
    %v141 = vld [vmem:[%s3 + $0x150] sm:$0xff]
    %v142 = vld [vmem:[%s3 + $0x158] sm:$0xff]
    %v143 = vld [vmem:[%s3 + $0x160] sm:$0xff]
    %v144 = vld [vmem:[%s3 + $0x168] sm:$0xff]
    %v145 = vld [vmem:[%s3 + $0x170] sm:$0xff]
    %v146 = vld [vmem:[%s3 + $0x178] sm:$0xff]
    %v147 = vld [vmem:[%s3 + $0x180] sm:$0xff]
    %v148 = vld [vmem:[%s3 + $0x188] sm:$0xff]
    %v149 = vld [vmem:[%s3 + $0x190] sm:$0xff]
    %v150 = vld [vmem:[%s3 + $0x198] sm:$0xff]
    %v151 = vld [vmem:[%s3 + $0x1a0] sm:$0xff]
    %v152 = vld [vmem:[%s3 + $0x1a8] sm:$0xff]
    %v153 = vld [vmem:[%s3 + $0x1b0] sm:$0xff]
    %v154 = vld [vmem:[%s3 + $0x1b8] sm:$0xff]
    %v155 = vld [vmem:[%s3 + $0x1c0] sm:$0xff]
    %v156 = vld [vmem:[%s3 + $0x1c8] sm:$0xff]
    %v157 = vld [vmem:[%s3 + $0x1d0] sm:$0xff]
    %v158 = vld [vmem:[%s3 + $0x1d8] sm:$0xff]
    %v159 = vld [vmem:[%s3 + $0x1e0] sm:$0xff]
    %v160 = vld [vmem:[%s3 + $0x1e8] sm:$0xff]
    %v161 = vld [vmem:[%s3 + $0x1f0] sm:$0xff]
    %v162 = vld [vmem:[%s3 + $0x1f8] sm:$0xff]
    %v163 = vld [vmem:[%s3 + $0x200] sm:$0xff]
    %v164 = vld [vmem:[%s3 + $0x208] sm:$0xff]
    %v165 = vld [vmem:[%s3 + $0x210] sm:$0xff]
    %v166 = vld [vmem:[%s3 + $0x218] sm:$0xff]
    %v167 = vld [vmem:[%s3 + $0x220] sm:$0xff]
    %v168 = vld [vmem:[%s3 + $0x228] sm:$0xff]
    %v169 = vld [vmem:[%s3 + $0x230] sm:$0xff]
    %v170 = vld [vmem:[%s3 + $0x238] sm:$0xff]
    %v171 = vld [vmem:[%s3 + $0x240] sm:$0xff]
    %v172 = vld [vmem:[%s3 + $0x248] sm:$0xff]
    %v173 = vld [vmem:[%s3 + $0x250] sm:$0xff]
    %v174 = vld [vmem:[%s3 + $0x258] sm:$0xff]
    %v175 = vld [vmem:[%s3 + $0x260] sm:$0xff]
    %v176 = vld [vmem:[%s3 + $0x268] sm:$0xff]
    %v177 = vld [vmem:[%s3 + $0x270] sm:$0xff]
    %v178 = vld [vmem:[%s3 + $0x278] sm:$0xff]
    %v179 = vld [vmem:[%s3 + $0x280] sm:$0xff]
    %v180 = vld [vmem:[%s3 + $0x288] sm:$0xff]
    %v181 = vld [vmem:[%s3 + $0x290] sm:$0xff]
    %v182 = vld [vmem:[%s3 + $0x298] sm:$0xff]
    %v183 = vld [vmem:[%s3 + $0x2a0] sm:$0xff]
    %v184 = vld [vmem:[%s3 + $0x2a8] sm:$0xff]
    %v185 = vld [vmem:[%s3 + $0x2b0] sm:$0xff]
    %v186 = vld [vmem:[%s3 + $0x2b8] sm:$0xff]
    %v187 = vld [vmem:[%s3 + $0x2c0] sm:$0xff]
    %v188 = vld [vmem:[%s3 + $0x2c8] sm:$0xff]
    %v189 = vld [vmem:[%s3 + $0x2d0] sm:$0xff]
    %v190 = vld [vmem:[%s3 + $0x2d8] sm:$0xff]
    %v191 = vld [vmem:[%s3 + $0x2e0] sm:$0xff]
    %v192 = vld [vmem:[%s3 + $0x2e8] sm:$0xff]
    %v193 = vld [vmem:[%s3 + $0x2f0] sm:$0xff]
    %v194 = vld [vmem:[%s3 + $0x2f8] sm:$0xff]
    %v195 = vld [vmem:[%s4] sm:$0x3f]
    %v197 = vlaneseq
    %v198 = vshrl.u32 %v197, 7
    %v199 = vsub.s32 0, %v198
    %v200 = vrot.slane %v195, %v199
    %v201 = vlaneseq
    %v202 = vshrl.u32 %v201, 7
    %v203 = vsub.s32 1, %v202
    %v204 = vrot.slane %v195, %v203
    %v205 = vlaneseq
    %v206 = vshrl.u32 %v205, 7
    %v207 = vsub.s32 2, %v206
    %v208 = vrot.slane %v195, %v207
    %v209 = vlaneseq
    %v210 = vshrl.u32 %v209, 7
    %v211 = vsub.s32 3, %v210
    %v212 = vrot.slane %v195, %v211
    %v213 = vlaneseq
    %v214 = vshrl.u32 %v213, 7
    %v215 = vsub.s32 4, %v214
    %v216 = vrot.slane %v195, %v215
    %v217 = vlaneseq
    %v218 = vshrl.u32 %v217, 7
    %v219 = vsub.s32 5, %v218
    %v220 = vrot.slane %v195, %v219
    %v323 = vunpack.c.l.b16 %v99
    %v324 = vunpack.c.h.b16 %v99
    %v325 = vunpack.c.l.b16 %v100
    %v326 = vunpack.c.h.b16 %v100
    %v327 = vunpack.c.l.b16 %v101
    %v328 = vunpack.c.h.b16 %v101
    %v329 = vunpack.c.l.b16 %v102
    %v330 = vunpack.c.h.b16 %v102
    %v331 = vunpack.c.l.b16 %v103
    %v332 = vunpack.c.h.b16 %v103
    %v333 = vunpack.c.l.b16 %v104
    %v334 = vunpack.c.h.b16 %v104
    %v335 = vunpack.c.l.b16 %v105
    %v336 = vunpack.c.h.b16 %v105
    %v337 = vunpack.c.l.b16 %v106
    %v338 = vunpack.c.h.b16 %v106
    %v339 = vunpack.c.l.b16 %v107
    %v340 = vunpack.c.h.b16 %v107
    %v341 = vunpack.c.l.b16 %v108
    %v342 = vunpack.c.h.b16 %v108
    %v343 = vunpack.c.l.b16 %v109
    %v344 = vunpack.c.h.b16 %v109
    %v345 = vunpack.c.l.b16 %v110
    %v346 = vunpack.c.h.b16 %v110
    %v347 = vunpack.c.l.b16 %v111
    %v348 = vunpack.c.h.b16 %v111
    %v349 = vunpack.c.l.b16 %v112
    %v350 = vunpack.c.h.b16 %v112
    %v351 = vunpack.c.l.b16 %v113
    %v352 = vunpack.c.h.b16 %v113
    %v353 = vunpack.c.l.b16 %v114
    %v354 = vunpack.c.h.b16 %v114
    %v355 = vunpack.c.l.b16 %v115
    %v356 = vunpack.c.h.b16 %v115
    %v357 = vunpack.c.l.b16 %v116
    %v358 = vunpack.c.h.b16 %v116
    %v359 = vunpack.c.l.b16 %v117
    %v360 = vunpack.c.h.b16 %v117
    %v361 = vunpack.c.l.b16 %v118
    %v362 = vunpack.c.h.b16 %v118
    %v363 = vunpack.c.l.b16 %v119
    %v364 = vunpack.c.h.b16 %v119
    %v365 = vunpack.c.l.b16 %v120
    %v366 = vunpack.c.h.b16 %v120
    %v367 = vunpack.c.l.b16 %v121
    %v368 = vunpack.c.h.b16 %v121
    %v369 = vunpack.c.l.b16 %v122
    %v370 = vunpack.c.h.b16 %v122
    %v371 = vunpack.c.l.b16 %v123
    %v372 = vunpack.c.h.b16 %v123
    %v373 = vunpack.c.l.b16 %v124
    %v374 = vunpack.c.h.b16 %v124
    %v375 = vunpack.c.l.b16 %v125
    %v376 = vunpack.c.h.b16 %v125
    %v377 = vunpack.c.l.b16 %v126
    %v378 = vunpack.c.h.b16 %v126
    %v379 = vunpack.c.l.b16 %v127
    %v380 = vunpack.c.h.b16 %v127
    %v381 = vunpack.c.l.b16 %v128
    %v382 = vunpack.c.h.b16 %v128
    %v383 = vunpack.c.l.b16 %v129
    %v384 = vunpack.c.h.b16 %v129
    %v385 = vunpack.c.l.b16 %v130
    %v386 = vunpack.c.h.b16 %v130
    %v387 = vunpack.c.l.b16 %v131
    %v388 = vunpack.c.h.b16 %v131
    %v389 = vunpack.c.l.b16 %v132
    %v390 = vunpack.c.h.b16 %v132
    %v391 = vunpack.c.l.b16 %v133
    %v392 = vunpack.c.h.b16 %v133
    %v393 = vunpack.c.l.b16 %v134
    %v394 = vunpack.c.h.b16 %v134
    %v395 = vunpack.c.l.b16 %v135
    %v396 = vunpack.c.h.b16 %v135
    %v397 = vunpack.c.l.b16 %v136
    %v398 = vunpack.c.h.b16 %v136
    %v399 = vunpack.c.l.b16 %v137
    %v400 = vunpack.c.h.b16 %v137
    %v401 = vunpack.c.l.b16 %v138
    %v402 = vunpack.c.h.b16 %v138
    %v403 = vunpack.c.l.b16 %v139
    %v404 = vunpack.c.h.b16 %v139
    %v405 = vunpack.c.l.b16 %v140
    %v406 = vunpack.c.h.b16 %v140
    %v407 = vunpack.c.l.b16 %v141
    %v408 = vunpack.c.h.b16 %v141
    %v409 = vunpack.c.l.b16 %v142
    %v410 = vunpack.c.h.b16 %v142
    %v411 = vunpack.c.l.b16 %v143
    %v412 = vunpack.c.h.b16 %v143
    %v413 = vunpack.c.l.b16 %v144
    %v414 = vunpack.c.h.b16 %v144
    %v415 = vunpack.c.l.b16 %v145
    %v416 = vunpack.c.h.b16 %v145
    %v417 = vunpack.c.l.b16 %v146
    %v418 = vunpack.c.h.b16 %v146
    %v419 = vunpack.c.l.b16 %v147
    %v420 = vunpack.c.h.b16 %v147
    %v421 = vunpack.c.l.b16 %v148
    %v422 = vunpack.c.h.b16 %v148
    %v423 = vunpack.c.l.b16 %v149
    %v424 = vunpack.c.h.b16 %v149
    %v425 = vunpack.c.l.b16 %v150
    %v426 = vunpack.c.h.b16 %v150
    %v427 = vunpack.c.l.b16 %v151
    %v428 = vunpack.c.h.b16 %v151
    %v429 = vunpack.c.l.b16 %v152
    %v430 = vunpack.c.h.b16 %v152
    %v431 = vunpack.c.l.b16 %v153
    %v432 = vunpack.c.h.b16 %v153
    %v433 = vunpack.c.l.b16 %v154
    %v434 = vunpack.c.h.b16 %v154
    %v435 = vunpack.c.l.b16 %v155
    %v436 = vunpack.c.h.b16 %v155
    %v437 = vunpack.c.l.b16 %v156
    %v438 = vunpack.c.h.b16 %v156
    %v439 = vunpack.c.l.b16 %v157
    %v440 = vunpack.c.h.b16 %v157
    %v441 = vunpack.c.l.b16 %v158
    %v442 = vunpack.c.h.b16 %v158
    %v443 = vunpack.c.l.b16 %v159
    %v444 = vunpack.c.h.b16 %v159
    %v445 = vunpack.c.l.b16 %v160
    %v446 = vunpack.c.h.b16 %v160
    %v447 = vunpack.c.l.b16 %v161
    %v448 = vunpack.c.h.b16 %v161
    %v449 = vunpack.c.l.b16 %v162
    %v450 = vunpack.c.h.b16 %v162
    %v451 = vunpack.c.l.b16 %v163
    %v452 = vunpack.c.h.b16 %v163
    %v453 = vunpack.c.l.b16 %v164
    %v454 = vunpack.c.h.b16 %v164
    %v455 = vunpack.c.l.b16 %v165
    %v456 = vunpack.c.h.b16 %v165
    %v457 = vunpack.c.l.b16 %v166
    %v458 = vunpack.c.h.b16 %v166
    %v459 = vunpack.c.l.b16 %v167
    %v460 = vunpack.c.h.b16 %v167
    %v461 = vunpack.c.l.b16 %v168
    %v462 = vunpack.c.h.b16 %v168
    %v463 = vunpack.c.l.b16 %v169
    %v464 = vunpack.c.h.b16 %v169
    %v465 = vunpack.c.l.b16 %v170
    %v466 = vunpack.c.h.b16 %v170
    %v467 = vunpack.c.l.b16 %v171
    %v468 = vunpack.c.h.b16 %v171
    %v469 = vunpack.c.l.b16 %v172
    %v470 = vunpack.c.h.b16 %v172
    %v471 = vunpack.c.l.b16 %v173
    %v472 = vunpack.c.h.b16 %v173
    %v473 = vunpack.c.l.b16 %v174
    %v474 = vunpack.c.h.b16 %v174
    %v475 = vunpack.c.l.b16 %v175
    %v476 = vunpack.c.h.b16 %v175
    %v477 = vunpack.c.l.b16 %v176
    %v478 = vunpack.c.h.b16 %v176
    %v479 = vunpack.c.l.b16 %v177
    %v480 = vunpack.c.h.b16 %v177
    %v481 = vunpack.c.l.b16 %v178
    %v482 = vunpack.c.h.b16 %v178
    %v483 = vunpack.c.l.b16 %v179
    %v484 = vunpack.c.h.b16 %v179
    %v485 = vunpack.c.l.b16 %v180
    %v486 = vunpack.c.h.b16 %v180
    %v487 = vunpack.c.l.b16 %v181
    %v488 = vunpack.c.h.b16 %v181
    %v489 = vunpack.c.l.b16 %v182
    %v490 = vunpack.c.h.b16 %v182
    %v491 = vunpack.c.l.b16 %v183
    %v492 = vunpack.c.h.b16 %v183
    %v493 = vunpack.c.l.b16 %v184
    %v494 = vunpack.c.h.b16 %v184
    %v495 = vunpack.c.l.b16 %v185
    %v496 = vunpack.c.h.b16 %v185
    %v497 = vunpack.c.l.b16 %v186
    %v498 = vunpack.c.h.b16 %v186
    %v499 = vunpack.c.l.b16 %v187
    %v500 = vunpack.c.h.b16 %v187
    %v501 = vunpack.c.l.b16 %v188
    %v502 = vunpack.c.h.b16 %v188
    %v503 = vunpack.c.l.b16 %v189
    %v504 = vunpack.c.h.b16 %v189
    %v505 = vunpack.c.l.b16 %v190
    %v506 = vunpack.c.h.b16 %v190
    %v507 = vunpack.c.l.b16 %v191
    %v508 = vunpack.c.h.b16 %v191
    %v509 = vunpack.c.l.b16 %v192
    %v510 = vunpack.c.h.b16 %v192
    %v511 = vunpack.c.l.b16 %v193
    %v512 = vunpack.c.h.b16 %v193
    %v513 = vunpack.c.l.b16 %v194
    %v514 = vunpack.c.h.b16 %v194
    %v515 = vpack.c.b16 %v329, %v323
    %v516 = vpack.c.b16 %v330, %v324
    %v517 = vpack.c.b16 %v331, %v325
    %v518 = vpack.c.b16 %v332, %v326
    %v519 = vpack.c.b16 %v333, %v327
    %v520 = vpack.c.b16 %v334, %v328
    %v521 = vpack.c.b16 %v341, %v335
    %v522 = vpack.c.b16 %v342, %v336
    %v523 = vpack.c.b16 %v343, %v337
    %v524 = vpack.c.b16 %v344, %v338
    %v525 = vpack.c.b16 %v345, %v339
    %v526 = vpack.c.b16 %v346, %v340
    %v527 = vpack.c.b16 %v353, %v347
    %v528 = vpack.c.b16 %v354, %v348
    %v529 = vpack.c.b16 %v355, %v349
    %v530 = vpack.c.b16 %v356, %v350
    %v531 = vpack.c.b16 %v357, %v351
    %v532 = vpack.c.b16 %v358, %v352
    %v533 = vpack.c.b16 %v365, %v359
    %v534 = vpack.c.b16 %v366, %v360
    %v535 = vpack.c.b16 %v367, %v361
    %v536 = vpack.c.b16 %v368, %v362
    %v537 = vpack.c.b16 %v369, %v363
    %v538 = vpack.c.b16 %v370, %v364
    %v539 = vpack.c.b16 %v377, %v371
    %v540 = vpack.c.b16 %v378, %v372
    %v541 = vpack.c.b16 %v379, %v373
    %v542 = vpack.c.b16 %v380, %v374
    %v543 = vpack.c.b16 %v381, %v375
    %v544 = vpack.c.b16 %v382, %v376
    %v545 = vpack.c.b16 %v389, %v383
    %v546 = vpack.c.b16 %v390, %v384
    %v547 = vpack.c.b16 %v391, %v385
    %v548 = vpack.c.b16 %v392, %v386
    %v549 = vpack.c.b16 %v393, %v387
    %v550 = vpack.c.b16 %v394, %v388
    %v551 = vpack.c.b16 %v401, %v395
    %v552 = vpack.c.b16 %v402, %v396
    %v553 = vpack.c.b16 %v403, %v397
    %v554 = vpack.c.b16 %v404, %v398
    %v555 = vpack.c.b16 %v405, %v399
    %v556 = vpack.c.b16 %v406, %v400
    %v557 = vpack.c.b16 %v413, %v407
    %v558 = vpack.c.b16 %v414, %v408
    %v559 = vpack.c.b16 %v415, %v409
    %v560 = vpack.c.b16 %v416, %v410
    %v561 = vpack.c.b16 %v417, %v411
    %v562 = vpack.c.b16 %v418, %v412
    %v563 = vpack.c.b16 %v425, %v419
    %v564 = vpack.c.b16 %v426, %v420
    %v565 = vpack.c.b16 %v427, %v421
    %v566 = vpack.c.b16 %v428, %v422
    %v567 = vpack.c.b16 %v429, %v423
    %v568 = vpack.c.b16 %v430, %v424
    %v569 = vpack.c.b16 %v437, %v431
    %v570 = vpack.c.b16 %v438, %v432
    %v571 = vpack.c.b16 %v439, %v433
    %v572 = vpack.c.b16 %v440, %v434
    %v573 = vpack.c.b16 %v441, %v435
    %v574 = vpack.c.b16 %v442, %v436
    %v575 = vpack.c.b16 %v449, %v443
    %v576 = vpack.c.b16 %v450, %v444
    %v577 = vpack.c.b16 %v451, %v445
    %v578 = vpack.c.b16 %v452, %v446
    %v579 = vpack.c.b16 %v453, %v447
    %v580 = vpack.c.b16 %v454, %v448
    %v581 = vpack.c.b16 %v461, %v455
    %v582 = vpack.c.b16 %v462, %v456
    %v583 = vpack.c.b16 %v463, %v457
    %v584 = vpack.c.b16 %v464, %v458
    %v585 = vpack.c.b16 %v465, %v459
    %v586 = vpack.c.b16 %v466, %v460
    %v587 = vpack.c.b16 %v473, %v467
    %v588 = vpack.c.b16 %v474, %v468
    %v589 = vpack.c.b16 %v475, %v469
    %v590 = vpack.c.b16 %v476, %v470
    %v591 = vpack.c.b16 %v477, %v471
    %v592 = vpack.c.b16 %v478, %v472
    %v593 = vpack.c.b16 %v485, %v479
    %v594 = vpack.c.b16 %v486, %v480
    %v595 = vpack.c.b16 %v487, %v481
    %v596 = vpack.c.b16 %v488, %v482
    %v597 = vpack.c.b16 %v489, %v483
    %v598 = vpack.c.b16 %v490, %v484
    %v599 = vpack.c.b16 %v497, %v491
    %v600 = vpack.c.b16 %v498, %v492
    %v601 = vpack.c.b16 %v499, %v493
    %v602 = vpack.c.b16 %v500, %v494
    %v603 = vpack.c.b16 %v501, %v495
    %v604 = vpack.c.b16 %v502, %v496
    %v605 = vpack.c.b16 %v509, %v503
    %v606 = vpack.c.b16 %v510, %v504
    %v607 = vpack.c.b16 %v511, %v505
    %v608 = vpack.c.b16 %v512, %v506
    %v609 = vpack.c.b16 %v513, %v507
    %v610 = vpack.c.b16 %v514, %v508
    %707 = vmatprep.subr.bf16.mxu0 %v516
    %708 = vmatpush1.bf16.msra.mxu0 %v515
    %709 = vmatprep.subr.bf16.mxu0 %v522
    %710 = vmatpush1.bf16.msra.mxu0 %v521
    %711 = vmatprep.subr.bf16.mxu0 %v528
    %712 = vmatpush1.bf16.msra.mxu0 %v527
    %713 = vmatprep.subr.bf16.mxu0 %v534
    %714 = vmatpush1.bf16.msra.mxu0 %v533
    %715 = vmatprep.subr.bf16.mxu0 %v540
    %716 = vmatpush1.bf16.msra.mxu0 %v539
    %717 = vmatprep.subr.bf16.mxu0 %v546
    %718 = vmatpush1.bf16.msra.mxu0 %v545
    %719 = vmatprep.subr.bf16.mxu0 %v552
    %720 = vmatpush1.bf16.msra.mxu0 %v551
    %721 = vmatprep.subr.bf16.mxu0 %v558
    %722 = vmatpush1.bf16.msra.mxu0 %v557
    %723 = vmatprep.subr.bf16.mxu0 %v564
    %724 = vmatpush1.bf16.msra.mxu0 %v563
    %725 = vmatprep.subr.bf16.mxu0 %v570
    %726 = vmatpush1.bf16.msra.mxu0 %v569
    %727 = vmatprep.subr.bf16.mxu0 %v576
    %728 = vmatpush1.bf16.msra.mxu0 %v575
    %729 = vmatprep.subr.bf16.mxu0 %v582
    %730 = vmatpush1.bf16.msra.mxu0 %v581
    %731 = vmatprep.subr.bf16.mxu0 %v588
    %732 = vmatpush1.bf16.msra.mxu0 %v587
    %733 = vmatprep.subr.bf16.mxu0 %v594
    %734 = vmatpush1.bf16.msra.mxu0 %v593
    %735 = vmatprep.subr.bf16.mxu0 %v600
    %736 = vmatpush1.bf16.msra.mxu0 %v599
    %737 = vmatprep.subr.bf16.mxu0 %v606
    %738 = vmatpush1.bf16.msra.mxu0 %v605
    %739 = vmatprep.mubr.bf16.mxu0 %v92
    %740 = vmatmul.mubr.bf16.gmra.mrb[0].mxu0 %v91
    %v741 = vpop.f32.mrb[0].mxu0
    %v742 = vadd.f32 %v200, %v741
    %v743 = vpop.f32.mrb[0].mxu0
    %v744 = vadd.f32 %v204, %v743
    %v745 = vpop.f32.mrb[0].mxu0
    %v746 = vadd.f32 %v200, %v745
    %v747 = vpop.f32.mrb[0].mxu0
    %v748 = vadd.f32 %v204, %v747
    %749 = vmatprep.mubr.bf16.mxu0 %v94
    %750 = vmatmul.mubr.bf16.gmra.mrb[0].mxu0 %v93
    %v751 = vpop.f32.mrb[0].mxu0
    %v752 = vadd.f32 %v200, %v751
    %v753 = vpop.f32.mrb[0].mxu0
    %v754 = vadd.f32 %v204, %v753
    %v755 = vpop.f32.mrb[0].mxu0
    %v756 = vadd.f32 %v200, %v755
    %v757 = vpop.f32.mrb[0].mxu0
    %v758 = vadd.f32 %v204, %v757
    %759 = vmatprep.mubr.bf16.mxu0 %v96
    %760 = vmatmul.mubr.bf16.gmra.mrb[0].mxu0 %v95
    %v761 = vpop.f32.mrb[0].mxu0
    %v762 = vadd.f32 %v200, %v761
    %v763 = vpop.f32.mrb[0].mxu0
    %v764 = vadd.f32 %v204, %v763
    %v765 = vpop.f32.mrb[0].mxu0
    %v766 = vadd.f32 %v200, %v765
    %v767 = vpop.f32.mrb[0].mxu0
    %v768 = vadd.f32 %v204, %v767
    %769 = vmatprep.mubr.bf16.mxu0 %v98
    %770 = vmatmul.mubr.bf16.gmra.mrb[0].mxu0 %v97
    %v771 = vpop.f32.mrb[0].mxu0
    %v772 = vadd.f32 %v200, %v771
    %v773 = vpop.f32.mrb[0].mxu0
    %v774 = vadd.f32 %v204, %v773
    %v775 = vpop.f32.mrb[0].mxu0
    %v776 = vadd.f32 %v200, %v775
    %v777 = vpop.f32.mrb[0].mxu0
    %v778 = vadd.f32 %v204, %v777
    %779 = vdwg.mxu0
    %780 = vmatprep.subr.bf16.mxu0 %v518
    %781 = vmatpush1.bf16.msra.mxu0 %v517
    %782 = vmatprep.subr.bf16.mxu0 %v524
    %783 = vmatpush1.bf16.msra.mxu0 %v523
    %784 = vmatprep.subr.bf16.mxu0 %v530
    %785 = vmatpush1.bf16.msra.mxu0 %v529
    %786 = vmatprep.subr.bf16.mxu0 %v536
    %787 = vmatpush1.bf16.msra.mxu0 %v535
    %788 = vmatprep.subr.bf16.mxu0 %v542
    %789 = vmatpush1.bf16.msra.mxu0 %v541
    %790 = vmatprep.subr.bf16.mxu0 %v548
    %791 = vmatpush1.bf16.msra.mxu0 %v547
    %792 = vmatprep.subr.bf16.mxu0 %v554
    %793 = vmatpush1.bf16.msra.mxu0 %v553
    %794 = vmatprep.subr.bf16.mxu0 %v560
    %795 = vmatpush1.bf16.msra.mxu0 %v559
    %796 = vmatprep.subr.bf16.mxu0 %v566
    %797 = vmatpush1.bf16.msra.mxu0 %v565
    %798 = vmatprep.subr.bf16.mxu0 %v572
    %799 = vmatpush1.bf16.msra.mxu0 %v571
    %800 = vmatprep.subr.bf16.mxu0 %v578
    %801 = vmatpush1.bf16.msra.mxu0 %v577
    %802 = vmatprep.subr.bf16.mxu0 %v584
    %803 = vmatpush1.bf16.msra.mxu0 %v583
    %804 = vmatprep.subr.bf16.mxu0 %v590
    %805 = vmatpush1.bf16.msra.mxu0 %v589
    %806 = vmatprep.subr.bf16.mxu0 %v596
    %807 = vmatpush1.bf16.msra.mxu0 %v595
    %808 = vmatprep.subr.bf16.mxu0 %v602
    %809 = vmatpush1.bf16.msra.mxu0 %v601
    %810 = vmatprep.subr.bf16.mxu0 %v608
    %811 = vmatpush1.bf16.msra.mxu0 %v607
    %812 = vmatprep.mubr.bf16.mxu0 %v92
    %813 = vmatmul.mubr.bf16.gmra.mrb[0].mxu0 %v91
    %v814 = vpop.f32.mrb[0].mxu0
    %v815 = vadd.f32 %v208, %v814
    %v816 = vpop.f32.mrb[0].mxu0
    %v817 = vadd.f32 %v212, %v816
    %v818 = vpop.f32.mrb[0].mxu0
    %v819 = vadd.f32 %v208, %v818
    %v820 = vpop.f32.mrb[0].mxu0
    %v821 = vadd.f32 %v212, %v820
    %822 = vmatprep.mubr.bf16.mxu0 %v94
    %823 = vmatmul.mubr.bf16.gmra.mrb[0].mxu0 %v93
    %v824 = vpop.f32.mrb[0].mxu0
    %v825 = vadd.f32 %v208, %v824
    %v826 = vpop.f32.mrb[0].mxu0
    %v827 = vadd.f32 %v212, %v826
    %v828 = vpop.f32.mrb[0].mxu0
    %v829 = vadd.f32 %v208, %v828
    %v830 = vpop.f32.mrb[0].mxu0
    %v831 = vadd.f32 %v212, %v830
    %832 = vmatprep.mubr.bf16.mxu0 %v96
    %833 = vmatmul.mubr.bf16.gmra.mrb[0].mxu0 %v95
    %v834 = vpop.f32.mrb[0].mxu0
    %v835 = vadd.f32 %v208, %v834
    %v836 = vpop.f32.mrb[0].mxu0
    %v837 = vadd.f32 %v212, %v836
    %v838 = vpop.f32.mrb[0].mxu0
    %v839 = vadd.f32 %v208, %v838
    %v840 = vpop.f32.mrb[0].mxu0
    %v841 = vadd.f32 %v212, %v840
    %842 = vmatprep.mubr.bf16.mxu0 %v98
    %843 = vmatmul.mubr.bf16.gmra.mrb[0].mxu0 %v97
    %v844 = vpop.f32.mrb[0].mxu0
    %v845 = vadd.f32 %v208, %v844
    %v846 = vpop.f32.mrb[0].mxu0
    %v847 = vadd.f32 %v212, %v846
    %v848 = vpop.f32.mrb[0].mxu0
    %v849 = vadd.f32 %v208, %v848
    %v850 = vpop.f32.mrb[0].mxu0
    %v851 = vadd.f32 %v212, %v850
    %852 = vdwg.mxu0
    %853 = vmatprep.subr.bf16.mxu0 %v520
    %854 = vmatpush1.bf16.msra.mxu0 %v519
    %855 = vmatprep.subr.bf16.mxu0 %v526
    %856 = vmatpush1.bf16.msra.mxu0 %v525
    %857 = vmatprep.subr.bf16.mxu0 %v532
    %858 = vmatpush1.bf16.msra.mxu0 %v531
    %859 = vmatprep.subr.bf16.mxu0 %v538
    %860 = vmatpush1.bf16.msra.mxu0 %v537
    %861 = vmatprep.subr.bf16.mxu0 %v544
    %862 = vmatpush1.bf16.msra.mxu0 %v543
    %863 = vmatprep.subr.bf16.mxu0 %v550
    %864 = vmatpush1.bf16.msra.mxu0 %v549
    %865 = vmatprep.subr.bf16.mxu0 %v556
    %866 = vmatpush1.bf16.msra.mxu0 %v555
    %867 = vmatprep.subr.bf16.mxu0 %v562
    %868 = vmatpush1.bf16.msra.mxu0 %v561
    %869 = vmatprep.subr.bf16.mxu0 %v568
    %870 = vmatpush1.bf16.msra.mxu0 %v567
    %871 = vmatprep.subr.bf16.mxu0 %v574
    %872 = vmatpush1.bf16.msra.mxu0 %v573
    %873 = vmatprep.subr.bf16.mxu0 %v580
    %874 = vmatpush1.bf16.msra.mxu0 %v579
    %875 = vmatprep.subr.bf16.mxu0 %v586
    %876 = vmatpush1.bf16.msra.mxu0 %v585
    %877 = vmatprep.subr.bf16.mxu0 %v592
    %878 = vmatpush1.bf16.msra.mxu0 %v591
    %879 = vmatprep.subr.bf16.mxu0 %v598
    %880 = vmatpush1.bf16.msra.mxu0 %v597
    %881 = vmatprep.subr.bf16.mxu0 %v604
    %882 = vmatpush1.bf16.msra.mxu0 %v603
    %883 = vmatprep.subr.bf16.mxu0 %v610
    %884 = vmatpush1.bf16.msra.mxu0 %v609
    %885 = vmatprep.mubr.bf16.mxu0 %v92
    %886 = vmatmul.mubr.bf16.gmra.mrb[0].mxu0 %v91
    %v887 = vpop.f32.mrb[0].mxu0
    %v888 = vadd.f32 %v216, %v887
    %v889 = vpop.f32.mrb[0].mxu0
    %v890 = vadd.f32 %v220, %v889
    %v891 = vpop.f32.mrb[0].mxu0
    %v892 = vadd.f32 %v216, %v891
    %v893 = vpop.f32.mrb[0].mxu0
    %v894 = vadd.f32 %v220, %v893
    %895 = vmatprep.mubr.bf16.mxu0 %v94
    %896 = vmatmul.mubr.bf16.gmra.mrb[0].mxu0 %v93
    %v897 = vpop.f32.mrb[0].mxu0
    %v898 = vadd.f32 %v216, %v897
    %v899 = vpop.f32.mrb[0].mxu0
    %v900 = vadd.f32 %v220, %v899
    %v901 = vpop.f32.mrb[0].mxu0
    %v902 = vadd.f32 %v216, %v901
    %v903 = vpop.f32.mrb[0].mxu0
    %v904 = vadd.f32 %v220, %v903
    %905 = vmatprep.mubr.bf16.mxu0 %v96
    %906 = vmatmul.mubr.bf16.gmra.mrb[0].mxu0 %v95
    %v907 = vpop.f32.mrb[0].mxu0
    %v908 = vadd.f32 %v216, %v907
    %v909 = vpop.f32.mrb[0].mxu0
    %v910 = vadd.f32 %v220, %v909
    %v911 = vpop.f32.mrb[0].mxu0
    %v912 = vadd.f32 %v216, %v911
    %v913 = vpop.f32.mrb[0].mxu0
    %v914 = vadd.f32 %v220, %v913
    %915 = vmatprep.mubr.bf16.mxu0 %v98
    %916 = vmatmul.mubr.bf16.gmra.mrb[0].mxu0 %v97
    %v917 = vpop.f32.mrb[0].mxu0
    %v918 = vadd.f32 %v216, %v917
    %v919 = vpop.f32.mrb[0].mxu0
    %v920 = vadd.f32 %v220, %v919
    %v921 = vpop.f32.mrb[0].mxu0
    %v922 = vadd.f32 %v216, %v921
    %v923 = vpop.f32.mrb[0].mxu0
    %v924 = vadd.f32 %v220, %v923
    %925 = vdwg.mxu0
    %926 = vst [vmem:[#allocation2] sm:$0xff] %v742
    %927 = vst [vmem:[#allocation2 + $0x8] sm:$0xff] %v744
    %928 = vst [vmem:[#allocation2 + $0x10] sm:$0xff] %v815
    %929 = vst [vmem:[#allocation2 + $0x18] sm:$0xff] %v817
    %930 = vst [vmem:[#allocation2 + $0x20] sm:$0xff] %v888
    %931 = vst [vmem:[#allocation2 + $0x28] sm:$0xff] %v890
    %932 = vst [vmem:[#allocation2 + $0x30] sm:$0xff] %v746
    %933 = vst [vmem:[#allocation2 + $0x38] sm:$0xff] %v748
    %934 = vst [vmem:[#allocation2 + $0x40] sm:$0xff] %v819
    %935 = vst [vmem:[#allocation2 + $0x48] sm:$0xff] %v821
    %936 = vst [vmem:[#allocation2 + $0x50] sm:$0xff] %v892
    %937 = vst [vmem:[#allocation2 + $0x58] sm:$0xff] %v894
    %938 = vst [vmem:[#allocation2 + $0x60] sm:$0xff] %v752
    %939 = vst [vmem:[#allocation2 + $0x68] sm:$0xff] %v754
    %940 = vst [vmem:[#allocation2 + $0x70] sm:$0xff] %v825
    %941 = vst [vmem:[#allocation2 + $0x78] sm:$0xff] %v827
    %942 = vst [vmem:[#allocation2 + $0x80] sm:$0xff] %v898
    %943 = vst [vmem:[#allocation2 + $0x88] sm:$0xff] %v900
    %944 = vst [vmem:[#allocation2 + $0x90] sm:$0xff] %v756
    %945 = vst [vmem:[#allocation2 + $0x98] sm:$0xff] %v758
    %946 = vst [vmem:[#allocation2 + $0xa0] sm:$0xff] %v829
    %947 = vst [vmem:[#allocation2 + $0xa8] sm:$0xff] %v831
    %948 = vst [vmem:[#allocation2 + $0xb0] sm:$0xff] %v902
    %949 = vst [vmem:[#allocation2 + $0xb8] sm:$0xff] %v904
    %950 = vst [vmem:[#allocation2 + $0xc0] sm:$0xff] %v762
    %951 = vst [vmem:[#allocation2 + $0xc8] sm:$0xff] %v764
    %952 = vst [vmem:[#allocation2 + $0xd0] sm:$0xff] %v835
    %953 = vst [vmem:[#allocation2 + $0xd8] sm:$0xff] %v837
    %954 = vst [vmem:[#allocation2 + $0xe0] sm:$0xff] %v908
    %955 = vst [vmem:[#allocation2 + $0xe8] sm:$0xff] %v910
    %956 = vst [vmem:[#allocation2 + $0xf0] sm:$0xff] %v766
    %957 = vst [vmem:[#allocation2 + $0xf8] sm:$0xff] %v768
    %958 = vst [vmem:[#allocation2 + $0x100] sm:$0xff] %v839
    %959 = vst [vmem:[#allocation2 + $0x108] sm:$0xff] %v841
    %960 = vst [vmem:[#allocation2 + $0x110] sm:$0xff] %v912
    %961 = vst [vmem:[#allocation2 + $0x118] sm:$0xff] %v914
    %962 = vst [vmem:[#allocation2 + $0x120] sm:$0xff] %v772
    %963 = vst [vmem:[#allocation2 + $0x128] sm:$0xff] %v774
    %964 = vst [vmem:[#allocation2 + $0x130] sm:$0xff] %v845
    %965 = vst [vmem:[#allocation2 + $0x138] sm:$0xff] %v847
    %966 = vst [vmem:[#allocation2 + $0x140] sm:$0xff] %v918
    %967 = vst [vmem:[#allocation2 + $0x148] sm:$0xff] %v920
    %968 = vst [vmem:[#allocation2 + $0x150] sm:$0xff] %v776
    %969 = vst [vmem:[#allocation2 + $0x158] sm:$0xff] %v778
    %970 = vst [vmem:[#allocation2 + $0x160] sm:$0xff] %v849
    %971 = vst [vmem:[#allocation2 + $0x168] sm:$0xff] %v851
    %972 = vst [vmem:[#allocation2 + $0x170] sm:$0xff] %v922
    %973 = vst [vmem:[#allocation2 + $0x178] sm:$0xff] %v924
    %v974 = vld [vmem:[#allocation4] sm:$0xff]
    %v975 = vld [vmem:[#allocation4 + $0x8] sm:$0xf]
    %v976 = vld [vmem:[#allocation4 + $0xc] sm:$0xff]
    %v977 = vld [vmem:[#allocation4 + $0x14] sm:$0xf]
    %v978 = vld [vmem:[#allocation4 + $0x18] sm:$0xff]
    %v979 = vld [vmem:[#allocation4 + $0x20] sm:$0xf]
    %v980 = vld [vmem:[#allocation4 + $0x24] sm:$0xff]
    %v981 = vld [vmem:[#allocation4 + $0x2c] sm:$0xf]
    %v982 = vld [vmem:[#allocation4 + $0x30] sm:$0xff]
    %v983 = vld [vmem:[#allocation4 + $0x38] sm:$0xf]
    %v984 = vld [vmem:[#allocation4 + $0x3c] sm:$0xff]
    %v985 = vld [vmem:[#allocation4 + $0x44] sm:$0xf]
    %v986 = vld [vmem:[#allocation4 + $0x48] sm:$0xff]
    %v987 = vld [vmem:[#allocation4 + $0x50] sm:$0xf]
    %v988 = vld [vmem:[#allocation4 + $0x54] sm:$0xff]
    %v989 = vld [vmem:[#allocation4 + $0x5c] sm:$0xf]
    %v990 = vld [vmem:[#allocation4 + $0x60] sm:$0xff]
    %v991 = vld [vmem:[#allocation4 + $0x68] sm:$0xf]
    %v992 = vld [vmem:[#allocation4 + $0x6c] sm:$0xff]
    %v993 = vld [vmem:[#allocation4 + $0x74] sm:$0xf]
    %v994 = vld [vmem:[#allocation4 + $0x78] sm:$0xff]
    %v995 = vld [vmem:[#allocation4 + $0x80] sm:$0xf]
    %v996 = vld [vmem:[#allocation4 + $0x84] sm:$0xff]
    %v997 = vld [vmem:[#allocation4 + $0x8c] sm:$0xf]
    %v998 = vld [vmem:[#allocation4 + $0x90] sm:$0xff]
    %v999 = vld [vmem:[#allocation4 + $0x98] sm:$0xf]
    %v1000 = vld [vmem:[#allocation4 + $0x9c] sm:$0xff]
    %v1001 = vld [vmem:[#allocation4 + $0xa4] sm:$0xf]
    %v1002 = vld [vmem:[#allocation4 + $0xa8] sm:$0xff]
    %v1003 = vld [vmem:[#allocation4 + $0xb0] sm:$0xf]
    %v1004 = vld [vmem:[#allocation4 + $0xb4] sm:$0xff]
    %v1005 = vld [vmem:[#allocation4 + $0xbc] sm:$0xf]
    %v1006 = vld [vmem:[#allocation6] sm:$0xff]
    %v1007 = vld [vmem:[#allocation6 + $0x8] sm:$0xf]
    %v1008 = vld [vmem:[#allocation6 + $0xc] sm:$0xff]
    %v1009 = vld [vmem:[#allocation6 + $0x14] sm:$0xf]
    %v1010 = vld [vmem:[#allocation6 + $0x18] sm:$0xff]
    %v1011 = vld [vmem:[#allocation6 + $0x20] sm:$0xf]
    %v1012 = vld [vmem:[#allocation6 + $0x24] sm:$0xff]
    %v1013 = vld [vmem:[#allocation6 + $0x2c] sm:$0xf]
    %v1014 = vld [vmem:[#allocation6 + $0x30] sm:$0xff]
    %v1015 = vld [vmem:[#allocation6 + $0x38] sm:$0xf]
    %v1016 = vld [vmem:[#allocation6 + $0x3c] sm:$0xff]
    %v1017 = vld [vmem:[#allocation6 + $0x44] sm:$0xf]
    %v1018 = vld [vmem:[#allocation6 + $0x48] sm:$0xff]
    %v1019 = vld [vmem:[#allocation6 + $0x50] sm:$0xf]
    %v1020 = vld [vmem:[#allocation6 + $0x54] sm:$0xff]
    %v1021 = vld [vmem:[#allocation6 + $0x5c] sm:$0xf]
    %v1022 = vld [vmem:[#allocation6 + $0x60] sm:$0xff]
    %v1023 = vld [vmem:[#allocation6 + $0x68] sm:$0xf]
    %v1024 = vld [vmem:[#allocation6 + $0x6c] sm:$0xff]
    %v1025 = vld [vmem:[#allocation6 + $0x74] sm:$0xf]
    %v1026 = vld [vmem:[#allocation6 + $0x78] sm:$0xff]
    %v1027 = vld [vmem:[#allocation6 + $0x80] sm:$0xf]
    %v1028 = vld [vmem:[#allocation6 + $0x84] sm:$0xff]
    %v1029 = vld [vmem:[#allocation6 + $0x8c] sm:$0xf]
    %v1030 = vld [vmem:[#allocation6 + $0x90] sm:$0xff]
    %v1031 = vld [vmem:[#allocation6 + $0x98] sm:$0xf]
    %v1032 = vld [vmem:[#allocation6 + $0x9c] sm:$0xff]
    %v1033 = vld [vmem:[#allocation6 + $0xa4] sm:$0xf]
    %v1034 = vld [vmem:[#allocation6 + $0xa8] sm:$0xff]
    %v1035 = vld [vmem:[#allocation6 + $0xb0] sm:$0xf]
    %v1036 = vld [vmem:[#allocation6 + $0xb4] sm:$0xff]
    %v1037 = vld [vmem:[#allocation6 + $0xbc] sm:$0xf]
    %v1038 = vld [vmem:[%s6] sm:$0x7]
    %v1039 = vld [vmem:[%s8] sm:$0x7]
    %v1040 = vld [vmem:[%s1] sm:$0xff]
    %v1041 = vld [vmem:[%s2] sm:$0xff]
    %v1042 = vpack.c.bf16 %v1040, %v1040
    %v1044 = vlaneseq
    %v1045 = vshrl.u32 %v1044, 7
    %v1046 = vsub.s32 0, %v1045
    %v1047 = vrot.slane %v1038, %v1046
    %v1048 = vlaneseq
    %v1049 = vshrl.u32 %v1048, 7
    %v1050 = vsub.s32 1, %v1049
    %v1051 = vrot.slane %v1038, %v1050
    %v1052 = vlaneseq
    %v1053 = vshrl.u32 %v1052, 7
    %v1054 = vsub.s32 2, %v1053
    %v1055 = vrot.slane %v1038, %v1054
    %v1091 = vunpack.c.l.b16 %v974
    %v1092 = vunpack.c.h.b16 %v974
    %v1093 = vunpack.c.l.b16 %v975
    %v1094 = vunpack.c.l.b16 %v976
    %v1095 = vunpack.c.h.b16 %v976
    %v1096 = vunpack.c.l.b16 %v977
    %v1097 = vunpack.c.l.b16 %v978
    %v1098 = vunpack.c.h.b16 %v978
    %v1099 = vunpack.c.l.b16 %v979
    %v1100 = vunpack.c.l.b16 %v980
    %v1101 = vunpack.c.h.b16 %v980
    %v1102 = vunpack.c.l.b16 %v981
    %v1103 = vunpack.c.l.b16 %v982
    %v1104 = vunpack.c.h.b16 %v982
    %v1105 = vunpack.c.l.b16 %v983
    %v1106 = vunpack.c.l.b16 %v984
    %v1107 = vunpack.c.h.b16 %v984
    %v1108 = vunpack.c.l.b16 %v985
    %v1109 = vunpack.c.l.b16 %v986
    %v1110 = vunpack.c.h.b16 %v986
    %v1111 = vunpack.c.l.b16 %v987
    %v1112 = vunpack.c.l.b16 %v988
    %v1113 = vunpack.c.h.b16 %v988
    %v1114 = vunpack.c.l.b16 %v989
    %v1115 = vunpack.c.l.b16 %v990
    %v1116 = vunpack.c.h.b16 %v990
    %v1117 = vunpack.c.l.b16 %v991
    %v1118 = vunpack.c.l.b16 %v992
    %v1119 = vunpack.c.h.b16 %v992
    %v1120 = vunpack.c.l.b16 %v993
    %v1121 = vunpack.c.l.b16 %v994
    %v1122 = vunpack.c.h.b16 %v994
    %v1123 = vunpack.c.l.b16 %v995
    %v1124 = vunpack.c.l.b16 %v996
    %v1125 = vunpack.c.h.b16 %v996
    %v1126 = vunpack.c.l.b16 %v997
    %v1127 = vunpack.c.l.b16 %v998
    %v1128 = vunpack.c.h.b16 %v998
    %v1129 = vunpack.c.l.b16 %v999
    %v1130 = vunpack.c.l.b16 %v1000
    %v1131 = vunpack.c.h.b16 %v1000
    %v1132 = vunpack.c.l.b16 %v1001
    %v1133 = vunpack.c.l.b16 %v1002
    %v1134 = vunpack.c.h.b16 %v1002
    %v1135 = vunpack.c.l.b16 %v1003
    %v1136 = vunpack.c.l.b16 %v1004
    %v1137 = vunpack.c.h.b16 %v1004
    %v1138 = vunpack.c.l.b16 %v1005
    %v1139 = vpack.c.b16 %v1094, %v1091
    %v1140 = vpack.c.b16 %v1095, %v1092
    %v1141 = vpack.c.b16 %v1096, %v1093
    %v1142 = vpack.c.b16 %v1100, %v1097
    %v1143 = vpack.c.b16 %v1101, %v1098
    %v1144 = vpack.c.b16 %v1102, %v1099
    %v1145 = vpack.c.b16 %v1106, %v1103
    %v1146 = vpack.c.b16 %v1107, %v1104
    %v1147 = vpack.c.b16 %v1108, %v1105
    %v1148 = vpack.c.b16 %v1112, %v1109
    %v1149 = vpack.c.b16 %v1113, %v1110
    %v1150 = vpack.c.b16 %v1114, %v1111
    %v1151 = vpack.c.b16 %v1118, %v1115
    %v1152 = vpack.c.b16 %v1119, %v1116
    %v1153 = vpack.c.b16 %v1120, %v1117
    %v1154 = vpack.c.b16 %v1124, %v1121
    %v1155 = vpack.c.b16 %v1125, %v1122
    %v1156 = vpack.c.b16 %v1126, %v1123
    %v1157 = vpack.c.b16 %v1130, %v1127
    %v1158 = vpack.c.b16 %v1131, %v1128
    %v1159 = vpack.c.b16 %v1132, %v1129
    %v1160 = vpack.c.b16 %v1136, %v1133
    %v1161 = vpack.c.b16 %v1137, %v1134
    %v1162 = vpack.c.b16 %v1138, %v1135
    %1187 = vmatprep.subr.bf16.mxu0 %v1140
    %1188 = vmatpush1.bf16.msra.mxu0 %v1139
    %1189 = vmatprep.subr.bf16.mxu0 %v1143
    %1190 = vmatpush1.bf16.msra.mxu0 %v1142
    %1191 = vmatprep.subr.bf16.mxu0 %v1146
    %1192 = vmatpush1.bf16.msra.mxu0 %v1145
    %1193 = vmatprep.subr.bf16.mxu0 %v1149
    %1194 = vmatpush1.bf16.msra.mxu0 %v1148
    %1195 = vmatprep.subr.bf16.mxu0 %v1152
    %1196 = vmatpush1.bf16.msra.mxu0 %v1151
    %1197 = vmatprep.subr.bf16.mxu0 %v1155
    %1198 = vmatpush1.bf16.msra.mxu0 %v1154
    %1199 = vmatprep.subr.bf16.mxu0 %v1158
    %1200 = vmatpush1.bf16.msra.mxu0 %v1157
    %1201 = vmatprep.subr.bf16.mxu0 %v1161
    %1202 = vmatpush1.bf16.msra.mxu0 %v1160
    %1203 = vmatprep.subr.bf16.mxu0 0
    %1204 = vmatpush1.bf16.msra.mxu0 0
    %1205 = vmatprep.subr.bf16.mxu0 0
    %1206 = vmatpush1.bf16.msra.mxu0 0
    %1207 = vmatprep.subr.bf16.mxu0 0
    %1208 = vmatpush1.bf16.msra.mxu0 0
    %1209 = vmatprep.subr.bf16.mxu0 0
    %1210 = vmatpush1.bf16.msra.mxu0 0
    %1211 = vmatprep.subr.bf16.mxu0 0
    %1212 = vmatpush1.bf16.msra.mxu0 0
    %1213 = vmatprep.subr.bf16.mxu0 0
    %1214 = vmatpush1.bf16.msra.mxu0 0
    %1215 = vmatprep.subr.bf16.mxu0 0
    %1216 = vmatpush1.bf16.msra.mxu0 0
    %1217 = vmatprep.subr.bf16.mxu0 0
    %1218 = vmatpush1.bf16.msra.mxu0 0
    %1219 = vmatprep.mubr.bf16.mxu0 0
    %1220 = vmatmul.mubr.bf16.gmra.mrb[0].mxu0 %v1042
    %v1221 = vpop.f32.mrb[0].mxu0
    %v1222 = vadd.f32 %v1047, %v1221
    %v1223 = vpop.f32.mrb[0].mxu0
    %v1224 = vadd.f32 %v1051, %v1223
    %v1225 = vpop.f32.mrb[0].mxu0
    %v1226 = vpop.f32.mrb[0].mxu0
    %1227 = vdwg.mxu0
    %1228 = vmatprep.subr.bf16.mxu0 0
    %1229 = vmatpush1.bf16.msra.mxu0 %v1141
    %1230 = vmatprep.subr.bf16.mxu0 0
    %1231 = vmatpush1.bf16.msra.mxu0 %v1144
    %1232 = vmatprep.subr.bf16.mxu0 0
    %1233 = vmatpush1.bf16.msra.mxu0 %v1147
    %1234 = vmatprep.subr.bf16.mxu0 0
    %1235 = vmatpush1.bf16.msra.mxu0 %v1150
    %1236 = vmatprep.subr.bf16.mxu0 0
    %1237 = vmatpush1.bf16.msra.mxu0 %v1153
    %1238 = vmatprep.subr.bf16.mxu0 0
    %1239 = vmatpush1.bf16.msra.mxu0 %v1156
    %1240 = vmatprep.subr.bf16.mxu0 0
    %1241 = vmatpush1.bf16.msra.mxu0 %v1159
    %1242 = vmatprep.subr.bf16.mxu0 0
    %1243 = vmatpush1.bf16.msra.mxu0 %v1162
    %1244 = vmatprep.subr.bf16.mxu0 0
    %1245 = vmatpush1.bf16.msra.mxu0 0
    %1246 = vmatprep.subr.bf16.mxu0 0
    %1247 = vmatpush1.bf16.msra.mxu0 0
    %1248 = vmatprep.subr.bf16.mxu0 0
    %1249 = vmatpush1.bf16.msra.mxu0 0
    %1250 = vmatprep.subr.bf16.mxu0 0
    %1251 = vmatpush1.bf16.msra.mxu0 0
    %1252 = vmatprep.subr.bf16.mxu0 0
    %1253 = vmatpush1.bf16.msra.mxu0 0
    %1254 = vmatprep.subr.bf16.mxu0 0
    %1255 = vmatpush1.bf16.msra.mxu0 0
    %1256 = vmatprep.subr.bf16.mxu0 0
    %1257 = vmatpush1.bf16.msra.mxu0 0
    %1258 = vmatprep.subr.bf16.mxu0 0
    %1259 = vmatpush1.bf16.msra.mxu0 0
    %1260 = vmatprep.mubr.bf16.mxu0 0
    %1261 = vmatmul.mubr.bf16.gmra.mrb[0].mxu0 %v1042
    %v1262 = vpop.f32.mrb[0].mxu0
    %v1263 = vadd.f32 %v1055, %v1262
    %v1264 = vpop.f32.mrb[0].mxu0
    %v1265 = vpop.f32.mrb[0].mxu0
    %v1266 = vpop.f32.mrb[0].mxu0
    %1267 = vdwg.mxu0
    %v1268 = vpack.c.bf16 %v1041, %v1041
    %v1270 = vlaneseq
    %v1271 = vshrl.u32 %v1270, 7
    %v1272 = vsub.s32 0, %v1271
    %v1273 = vrot.slane %v1039, %v1272
    %v1274 = vlaneseq
    %v1275 = vshrl.u32 %v1274, 7
    %v1276 = vsub.s32 1, %v1275
    %v1277 = vrot.slane %v1039, %v1276
    %v1278 = vlaneseq
    %v1279 = vshrl.u32 %v1278, 7
    %v1280 = vsub.s32 2, %v1279
    %v1281 = vrot.slane %v1039, %v1280
    %v1317 = vunpack.c.l.b16 %v1006
    %v1318 = vunpack.c.h.b16 %v1006
    %v1319 = vunpack.c.l.b16 %v1007
    %v1320 = vunpack.c.l.b16 %v1008
    %v1321 = vunpack.c.h.b16 %v1008
    %v1322 = vunpack.c.l.b16 %v1009
    %v1323 = vunpack.c.l.b16 %v1010
    %v1324 = vunpack.c.h.b16 %v1010
    %v1325 = vunpack.c.l.b16 %v1011
    %v1326 = vunpack.c.l.b16 %v1012
    %v1327 = vunpack.c.h.b16 %v1012
    %v1328 = vunpack.c.l.b16 %v1013
    %v1329 = vunpack.c.l.b16 %v1014
    %v1330 = vunpack.c.h.b16 %v1014
    %v1331 = vunpack.c.l.b16 %v1015
    %v1332 = vunpack.c.l.b16 %v1016
    %v1333 = vunpack.c.h.b16 %v1016
    %v1334 = vunpack.c.l.b16 %v1017
    %v1335 = vunpack.c.l.b16 %v1018
    %v1336 = vunpack.c.h.b16 %v1018
    %v1337 = vunpack.c.l.b16 %v1019
    %v1338 = vunpack.c.l.b16 %v1020
    %v1339 = vunpack.c.h.b16 %v1020
    %v1340 = vunpack.c.l.b16 %v1021
    %v1341 = vunpack.c.l.b16 %v1022
    %v1342 = vunpack.c.h.b16 %v1022
    %v1343 = vunpack.c.l.b16 %v1023
    %v1344 = vunpack.c.l.b16 %v1024
    %v1345 = vunpack.c.h.b16 %v1024
    %v1346 = vunpack.c.l.b16 %v1025
    %v1347 = vunpack.c.l.b16 %v1026
    %v1348 = vunpack.c.h.b16 %v1026
    %v1349 = vunpack.c.l.b16 %v1027
    %v1350 = vunpack.c.l.b16 %v1028
    %v1351 = vunpack.c.h.b16 %v1028
    %v1352 = vunpack.c.l.b16 %v1029
    %v1353 = vunpack.c.l.b16 %v1030
    %v1354 = vunpack.c.h.b16 %v1030
    %v1355 = vunpack.c.l.b16 %v1031
    %v1356 = vunpack.c.l.b16 %v1032
    %v1357 = vunpack.c.h.b16 %v1032
    %v1358 = vunpack.c.l.b16 %v1033
    %v1359 = vunpack.c.l.b16 %v1034
    %v1360 = vunpack.c.h.b16 %v1034
    %v1361 = vunpack.c.l.b16 %v1035
    %v1362 = vunpack.c.l.b16 %v1036
    %v1363 = vunpack.c.h.b16 %v1036
    %v1364 = vunpack.c.l.b16 %v1037
    %v1365 = vpack.c.b16 %v1320, %v1317
    %v1366 = vpack.c.b16 %v1321, %v1318
    %v1367 = vpack.c.b16 %v1322, %v1319
    %v1368 = vpack.c.b16 %v1326, %v1323
    %v1369 = vpack.c.b16 %v1327, %v1324
    %v1370 = vpack.c.b16 %v1328, %v1325
    %v1371 = vpack.c.b16 %v1332, %v1329
    %v1372 = vpack.c.b16 %v1333, %v1330
    %v1373 = vpack.c.b16 %v1334, %v1331
    %v1374 = vpack.c.b16 %v1338, %v1335
    %v1375 = vpack.c.b16 %v1339, %v1336
    %v1376 = vpack.c.b16 %v1340, %v1337
    %v1377 = vpack.c.b16 %v1344, %v1341
    %v1378 = vpack.c.b16 %v1345, %v1342
    %v1379 = vpack.c.b16 %v1346, %v1343
    %v1380 = vpack.c.b16 %v1350, %v1347
    %v1381 = vpack.c.b16 %v1351, %v1348
    %v1382 = vpack.c.b16 %v1352, %v1349
    %v1383 = vpack.c.b16 %v1356, %v1353
    %v1384 = vpack.c.b16 %v1357, %v1354
    %v1385 = vpack.c.b16 %v1358, %v1355
    %v1386 = vpack.c.b16 %v1362, %v1359
    %v1387 = vpack.c.b16 %v1363, %v1360
    %v1388 = vpack.c.b16 %v1364, %v1361
    %1413 = vmatprep.subr.bf16.mxu0 %v1366
    %1414 = vmatpush1.bf16.msra.mxu0 %v1365
    %1415 = vmatprep.subr.bf16.mxu0 %v1369
    %1416 = vmatpush1.bf16.msra.mxu0 %v1368
    %1417 = vmatprep.subr.bf16.mxu0 %v1372
    %1418 = vmatpush1.bf16.msra.mxu0 %v1371
    %1419 = vmatprep.subr.bf16.mxu0 %v1375
    %1420 = vmatpush1.bf16.msra.mxu0 %v1374
    %1421 = vmatprep.subr.bf16.mxu0 %v1378
    %1422 = vmatpush1.bf16.msra.mxu0 %v1377
    %1423 = vmatprep.subr.bf16.mxu0 %v1381
    %1424 = vmatpush1.bf16.msra.mxu0 %v1380
    %1425 = vmatprep.subr.bf16.mxu0 %v1384
    %1426 = vmatpush1.bf16.msra.mxu0 %v1383
    %1427 = vmatprep.subr.bf16.mxu0 %v1387
    %1428 = vmatpush1.bf16.msra.mxu0 %v1386
    %1429 = vmatprep.subr.bf16.mxu0 0
    %1430 = vmatpush1.bf16.msra.mxu0 0
    %1431 = vmatprep.subr.bf16.mxu0 0
    %1432 = vmatpush1.bf16.msra.mxu0 0
    %1433 = vmatprep.subr.bf16.mxu0 0
    %1434 = vmatpush1.bf16.msra.mxu0 0
    %1435 = vmatprep.subr.bf16.mxu0 0
    %1436 = vmatpush1.bf16.msra.mxu0 0
    %1437 = vmatprep.subr.bf16.mxu0 0
    %1438 = vmatpush1.bf16.msra.mxu0 0
    %1439 = vmatprep.subr.bf16.mxu0 0
    %1440 = vmatpush1.bf16.msra.mxu0 0
    %1441 = vmatprep.subr.bf16.mxu0 0
    %1442 = vmatpush1.bf16.msra.mxu0 0
    %1443 = vmatprep.subr.bf16.mxu0 0
    %1444 = vmatpush1.bf16.msra.mxu0 0
    %1445 = vmatprep.mubr.bf16.mxu0 0
    %1446 = vmatmul.mubr.bf16.gmra.mrb[0].mxu0 %v1268
    %v1447 = vpop.f32.mrb[0].mxu0
    %v1448 = vadd.f32 %v1273, %v1447
    %v1449 = vpop.f32.mrb[0].mxu0
    %v1450 = vadd.f32 %v1277, %v1449
    %v1451 = vpop.f32.mrb[0].mxu0
    %v1452 = vpop.f32.mrb[0].mxu0
    %1453 = vdwg.mxu0
    %1454 = vmatprep.subr.bf16.mxu0 0
    %1455 = vmatpush1.bf16.msra.mxu0 %v1367
    %1456 = vmatprep.subr.bf16.mxu0 0
    %1457 = vmatpush1.bf16.msra.mxu0 %v1370
    %1458 = vmatprep.subr.bf16.mxu0 0
    %1459 = vmatpush1.bf16.msra.mxu0 %v1373
    %1460 = vmatprep.subr.bf16.mxu0 0
    %1461 = vmatpush1.bf16.msra.mxu0 %v1376
    %1462 = vmatprep.subr.bf16.mxu0 0
    %1463 = vmatpush1.bf16.msra.mxu0 %v1379
    %1464 = vmatprep.subr.bf16.mxu0 0
    %1465 = vmatpush1.bf16.msra.mxu0 %v1382
    %1466 = vmatprep.subr.bf16.mxu0 0
    %1467 = vmatpush1.bf16.msra.mxu0 %v1385
    %1468 = vmatprep.subr.bf16.mxu0 0
    %1469 = vmatpush1.bf16.msra.mxu0 %v1388
    %1470 = vmatprep.subr.bf16.mxu0 0
    %1471 = vmatpush1.bf16.msra.mxu0 0
    %1472 = vmatprep.subr.bf16.mxu0 0
    %1473 = vmatpush1.bf16.msra.mxu0 0
    %1474 = vmatprep.subr.bf16.mxu0 0
    %1475 = vmatpush1.bf16.msra.mxu0 0
    %1476 = vmatprep.subr.bf16.mxu0 0
    %1477 = vmatpush1.bf16.msra.mxu0 0
    %1478 = vmatprep.subr.bf16.mxu0 0
    %1479 = vmatpush1.bf16.msra.mxu0 0
    %1480 = vmatprep.subr.bf16.mxu0 0
    %1481 = vmatpush1.bf16.msra.mxu0 0
    %1482 = vmatprep.subr.bf16.mxu0 0
    %1483 = vmatpush1.bf16.msra.mxu0 0
    %1484 = vmatprep.subr.bf16.mxu0 0
    %1485 = vmatpush1.bf16.msra.mxu0 0
    %1486 = vmatprep.mubr.bf16.mxu0 0
    %1487 = vmatmul.mubr.bf16.gmra.mrb[0].mxu0 %v1268
    %v1488 = vpop.f32.mrb[0].mxu0
    %v1489 = vadd.f32 %v1281, %v1488
    %v1490 = vpop.f32.mrb[0].mxu0
    %v1491 = vpop.f32.mrb[0].mxu0
    %v1492 = vpop.f32.mrb[0].mxu0
    %1493 = vdwg.mxu0
    %s1494 = smul.u32 0, 6
    %s1495 = smul.addr %s1494, 8
    %s1496 = scalar_lea.vmem [#allocation2], %s1495
    %v1497 = vld [vmem:[%s1496] sm:$0xff]
    %v1498 = vld [vmem:[%s1496 + $0x8] sm:$0xff]
    %v1499 = vld [vmem:[%s1496 + $0x10] sm:$0xff]
    %s1500 = smul.u32 7, 6
    %s1501 = smul.addr %s1500, 8
    %s1502 = scalar_lea.vmem [#allocation2], %s1501
    %v1503 = vld [vmem:[%s1502 + $0x18] sm:$0xff]
    %v1504 = vld [vmem:[%s1502 + $0x20] sm:$0xff]
    %v1505 = vld [vmem:[%s1502 + $0x28] sm:$0xff]
    %v1506 = vadd.f32 %v1497, %v1222
    %v1507 = vxor.u32 %v1506, 2147483648
    %v1508 = vmul.f32 %v1507, 1.442695
    %v1509 = vpow.pop %v1508
    %v1510 = vadd.f32 %v1509, 1.0
    %v1511 = vrcp.pop %v1510
    %v1512 = vmul.f32 1.0, %v1511
    %v1513 = vadd.f32 %v1498, %v1224
    %v1514 = vxor.u32 %v1513, 2147483648
    %v1515 = vmul.f32 %v1514, 1.442695
    %v1516 = vpow.pop %v1515
    %v1517 = vadd.f32 %v1516, 1.0
    %v1518 = vrcp.pop %v1517
    %v1519 = vmul.f32 1.0, %v1518
    %v1520 = vmul.f32 %v1512, %v1263
    %v1521 = vadd.f32 %v1499, %v1520
    %v1522 = vtanh.pop %v1521
    %v1523 = vsub.f32 1.0, %v1519
    %v1524 = vmul.f32 %v1523, %v1522
    %v1525 = vmul.f32 %v1519, %v1040
    %v1526 = vadd.f32 %v1524, %v1525
    %v1527 = vadd.f32 %v1503, %v1448
    %v1528 = vxor.u32 %v1527, 2147483648
    %v1529 = vmul.f32 %v1528, 1.442695
    %v1530 = vpow.pop %v1529
    %v1531 = vadd.f32 %v1530, 1.0
    %v1532 = vrcp.pop %v1531
    %v1533 = vmul.f32 1.0, %v1532
    %v1534 = vadd.f32 %v1504, %v1450
    %v1535 = vxor.u32 %v1534, 2147483648
    %v1536 = vmul.f32 %v1535, 1.442695
    %v1537 = vpow.pop %v1536
    %v1538 = vadd.f32 %v1537, 1.0
    %v1539 = vrcp.pop %v1538
    %v1540 = vmul.f32 1.0, %v1539
    %v1541 = vmul.f32 %v1533, %v1489
    %v1542 = vadd.f32 %v1505, %v1541
    %v1543 = vtanh.pop %v1542
    %v1544 = vsub.f32 1.0, %v1540
    %v1545 = vmul.f32 %v1544, %v1543
    %v1546 = vmul.f32 %v1540, %v1041
    %v1547 = vadd.f32 %v1545, %v1546
    %v1548 = vpack.c.bf16 %v1526, %v1526
    %1549 = vmatprep.subr.bf16.mxu0 %v1140
    %1550 = vmatpush1.bf16.msra.mxu0 %v1139
    %1551 = vmatprep.subr.bf16.mxu0 %v1143
    %1552 = vmatpush1.bf16.msra.mxu0 %v1142
    %1553 = vmatprep.subr.bf16.mxu0 %v1146
    %1554 = vmatpush1.bf16.msra.mxu0 %v1145
    %1555 = vmatprep.subr.bf16.mxu0 %v1149
    %1556 = vmatpush1.bf16.msra.mxu0 %v1148
    %1557 = vmatprep.subr.bf16.mxu0 %v1152
    %1558 = vmatpush1.bf16.msra.mxu0 %v1151
    %1559 = vmatprep.subr.bf16.mxu0 %v1155
    %1560 = vmatpush1.bf16.msra.mxu0 %v1154
    %1561 = vmatprep.subr.bf16.mxu0 %v1158
    %1562 = vmatpush1.bf16.msra.mxu0 %v1157
    %1563 = vmatprep.subr.bf16.mxu0 %v1161
    %1564 = vmatpush1.bf16.msra.mxu0 %v1160
    %1565 = vmatprep.subr.bf16.mxu0 0
    %1566 = vmatpush1.bf16.msra.mxu0 0
    %1567 = vmatprep.subr.bf16.mxu0 0
    %1568 = vmatpush1.bf16.msra.mxu0 0
    %1569 = vmatprep.subr.bf16.mxu0 0
    %1570 = vmatpush1.bf16.msra.mxu0 0
    %1571 = vmatprep.subr.bf16.mxu0 0
    %1572 = vmatpush1.bf16.msra.mxu0 0
    %1573 = vmatprep.subr.bf16.mxu0 0
    %1574 = vmatpush1.bf16.msra.mxu0 0
    %1575 = vmatprep.subr.bf16.mxu0 0
    %1576 = vmatpush1.bf16.msra.mxu0 0
    %1577 = vmatprep.subr.bf16.mxu0 0
    %1578 = vmatpush1.bf16.msra.mxu0 0
    %1579 = vmatprep.subr.bf16.mxu0 0
    %1580 = vmatpush1.bf16.msra.mxu0 0
    %1581 = vmatprep.mubr.bf16.mxu0 0
    %1582 = vmatmul.mubr.bf16.gmra.mrb[0].mxu0 %v1548
    %v1583 = vpop.f32.mrb[0].mxu0
    %v1584 = vadd.f32 %v1047, %v1583
    %v1585 = vpop.f32.mrb[0].mxu0
    %v1586 = vadd.f32 %v1051, %v1585
    %v1587 = vpop.f32.mrb[0].mxu0
    %v1588 = vpop.f32.mrb[0].mxu0
    %1589 = vdwg.mxu0
    %1590 = vmatprep.subr.bf16.mxu0 0
    %1591 = vmatpush1.bf16.msra.mxu0 %v1141
    %1592 = vmatprep.subr.bf16.mxu0 0
    %1593 = vmatpush1.bf16.msra.mxu0 %v1144
    %1594 = vmatprep.subr.bf16.mxu0 0
    %1595 = vmatpush1.bf16.msra.mxu0 %v1147
    %1596 = vmatprep.subr.bf16.mxu0 0
    %1597 = vmatpush1.bf16.msra.mxu0 %v1150
    %1598 = vmatprep.subr.bf16.mxu0 0
    %1599 = vmatpush1.bf16.msra.mxu0 %v1153
    %1600 = vmatprep.subr.bf16.mxu0 0
    %1601 = vmatpush1.bf16.msra.mxu0 %v1156
    %1602 = vmatprep.subr.bf16.mxu0 0
    %1603 = vmatpush1.bf16.msra.mxu0 %v1159
    %1604 = vmatprep.subr.bf16.mxu0 0
    %1605 = vmatpush1.bf16.msra.mxu0 %v1162
    %1606 = vmatprep.subr.bf16.mxu0 0
    %1607 = vmatpush1.bf16.msra.mxu0 0
    %1608 = vmatprep.subr.bf16.mxu0 0
    %1609 = vmatpush1.bf16.msra.mxu0 0
    %1610 = vmatprep.subr.bf16.mxu0 0
    %1611 = vmatpush1.bf16.msra.mxu0 0
    %1612 = vmatprep.subr.bf16.mxu0 0
    %1613 = vmatpush1.bf16.msra.mxu0 0
    %1614 = vmatprep.subr.bf16.mxu0 0
    %1615 = vmatpush1.bf16.msra.mxu0 0
    %1616 = vmatprep.subr.bf16.mxu0 0
    %1617 = vmatpush1.bf16.msra.mxu0 0
    %1618 = vmatprep.subr.bf16.mxu0 0
    %1619 = vmatpush1.bf16.msra.mxu0 0
    %1620 = vmatprep.subr.bf16.mxu0 0
    %1621 = vmatpush1.bf16.msra.mxu0 0
    %1622 = vmatprep.mubr.bf16.mxu0 0
    %1623 = vmatmul.mubr.bf16.gmra.mrb[0].mxu0 %v1548
    %v1624 = vpop.f32.mrb[0].mxu0
    %v1625 = vadd.f32 %v1055, %v1624
    %v1626 = vpop.f32.mrb[0].mxu0
    %v1627 = vpop.f32.mrb[0].mxu0
    %v1628 = vpop.f32.mrb[0].mxu0
    %1629 = vdwg.mxu0
    %v1630 = vpack.c.bf16 %v1547, %v1547
    %1631 = vmatprep.subr.bf16.mxu0 %v1366
    %1632 = vmatpush1.bf16.msra.mxu0 %v1365
    %1633 = vmatprep.subr.bf16.mxu0 %v1369
    %1634 = vmatpush1.bf16.msra.mxu0 %v1368
    %1635 = vmatprep.subr.bf16.mxu0 %v1372
    %1636 = vmatpush1.bf16.msra.mxu0 %v1371
    %1637 = vmatprep.subr.bf16.mxu0 %v1375
    %1638 = vmatpush1.bf16.msra.mxu0 %v1374
    %1639 = vmatprep.subr.bf16.mxu0 %v1378
    %1640 = vmatpush1.bf16.msra.mxu0 %v1377
    %1641 = vmatprep.subr.bf16.mxu0 %v1381
    %1642 = vmatpush1.bf16.msra.mxu0 %v1380
    %1643 = vmatprep.subr.bf16.mxu0 %v1384
    %1644 = vmatpush1.bf16.msra.mxu0 %v1383
    %1645 = vmatprep.subr.bf16.mxu0 %v1387
    %1646 = vmatpush1.bf16.msra.mxu0 %v1386
    %1647 = vmatprep.subr.bf16.mxu0 0
    %1648 = vmatpush1.bf16.msra.mxu0 0
    %1649 = vmatprep.subr.bf16.mxu0 0
    %1650 = vmatpush1.bf16.msra.mxu0 0
    %1651 = vmatprep.subr.bf16.mxu0 0
    %1652 = vmatpush1.bf16.msra.mxu0 0
    %1653 = vmatprep.subr.bf16.mxu0 0
    %1654 = vmatpush1.bf16.msra.mxu0 0
    %1655 = vmatprep.subr.bf16.mxu0 0
    %1656 = vmatpush1.bf16.msra.mxu0 0
    %1657 = vmatprep.subr.bf16.mxu0 0
    %1658 = vmatpush1.bf16.msra.mxu0 0
    %1659 = vmatprep.subr.bf16.mxu0 0
    %1660 = vmatpush1.bf16.msra.mxu0 0
    %1661 = vmatprep.subr.bf16.mxu0 0
    %1662 = vmatpush1.bf16.msra.mxu0 0
    %1663 = vmatprep.mubr.bf16.mxu0 0
    %1664 = vmatmul.mubr.bf16.gmra.mrb[0].mxu0 %v1630
    %v1665 = vpop.f32.mrb[0].mxu0
    %v1666 = vadd.f32 %v1273, %v1665
    %v1667 = vpop.f32.mrb[0].mxu0
    %v1668 = vadd.f32 %v1277, %v1667
    %v1669 = vpop.f32.mrb[0].mxu0
    %v1670 = vpop.f32.mrb[0].mxu0
    %1671 = vdwg.mxu0
    %1672 = vmatprep.subr.bf16.mxu0 0
    %1673 = vmatpush1.bf16.msra.mxu0 %v1367
    %1674 = vmatprep.subr.bf16.mxu0 0
    %1675 = vmatpush1.bf16.msra.mxu0 %v1370
    %1676 = vmatprep.subr.bf16.mxu0 0
    %1677 = vmatpush1.bf16.msra.mxu0 %v1373
    %1678 = vmatprep.subr.bf16.mxu0 0
    %1679 = vmatpush1.bf16.msra.mxu0 %v1376
    %1680 = vmatprep.subr.bf16.mxu0 0
    %1681 = vmatpush1.bf16.msra.mxu0 %v1379
    %1682 = vmatprep.subr.bf16.mxu0 0
    %1683 = vmatpush1.bf16.msra.mxu0 %v1382
    %1684 = vmatprep.subr.bf16.mxu0 0
    %1685 = vmatpush1.bf16.msra.mxu0 %v1385
    %1686 = vmatprep.subr.bf16.mxu0 0
    %1687 = vmatpush1.bf16.msra.mxu0 %v1388
    %1688 = vmatprep.subr.bf16.mxu0 0
    %1689 = vmatpush1.bf16.msra.mxu0 0
    %1690 = vmatprep.subr.bf16.mxu0 0
    %1691 = vmatpush1.bf16.msra.mxu0 0
    %1692 = vmatprep.subr.bf16.mxu0 0
    %1693 = vmatpush1.bf16.msra.mxu0 0
    %1694 = vmatprep.subr.bf16.mxu0 0
    %1695 = vmatpush1.bf16.msra.mxu0 0
    %1696 = vmatprep.subr.bf16.mxu0 0
    %1697 = vmatpush1.bf16.msra.mxu0 0
    %1698 = vmatprep.subr.bf16.mxu0 0
    %1699 = vmatpush1.bf16.msra.mxu0 0
    %1700 = vmatprep.subr.bf16.mxu0 0
    %1701 = vmatpush1.bf16.msra.mxu0 0
    %1702 = vmatprep.subr.bf16.mxu0 0
    %1703 = vmatpush1.bf16.msra.mxu0 0
    %1704 = vmatprep.mubr.bf16.mxu0 0
    %1705 = vmatmul.mubr.bf16.gmra.mrb[0].mxu0 %v1630
    %v1706 = vpop.f32.mrb[0].mxu0
    %v1707 = vadd.f32 %v1281, %v1706
    %v1708 = vpop.f32.mrb[0].mxu0
    %v1709 = vpop.f32.mrb[0].mxu0
    %v1710 = vpop.f32.mrb[0].mxu0
    %1711 = vdwg.mxu0
    %s1712 = smul.u32 1, 6
    %s1713 = smul.addr %s1712, 8
    %s1714 = scalar_lea.vmem [#allocation2], %s1713
    %v1715 = vld [vmem:[%s1714] sm:$0xff]
    %v1716 = vld [vmem:[%s1714 + $0x8] sm:$0xff]
    %v1717 = vld [vmem:[%s1714 + $0x10] sm:$0xff]
    %s1718 = smul.u32 6, 6
    %s1719 = smul.addr %s1718, 8
    %s1720 = scalar_lea.vmem [#allocation2], %s1719
    %v1721 = vld [vmem:[%s1720 + $0x18] sm:$0xff]
    %v1722 = vld [vmem:[%s1720 + $0x20] sm:$0xff]
    %v1723 = vld [vmem:[%s1720 + $0x28] sm:$0xff]
    %v1724 = vadd.f32 %v1715, %v1584
    %v1725 = vxor.u32 %v1724, 2147483648
    %v1726 = vmul.f32 %v1725, 1.442695
    %v1727 = vpow.pop %v1726
    %v1728 = vadd.f32 %v1727, 1.0
    %v1729 = vrcp.pop %v1728
    %v1730 = vmul.f32 1.0, %v1729
    %v1731 = vadd.f32 %v1716, %v1586
    %v1732 = vxor.u32 %v1731, 2147483648
    %v1733 = vmul.f32 %v1732, 1.442695
    %v1734 = vpow.pop %v1733
    %v1735 = vadd.f32 %v1734, 1.0
    %v1736 = vrcp.pop %v1735
    %v1737 = vmul.f32 1.0, %v1736
    %v1738 = vmul.f32 %v1730, %v1625
    %v1739 = vadd.f32 %v1717, %v1738
    %v1740 = vtanh.pop %v1739
    %v1741 = vsub.f32 1.0, %v1737
    %v1742 = vmul.f32 %v1741, %v1740
    %v1743 = vmul.f32 %v1737, %v1526
    %v1744 = vadd.f32 %v1742, %v1743
    %v1745 = vadd.f32 %v1721, %v1666
    %v1746 = vxor.u32 %v1745, 2147483648
    %v1747 = vmul.f32 %v1746, 1.442695
    %v1748 = vpow.pop %v1747
    %v1749 = vadd.f32 %v1748, 1.0
    %v1750 = vrcp.pop %v1749
    %v1751 = vmul.f32 1.0, %v1750
    %v1752 = vadd.f32 %v1722, %v1668
    %v1753 = vxor.u32 %v1752, 2147483648
    %v1754 = vmul.f32 %v1753, 1.442695
    %v1755 = vpow.pop %v1754
    %v1756 = vadd.f32 %v1755, 1.0
    %v1757 = vrcp.pop %v1756
    %v1758 = vmul.f32 1.0, %v1757
    %v1759 = vmul.f32 %v1751, %v1707
    %v1760 = vadd.f32 %v1723, %v1759
    %v1761 = vtanh.pop %v1760
    %v1762 = vsub.f32 1.0, %v1758
    %v1763 = vmul.f32 %v1762, %v1761
    %v1764 = vmul.f32 %v1758, %v1547
    %v1765 = vadd.f32 %v1763, %v1764
    %v1766 = vpack.c.bf16 %v1744, %v1744
    %1767 = vmatprep.subr.bf16.mxu0 %v1140
    %1768 = vmatpush1.bf16.msra.mxu0 %v1139
    %1769 = vmatprep.subr.bf16.mxu0 %v1143
    %1770 = vmatpush1.bf16.msra.mxu0 %v1142
    %1771 = vmatprep.subr.bf16.mxu0 %v1146
    %1772 = vmatpush1.bf16.msra.mxu0 %v1145
    %1773 = vmatprep.subr.bf16.mxu0 %v1149
    %1774 = vmatpush1.bf16.msra.mxu0 %v1148
    %1775 = vmatprep.subr.bf16.mxu0 %v1152
    %1776 = vmatpush1.bf16.msra.mxu0 %v1151
    %1777 = vmatprep.subr.bf16.mxu0 %v1155
    %1778 = vmatpush1.bf16.msra.mxu0 %v1154
    %1779 = vmatprep.subr.bf16.mxu0 %v1158
    %1780 = vmatpush1.bf16.msra.mxu0 %v1157
    %1781 = vmatprep.subr.bf16.mxu0 %v1161
    %1782 = vmatpush1.bf16.msra.mxu0 %v1160
    %1783 = vmatprep.subr.bf16.mxu0 0
    %1784 = vmatpush1.bf16.msra.mxu0 0
    %1785 = vmatprep.subr.bf16.mxu0 0
    %1786 = vmatpush1.bf16.msra.mxu0 0
    %1787 = vmatprep.subr.bf16.mxu0 0
    %1788 = vmatpush1.bf16.msra.mxu0 0
    %1789 = vmatprep.subr.bf16.mxu0 0
    %1790 = vmatpush1.bf16.msra.mxu0 0
    %1791 = vmatprep.subr.bf16.mxu0 0
    %1792 = vmatpush1.bf16.msra.mxu0 0
    %1793 = vmatprep.subr.bf16.mxu0 0
    %1794 = vmatpush1.bf16.msra.mxu0 0
    %1795 = vmatprep.subr.bf16.mxu0 0
    %1796 = vmatpush1.bf16.msra.mxu0 0
    %1797 = vmatprep.subr.bf16.mxu0 0
    %1798 = vmatpush1.bf16.msra.mxu0 0
    %1799 = vmatprep.mubr.bf16.mxu0 0
    %1800 = vmatmul.mubr.bf16.gmra.mrb[0].mxu0 %v1766
    %v1801 = vpop.f32.mrb[0].mxu0
    %v1802 = vadd.f32 %v1047, %v1801
    %v1803 = vpop.f32.mrb[0].mxu0
    %v1804 = vadd.f32 %v1051, %v1803
    %v1805 = vpop.f32.mrb[0].mxu0
    %v1806 = vpop.f32.mrb[0].mxu0
    %1807 = vdwg.mxu0
    %1808 = vmatprep.subr.bf16.mxu0 0
    %1809 = vmatpush1.bf16.msra.mxu0 %v1141
    %1810 = vmatprep.subr.bf16.mxu0 0
    %1811 = vmatpush1.bf16.msra.mxu0 %v1144
    %1812 = vmatprep.subr.bf16.mxu0 0
    %1813 = vmatpush1.bf16.msra.mxu0 %v1147
    %1814 = vmatprep.subr.bf16.mxu0 0
    %1815 = vmatpush1.bf16.msra.mxu0 %v1150
    %1816 = vmatprep.subr.bf16.mxu0 0
    %1817 = vmatpush1.bf16.msra.mxu0 %v1153
    %1818 = vmatprep.subr.bf16.mxu0 0
    %1819 = vmatpush1.bf16.msra.mxu0 %v1156
    %1820 = vmatprep.subr.bf16.mxu0 0
    %1821 = vmatpush1.bf16.msra.mxu0 %v1159
    %1822 = vmatprep.subr.bf16.mxu0 0
    %1823 = vmatpush1.bf16.msra.mxu0 %v1162
    %1824 = vmatprep.subr.bf16.mxu0 0
    %1825 = vmatpush1.bf16.msra.mxu0 0
    %1826 = vmatprep.subr.bf16.mxu0 0
    %1827 = vmatpush1.bf16.msra.mxu0 0
    %1828 = vmatprep.subr.bf16.mxu0 0
    %1829 = vmatpush1.bf16.msra.mxu0 0
    %1830 = vmatprep.subr.bf16.mxu0 0
    %1831 = vmatpush1.bf16.msra.mxu0 0
    %1832 = vmatprep.subr.bf16.mxu0 0
    %1833 = vmatpush1.bf16.msra.mxu0 0
    %1834 = vmatprep.subr.bf16.mxu0 0
    %1835 = vmatpush1.bf16.msra.mxu0 0
    %1836 = vmatprep.subr.bf16.mxu0 0
    %1837 = vmatpush1.bf16.msra.mxu0 0
    %1838 = vmatprep.subr.bf16.mxu0 0
    %1839 = vmatpush1.bf16.msra.mxu0 0
    %1840 = vmatprep.mubr.bf16.mxu0 0
    %1841 = vmatmul.mubr.bf16.gmra.mrb[0].mxu0 %v1766
    %v1842 = vpop.f32.mrb[0].mxu0
    %v1843 = vadd.f32 %v1055, %v1842
    %v1844 = vpop.f32.mrb[0].mxu0
    %v1845 = vpop.f32.mrb[0].mxu0
    %v1846 = vpop.f32.mrb[0].mxu0
    %1847 = vdwg.mxu0
    %v1848 = vpack.c.bf16 %v1765, %v1765
    %1849 = vmatprep.subr.bf16.mxu0 %v1366
    %1850 = vmatpush1.bf16.msra.mxu0 %v1365
    %1851 = vmatprep.subr.bf16.mxu0 %v1369
    %1852 = vmatpush1.bf16.msra.mxu0 %v1368
    %1853 = vmatprep.subr.bf16.mxu0 %v1372
    %1854 = vmatpush1.bf16.msra.mxu0 %v1371
    %1855 = vmatprep.subr.bf16.mxu0 %v1375
    %1856 = vmatpush1.bf16.msra.mxu0 %v1374
    %1857 = vmatprep.subr.bf16.mxu0 %v1378
    %1858 = vmatpush1.bf16.msra.mxu0 %v1377
    %1859 = vmatprep.subr.bf16.mxu0 %v1381
    %1860 = vmatpush1.bf16.msra.mxu0 %v1380
    %1861 = vmatprep.subr.bf16.mxu0 %v1384
    %1862 = vmatpush1.bf16.msra.mxu0 %v1383
    %1863 = vmatprep.subr.bf16.mxu0 %v1387
    %1864 = vmatpush1.bf16.msra.mxu0 %v1386
    %1865 = vmatprep.subr.bf16.mxu0 0
    %1866 = vmatpush1.bf16.msra.mxu0 0
    %1867 = vmatprep.subr.bf16.mxu0 0
    %1868 = vmatpush1.bf16.msra.mxu0 0
    %1869 = vmatprep.subr.bf16.mxu0 0
    %1870 = vmatpush1.bf16.msra.mxu0 0
    %1871 = vmatprep.subr.bf16.mxu0 0
    %1872 = vmatpush1.bf16.msra.mxu0 0
    %1873 = vmatprep.subr.bf16.mxu0 0
    %1874 = vmatpush1.bf16.msra.mxu0 0
    %1875 = vmatprep.subr.bf16.mxu0 0
    %1876 = vmatpush1.bf16.msra.mxu0 0
    %1877 = vmatprep.subr.bf16.mxu0 0
    %1878 = vmatpush1.bf16.msra.mxu0 0
    %1879 = vmatprep.subr.bf16.mxu0 0
    %1880 = vmatpush1.bf16.msra.mxu0 0
    %1881 = vmatprep.mubr.bf16.mxu0 0
    %1882 = vmatmul.mubr.bf16.gmra.mrb[0].mxu0 %v1848
    %v1883 = vpop.f32.mrb[0].mxu0
    %v1884 = vadd.f32 %v1273, %v1883
    %v1885 = vpop.f32.mrb[0].mxu0
    %v1886 = vadd.f32 %v1277, %v1885
    %v1887 = vpop.f32.mrb[0].mxu0
    %v1888 = vpop.f32.mrb[0].mxu0
    %1889 = vdwg.mxu0
    %1890 = vmatprep.subr.bf16.mxu0 0
    %1891 = vmatpush1.bf16.msra.mxu0 %v1367
    %1892 = vmatprep.subr.bf16.mxu0 0
    %1893 = vmatpush1.bf16.msra.mxu0 %v1370
    %1894 = vmatprep.subr.bf16.mxu0 0
    %1895 = vmatpush1.bf16.msra.mxu0 %v1373
    %1896 = vmatprep.subr.bf16.mxu0 0
    %1897 = vmatpush1.bf16.msra.mxu0 %v1376
    %1898 = vmatprep.subr.bf16.mxu0 0
    %1899 = vmatpush1.bf16.msra.mxu0 %v1379
    %1900 = vmatprep.subr.bf16.mxu0 0
    %1901 = vmatpush1.bf16.msra.mxu0 %v1382
    %1902 = vmatprep.subr.bf16.mxu0 0
    %1903 = vmatpush1.bf16.msra.mxu0 %v1385
    %1904 = vmatprep.subr.bf16.mxu0 0
    %1905 = vmatpush1.bf16.msra.mxu0 %v1388
    %1906 = vmatprep.subr.bf16.mxu0 0
    %1907 = vmatpush1.bf16.msra.mxu0 0
    %1908 = vmatprep.subr.bf16.mxu0 0
    %1909 = vmatpush1.bf16.msra.mxu0 0
    %1910 = vmatprep.subr.bf16.mxu0 0
    %1911 = vmatpush1.bf16.msra.mxu0 0
    %1912 = vmatprep.subr.bf16.mxu0 0
    %1913 = vmatpush1.bf16.msra.mxu0 0
    %1914 = vmatprep.subr.bf16.mxu0 0
    %1915 = vmatpush1.bf16.msra.mxu0 0
    %1916 = vmatprep.subr.bf16.mxu0 0
    %1917 = vmatpush1.bf16.msra.mxu0 0
    %1918 = vmatprep.subr.bf16.mxu0 0
    %1919 = vmatpush1.bf16.msra.mxu0 0
    %1920 = vmatprep.subr.bf16.mxu0 0
    %1921 = vmatpush1.bf16.msra.mxu0 0
    %1922 = vmatprep.mubr.bf16.mxu0 0
    %1923 = vmatmul.mubr.bf16.gmra.mrb[0].mxu0 %v1848
    %v1924 = vpop.f32.mrb[0].mxu0
    %v1925 = vadd.f32 %v1281, %v1924
    %v1926 = vpop.f32.mrb[0].mxu0
    %v1927 = vpop.f32.mrb[0].mxu0
    %v1928 = vpop.f32.mrb[0].mxu0
    %1929 = vdwg.mxu0
    %s1930 = smul.u32 2, 6
    %s1931 = smul.addr %s1930, 8
    %s1932 = scalar_lea.vmem [#allocation2], %s1931
    %v1933 = vld [vmem:[%s1932] sm:$0xff]
    %v1934 = vld [vmem:[%s1932 + $0x8] sm:$0xff]
    %v1935 = vld [vmem:[%s1932 + $0x10] sm:$0xff]
    %s1936 = smul.u32 5, 6
    %s1937 = smul.addr %s1936, 8
    %s1938 = scalar_lea.vmem [#allocation2], %s1937
    %v1939 = vld [vmem:[%s1938 + $0x18] sm:$0xff]
    %v1940 = vld [vmem:[%s1938 + $0x20] sm:$0xff]
    %v1941 = vld [vmem:[%s1938 + $0x28] sm:$0xff]
    %v1942 = vadd.f32 %v1933, %v1802
    %v1943 = vxor.u32 %v1942, 2147483648
    %v1944 = vmul.f32 %v1943, 1.442695
    %v1945 = vpow.pop %v1944
    %v1946 = vadd.f32 %v1945, 1.0
    %v1947 = vrcp.pop %v1946
    %v1948 = vmul.f32 1.0, %v1947
    %v1949 = vadd.f32 %v1934, %v1804
    %v1950 = vxor.u32 %v1949, 2147483648
    %v1951 = vmul.f32 %v1950, 1.442695
    %v1952 = vpow.pop %v1951
    %v1953 = vadd.f32 %v1952, 1.0
    %v1954 = vrcp.pop %v1953
    %v1955 = vmul.f32 1.0, %v1954
    %v1956 = vmul.f32 %v1948, %v1843
    %v1957 = vadd.f32 %v1935, %v1956
    %v1958 = vtanh.pop %v1957
    %v1959 = vsub.f32 1.0, %v1955
    %v1960 = vmul.f32 %v1959, %v1958
    %v1961 = vmul.f32 %v1955, %v1744
    %v1962 = vadd.f32 %v1960, %v1961
    %v1963 = vadd.f32 %v1939, %v1884
    %v1964 = vxor.u32 %v1963, 2147483648
    %v1965 = vmul.f32 %v1964, 1.442695
    %v1966 = vpow.pop %v1965
    %v1967 = vadd.f32 %v1966, 1.0
    %v1968 = vrcp.pop %v1967
    %v1969 = vmul.f32 1.0, %v1968
    %v1970 = vadd.f32 %v1940, %v1886
    %v1971 = vxor.u32 %v1970, 2147483648
    %v1972 = vmul.f32 %v1971, 1.442695
    %v1973 = vpow.pop %v1972
    %v1974 = vadd.f32 %v1973, 1.0
    %v1975 = vrcp.pop %v1974
    %v1976 = vmul.f32 1.0, %v1975
    %v1977 = vmul.f32 %v1969, %v1925
    %v1978 = vadd.f32 %v1941, %v1977
    %v1979 = vtanh.pop %v1978
    %v1980 = vsub.f32 1.0, %v1976
    %v1981 = vmul.f32 %v1980, %v1979
    %v1982 = vmul.f32 %v1976, %v1765
    %v1983 = vadd.f32 %v1981, %v1982
    %v1984 = vpack.c.bf16 %v1962, %v1962
    %1985 = vmatprep.subr.bf16.mxu0 %v1140
    %1986 = vmatpush1.bf16.msra.mxu0 %v1139
    %1987 = vmatprep.subr.bf16.mxu0 %v1143
    %1988 = vmatpush1.bf16.msra.mxu0 %v1142
    %1989 = vmatprep.subr.bf16.mxu0 %v1146
    %1990 = vmatpush1.bf16.msra.mxu0 %v1145
    %1991 = vmatprep.subr.bf16.mxu0 %v1149
    %1992 = vmatpush1.bf16.msra.mxu0 %v1148
    %1993 = vmatprep.subr.bf16.mxu0 %v1152
    %1994 = vmatpush1.bf16.msra.mxu0 %v1151
    %1995 = vmatprep.subr.bf16.mxu0 %v1155
    %1996 = vmatpush1.bf16.msra.mxu0 %v1154
    %1997 = vmatprep.subr.bf16.mxu0 %v1158
    %1998 = vmatpush1.bf16.msra.mxu0 %v1157
    %1999 = vmatprep.subr.bf16.mxu0 %v1161
    %2000 = vmatpush1.bf16.msra.mxu0 %v1160
    %2001 = vmatprep.subr.bf16.mxu0 0
    %2002 = vmatpush1.bf16.msra.mxu0 0
    %2003 = vmatprep.subr.bf16.mxu0 0
    %2004 = vmatpush1.bf16.msra.mxu0 0
    %2005 = vmatprep.subr.bf16.mxu0 0
    %2006 = vmatpush1.bf16.msra.mxu0 0
    %2007 = vmatprep.subr.bf16.mxu0 0
    %2008 = vmatpush1.bf16.msra.mxu0 0
    %2009 = vmatprep.subr.bf16.mxu0 0
    %2010 = vmatpush1.bf16.msra.mxu0 0
    %2011 = vmatprep.subr.bf16.mxu0 0
    %2012 = vmatpush1.bf16.msra.mxu0 0
    %2013 = vmatprep.subr.bf16.mxu0 0
    %2014 = vmatpush1.bf16.msra.mxu0 0
    %2015 = vmatprep.subr.bf16.mxu0 0
    %2016 = vmatpush1.bf16.msra.mxu0 0
    %2017 = vmatprep.mubr.bf16.mxu0 0
    %2018 = vmatmul.mubr.bf16.gmra.mrb[0].mxu0 %v1984
    %v2019 = vpop.f32.mrb[0].mxu0
    %v2020 = vadd.f32 %v1047, %v2019
    %v2021 = vpop.f32.mrb[0].mxu0
    %v2022 = vadd.f32 %v1051, %v2021
    %v2023 = vpop.f32.mrb[0].mxu0
    %v2024 = vpop.f32.mrb[0].mxu0
    %2025 = vdwg.mxu0
    %2026 = vmatprep.subr.bf16.mxu0 0
    %2027 = vmatpush1.bf16.msra.mxu0 %v1141
    %2028 = vmatprep.subr.bf16.mxu0 0
    %2029 = vmatpush1.bf16.msra.mxu0 %v1144
    %2030 = vmatprep.subr.bf16.mxu0 0
    %2031 = vmatpush1.bf16.msra.mxu0 %v1147
    %2032 = vmatprep.subr.bf16.mxu0 0
    %2033 = vmatpush1.bf16.msra.mxu0 %v1150
    %2034 = vmatprep.subr.bf16.mxu0 0
    %2035 = vmatpush1.bf16.msra.mxu0 %v1153
    %2036 = vmatprep.subr.bf16.mxu0 0
    %2037 = vmatpush1.bf16.msra.mxu0 %v1156
    %2038 = vmatprep.subr.bf16.mxu0 0
    %2039 = vmatpush1.bf16.msra.mxu0 %v1159
    %2040 = vmatprep.subr.bf16.mxu0 0
    %2041 = vmatpush1.bf16.msra.mxu0 %v1162
    %2042 = vmatprep.subr.bf16.mxu0 0
    %2043 = vmatpush1.bf16.msra.mxu0 0
    %2044 = vmatprep.subr.bf16.mxu0 0
    %2045 = vmatpush1.bf16.msra.mxu0 0
    %2046 = vmatprep.subr.bf16.mxu0 0
    %2047 = vmatpush1.bf16.msra.mxu0 0
    %2048 = vmatprep.subr.bf16.mxu0 0
    %2049 = vmatpush1.bf16.msra.mxu0 0
    %2050 = vmatprep.subr.bf16.mxu0 0
    %2051 = vmatpush1.bf16.msra.mxu0 0
    %2052 = vmatprep.subr.bf16.mxu0 0
    %2053 = vmatpush1.bf16.msra.mxu0 0
    %2054 = vmatprep.subr.bf16.mxu0 0
    %2055 = vmatpush1.bf16.msra.mxu0 0
    %2056 = vmatprep.subr.bf16.mxu0 0
    %2057 = vmatpush1.bf16.msra.mxu0 0
    %2058 = vmatprep.mubr.bf16.mxu0 0
    %2059 = vmatmul.mubr.bf16.gmra.mrb[0].mxu0 %v1984
    %v2060 = vpop.f32.mrb[0].mxu0
    %v2061 = vadd.f32 %v1055, %v2060
    %v2062 = vpop.f32.mrb[0].mxu0
    %v2063 = vpop.f32.mrb[0].mxu0
    %v2064 = vpop.f32.mrb[0].mxu0
    %2065 = vdwg.mxu0
    %v2066 = vpack.c.bf16 %v1983, %v1983
    %2067 = vmatprep.subr.bf16.mxu0 %v1366
    %2068 = vmatpush1.bf16.msra.mxu0 %v1365
    %2069 = vmatprep.subr.bf16.mxu0 %v1369
    %2070 = vmatpush1.bf16.msra.mxu0 %v1368
    %2071 = vmatprep.subr.bf16.mxu0 %v1372
    %2072 = vmatpush1.bf16.msra.mxu0 %v1371
    %2073 = vmatprep.subr.bf16.mxu0 %v1375
    %2074 = vmatpush1.bf16.msra.mxu0 %v1374
    %2075 = vmatprep.subr.bf16.mxu0 %v1378
    %2076 = vmatpush1.bf16.msra.mxu0 %v1377
    %2077 = vmatprep.subr.bf16.mxu0 %v1381
    %2078 = vmatpush1.bf16.msra.mxu0 %v1380
    %2079 = vmatprep.subr.bf16.mxu0 %v1384
    %2080 = vmatpush1.bf16.msra.mxu0 %v1383
    %2081 = vmatprep.subr.bf16.mxu0 %v1387
    %2082 = vmatpush1.bf16.msra.mxu0 %v1386
    %2083 = vmatprep.subr.bf16.mxu0 0
    %2084 = vmatpush1.bf16.msra.mxu0 0
    %2085 = vmatprep.subr.bf16.mxu0 0
    %2086 = vmatpush1.bf16.msra.mxu0 0
    %2087 = vmatprep.subr.bf16.mxu0 0
    %2088 = vmatpush1.bf16.msra.mxu0 0
    %2089 = vmatprep.subr.bf16.mxu0 0
    %2090 = vmatpush1.bf16.msra.mxu0 0
    %2091 = vmatprep.subr.bf16.mxu0 0
    %2092 = vmatpush1.bf16.msra.mxu0 0
    %2093 = vmatprep.subr.bf16.mxu0 0
    %2094 = vmatpush1.bf16.msra.mxu0 0
    %2095 = vmatprep.subr.bf16.mxu0 0
    %2096 = vmatpush1.bf16.msra.mxu0 0
    %2097 = vmatprep.subr.bf16.mxu0 0
    %2098 = vmatpush1.bf16.msra.mxu0 0
    %2099 = vmatprep.mubr.bf16.mxu0 0
    %2100 = vmatmul.mubr.bf16.gmra.mrb[0].mxu0 %v2066
    %v2101 = vpop.f32.mrb[0].mxu0
    %v2102 = vadd.f32 %v1273, %v2101
    %v2103 = vpop.f32.mrb[0].mxu0
    %v2104 = vadd.f32 %v1277, %v2103
    %v2105 = vpop.f32.mrb[0].mxu0
    %v2106 = vpop.f32.mrb[0].mxu0
    %2107 = vdwg.mxu0
    %2108 = vmatprep.subr.bf16.mxu0 0
    %2109 = vmatpush1.bf16.msra.mxu0 %v1367
    %2110 = vmatprep.subr.bf16.mxu0 0
    %2111 = vmatpush1.bf16.msra.mxu0 %v1370
    %2112 = vmatprep.subr.bf16.mxu0 0
    %2113 = vmatpush1.bf16.msra.mxu0 %v1373
    %2114 = vmatprep.subr.bf16.mxu0 0
    %2115 = vmatpush1.bf16.msra.mxu0 %v1376
    %2116 = vmatprep.subr.bf16.mxu0 0
    %2117 = vmatpush1.bf16.msra.mxu0 %v1379
    %2118 = vmatprep.subr.bf16.mxu0 0
    %2119 = vmatpush1.bf16.msra.mxu0 %v1382
    %2120 = vmatprep.subr.bf16.mxu0 0
    %2121 = vmatpush1.bf16.msra.mxu0 %v1385
    %2122 = vmatprep.subr.bf16.mxu0 0
    %2123 = vmatpush1.bf16.msra.mxu0 %v1388
    %2124 = vmatprep.subr.bf16.mxu0 0
    %2125 = vmatpush1.bf16.msra.mxu0 0
    %2126 = vmatprep.subr.bf16.mxu0 0
    %2127 = vmatpush1.bf16.msra.mxu0 0
    %2128 = vmatprep.subr.bf16.mxu0 0
    %2129 = vmatpush1.bf16.msra.mxu0 0
    %2130 = vmatprep.subr.bf16.mxu0 0
    %2131 = vmatpush1.bf16.msra.mxu0 0
    %2132 = vmatprep.subr.bf16.mxu0 0
    %2133 = vmatpush1.bf16.msra.mxu0 0
    %2134 = vmatprep.subr.bf16.mxu0 0
    %2135 = vmatpush1.bf16.msra.mxu0 0
    %2136 = vmatprep.subr.bf16.mxu0 0
    %2137 = vmatpush1.bf16.msra.mxu0 0
    %2138 = vmatprep.subr.bf16.mxu0 0
    %2139 = vmatpush1.bf16.msra.mxu0 0
    %2140 = vmatprep.mubr.bf16.mxu0 0
    %2141 = vmatmul.mubr.bf16.gmra.mrb[0].mxu0 %v2066
    %v2142 = vpop.f32.mrb[0].mxu0
    %v2143 = vadd.f32 %v1281, %v2142
    %v2144 = vpop.f32.mrb[0].mxu0
    %v2145 = vpop.f32.mrb[0].mxu0
    %v2146 = vpop.f32.mrb[0].mxu0
    %2147 = vdwg.mxu0
    %s2148 = smul.u32 3, 6
    %s2149 = smul.addr %s2148, 8
    %s2150 = scalar_lea.vmem [#allocation2], %s2149
    %v2151 = vld [vmem:[%s2150] sm:$0xff]
    %v2152 = vld [vmem:[%s2150 + $0x8] sm:$0xff]
    %v2153 = vld [vmem:[%s2150 + $0x10] sm:$0xff]
    %s2154 = smul.u32 4, 6
    %s2155 = smul.addr %s2154, 8
    %s2156 = scalar_lea.vmem [#allocation2], %s2155
    %v2157 = vld [vmem:[%s2156 + $0x18] sm:$0xff]
    %v2158 = vld [vmem:[%s2156 + $0x20] sm:$0xff]
    %v2159 = vld [vmem:[%s2156 + $0x28] sm:$0xff]
    %v2160 = vadd.f32 %v2151, %v2020
    %v2161 = vxor.u32 %v2160, 2147483648
    %v2162 = vmul.f32 %v2161, 1.442695
    %v2163 = vpow.pop %v2162
    %v2164 = vadd.f32 %v2163, 1.0
    %v2165 = vrcp.pop %v2164
    %v2166 = vmul.f32 1.0, %v2165
    %v2167 = vadd.f32 %v2152, %v2022
    %v2168 = vxor.u32 %v2167, 2147483648
    %v2169 = vmul.f32 %v2168, 1.442695
    %v2170 = vpow.pop %v2169
    %v2171 = vadd.f32 %v2170, 1.0
    %v2172 = vrcp.pop %v2171
    %v2173 = vmul.f32 1.0, %v2172
    %v2174 = vmul.f32 %v2166, %v2061
    %v2175 = vadd.f32 %v2153, %v2174
    %v2176 = vtanh.pop %v2175
    %v2177 = vsub.f32 1.0, %v2173
    %v2178 = vmul.f32 %v2177, %v2176
    %v2179 = vmul.f32 %v2173, %v1962
    %v2180 = vadd.f32 %v2178, %v2179
    %v2181 = vadd.f32 %v2157, %v2102
    %v2182 = vxor.u32 %v2181, 2147483648
    %v2183 = vmul.f32 %v2182, 1.442695
    %v2184 = vpow.pop %v2183
    %v2185 = vadd.f32 %v2184, 1.0
    %v2186 = vrcp.pop %v2185
    %v2187 = vmul.f32 1.0, %v2186
    %v2188 = vadd.f32 %v2158, %v2104
    %v2189 = vxor.u32 %v2188, 2147483648
    %v2190 = vmul.f32 %v2189, 1.442695
    %v2191 = vpow.pop %v2190
    %v2192 = vadd.f32 %v2191, 1.0
    %v2193 = vrcp.pop %v2192
    %v2194 = vmul.f32 1.0, %v2193
    %v2195 = vmul.f32 %v2187, %v2143
    %v2196 = vadd.f32 %v2159, %v2195
    %v2197 = vtanh.pop %v2196
    %v2198 = vsub.f32 1.0, %v2194
    %v2199 = vmul.f32 %v2198, %v2197
    %v2200 = vmul.f32 %v2194, %v1983
    %v2201 = vadd.f32 %v2199, %v2200
    %v2202 = vpack.c.bf16 %v2180, %v2180
    %2203 = vmatprep.subr.bf16.mxu0 %v1140
    %2204 = vmatpush1.bf16.msra.mxu0 %v1139
    %2205 = vmatprep.subr.bf16.mxu0 %v1143
    %2206 = vmatpush1.bf16.msra.mxu0 %v1142
    %2207 = vmatprep.subr.bf16.mxu0 %v1146
    %2208 = vmatpush1.bf16.msra.mxu0 %v1145
    %2209 = vmatprep.subr.bf16.mxu0 %v1149
    %2210 = vmatpush1.bf16.msra.mxu0 %v1148
    %2211 = vmatprep.subr.bf16.mxu0 %v1152
    %2212 = vmatpush1.bf16.msra.mxu0 %v1151
    %2213 = vmatprep.subr.bf16.mxu0 %v1155
    %2214 = vmatpush1.bf16.msra.mxu0 %v1154
    %2215 = vmatprep.subr.bf16.mxu0 %v1158
    %2216 = vmatpush1.bf16.msra.mxu0 %v1157
    %2217 = vmatprep.subr.bf16.mxu0 %v1161
    %2218 = vmatpush1.bf16.msra.mxu0 %v1160
    %2219 = vmatprep.subr.bf16.mxu0 0
    %2220 = vmatpush1.bf16.msra.mxu0 0
    %2221 = vmatprep.subr.bf16.mxu0 0
    %2222 = vmatpush1.bf16.msra.mxu0 0
    %2223 = vmatprep.subr.bf16.mxu0 0
    %2224 = vmatpush1.bf16.msra.mxu0 0
    %2225 = vmatprep.subr.bf16.mxu0 0
    %2226 = vmatpush1.bf16.msra.mxu0 0
    %2227 = vmatprep.subr.bf16.mxu0 0
    %2228 = vmatpush1.bf16.msra.mxu0 0
    %2229 = vmatprep.subr.bf16.mxu0 0
    %2230 = vmatpush1.bf16.msra.mxu0 0
    %2231 = vmatprep.subr.bf16.mxu0 0
    %2232 = vmatpush1.bf16.msra.mxu0 0
    %2233 = vmatprep.subr.bf16.mxu0 0
    %2234 = vmatpush1.bf16.msra.mxu0 0
    %2235 = vmatprep.mubr.bf16.mxu0 0
    %2236 = vmatmul.mubr.bf16.gmra.mrb[0].mxu0 %v2202
    %v2237 = vpop.f32.mrb[0].mxu0
    %v2238 = vadd.f32 %v1047, %v2237
    %v2239 = vpop.f32.mrb[0].mxu0
    %v2240 = vadd.f32 %v1051, %v2239
    %v2241 = vpop.f32.mrb[0].mxu0
    %v2242 = vpop.f32.mrb[0].mxu0
    %2243 = vdwg.mxu0
    %2244 = vmatprep.subr.bf16.mxu0 0
    %2245 = vmatpush1.bf16.msra.mxu0 %v1141
    %2246 = vmatprep.subr.bf16.mxu0 0
    %2247 = vmatpush1.bf16.msra.mxu0 %v1144
    %2248 = vmatprep.subr.bf16.mxu0 0
    %2249 = vmatpush1.bf16.msra.mxu0 %v1147
    %2250 = vmatprep.subr.bf16.mxu0 0
    %2251 = vmatpush1.bf16.msra.mxu0 %v1150
    %2252 = vmatprep.subr.bf16.mxu0 0
    %2253 = vmatpush1.bf16.msra.mxu0 %v1153
    %2254 = vmatprep.subr.bf16.mxu0 0
    %2255 = vmatpush1.bf16.msra.mxu0 %v1156
    %2256 = vmatprep.subr.bf16.mxu0 0
    %2257 = vmatpush1.bf16.msra.mxu0 %v1159
    %2258 = vmatprep.subr.bf16.mxu0 0
    %2259 = vmatpush1.bf16.msra.mxu0 %v1162
    %2260 = vmatprep.subr.bf16.mxu0 0
    %2261 = vmatpush1.bf16.msra.mxu0 0
    %2262 = vmatprep.subr.bf16.mxu0 0
    %2263 = vmatpush1.bf16.msra.mxu0 0
    %2264 = vmatprep.subr.bf16.mxu0 0
    %2265 = vmatpush1.bf16.msra.mxu0 0
    %2266 = vmatprep.subr.bf16.mxu0 0
    %2267 = vmatpush1.bf16.msra.mxu0 0
    %2268 = vmatprep.subr.bf16.mxu0 0
    %2269 = vmatpush1.bf16.msra.mxu0 0
    %2270 = vmatprep.subr.bf16.mxu0 0
    %2271 = vmatpush1.bf16.msra.mxu0 0
    %2272 = vmatprep.subr.bf16.mxu0 0
    %2273 = vmatpush1.bf16.msra.mxu0 0
    %2274 = vmatprep.subr.bf16.mxu0 0
    %2275 = vmatpush1.bf16.msra.mxu0 0
    %2276 = vmatprep.mubr.bf16.mxu0 0
    %2277 = vmatmul.mubr.bf16.gmra.mrb[0].mxu0 %v2202
    %v2278 = vpop.f32.mrb[0].mxu0
    %v2279 = vadd.f32 %v1055, %v2278
    %v2280 = vpop.f32.mrb[0].mxu0
    %v2281 = vpop.f32.mrb[0].mxu0
    %v2282 = vpop.f32.mrb[0].mxu0
    %2283 = vdwg.mxu0
    %v2284 = vpack.c.bf16 %v2201, %v2201
    %2285 = vmatprep.subr.bf16.mxu0 %v1366
    %2286 = vmatpush1.bf16.msra.mxu0 %v1365
    %2287 = vmatprep.subr.bf16.mxu0 %v1369
    %2288 = vmatpush1.bf16.msra.mxu0 %v1368
    %2289 = vmatprep.subr.bf16.mxu0 %v1372
    %2290 = vmatpush1.bf16.msra.mxu0 %v1371
    %2291 = vmatprep.subr.bf16.mxu0 %v1375
    %2292 = vmatpush1.bf16.msra.mxu0 %v1374
    %2293 = vmatprep.subr.bf16.mxu0 %v1378
    %2294 = vmatpush1.bf16.msra.mxu0 %v1377
    %2295 = vmatprep.subr.bf16.mxu0 %v1381
    %2296 = vmatpush1.bf16.msra.mxu0 %v1380
    %2297 = vmatprep.subr.bf16.mxu0 %v1384
    %2298 = vmatpush1.bf16.msra.mxu0 %v1383
    %2299 = vmatprep.subr.bf16.mxu0 %v1387
    %2300 = vmatpush1.bf16.msra.mxu0 %v1386
    %2301 = vmatprep.subr.bf16.mxu0 0
    %2302 = vmatpush1.bf16.msra.mxu0 0
    %2303 = vmatprep.subr.bf16.mxu0 0
    %2304 = vmatpush1.bf16.msra.mxu0 0
    %2305 = vmatprep.subr.bf16.mxu0 0
    %2306 = vmatpush1.bf16.msra.mxu0 0
    %2307 = vmatprep.subr.bf16.mxu0 0
    %2308 = vmatpush1.bf16.msra.mxu0 0
    %2309 = vmatprep.subr.bf16.mxu0 0
    %2310 = vmatpush1.bf16.msra.mxu0 0
    %2311 = vmatprep.subr.bf16.mxu0 0
    %2312 = vmatpush1.bf16.msra.mxu0 0
    %2313 = vmatprep.subr.bf16.mxu0 0
    %2314 = vmatpush1.bf16.msra.mxu0 0
    %2315 = vmatprep.subr.bf16.mxu0 0
    %2316 = vmatpush1.bf16.msra.mxu0 0
    %2317 = vmatprep.mubr.bf16.mxu0 0
    %2318 = vmatmul.mubr.bf16.gmra.mrb[0].mxu0 %v2284
    %v2319 = vpop.f32.mrb[0].mxu0
    %v2320 = vadd.f32 %v1273, %v2319
    %v2321 = vpop.f32.mrb[0].mxu0
    %v2322 = vadd.f32 %v1277, %v2321
    %v2323 = vpop.f32.mrb[0].mxu0
    %v2324 = vpop.f32.mrb[0].mxu0
    %2325 = vdwg.mxu0
    %2326 = vmatprep.subr.bf16.mxu0 0
    %2327 = vmatpush1.bf16.msra.mxu0 %v1367
    %2328 = vmatprep.subr.bf16.mxu0 0
    %2329 = vmatpush1.bf16.msra.mxu0 %v1370
    %2330 = vmatprep.subr.bf16.mxu0 0
    %2331 = vmatpush1.bf16.msra.mxu0 %v1373
    %2332 = vmatprep.subr.bf16.mxu0 0
    %2333 = vmatpush1.bf16.msra.mxu0 %v1376
    %2334 = vmatprep.subr.bf16.mxu0 0
    %2335 = vmatpush1.bf16.msra.mxu0 %v1379
    %2336 = vmatprep.subr.bf16.mxu0 0
    %2337 = vmatpush1.bf16.msra.mxu0 %v1382
    %2338 = vmatprep.subr.bf16.mxu0 0
    %2339 = vmatpush1.bf16.msra.mxu0 %v1385
    %2340 = vmatprep.subr.bf16.mxu0 0
    %2341 = vmatpush1.bf16.msra.mxu0 %v1388
    %2342 = vmatprep.subr.bf16.mxu0 0
    %2343 = vmatpush1.bf16.msra.mxu0 0
    %2344 = vmatprep.subr.bf16.mxu0 0
    %2345 = vmatpush1.bf16.msra.mxu0 0
    %2346 = vmatprep.subr.bf16.mxu0 0
    %2347 = vmatpush1.bf16.msra.mxu0 0
    %2348 = vmatprep.subr.bf16.mxu0 0
    %2349 = vmatpush1.bf16.msra.mxu0 0
    %2350 = vmatprep.subr.bf16.mxu0 0
    %2351 = vmatpush1.bf16.msra.mxu0 0
    %2352 = vmatprep.subr.bf16.mxu0 0
    %2353 = vmatpush1.bf16.msra.mxu0 0
    %2354 = vmatprep.subr.bf16.mxu0 0
    %2355 = vmatpush1.bf16.msra.mxu0 0
    %2356 = vmatprep.subr.bf16.mxu0 0
    %2357 = vmatpush1.bf16.msra.mxu0 0
    %2358 = vmatprep.mubr.bf16.mxu0 0
    %2359 = vmatmul.mubr.bf16.gmra.mrb[0].mxu0 %v2284
    %v2360 = vpop.f32.mrb[0].mxu0
    %v2361 = vadd.f32 %v1281, %v2360
    %v2362 = vpop.f32.mrb[0].mxu0
    %v2363 = vpop.f32.mrb[0].mxu0
    %v2364 = vpop.f32.mrb[0].mxu0
    %2365 = vdwg.mxu0
    %v2366 = vld [vmem:[%s2156] sm:$0xff]
    %v2367 = vld [vmem:[%s2156 + $0x8] sm:$0xff]
    %v2368 = vld [vmem:[%s2156 + $0x10] sm:$0xff]
    %v2369 = vld [vmem:[%s2150 + $0x18] sm:$0xff]
    %v2370 = vld [vmem:[%s2150 + $0x20] sm:$0xff]
    %v2371 = vld [vmem:[%s2150 + $0x28] sm:$0xff]
    %v2372 = vadd.f32 %v2366, %v2238
    %v2373 = vxor.u32 %v2372, 2147483648
    %v2374 = vmul.f32 %v2373, 1.442695
    %v2375 = vpow.pop %v2374
    %v2376 = vadd.f32 %v2375, 1.0
    %v2377 = vrcp.pop %v2376
    %v2378 = vmul.f32 1.0, %v2377
    %v2379 = vadd.f32 %v2367, %v2240
    %v2380 = vxor.u32 %v2379, 2147483648
    %v2381 = vmul.f32 %v2380, 1.442695
    %v2382 = vpow.pop %v2381
    %v2383 = vadd.f32 %v2382, 1.0
    %v2384 = vrcp.pop %v2383
    %v2385 = vmul.f32 1.0, %v2384
    %v2386 = vmul.f32 %v2378, %v2279
    %v2387 = vadd.f32 %v2368, %v2386
    %v2388 = vtanh.pop %v2387
    %v2389 = vsub.f32 1.0, %v2385
    %v2390 = vmul.f32 %v2389, %v2388
    %v2391 = vmul.f32 %v2385, %v2180
    %v2392 = vadd.f32 %v2390, %v2391
    %v2393 = vadd.f32 %v2369, %v2320
    %v2394 = vxor.u32 %v2393, 2147483648
    %v2395 = vmul.f32 %v2394, 1.442695
    %v2396 = vpow.pop %v2395
    %v2397 = vadd.f32 %v2396, 1.0
    %v2398 = vrcp.pop %v2397
    %v2399 = vmul.f32 1.0, %v2398
    %v2400 = vadd.f32 %v2370, %v2322
    %v2401 = vxor.u32 %v2400, 2147483648
    %v2402 = vmul.f32 %v2401, 1.442695
    %v2403 = vpow.pop %v2402
    %v2404 = vadd.f32 %v2403, 1.0
    %v2405 = vrcp.pop %v2404
    %v2406 = vmul.f32 1.0, %v2405
    %v2407 = vmul.f32 %v2399, %v2361
    %v2408 = vadd.f32 %v2371, %v2407
    %v2409 = vtanh.pop %v2408
    %v2410 = vsub.f32 1.0, %v2406
    %v2411 = vmul.f32 %v2410, %v2409
    %v2412 = vmul.f32 %v2406, %v2201
    %v2413 = vadd.f32 %v2411, %v2412
    %v2414 = vpack.c.bf16 %v2392, %v2392
    %2415 = vmatprep.subr.bf16.mxu0 %v1140
    %2416 = vmatpush1.bf16.msra.mxu0 %v1139
    %2417 = vmatprep.subr.bf16.mxu0 %v1143
    %2418 = vmatpush1.bf16.msra.mxu0 %v1142
    %2419 = vmatprep.subr.bf16.mxu0 %v1146
    %2420 = vmatpush1.bf16.msra.mxu0 %v1145
    %2421 = vmatprep.subr.bf16.mxu0 %v1149
    %2422 = vmatpush1.bf16.msra.mxu0 %v1148
    %2423 = vmatprep.subr.bf16.mxu0 %v1152
    %2424 = vmatpush1.bf16.msra.mxu0 %v1151
    %2425 = vmatprep.subr.bf16.mxu0 %v1155
    %2426 = vmatpush1.bf16.msra.mxu0 %v1154
    %2427 = vmatprep.subr.bf16.mxu0 %v1158
    %2428 = vmatpush1.bf16.msra.mxu0 %v1157
    %2429 = vmatprep.subr.bf16.mxu0 %v1161
    %2430 = vmatpush1.bf16.msra.mxu0 %v1160
    %2431 = vmatprep.subr.bf16.mxu0 0
    %2432 = vmatpush1.bf16.msra.mxu0 0
    %2433 = vmatprep.subr.bf16.mxu0 0
    %2434 = vmatpush1.bf16.msra.mxu0 0
    %2435 = vmatprep.subr.bf16.mxu0 0
    %2436 = vmatpush1.bf16.msra.mxu0 0
    %2437 = vmatprep.subr.bf16.mxu0 0
    %2438 = vmatpush1.bf16.msra.mxu0 0
    %2439 = vmatprep.subr.bf16.mxu0 0
    %2440 = vmatpush1.bf16.msra.mxu0 0
    %2441 = vmatprep.subr.bf16.mxu0 0
    %2442 = vmatpush1.bf16.msra.mxu0 0
    %2443 = vmatprep.subr.bf16.mxu0 0
    %2444 = vmatpush1.bf16.msra.mxu0 0
    %2445 = vmatprep.subr.bf16.mxu0 0
    %2446 = vmatpush1.bf16.msra.mxu0 0
    %2447 = vmatprep.mubr.bf16.mxu0 0
    %2448 = vmatmul.mubr.bf16.gmra.mrb[0].mxu0 %v2414
    %v2449 = vpop.f32.mrb[0].mxu0
    %v2450 = vadd.f32 %v1047, %v2449
    %v2451 = vpop.f32.mrb[0].mxu0
    %v2452 = vadd.f32 %v1051, %v2451
    %v2453 = vpop.f32.mrb[0].mxu0
    %v2454 = vpop.f32.mrb[0].mxu0
    %2455 = vdwg.mxu0
    %2456 = vmatprep.subr.bf16.mxu0 0
    %2457 = vmatpush1.bf16.msra.mxu0 %v1141
    %2458 = vmatprep.subr.bf16.mxu0 0
    %2459 = vmatpush1.bf16.msra.mxu0 %v1144
    %2460 = vmatprep.subr.bf16.mxu0 0
    %2461 = vmatpush1.bf16.msra.mxu0 %v1147
    %2462 = vmatprep.subr.bf16.mxu0 0
    %2463 = vmatpush1.bf16.msra.mxu0 %v1150
    %2464 = vmatprep.subr.bf16.mxu0 0
    %2465 = vmatpush1.bf16.msra.mxu0 %v1153
    %2466 = vmatprep.subr.bf16.mxu0 0
    %2467 = vmatpush1.bf16.msra.mxu0 %v1156
    %2468 = vmatprep.subr.bf16.mxu0 0
    %2469 = vmatpush1.bf16.msra.mxu0 %v1159
    %2470 = vmatprep.subr.bf16.mxu0 0
    %2471 = vmatpush1.bf16.msra.mxu0 %v1162
    %2472 = vmatprep.subr.bf16.mxu0 0
    %2473 = vmatpush1.bf16.msra.mxu0 0
    %2474 = vmatprep.subr.bf16.mxu0 0
    %2475 = vmatpush1.bf16.msra.mxu0 0
    %2476 = vmatprep.subr.bf16.mxu0 0
    %2477 = vmatpush1.bf16.msra.mxu0 0
    %2478 = vmatprep.subr.bf16.mxu0 0
    %2479 = vmatpush1.bf16.msra.mxu0 0
    %2480 = vmatprep.subr.bf16.mxu0 0
    %2481 = vmatpush1.bf16.msra.mxu0 0
    %2482 = vmatprep.subr.bf16.mxu0 0
    %2483 = vmatpush1.bf16.msra.mxu0 0
    %2484 = vmatprep.subr.bf16.mxu0 0
    %2485 = vmatpush1.bf16.msra.mxu0 0
    %2486 = vmatprep.subr.bf16.mxu0 0
    %2487 = vmatpush1.bf16.msra.mxu0 0
    %2488 = vmatprep.mubr.bf16.mxu0 0
    %2489 = vmatmul.mubr.bf16.gmra.mrb[0].mxu0 %v2414
    %v2490 = vpop.f32.mrb[0].mxu0
    %v2491 = vadd.f32 %v1055, %v2490
    %v2492 = vpop.f32.mrb[0].mxu0
    %v2493 = vpop.f32.mrb[0].mxu0
    %v2494 = vpop.f32.mrb[0].mxu0
    %2495 = vdwg.mxu0
    %v2496 = vpack.c.bf16 %v2413, %v2413
    %2497 = vmatprep.subr.bf16.mxu0 %v1366
    %2498 = vmatpush1.bf16.msra.mxu0 %v1365
    %2499 = vmatprep.subr.bf16.mxu0 %v1369
    %2500 = vmatpush1.bf16.msra.mxu0 %v1368
    %2501 = vmatprep.subr.bf16.mxu0 %v1372
    %2502 = vmatpush1.bf16.msra.mxu0 %v1371
    %2503 = vmatprep.subr.bf16.mxu0 %v1375
    %2504 = vmatpush1.bf16.msra.mxu0 %v1374
    %2505 = vmatprep.subr.bf16.mxu0 %v1378
    %2506 = vmatpush1.bf16.msra.mxu0 %v1377
    %2507 = vmatprep.subr.bf16.mxu0 %v1381
    %2508 = vmatpush1.bf16.msra.mxu0 %v1380
    %2509 = vmatprep.subr.bf16.mxu0 %v1384
    %2510 = vmatpush1.bf16.msra.mxu0 %v1383
    %2511 = vmatprep.subr.bf16.mxu0 %v1387
    %2512 = vmatpush1.bf16.msra.mxu0 %v1386
    %2513 = vmatprep.subr.bf16.mxu0 0
    %2514 = vmatpush1.bf16.msra.mxu0 0
    %2515 = vmatprep.subr.bf16.mxu0 0
    %2516 = vmatpush1.bf16.msra.mxu0 0
    %2517 = vmatprep.subr.bf16.mxu0 0
    %2518 = vmatpush1.bf16.msra.mxu0 0
    %2519 = vmatprep.subr.bf16.mxu0 0
    %2520 = vmatpush1.bf16.msra.mxu0 0
    %2521 = vmatprep.subr.bf16.mxu0 0
    %2522 = vmatpush1.bf16.msra.mxu0 0
    %2523 = vmatprep.subr.bf16.mxu0 0
    %2524 = vmatpush1.bf16.msra.mxu0 0
    %2525 = vmatprep.subr.bf16.mxu0 0
    %2526 = vmatpush1.bf16.msra.mxu0 0
    %2527 = vmatprep.subr.bf16.mxu0 0
    %2528 = vmatpush1.bf16.msra.mxu0 0
    %2529 = vmatprep.mubr.bf16.mxu0 0
    %2530 = vmatmul.mubr.bf16.gmra.mrb[0].mxu0 %v2496
    %v2531 = vpop.f32.mrb[0].mxu0
    %v2532 = vadd.f32 %v1273, %v2531
    %v2533 = vpop.f32.mrb[0].mxu0
    %v2534 = vadd.f32 %v1277, %v2533
    %v2535 = vpop.f32.mrb[0].mxu0
    %v2536 = vpop.f32.mrb[0].mxu0
    %2537 = vdwg.mxu0
    %2538 = vmatprep.subr.bf16.mxu0 0
    %2539 = vmatpush1.bf16.msra.mxu0 %v1367
    %2540 = vmatprep.subr.bf16.mxu0 0
    %2541 = vmatpush1.bf16.msra.mxu0 %v1370
    %2542 = vmatprep.subr.bf16.mxu0 0
    %2543 = vmatpush1.bf16.msra.mxu0 %v1373
    %2544 = vmatprep.subr.bf16.mxu0 0
    %2545 = vmatpush1.bf16.msra.mxu0 %v1376
    %2546 = vmatprep.subr.bf16.mxu0 0
    %2547 = vmatpush1.bf16.msra.mxu0 %v1379
    %2548 = vmatprep.subr.bf16.mxu0 0
    %2549 = vmatpush1.bf16.msra.mxu0 %v1382
    %2550 = vmatprep.subr.bf16.mxu0 0
    %2551 = vmatpush1.bf16.msra.mxu0 %v1385
    %2552 = vmatprep.subr.bf16.mxu0 0
    %2553 = vmatpush1.bf16.msra.mxu0 %v1388
    %2554 = vmatprep.subr.bf16.mxu0 0
    %2555 = vmatpush1.bf16.msra.mxu0 0
    %2556 = vmatprep.subr.bf16.mxu0 0
    %2557 = vmatpush1.bf16.msra.mxu0 0
    %2558 = vmatprep.subr.bf16.mxu0 0
    %2559 = vmatpush1.bf16.msra.mxu0 0
    %2560 = vmatprep.subr.bf16.mxu0 0
    %2561 = vmatpush1.bf16.msra.mxu0 0
    %2562 = vmatprep.subr.bf16.mxu0 0
    %2563 = vmatpush1.bf16.msra.mxu0 0
    %2564 = vmatprep.subr.bf16.mxu0 0
    %2565 = vmatpush1.bf16.msra.mxu0 0
    %2566 = vmatprep.subr.bf16.mxu0 0
    %2567 = vmatpush1.bf16.msra.mxu0 0
    %2568 = vmatprep.subr.bf16.mxu0 0
    %2569 = vmatpush1.bf16.msra.mxu0 0
    %2570 = vmatprep.mubr.bf16.mxu0 0
    %2571 = vmatmul.mubr.bf16.gmra.mrb[0].mxu0 %v2496
    %v2572 = vpop.f32.mrb[0].mxu0
    %v2573 = vadd.f32 %v1281, %v2572
    %v2574 = vpop.f32.mrb[0].mxu0
    %v2575 = vpop.f32.mrb[0].mxu0
    %v2576 = vpop.f32.mrb[0].mxu0
    %2577 = vdwg.mxu0
    %v2578 = vld [vmem:[%s1938] sm:$0xff]
    %v2579 = vld [vmem:[%s1938 + $0x8] sm:$0xff]
    %v2580 = vld [vmem:[%s1938 + $0x10] sm:$0xff]
    %v2581 = vld [vmem:[%s1932 + $0x18] sm:$0xff]
    %v2582 = vld [vmem:[%s1932 + $0x20] sm:$0xff]
    %v2583 = vld [vmem:[%s1932 + $0x28] sm:$0xff]
    %v2584 = vadd.f32 %v2578, %v2450
    %v2585 = vxor.u32 %v2584, 2147483648
    %v2586 = vmul.f32 %v2585, 1.442695
    %v2587 = vpow.pop %v2586
    %v2588 = vadd.f32 %v2587, 1.0
    %v2589 = vrcp.pop %v2588
    %v2590 = vmul.f32 1.0, %v2589
    %v2591 = vadd.f32 %v2579, %v2452
    %v2592 = vxor.u32 %v2591, 2147483648
    %v2593 = vmul.f32 %v2592, 1.442695
    %v2594 = vpow.pop %v2593
    %v2595 = vadd.f32 %v2594, 1.0
    %v2596 = vrcp.pop %v2595
    %v2597 = vmul.f32 1.0, %v2596
    %v2598 = vmul.f32 %v2590, %v2491
    %v2599 = vadd.f32 %v2580, %v2598
    %v2600 = vtanh.pop %v2599
    %v2601 = vsub.f32 1.0, %v2597
    %v2602 = vmul.f32 %v2601, %v2600
    %v2603 = vmul.f32 %v2597, %v2392
    %v2604 = vadd.f32 %v2602, %v2603
    %v2605 = vadd.f32 %v2581, %v2532
    %v2606 = vxor.u32 %v2605, 2147483648
    %v2607 = vmul.f32 %v2606, 1.442695
    %v2608 = vpow.pop %v2607
    %v2609 = vadd.f32 %v2608, 1.0
    %v2610 = vrcp.pop %v2609
    %v2611 = vmul.f32 1.0, %v2610
    %v2612 = vadd.f32 %v2582, %v2534
    %v2613 = vxor.u32 %v2612, 2147483648
    %v2614 = vmul.f32 %v2613, 1.442695
    %v2615 = vpow.pop %v2614
    %v2616 = vadd.f32 %v2615, 1.0
    %v2617 = vrcp.pop %v2616
    %v2618 = vmul.f32 1.0, %v2617
    %v2619 = vmul.f32 %v2611, %v2573
    %v2620 = vadd.f32 %v2583, %v2619
    %v2621 = vtanh.pop %v2620
    %v2622 = vsub.f32 1.0, %v2618
    %v2623 = vmul.f32 %v2622, %v2621
    %v2624 = vmul.f32 %v2618, %v2413
    %v2625 = vadd.f32 %v2623, %v2624
    %v2626 = vpack.c.bf16 %v2604, %v2604
    %2627 = vmatprep.subr.bf16.mxu0 %v1140
    %2628 = vmatpush1.bf16.msra.mxu0 %v1139
    %2629 = vmatprep.subr.bf16.mxu0 %v1143
    %2630 = vmatpush1.bf16.msra.mxu0 %v1142
    %2631 = vmatprep.subr.bf16.mxu0 %v1146
    %2632 = vmatpush1.bf16.msra.mxu0 %v1145
    %2633 = vmatprep.subr.bf16.mxu0 %v1149
    %2634 = vmatpush1.bf16.msra.mxu0 %v1148
    %2635 = vmatprep.subr.bf16.mxu0 %v1152
    %2636 = vmatpush1.bf16.msra.mxu0 %v1151
    %2637 = vmatprep.subr.bf16.mxu0 %v1155
    %2638 = vmatpush1.bf16.msra.mxu0 %v1154
    %2639 = vmatprep.subr.bf16.mxu0 %v1158
    %2640 = vmatpush1.bf16.msra.mxu0 %v1157
    %2641 = vmatprep.subr.bf16.mxu0 %v1161
    %2642 = vmatpush1.bf16.msra.mxu0 %v1160
    %2643 = vmatprep.subr.bf16.mxu0 0
    %2644 = vmatpush1.bf16.msra.mxu0 0
    %2645 = vmatprep.subr.bf16.mxu0 0
    %2646 = vmatpush1.bf16.msra.mxu0 0
    %2647 = vmatprep.subr.bf16.mxu0 0
    %2648 = vmatpush1.bf16.msra.mxu0 0
    %2649 = vmatprep.subr.bf16.mxu0 0
    %2650 = vmatpush1.bf16.msra.mxu0 0
    %2651 = vmatprep.subr.bf16.mxu0 0
    %2652 = vmatpush1.bf16.msra.mxu0 0
    %2653 = vmatprep.subr.bf16.mxu0 0
    %2654 = vmatpush1.bf16.msra.mxu0 0
    %2655 = vmatprep.subr.bf16.mxu0 0
    %2656 = vmatpush1.bf16.msra.mxu0 0
    %2657 = vmatprep.subr.bf16.mxu0 0
    %2658 = vmatpush1.bf16.msra.mxu0 0
    %2659 = vmatprep.mubr.bf16.mxu0 0
    %2660 = vmatmul.mubr.bf16.gmra.mrb[0].mxu0 %v2626
    %v2661 = vpop.f32.mrb[0].mxu0
    %v2662 = vadd.f32 %v1047, %v2661
    %v2663 = vpop.f32.mrb[0].mxu0
    %v2664 = vadd.f32 %v1051, %v2663
    %v2665 = vpop.f32.mrb[0].mxu0
    %v2666 = vpop.f32.mrb[0].mxu0
    %2667 = vdwg.mxu0
    %2668 = vmatprep.subr.bf16.mxu0 0
    %2669 = vmatpush1.bf16.msra.mxu0 %v1141
    %2670 = vmatprep.subr.bf16.mxu0 0
    %2671 = vmatpush1.bf16.msra.mxu0 %v1144
    %2672 = vmatprep.subr.bf16.mxu0 0
    %2673 = vmatpush1.bf16.msra.mxu0 %v1147
    %2674 = vmatprep.subr.bf16.mxu0 0
    %2675 = vmatpush1.bf16.msra.mxu0 %v1150
    %2676 = vmatprep.subr.bf16.mxu0 0
    %2677 = vmatpush1.bf16.msra.mxu0 %v1153
    %2678 = vmatprep.subr.bf16.mxu0 0
    %2679 = vmatpush1.bf16.msra.mxu0 %v1156
    %2680 = vmatprep.subr.bf16.mxu0 0
    %2681 = vmatpush1.bf16.msra.mxu0 %v1159
    %2682 = vmatprep.subr.bf16.mxu0 0
    %2683 = vmatpush1.bf16.msra.mxu0 %v1162
    %2684 = vmatprep.subr.bf16.mxu0 0
    %2685 = vmatpush1.bf16.msra.mxu0 0
    %2686 = vmatprep.subr.bf16.mxu0 0
    %2687 = vmatpush1.bf16.msra.mxu0 0
    %2688 = vmatprep.subr.bf16.mxu0 0
    %2689 = vmatpush1.bf16.msra.mxu0 0
    %2690 = vmatprep.subr.bf16.mxu0 0
    %2691 = vmatpush1.bf16.msra.mxu0 0
    %2692 = vmatprep.subr.bf16.mxu0 0
    %2693 = vmatpush1.bf16.msra.mxu0 0
    %2694 = vmatprep.subr.bf16.mxu0 0
    %2695 = vmatpush1.bf16.msra.mxu0 0
    %2696 = vmatprep.subr.bf16.mxu0 0
    %2697 = vmatpush1.bf16.msra.mxu0 0
    %2698 = vmatprep.subr.bf16.mxu0 0
    %2699 = vmatpush1.bf16.msra.mxu0 0
    %2700 = vmatprep.mubr.bf16.mxu0 0
    %2701 = vmatmul.mubr.bf16.gmra.mrb[0].mxu0 %v2626
    %v2702 = vpop.f32.mrb[0].mxu0
    %v2703 = vadd.f32 %v1055, %v2702
    %v2704 = vpop.f32.mrb[0].mxu0
    %v2705 = vpop.f32.mrb[0].mxu0
    %v2706 = vpop.f32.mrb[0].mxu0
    %2707 = vdwg.mxu0
    %v2708 = vpack.c.bf16 %v2625, %v2625
    %2709 = vmatprep.subr.bf16.mxu0 %v1366
    %2710 = vmatpush1.bf16.msra.mxu0 %v1365
    %2711 = vmatprep.subr.bf16.mxu0 %v1369
    %2712 = vmatpush1.bf16.msra.mxu0 %v1368
    %2713 = vmatprep.subr.bf16.mxu0 %v1372
    %2714 = vmatpush1.bf16.msra.mxu0 %v1371
    %2715 = vmatprep.subr.bf16.mxu0 %v1375
    %2716 = vmatpush1.bf16.msra.mxu0 %v1374
    %2717 = vmatprep.subr.bf16.mxu0 %v1378
    %2718 = vmatpush1.bf16.msra.mxu0 %v1377
    %2719 = vmatprep.subr.bf16.mxu0 %v1381
    %2720 = vmatpush1.bf16.msra.mxu0 %v1380
    %2721 = vmatprep.subr.bf16.mxu0 %v1384
    %2722 = vmatpush1.bf16.msra.mxu0 %v1383
    %2723 = vmatprep.subr.bf16.mxu0 %v1387
    %2724 = vmatpush1.bf16.msra.mxu0 %v1386
    %2725 = vmatprep.subr.bf16.mxu0 0
    %2726 = vmatpush1.bf16.msra.mxu0 0
    %2727 = vmatprep.subr.bf16.mxu0 0
    %2728 = vmatpush1.bf16.msra.mxu0 0
    %2729 = vmatprep.subr.bf16.mxu0 0
    %2730 = vmatpush1.bf16.msra.mxu0 0
    %2731 = vmatprep.subr.bf16.mxu0 0
    %2732 = vmatpush1.bf16.msra.mxu0 0
    %2733 = vmatprep.subr.bf16.mxu0 0
    %2734 = vmatpush1.bf16.msra.mxu0 0
    %2735 = vmatprep.subr.bf16.mxu0 0
    %2736 = vmatpush1.bf16.msra.mxu0 0
    %2737 = vmatprep.subr.bf16.mxu0 0
    %2738 = vmatpush1.bf16.msra.mxu0 0
    %2739 = vmatprep.subr.bf16.mxu0 0
    %2740 = vmatpush1.bf16.msra.mxu0 0
    %2741 = vmatprep.mubr.bf16.mxu0 0
    %2742 = vmatmul.mubr.bf16.gmra.mrb[0].mxu0 %v2708
    %v2743 = vpop.f32.mrb[0].mxu0
    %v2744 = vadd.f32 %v1273, %v2743
    %v2745 = vpop.f32.mrb[0].mxu0
    %v2746 = vadd.f32 %v1277, %v2745
    %v2747 = vpop.f32.mrb[0].mxu0
    %v2748 = vpop.f32.mrb[0].mxu0
    %2749 = vdwg.mxu0
    %2750 = vmatprep.subr.bf16.mxu0 0
    %2751 = vmatpush1.bf16.msra.mxu0 %v1367
    %2752 = vmatprep.subr.bf16.mxu0 0
    %2753 = vmatpush1.bf16.msra.mxu0 %v1370
    %2754 = vmatprep.subr.bf16.mxu0 0
    %2755 = vmatpush1.bf16.msra.mxu0 %v1373
    %2756 = vmatprep.subr.bf16.mxu0 0
    %2757 = vmatpush1.bf16.msra.mxu0 %v1376
    %2758 = vmatprep.subr.bf16.mxu0 0
    %2759 = vmatpush1.bf16.msra.mxu0 %v1379
    %2760 = vmatprep.subr.bf16.mxu0 0
    %2761 = vmatpush1.bf16.msra.mxu0 %v1382
    %2762 = vmatprep.subr.bf16.mxu0 0
    %2763 = vmatpush1.bf16.msra.mxu0 %v1385
    %2764 = vmatprep.subr.bf16.mxu0 0
    %2765 = vmatpush1.bf16.msra.mxu0 %v1388
    %2766 = vmatprep.subr.bf16.mxu0 0
    %2767 = vmatpush1.bf16.msra.mxu0 0
    %2768 = vmatprep.subr.bf16.mxu0 0
    %2769 = vmatpush1.bf16.msra.mxu0 0
    %2770 = vmatprep.subr.bf16.mxu0 0
    %2771 = vmatpush1.bf16.msra.mxu0 0
    %2772 = vmatprep.subr.bf16.mxu0 0
    %2773 = vmatpush1.bf16.msra.mxu0 0
    %2774 = vmatprep.subr.bf16.mxu0 0
    %2775 = vmatpush1.bf16.msra.mxu0 0
    %2776 = vmatprep.subr.bf16.mxu0 0
    %2777 = vmatpush1.bf16.msra.mxu0 0
    %2778 = vmatprep.subr.bf16.mxu0 0
    %2779 = vmatpush1.bf16.msra.mxu0 0
    %2780 = vmatprep.subr.bf16.mxu0 0
    %2781 = vmatpush1.bf16.msra.mxu0 0
    %2782 = vmatprep.mubr.bf16.mxu0 0
    %2783 = vmatmul.mubr.bf16.gmra.mrb[0].mxu0 %v2708
    %v2784 = vpop.f32.mrb[0].mxu0
    %v2785 = vadd.f32 %v1281, %v2784
    %v2786 = vpop.f32.mrb[0].mxu0
    %v2787 = vpop.f32.mrb[0].mxu0
    %v2788 = vpop.f32.mrb[0].mxu0
    %2789 = vdwg.mxu0
    %v2790 = vld [vmem:[%s1720] sm:$0xff]
    %v2791 = vld [vmem:[%s1720 + $0x8] sm:$0xff]
    %v2792 = vld [vmem:[%s1720 + $0x10] sm:$0xff]
    %v2793 = vld [vmem:[%s1714 + $0x18] sm:$0xff]
    %v2794 = vld [vmem:[%s1714 + $0x20] sm:$0xff]
    %v2795 = vld [vmem:[%s1714 + $0x28] sm:$0xff]
    %v2796 = vadd.f32 %v2790, %v2662
    %v2797 = vxor.u32 %v2796, 2147483648
    %v2798 = vmul.f32 %v2797, 1.442695
    %v2799 = vpow.pop %v2798
    %v2800 = vadd.f32 %v2799, 1.0
    %v2801 = vrcp.pop %v2800
    %v2802 = vmul.f32 1.0, %v2801
    %v2803 = vadd.f32 %v2791, %v2664
    %v2804 = vxor.u32 %v2803, 2147483648
    %v2805 = vmul.f32 %v2804, 1.442695
    %v2806 = vpow.pop %v2805
    %v2807 = vadd.f32 %v2806, 1.0
    %v2808 = vrcp.pop %v2807
    %v2809 = vmul.f32 1.0, %v2808
    %v2810 = vmul.f32 %v2802, %v2703
    %v2811 = vadd.f32 %v2792, %v2810
    %v2812 = vtanh.pop %v2811
    %v2813 = vsub.f32 1.0, %v2809
    %v2814 = vmul.f32 %v2813, %v2812
    %v2815 = vmul.f32 %v2809, %v2604
    %v2816 = vadd.f32 %v2814, %v2815
    %v2817 = vadd.f32 %v2793, %v2744
    %v2818 = vxor.u32 %v2817, 2147483648
    %v2819 = vmul.f32 %v2818, 1.442695
    %v2820 = vpow.pop %v2819
    %v2821 = vadd.f32 %v2820, 1.0
    %v2822 = vrcp.pop %v2821
    %v2823 = vmul.f32 1.0, %v2822
    %v2824 = vadd.f32 %v2794, %v2746
    %v2825 = vxor.u32 %v2824, 2147483648
    %v2826 = vmul.f32 %v2825, 1.442695
    %v2827 = vpow.pop %v2826
    %v2828 = vadd.f32 %v2827, 1.0
    %v2829 = vrcp.pop %v2828
    %v2830 = vmul.f32 1.0, %v2829
    %v2831 = vmul.f32 %v2823, %v2785
    %v2832 = vadd.f32 %v2795, %v2831
    %v2833 = vtanh.pop %v2832
    %v2834 = vsub.f32 1.0, %v2830
    %v2835 = vmul.f32 %v2834, %v2833
    %v2836 = vmul.f32 %v2830, %v2625
    %v2837 = vadd.f32 %v2835, %v2836
    %v2838 = vpack.c.bf16 %v2816, %v2816
    %2839 = vmatprep.subr.bf16.mxu0 %v1140
    %2840 = vmatpush1.bf16.msra.mxu0 %v1139
    %2841 = vmatprep.subr.bf16.mxu0 %v1143
    %2842 = vmatpush1.bf16.msra.mxu0 %v1142
    %2843 = vmatprep.subr.bf16.mxu0 %v1146
    %2844 = vmatpush1.bf16.msra.mxu0 %v1145
    %2845 = vmatprep.subr.bf16.mxu0 %v1149
    %2846 = vmatpush1.bf16.msra.mxu0 %v1148
    %2847 = vmatprep.subr.bf16.mxu0 %v1152
    %2848 = vmatpush1.bf16.msra.mxu0 %v1151
    %2849 = vmatprep.subr.bf16.mxu0 %v1155
    %2850 = vmatpush1.bf16.msra.mxu0 %v1154
    %2851 = vmatprep.subr.bf16.mxu0 %v1158
    %2852 = vmatpush1.bf16.msra.mxu0 %v1157
    %2853 = vmatprep.subr.bf16.mxu0 %v1161
    %2854 = vmatpush1.bf16.msra.mxu0 %v1160
    %2855 = vmatprep.subr.bf16.mxu0 0
    %2856 = vmatpush1.bf16.msra.mxu0 0
    %2857 = vmatprep.subr.bf16.mxu0 0
    %2858 = vmatpush1.bf16.msra.mxu0 0
    %2859 = vmatprep.subr.bf16.mxu0 0
    %2860 = vmatpush1.bf16.msra.mxu0 0
    %2861 = vmatprep.subr.bf16.mxu0 0
    %2862 = vmatpush1.bf16.msra.mxu0 0
    %2863 = vmatprep.subr.bf16.mxu0 0
    %2864 = vmatpush1.bf16.msra.mxu0 0
    %2865 = vmatprep.subr.bf16.mxu0 0
    %2866 = vmatpush1.bf16.msra.mxu0 0
    %2867 = vmatprep.subr.bf16.mxu0 0
    %2868 = vmatpush1.bf16.msra.mxu0 0
    %2869 = vmatprep.subr.bf16.mxu0 0
    %2870 = vmatpush1.bf16.msra.mxu0 0
    %2871 = vmatprep.mubr.bf16.mxu0 0
    %2872 = vmatmul.mubr.bf16.gmra.mrb[0].mxu0 %v2838
    %v2873 = vpop.f32.mrb[0].mxu0
    %v2874 = vadd.f32 %v1047, %v2873
    %v2875 = vpop.f32.mrb[0].mxu0
    %v2876 = vadd.f32 %v1051, %v2875
    %v2877 = vpop.f32.mrb[0].mxu0
    %v2878 = vpop.f32.mrb[0].mxu0
    %2879 = vdwg.mxu0
    %2880 = vmatprep.subr.bf16.mxu0 0
    %2881 = vmatpush1.bf16.msra.mxu0 %v1141
    %2882 = vmatprep.subr.bf16.mxu0 0
    %2883 = vmatpush1.bf16.msra.mxu0 %v1144
    %2884 = vmatprep.subr.bf16.mxu0 0
    %2885 = vmatpush1.bf16.msra.mxu0 %v1147
    %2886 = vmatprep.subr.bf16.mxu0 0
    %2887 = vmatpush1.bf16.msra.mxu0 %v1150
    %2888 = vmatprep.subr.bf16.mxu0 0
    %2889 = vmatpush1.bf16.msra.mxu0 %v1153
    %2890 = vmatprep.subr.bf16.mxu0 0
    %2891 = vmatpush1.bf16.msra.mxu0 %v1156
    %2892 = vmatprep.subr.bf16.mxu0 0
    %2893 = vmatpush1.bf16.msra.mxu0 %v1159
    %2894 = vmatprep.subr.bf16.mxu0 0
    %2895 = vmatpush1.bf16.msra.mxu0 %v1162
    %2896 = vmatprep.subr.bf16.mxu0 0
    %2897 = vmatpush1.bf16.msra.mxu0 0
    %2898 = vmatprep.subr.bf16.mxu0 0
    %2899 = vmatpush1.bf16.msra.mxu0 0
    %2900 = vmatprep.subr.bf16.mxu0 0
    %2901 = vmatpush1.bf16.msra.mxu0 0
    %2902 = vmatprep.subr.bf16.mxu0 0
    %2903 = vmatpush1.bf16.msra.mxu0 0
    %2904 = vmatprep.subr.bf16.mxu0 0
    %2905 = vmatpush1.bf16.msra.mxu0 0
    %2906 = vmatprep.subr.bf16.mxu0 0
    %2907 = vmatpush1.bf16.msra.mxu0 0
    %2908 = vmatprep.subr.bf16.mxu0 0
    %2909 = vmatpush1.bf16.msra.mxu0 0
    %2910 = vmatprep.subr.bf16.mxu0 0
    %2911 = vmatpush1.bf16.msra.mxu0 0
    %2912 = vmatprep.mubr.bf16.mxu0 0
    %2913 = vmatmul.mubr.bf16.gmra.mrb[0].mxu0 %v2838
    %v2914 = vpop.f32.mrb[0].mxu0
    %v2915 = vadd.f32 %v1055, %v2914
    %v2916 = vpop.f32.mrb[0].mxu0
    %v2917 = vpop.f32.mrb[0].mxu0
    %v2918 = vpop.f32.mrb[0].mxu0
    %2919 = vdwg.mxu0
    %v2920 = vpack.c.bf16 %v2837, %v2837
    %2921 = vmatprep.subr.bf16.mxu0 %v1366
    %2922 = vmatpush1.bf16.msra.mxu0 %v1365
    %2923 = vmatprep.subr.bf16.mxu0 %v1369
    %2924 = vmatpush1.bf16.msra.mxu0 %v1368
    %2925 = vmatprep.subr.bf16.mxu0 %v1372
    %2926 = vmatpush1.bf16.msra.mxu0 %v1371
    %2927 = vmatprep.subr.bf16.mxu0 %v1375
    %2928 = vmatpush1.bf16.msra.mxu0 %v1374
    %2929 = vmatprep.subr.bf16.mxu0 %v1378
    %2930 = vmatpush1.bf16.msra.mxu0 %v1377
    %2931 = vmatprep.subr.bf16.mxu0 %v1381
    %2932 = vmatpush1.bf16.msra.mxu0 %v1380
    %2933 = vmatprep.subr.bf16.mxu0 %v1384
    %2934 = vmatpush1.bf16.msra.mxu0 %v1383
    %2935 = vmatprep.subr.bf16.mxu0 %v1387
    %2936 = vmatpush1.bf16.msra.mxu0 %v1386
    %2937 = vmatprep.subr.bf16.mxu0 0
    %2938 = vmatpush1.bf16.msra.mxu0 0
    %2939 = vmatprep.subr.bf16.mxu0 0
    %2940 = vmatpush1.bf16.msra.mxu0 0
    %2941 = vmatprep.subr.bf16.mxu0 0
    %2942 = vmatpush1.bf16.msra.mxu0 0
    %2943 = vmatprep.subr.bf16.mxu0 0
    %2944 = vmatpush1.bf16.msra.mxu0 0
    %2945 = vmatprep.subr.bf16.mxu0 0
    %2946 = vmatpush1.bf16.msra.mxu0 0
    %2947 = vmatprep.subr.bf16.mxu0 0
    %2948 = vmatpush1.bf16.msra.mxu0 0
    %2949 = vmatprep.subr.bf16.mxu0 0
    %2950 = vmatpush1.bf16.msra.mxu0 0
    %2951 = vmatprep.subr.bf16.mxu0 0
    %2952 = vmatpush1.bf16.msra.mxu0 0
    %2953 = vmatprep.mubr.bf16.mxu0 0
    %2954 = vmatmul.mubr.bf16.gmra.mrb[0].mxu0 %v2920
    %v2955 = vpop.f32.mrb[0].mxu0
    %v2956 = vadd.f32 %v1273, %v2955
    %v2957 = vpop.f32.mrb[0].mxu0
    %v2958 = vadd.f32 %v1277, %v2957
    %v2959 = vpop.f32.mrb[0].mxu0
    %v2960 = vpop.f32.mrb[0].mxu0
    %2961 = vdwg.mxu0
    %2962 = vmatprep.subr.bf16.mxu0 0
    %2963 = vmatpush1.bf16.msra.mxu0 %v1367
    %2964 = vmatprep.subr.bf16.mxu0 0
    %2965 = vmatpush1.bf16.msra.mxu0 %v1370
    %2966 = vmatprep.subr.bf16.mxu0 0
    %2967 = vmatpush1.bf16.msra.mxu0 %v1373
    %2968 = vmatprep.subr.bf16.mxu0 0
    %2969 = vmatpush1.bf16.msra.mxu0 %v1376
    %2970 = vmatprep.subr.bf16.mxu0 0
    %2971 = vmatpush1.bf16.msra.mxu0 %v1379
    %2972 = vmatprep.subr.bf16.mxu0 0
    %2973 = vmatpush1.bf16.msra.mxu0 %v1382
    %2974 = vmatprep.subr.bf16.mxu0 0
    %2975 = vmatpush1.bf16.msra.mxu0 %v1385
    %2976 = vmatprep.subr.bf16.mxu0 0
    %2977 = vmatpush1.bf16.msra.mxu0 %v1388
    %2978 = vmatprep.subr.bf16.mxu0 0
    %2979 = vmatpush1.bf16.msra.mxu0 0
    %2980 = vmatprep.subr.bf16.mxu0 0
    %2981 = vmatpush1.bf16.msra.mxu0 0
    %2982 = vmatprep.subr.bf16.mxu0 0
    %2983 = vmatpush1.bf16.msra.mxu0 0
    %2984 = vmatprep.subr.bf16.mxu0 0
    %2985 = vmatpush1.bf16.msra.mxu0 0
    %2986 = vmatprep.subr.bf16.mxu0 0
    %2987 = vmatpush1.bf16.msra.mxu0 0
    %2988 = vmatprep.subr.bf16.mxu0 0
    %2989 = vmatpush1.bf16.msra.mxu0 0
    %2990 = vmatprep.subr.bf16.mxu0 0
    %2991 = vmatpush1.bf16.msra.mxu0 0
    %2992 = vmatprep.subr.bf16.mxu0 0
    %2993 = vmatpush1.bf16.msra.mxu0 0
    %2994 = vmatprep.mubr.bf16.mxu0 0
    %2995 = vmatmul.mubr.bf16.gmra.mrb[0].mxu0 %v2920
    %v2996 = vpop.f32.mrb[0].mxu0
    %v2997 = vadd.f32 %v1281, %v2996
    %v2998 = vpop.f32.mrb[0].mxu0
    %v2999 = vpop.f32.mrb[0].mxu0
    %v3000 = vpop.f32.mrb[0].mxu0
    %3001 = vdwg.mxu0
    %v3002 = vld [vmem:[%s1502] sm:$0xff]
    %v3003 = vld [vmem:[%s1502 + $0x8] sm:$0xff]
    %v3004 = vld [vmem:[%s1502 + $0x10] sm:$0xff]
    %v3005 = vld [vmem:[%s1496 + $0x18] sm:$0xff]
    %v3006 = vld [vmem:[%s1496 + $0x20] sm:$0xff]
    %v3007 = vld [vmem:[%s1496 + $0x28] sm:$0xff]
    %v3008 = vadd.f32 %v3002, %v2874
    %v3009 = vxor.u32 %v3008, 2147483648
    %v3010 = vmul.f32 %v3009, 1.442695
    %v3011 = vpow.pop %v3010
    %v3012 = vadd.f32 %v3011, 1.0
    %v3013 = vrcp.pop %v3012
    %v3014 = vmul.f32 1.0, %v3013
    %v3015 = vadd.f32 %v3003, %v2876
    %v3016 = vxor.u32 %v3015, 2147483648
    %v3017 = vmul.f32 %v3016, 1.442695
    %v3018 = vpow.pop %v3017
    %v3019 = vadd.f32 %v3018, 1.0
    %v3020 = vrcp.pop %v3019
    %v3021 = vmul.f32 1.0, %v3020
    %v3022 = vmul.f32 %v3014, %v2915
    %v3023 = vadd.f32 %v3004, %v3022
    %v3024 = vtanh.pop %v3023
    %v3025 = vsub.f32 1.0, %v3021
    %v3026 = vmul.f32 %v3025, %v3024
    %v3027 = vmul.f32 %v3021, %v2816
    %v3028 = vadd.f32 %v3026, %v3027
    %v3029 = vadd.f32 %v3005, %v2956
    %v3030 = vxor.u32 %v3029, 2147483648
    %v3031 = vmul.f32 %v3030, 1.442695
    %v3032 = vpow.pop %v3031
    %v3033 = vadd.f32 %v3032, 1.0
    %v3034 = vrcp.pop %v3033
    %v3035 = vmul.f32 1.0, %v3034
    %v3036 = vadd.f32 %v3006, %v2958
    %v3037 = vxor.u32 %v3036, 2147483648
    %v3038 = vmul.f32 %v3037, 1.442695
    %v3039 = vpow.pop %v3038
    %v3040 = vadd.f32 %v3039, 1.0
    %v3041 = vrcp.pop %v3040
    %v3042 = vmul.f32 1.0, %v3041
    %v3043 = vmul.f32 %v3035, %v2997
    %v3044 = vadd.f32 %v3007, %v3043
    %v3045 = vtanh.pop %v3044
    %v3046 = vsub.f32 1.0, %v3042
    %v3047 = vmul.f32 %v3046, %v3045
    %v3048 = vmul.f32 %v3042, %v2837
    %v3049 = vadd.f32 %v3047, %v3048
    %v3050 = vld [vmem:[%s0 + $0x70] sm:$0xff]
    %v3051 = vld [vmem:[%s0 + $0x8] sm:$0xff]
    %v3052 = vpack.c.bf16 %v3050, %v3050
    %v3053 = vpack.c.bf16 %v3051, %v3051
    %v3054 = vpack.c.bf16 %v3028, %v3028
    %v3055 = vpack.c.bf16 %v3049, %v3049
    %v3056 = vld [vmem:[%s9] sm:$0xf]
    %v3057 = vld [vmem:[%s9 + $0x4] sm:$0xf]
    %v3058 = vld [vmem:[%s9 + $0x8] sm:$0xf]
    %v3059 = vld [vmem:[%s9 + $0xc] sm:$0xf]
    %v3060 = vld [vmem:[%s9 + $0x10] sm:$0xf]
    %v3061 = vld [vmem:[%s9 + $0x14] sm:$0xf]
    %v3062 = vld [vmem:[%s9 + $0x18] sm:$0xf]
    %v3063 = vld [vmem:[%s9 + $0x1c] sm:$0xf]
    %v3064 = vld [vmem:[%s9 + $0x20] sm:$0xf]
    %v3065 = vld [vmem:[%s9 + $0x24] sm:$0xf]
    %v3066 = vld [vmem:[%s9 + $0x28] sm:$0xf]
    %v3067 = vld [vmem:[%s9 + $0x2c] sm:$0xf]
    %v3068 = vld [vmem:[%s9 + $0x30] sm:$0xf]
    %v3069 = vld [vmem:[%s9 + $0x34] sm:$0xf]
    %v3070 = vld [vmem:[%s9 + $0x38] sm:$0xf]
    %v3071 = vld [vmem:[%s9 + $0x3c] sm:$0xf]
    %v3072 = vld [vmem:[%s9 + $0x40] sm:$0xf]
    %v3073 = vld [vmem:[%s9 + $0x44] sm:$0xf]
    %v3074 = vld [vmem:[%s9 + $0x48] sm:$0xf]
    %v3075 = vld [vmem:[%s9 + $0x4c] sm:$0xf]
    %v3076 = vld [vmem:[%s9 + $0x50] sm:$0xf]
    %v3077 = vld [vmem:[%s9 + $0x54] sm:$0xf]
    %v3078 = vld [vmem:[%s9 + $0x58] sm:$0xf]
    %v3079 = vld [vmem:[%s9 + $0x5c] sm:$0xf]
    %v3080 = vld [vmem:[%s9 + $0x60] sm:$0xf]
    %v3081 = vld [vmem:[%s9 + $0x64] sm:$0xf]
    %v3082 = vld [vmem:[%s9 + $0x68] sm:$0xf]
    %v3083 = vld [vmem:[%s9 + $0x6c] sm:$0xf]
    %v3084 = vld [vmem:[%s9 + $0x70] sm:$0xf]
    %v3085 = vld [vmem:[%s9 + $0x74] sm:$0xf]
    %v3086 = vld [vmem:[%s9 + $0x78] sm:$0xf]
    %v3087 = vld [vmem:[%s9 + $0x7c] sm:$0xf]
    %v3088 = vld [vmem:[%s9 + $0x80] sm:$0xf]
    %v3089 = vld [vmem:[%s9 + $0x84] sm:$0xf]
    %v3090 = vld [vmem:[%s9 + $0x88] sm:$0xf]
    %v3091 = vld [vmem:[%s9 + $0x8c] sm:$0xf]
    %v3092 = vld [vmem:[%s9 + $0x90] sm:$0xf]
    %v3093 = vld [vmem:[%s9 + $0x94] sm:$0xf]
    %v3094 = vld [vmem:[%s9 + $0x98] sm:$0xf]
    %v3095 = vld [vmem:[%s9 + $0x9c] sm:$0xf]
    %v3096 = vld [vmem:[%s9 + $0xa0] sm:$0xf]
    %v3097 = vld [vmem:[%s9 + $0xa4] sm:$0xf]
    %v3098 = vld [vmem:[%s9 + $0xa8] sm:$0xf]
    %v3099 = vld [vmem:[%s9 + $0xac] sm:$0xf]
    %v3100 = vld [vmem:[%s9 + $0xb0] sm:$0xf]
    %v3101 = vld [vmem:[%s9 + $0xb4] sm:$0xf]
    %v3102 = vld [vmem:[%s9 + $0xb8] sm:$0xf]
    %v3103 = vld [vmem:[%s9 + $0xbc] sm:$0xf]
    %v3104 = vld [vmem:[%s9 + $0xc0] sm:$0xf]
    %v3105 = vld [vmem:[%s9 + $0xc4] sm:$0xf]
    %v3106 = vld [vmem:[%s9 + $0xc8] sm:$0xf]
    %v3107 = vld [vmem:[%s9 + $0xcc] sm:$0xf]
    %v3108 = vld [vmem:[%s9 + $0xd0] sm:$0xf]
    %v3109 = vld [vmem:[%s9 + $0xd4] sm:$0xf]
    %v3110 = vld [vmem:[%s9 + $0xd8] sm:$0xf]
    %v3111 = vld [vmem:[%s9 + $0xdc] sm:$0xf]
    %v3112 = vld [vmem:[%s9 + $0xe0] sm:$0xf]
    %v3113 = vld [vmem:[%s9 + $0xe4] sm:$0xf]
    %v3114 = vld [vmem:[%s9 + $0xe8] sm:$0xf]
    %v3115 = vld [vmem:[%s9 + $0xec] sm:$0xf]
    %v3116 = vld [vmem:[%s9 + $0xf0] sm:$0xf]
    %v3117 = vld [vmem:[%s9 + $0xf4] sm:$0xf]
    %v3118 = vld [vmem:[%s9 + $0xf8] sm:$0xf]
    %v3119 = vld [vmem:[%s9 + $0xfc] sm:$0xf]
    %v3120 = vld [vmem:[%s10] sm:$0x1]
    %v3122 = vlaneseq
    %v3123 = vshrl.u32 %v3122, 7
    %v3124 = vsub.s32 0, %v3123
    %v3125 = vrot.slane %v3120, %v3124
    %v3191 = vunpack.c.l.b16 %v3056
    %v3192 = vunpack.c.l.b16 %v3057
    %v3193 = vunpack.c.l.b16 %v3058
    %v3194 = vunpack.c.l.b16 %v3059
    %v3195 = vunpack.c.l.b16 %v3060
    %v3196 = vunpack.c.l.b16 %v3061
    %v3197 = vunpack.c.l.b16 %v3062
    %v3198 = vunpack.c.l.b16 %v3063
    %v3199 = vunpack.c.l.b16 %v3064
    %v3200 = vunpack.c.l.b16 %v3065
    %v3201 = vunpack.c.l.b16 %v3066
    %v3202 = vunpack.c.l.b16 %v3067
    %v3203 = vunpack.c.l.b16 %v3068
    %v3204 = vunpack.c.l.b16 %v3069
    %v3205 = vunpack.c.l.b16 %v3070
    %v3206 = vunpack.c.l.b16 %v3071
    %v3207 = vunpack.c.l.b16 %v3072
    %v3208 = vunpack.c.l.b16 %v3073
    %v3209 = vunpack.c.l.b16 %v3074
    %v3210 = vunpack.c.l.b16 %v3075
    %v3211 = vunpack.c.l.b16 %v3076
    %v3212 = vunpack.c.l.b16 %v3077
    %v3213 = vunpack.c.l.b16 %v3078
    %v3214 = vunpack.c.l.b16 %v3079
    %v3215 = vunpack.c.l.b16 %v3080
    %v3216 = vunpack.c.l.b16 %v3081
    %v3217 = vunpack.c.l.b16 %v3082
    %v3218 = vunpack.c.l.b16 %v3083
    %v3219 = vunpack.c.l.b16 %v3084
    %v3220 = vunpack.c.l.b16 %v3085
    %v3221 = vunpack.c.l.b16 %v3086
    %v3222 = vunpack.c.l.b16 %v3087
    %v3223 = vunpack.c.l.b16 %v3088
    %v3224 = vunpack.c.l.b16 %v3089
    %v3225 = vunpack.c.l.b16 %v3090
    %v3226 = vunpack.c.l.b16 %v3091
    %v3227 = vunpack.c.l.b16 %v3092
    %v3228 = vunpack.c.l.b16 %v3093
    %v3229 = vunpack.c.l.b16 %v3094
    %v3230 = vunpack.c.l.b16 %v3095
    %v3231 = vunpack.c.l.b16 %v3096
    %v3232 = vunpack.c.l.b16 %v3097
    %v3233 = vunpack.c.l.b16 %v3098
    %v3234 = vunpack.c.l.b16 %v3099
    %v3235 = vunpack.c.l.b16 %v3100
    %v3236 = vunpack.c.l.b16 %v3101
    %v3237 = vunpack.c.l.b16 %v3102
    %v3238 = vunpack.c.l.b16 %v3103
    %v3239 = vunpack.c.l.b16 %v3104
    %v3240 = vunpack.c.l.b16 %v3105
    %v3241 = vunpack.c.l.b16 %v3106
    %v3242 = vunpack.c.l.b16 %v3107
    %v3243 = vunpack.c.l.b16 %v3108
    %v3244 = vunpack.c.l.b16 %v3109
    %v3245 = vunpack.c.l.b16 %v3110
    %v3246 = vunpack.c.l.b16 %v3111
    %v3247 = vunpack.c.l.b16 %v3112
    %v3248 = vunpack.c.l.b16 %v3113
    %v3249 = vunpack.c.l.b16 %v3114
    %v3250 = vunpack.c.l.b16 %v3115
    %v3251 = vunpack.c.l.b16 %v3116
    %v3252 = vunpack.c.l.b16 %v3117
    %v3253 = vunpack.c.l.b16 %v3118
    %v3254 = vunpack.c.l.b16 %v3119
    %v3255 = vpack.c.b16 %v3192, %v3191
    %v3256 = vpack.c.b16 %v3194, %v3193
    %v3257 = vpack.c.b16 %v3196, %v3195
    %v3258 = vpack.c.b16 %v3198, %v3197
    %v3259 = vpack.c.b16 %v3200, %v3199
    %v3260 = vpack.c.b16 %v3202, %v3201
    %v3261 = vpack.c.b16 %v3204, %v3203
    %v3262 = vpack.c.b16 %v3206, %v3205
    %v3263 = vpack.c.b16 %v3208, %v3207
    %v3264 = vpack.c.b16 %v3210, %v3209
    %v3265 = vpack.c.b16 %v3212, %v3211
    %v3266 = vpack.c.b16 %v3214, %v3213
    %v3267 = vpack.c.b16 %v3216, %v3215
    %v3268 = vpack.c.b16 %v3218, %v3217
    %v3269 = vpack.c.b16 %v3220, %v3219
    %v3270 = vpack.c.b16 %v3222, %v3221
    %v3271 = vpack.c.b16 %v3224, %v3223
    %v3272 = vpack.c.b16 %v3226, %v3225
    %v3273 = vpack.c.b16 %v3228, %v3227
    %v3274 = vpack.c.b16 %v3230, %v3229
    %v3275 = vpack.c.b16 %v3232, %v3231
    %v3276 = vpack.c.b16 %v3234, %v3233
    %v3277 = vpack.c.b16 %v3236, %v3235
    %v3278 = vpack.c.b16 %v3238, %v3237
    %v3279 = vpack.c.b16 %v3240, %v3239
    %v3280 = vpack.c.b16 %v3242, %v3241
    %v3281 = vpack.c.b16 %v3244, %v3243
    %v3282 = vpack.c.b16 %v3246, %v3245
    %v3283 = vpack.c.b16 %v3248, %v3247
    %v3284 = vpack.c.b16 %v3250, %v3249
    %v3285 = vpack.c.b16 %v3252, %v3251
    %v3286 = vpack.c.b16 %v3254, %v3253
    %3319 = vmatprep.subr.bf16.mxu0 0
    %3320 = vmatpush1.bf16.msra.mxu0 %v3255
    %3321 = vmatprep.subr.bf16.mxu0 0
    %3322 = vmatpush1.bf16.msra.mxu0 %v3256
    %3323 = vmatprep.subr.bf16.mxu0 0
    %3324 = vmatpush1.bf16.msra.mxu0 %v3257
    %3325 = vmatprep.subr.bf16.mxu0 0
    %3326 = vmatpush1.bf16.msra.mxu0 %v3258
    %3327 = vmatprep.subr.bf16.mxu0 0
    %3328 = vmatpush1.bf16.msra.mxu0 %v3259
    %3329 = vmatprep.subr.bf16.mxu0 0
    %3330 = vmatpush1.bf16.msra.mxu0 %v3260
    %3331 = vmatprep.subr.bf16.mxu0 0
    %3332 = vmatpush1.bf16.msra.mxu0 %v3261
    %3333 = vmatprep.subr.bf16.mxu0 0
    %3334 = vmatpush1.bf16.msra.mxu0 %v3262
    %3335 = vmatprep.subr.bf16.mxu0 0
    %3336 = vmatpush1.bf16.msra.mxu0 %v3263
    %3337 = vmatprep.subr.bf16.mxu0 0
    %3338 = vmatpush1.bf16.msra.mxu0 %v3264
    %3339 = vmatprep.subr.bf16.mxu0 0
    %3340 = vmatpush1.bf16.msra.mxu0 %v3265
    %3341 = vmatprep.subr.bf16.mxu0 0
    %3342 = vmatpush1.bf16.msra.mxu0 %v3266
    %3343 = vmatprep.subr.bf16.mxu0 0
    %3344 = vmatpush1.bf16.msra.mxu0 %v3267
    %3345 = vmatprep.subr.bf16.mxu0 0
    %3346 = vmatpush1.bf16.msra.mxu0 %v3268
    %3347 = vmatprep.subr.bf16.mxu0 0
    %3348 = vmatpush1.bf16.msra.mxu0 %v3269
    %3349 = vmatprep.subr.bf16.mxu0 0
    %3350 = vmatpush1.bf16.msra.mxu0 %v3270
    %3351 = vmatprep.mubr.bf16.mxu0 %v3053
    %3352 = vmatmul.mubr.bf16.gmra.mrb[0].mxu0 %v3052
    %v3353 = vpop.f32.mrb[0].mxu0
    %v3354 = vadd.f32 %v3125, %v3353
    %v3355 = vpop.f32.mrb[0].mxu0
    %v3356 = vpop.f32.mrb[0].mxu0
    %v3357 = vpop.f32.mrb[0].mxu0
    %3358 = vdwg.mxu0
    %3359 = vmatprep.subr.bf16.mxu0 0
    %3360 = vmatpush1.bf16.msra.mxu0 %v3271
    %3361 = vmatprep.subr.bf16.mxu0 0
    %3362 = vmatpush1.bf16.msra.mxu0 %v3272
    %3363 = vmatprep.subr.bf16.mxu0 0
    %3364 = vmatpush1.bf16.msra.mxu0 %v3273
    %3365 = vmatprep.subr.bf16.mxu0 0
    %3366 = vmatpush1.bf16.msra.mxu0 %v3274
    %3367 = vmatprep.subr.bf16.mxu0 0
    %3368 = vmatpush1.bf16.msra.mxu0 %v3275
    %3369 = vmatprep.subr.bf16.mxu0 0
    %3370 = vmatpush1.bf16.msra.mxu0 %v3276
    %3371 = vmatprep.subr.bf16.mxu0 0
    %3372 = vmatpush1.bf16.msra.mxu0 %v3277
    %3373 = vmatprep.subr.bf16.mxu0 0
    %3374 = vmatpush1.bf16.msra.mxu0 %v3278
    %3375 = vmatprep.subr.bf16.mxu0 0
    %3376 = vmatpush1.bf16.msra.mxu0 %v3279
    %3377 = vmatprep.subr.bf16.mxu0 0
    %3378 = vmatpush1.bf16.msra.mxu0 %v3280
    %3379 = vmatprep.subr.bf16.mxu0 0
    %3380 = vmatpush1.bf16.msra.mxu0 %v3281
    %3381 = vmatprep.subr.bf16.mxu0 0
    %3382 = vmatpush1.bf16.msra.mxu0 %v3282
    %3383 = vmatprep.subr.bf16.mxu0 0
    %3384 = vmatpush1.bf16.msra.mxu0 %v3283
    %3385 = vmatprep.subr.bf16.mxu0 0
    %3386 = vmatpush1.bf16.msra.mxu0 %v3284
    %3387 = vmatprep.subr.bf16.mxu0 0
    %3388 = vmatpush1.bf16.msra.mxu0 %v3285
    %3389 = vmatprep.subr.bf16.mxu0 0
    %3390 = vmatpush1.bf16.msra.mxu0 %v3286
    %3391 = vmatprep.mubr.bf16.mxu0 %v3055
    %3392 = vmatmul.mubr.bf16.gmra.mrb[0].mxu0 %v3054
    %v3393 = vpop.f32.mrb[0].mxu0
    %v3394 = vadd.f32 %v3354, %v3393
    %v3395 = vpop.f32.mrb[0].mxu0
    %v3396 = vpop.f32.mrb[0].mxu0
    %v3397 = vpop.f32.mrb[0].mxu0
    %3398 = vdwg.mxu0
    %v3399 = vtanh.pop %v3394
    %v3400 = vld [vmem:[%s11] sm:$0x1]
    %v3402 = vlaneseq
    %v3403 = vshrl.u32 %v3402, 7
    %v3404 = vsub.s32 0, %v3403
    %v3405 = vrot.slane %v3400, %v3404
    %v3407 = vmul.f32 %v3399, %v3405
    %3408 = vadd.xlane.f32.xlu0 %v3407
    %v3409 = vpop.xlane.xlu0 %3408
    %v3410 = vld [vmem:[#allocation3] sm:$0x1]
    %v3412 = vlaneseq
    %v3413 = vshrl.u32 %v3412, 7
    %v3414 = vsub.s32 0, %v3413
    %v3415 = vrot.slane %v3410, %v3414
    %v3417 = vadd.f32 %v3409, %v3415
    %v3418 = vxor.u32 %v3417, 2147483648
    %v3419 = vmul.f32 %v3418, 1.442695
    %v3420 = vpow.pop %v3419
    %v3421 = vadd.f32 %v3420, 1.0
    %v3422 = vrcp.pop %v3421
    %v3423 = vmul.f32 1.0, %v3422
    %vm3424 = vcmask 7168
    %3425 = vst.msk [vmem:[%s13] sm:$0xff] %vm3424, %v3423
    // Predicated region
    $region62: #{forward.5} parent=1 // pred_check
      _
    $region63: #{forward.5} parent=1 // pred_check_branch
      %3427 = sbr.rel (0) target = $region65
    $region64: #{forward.5} parent=1 // pred_region
      _
    $region65: #{forward.5} parent=1 // pred_fallthru
      _
    // Predicated region
    $region66: #{forward.5} parent=1 // pred_check
      _
    $region67: #{forward.5} parent=1 // pred_check_branch
      %3429 = sbr.rel (0) target = $region69
    $region68: #{forward.5} parent=1 // pred_region
      _
    $region69: #{forward.5} parent=1 // pred_fallthru
      _
    %3430 = vsyncpa [#allocation5], 1
    %3431 = vsyncpa [#allocation7], 1

// kernel: forward.4
$region0: #{forward.4}
  #allocation0 [shape = 'u32[]', space=smem, size = 0x4, offset = 0x4, fixed_abs, tag = 'smem constant byte address 0x4 - core index']
  #allocation1 [shape = 'u32[144,128]{1,0:T(1,128)}', space=vmem, size = 0x12000, scoped, tag = 'internal scratch']
  #allocation2 [shape = 'f32[64,768]{1,0:T(8,128)}', space=vmem, size = 0x30000, scoped, tag = 'scratch operand']
  %s0 = inlined_call_operand.vmem [shape: bf16[64,128], index: 0, kind: input, shape index: {}]
  %s1 = inlined_call_operand.vmem [shape: f32[8,128], index: 1, kind: input, shape index: {}]
  %s2 = inlined_call_operand.vmem [shape: f32[8,128], index: 2, kind: input, shape index: {}]
  %s3 = inlined_call_operand.vmem [shape: bf16[128,768], index: 3, kind: input, shape index: {}]
  %s4 = inlined_call_operand.vmem [shape: f32[1,768], index: 4, kind: input, shape index: {}]
  %s5 = inlined_call_operand.vmem [shape: bf16[128,384], index: 5, kind: input, shape index: {}]
  %s6 = inlined_call_operand.vmem [shape: f32[1,384], index: 6, kind: input, shape index: {}]
  %s7 = inlined_call_operand.vmem [shape: bf16[128,384], index: 7, kind: input, shape index: {}]
  %s8 = inlined_call_operand.vmem [shape: f32[1,384], index: 8, kind: input, shape index: {}]
  %s9 = inlined_call_operand.vmem [shape: f32[64,256], index: 9, kind: output, shape index: {}]
  %s10 = sld [smem:[#allocation0]]
  $region46: #{forward.4} parent=0
    _
  %s12 = ssub.s32 1, %s10
  %s13 = scalar_select 0, %s12, %s10
  // Predicated region
  $region2: #{forward.4} parent=0 // pred_check
    _
  $region3: #{forward.4} parent=0 // pred_check_branch
    %15 = sbr.rel (0) target = $region5
  $region4: #{forward.4} parent=0 // pred_region
    _
  $region5: #{forward.4} parent=0 // pred_fallthru
    _
  // Predicated region
  $region6: #{forward.4} parent=0 // pred_check
    _
  $region7: #{forward.4} parent=0 // pred_check_branch
    %17 = sbr.rel (0) target = $region9
  $region8: #{forward.4} parent=0 // pred_region
    _
  $region9: #{forward.4} parent=0 // pred_fallthru
    _
  // Predicated region
  $region10: #{forward.4} parent=0 // pred_check
    _
  $region11: #{forward.4} parent=0 // pred_check_branch
    %19 = sbr.rel (0) target = $region13
  $region12: #{forward.4} parent=0 // pred_region
    _
  $region13: #{forward.4} parent=0 // pred_fallthru
    _
  // Predicated region
  $region14: #{forward.4} parent=0 // pred_check
    _
  $region15: #{forward.4} parent=0 // pred_check_branch
    %21 = sbr.rel (0) target = $region17
  $region16: #{forward.4} parent=0 // pred_region
    _
  $region17: #{forward.4} parent=0 // pred_fallthru
    _
  // Predicated region
  $region18: #{forward.4} parent=0 // pred_check
    _
  $region19: #{forward.4} parent=0 // pred_check_branch
    %23 = sbr.rel (0) target = $region21
  $region20: #{forward.4} parent=0 // pred_region
    _
  $region21: #{forward.4} parent=0 // pred_fallthru
    _
  // Predicated region
  $region22: #{forward.4} parent=0 // pred_check
    _
  $region23: #{forward.4} parent=0 // pred_check_branch
    %25 = sbr.rel (0) target = $region25
  $region24: #{forward.4} parent=0 // pred_region
    _
  $region25: #{forward.4} parent=0 // pred_fallthru
    _
  // Predicated region
  $region26: #{forward.4} parent=0 // pred_check
    _
  $region27: #{forward.4} parent=0 // pred_check_branch
    %27 = sbr.rel (0) target = $region29
  $region28: #{forward.4} parent=0 // pred_region
    _
  $region29: #{forward.4} parent=0 // pred_fallthru
    _
  // Predicated region
  $region30: #{forward.4} parent=0 // pred_check
    _
  $region31: #{forward.4} parent=0 // pred_check_branch
    %29 = sbr.rel (0) target = $region33
  $region32: #{forward.4} parent=0 // pred_region
    _
  $region33: #{forward.4} parent=0 // pred_fallthru
    _
  // Predicated region
  $region34: #{forward.4} parent=0 // pred_check
    _
  $region35: #{forward.4} parent=0 // pred_check_branch
    %31 = sbr.rel (0) target = $region37
  $region36: #{forward.4} parent=0 // pred_region
    _
  $region37: #{forward.4} parent=0 // pred_fallthru
    _
  %v33 = vld [vmem:[%s0] sm:$0xf]
  %v34 = vld [vmem:[%s0 + $0x4] sm:$0xf]
  %v35 = vld [vmem:[%s0 + $0x8] sm:$0xf]
  %v36 = vld [vmem:[%s0 + $0xc] sm:$0xf]
  %v37 = vld [vmem:[%s0 + $0x10] sm:$0xf]
  %v38 = vld [vmem:[%s0 + $0x14] sm:$0xf]
  %v39 = vld [vmem:[%s0 + $0x18] sm:$0xf]
  %v40 = vld [vmem:[%s0 + $0x1c] sm:$0xf]
  %v41 = vld [vmem:[%s3] sm:$0xff]
  %v42 = vld [vmem:[%s3 + $0x8] sm:$0xff]
  %v43 = vld [vmem:[%s3 + $0x10] sm:$0xff]
  %v44 = vld [vmem:[%s3 + $0x18] sm:$0xff]
  %v45 = vld [vmem:[%s3 + $0x20] sm:$0xff]
  %v46 = vld [vmem:[%s3 + $0x28] sm:$0xff]
  %v47 = vld [vmem:[%s3 + $0x30] sm:$0xff]
  %v48 = vld [vmem:[%s3 + $0x38] sm:$0xff]
  %v49 = vld [vmem:[%s3 + $0x40] sm:$0xff]
  %v50 = vld [vmem:[%s3 + $0x48] sm:$0xff]
  %v51 = vld [vmem:[%s3 + $0x50] sm:$0xff]
  %v52 = vld [vmem:[%s3 + $0x58] sm:$0xff]
  %v53 = vld [vmem:[%s3 + $0x60] sm:$0xff]
  %v54 = vld [vmem:[%s3 + $0x68] sm:$0xff]
  %v55 = vld [vmem:[%s3 + $0x70] sm:$0xff]
  %v56 = vld [vmem:[%s3 + $0x78] sm:$0xff]
  %v57 = vld [vmem:[%s3 + $0x80] sm:$0xff]
  %v58 = vld [vmem:[%s3 + $0x88] sm:$0xff]
  %v59 = vld [vmem:[%s3 + $0x90] sm:$0xff]
  %v60 = vld [vmem:[%s3 + $0x98] sm:$0xff]
  %v61 = vld [vmem:[%s3 + $0xa0] sm:$0xff]
  %v62 = vld [vmem:[%s3 + $0xa8] sm:$0xff]
  %v63 = vld [vmem:[%s3 + $0xb0] sm:$0xff]
  %v64 = vld [vmem:[%s3 + $0xb8] sm:$0xff]
  %v65 = vld [vmem:[%s3 + $0xc0] sm:$0xff]
  %v66 = vld [vmem:[%s3 + $0xc8] sm:$0xff]
  %v67 = vld [vmem:[%s3 + $0xd0] sm:$0xff]
  %v68 = vld [vmem:[%s3 + $0xd8] sm:$0xff]
  %v69 = vld [vmem:[%s3 + $0xe0] sm:$0xff]
  %v70 = vld [vmem:[%s3 + $0xe8] sm:$0xff]
  %v71 = vld [vmem:[%s3 + $0xf0] sm:$0xff]
  %v72 = vld [vmem:[%s3 + $0xf8] sm:$0xff]
  %v73 = vld [vmem:[%s3 + $0x100] sm:$0xff]
  %v74 = vld [vmem:[%s3 + $0x108] sm:$0xff]
  %v75 = vld [vmem:[%s3 + $0x110] sm:$0xff]
  %v76 = vld [vmem:[%s3 + $0x118] sm:$0xff]
  %v77 = vld [vmem:[%s3 + $0x120] sm:$0xff]
  %v78 = vld [vmem:[%s3 + $0x128] sm:$0xff]
  %v79 = vld [vmem:[%s3 + $0x130] sm:$0xff]
  %v80 = vld [vmem:[%s3 + $0x138] sm:$0xff]
  %v81 = vld [vmem:[%s3 + $0x140] sm:$0xff]
  %v82 = vld [vmem:[%s3 + $0x148] sm:$0xff]
  %v83 = vld [vmem:[%s3 + $0x150] sm:$0xff]
  %v84 = vld [vmem:[%s3 + $0x158] sm:$0xff]
  %v85 = vld [vmem:[%s3 + $0x160] sm:$0xff]
  %v86 = vld [vmem:[%s3 + $0x168] sm:$0xff]
  %v87 = vld [vmem:[%s3 + $0x170] sm:$0xff]
  %v88 = vld [vmem:[%s3 + $0x178] sm:$0xff]
  %v89 = vld [vmem:[%s4] sm:$0x3f]
  %v91 = vlaneseq
  %v92 = vshrl.u32 %v91, 7
  %v93 = vsub.s32 0, %v92
  %v94 = vrot.slane %v89, %v93
  %v95 = vlaneseq
  %v96 = vshrl.u32 %v95, 7
  %v97 = vsub.s32 1, %v96
  %v98 = vrot.slane %v89, %v97
  %v99 = vlaneseq
  %v100 = vshrl.u32 %v99, 7
  %v101 = vsub.s32 2, %v100
  %v102 = vrot.slane %v89, %v101
  %v103 = vlaneseq
  %v104 = vshrl.u32 %v103, 7
  %v105 = vsub.s32 3, %v104
  %v106 = vrot.slane %v89, %v105
  %v107 = vlaneseq
  %v108 = vshrl.u32 %v107, 7
  %v109 = vsub.s32 4, %v108
  %v110 = vrot.slane %v89, %v109
  %v111 = vlaneseq
  %v112 = vshrl.u32 %v111, 7
  %v113 = vsub.s32 5, %v112
  %v114 = vrot.slane %v89, %v113
  %v129 = vunpack.c.l.b16 %v33
  %v130 = vunpack.c.l.b16 %v34
  %v131 = vunpack.c.l.b16 %v35
  %v132 = vunpack.c.l.b16 %v36
  %v133 = vunpack.c.l.b16 %v37
  %v134 = vunpack.c.l.b16 %v38
  %v135 = vunpack.c.l.b16 %v39
  %v136 = vunpack.c.l.b16 %v40
  %v137 = vpack.c.b16 %v130, %v129
  %v138 = vpack.c.b16 %v132, %v131
  %v139 = vpack.c.b16 %v134, %v133
  %v140 = vpack.c.b16 %v136, %v135
  %v193 = vunpack.c.l.b16 %v41
  %v194 = vunpack.c.h.b16 %v41
  %v195 = vunpack.c.l.b16 %v42
  %v196 = vunpack.c.h.b16 %v42
  %v197 = vunpack.c.l.b16 %v43
  %v198 = vunpack.c.h.b16 %v43
  %v199 = vunpack.c.l.b16 %v44
  %v200 = vunpack.c.h.b16 %v44
  %v201 = vunpack.c.l.b16 %v45
  %v202 = vunpack.c.h.b16 %v45
  %v203 = vunpack.c.l.b16 %v46
  %v204 = vunpack.c.h.b16 %v46
  %v205 = vunpack.c.l.b16 %v47
  %v206 = vunpack.c.h.b16 %v47
  %v207 = vunpack.c.l.b16 %v48
  %v208 = vunpack.c.h.b16 %v48
  %v209 = vunpack.c.l.b16 %v49
  %v210 = vunpack.c.h.b16 %v49
  %v211 = vunpack.c.l.b16 %v50
  %v212 = vunpack.c.h.b16 %v50
  %v213 = vunpack.c.l.b16 %v51
  %v214 = vunpack.c.h.b16 %v51
  %v215 = vunpack.c.l.b16 %v52
  %v216 = vunpack.c.h.b16 %v52
  %v217 = vunpack.c.l.b16 %v53
  %v218 = vunpack.c.h.b16 %v53
  %v219 = vunpack.c.l.b16 %v54
  %v220 = vunpack.c.h.b16 %v54
  %v221 = vunpack.c.l.b16 %v55
  %v222 = vunpack.c.h.b16 %v55
  %v223 = vunpack.c.l.b16 %v56
  %v224 = vunpack.c.h.b16 %v56
  %v225 = vunpack.c.l.b16 %v57
  %v226 = vunpack.c.h.b16 %v57
  %v227 = vunpack.c.l.b16 %v58
  %v228 = vunpack.c.h.b16 %v58
  %v229 = vunpack.c.l.b16 %v59
  %v230 = vunpack.c.h.b16 %v59
  %v231 = vunpack.c.l.b16 %v60
  %v232 = vunpack.c.h.b16 %v60
  %v233 = vunpack.c.l.b16 %v61
  %v234 = vunpack.c.h.b16 %v61
  %v235 = vunpack.c.l.b16 %v62
  %v236 = vunpack.c.h.b16 %v62
  %v237 = vunpack.c.l.b16 %v63
  %v238 = vunpack.c.h.b16 %v63
  %v239 = vunpack.c.l.b16 %v64
  %v240 = vunpack.c.h.b16 %v64
  %v241 = vunpack.c.l.b16 %v65
  %v242 = vunpack.c.h.b16 %v65
  %v243 = vunpack.c.l.b16 %v66
  %v244 = vunpack.c.h.b16 %v66
  %v245 = vunpack.c.l.b16 %v67
  %v246 = vunpack.c.h.b16 %v67
  %v247 = vunpack.c.l.b16 %v68
  %v248 = vunpack.c.h.b16 %v68
  %v249 = vunpack.c.l.b16 %v69
  %v250 = vunpack.c.h.b16 %v69
  %v251 = vunpack.c.l.b16 %v70
  %v252 = vunpack.c.h.b16 %v70
  %v253 = vunpack.c.l.b16 %v71
  %v254 = vunpack.c.h.b16 %v71
  %v255 = vunpack.c.l.b16 %v72
  %v256 = vunpack.c.h.b16 %v72
  %v257 = vunpack.c.l.b16 %v73
  %v258 = vunpack.c.h.b16 %v73
  %v259 = vunpack.c.l.b16 %v74
  %v260 = vunpack.c.h.b16 %v74
  %v261 = vunpack.c.l.b16 %v75
  %v262 = vunpack.c.h.b16 %v75
  %v263 = vunpack.c.l.b16 %v76
  %v264 = vunpack.c.h.b16 %v76
  %v265 = vunpack.c.l.b16 %v77
  %v266 = vunpack.c.h.b16 %v77
  %v267 = vunpack.c.l.b16 %v78
  %v268 = vunpack.c.h.b16 %v78
  %v269 = vunpack.c.l.b16 %v79
  %v270 = vunpack.c.h.b16 %v79
  %v271 = vunpack.c.l.b16 %v80
  %v272 = vunpack.c.h.b16 %v80
  %v273 = vunpack.c.l.b16 %v81
  %v274 = vunpack.c.h.b16 %v81
  %v275 = vunpack.c.l.b16 %v82
  %v276 = vunpack.c.h.b16 %v82
  %v277 = vunpack.c.l.b16 %v83
  %v278 = vunpack.c.h.b16 %v83
  %v279 = vunpack.c.l.b16 %v84
  %v280 = vunpack.c.h.b16 %v84
  %v281 = vunpack.c.l.b16 %v85
  %v282 = vunpack.c.h.b16 %v85
  %v283 = vunpack.c.l.b16 %v86
  %v284 = vunpack.c.h.b16 %v86
  %v285 = vunpack.c.l.b16 %v87
  %v286 = vunpack.c.h.b16 %v87
  %v287 = vunpack.c.l.b16 %v88
  %v288 = vunpack.c.h.b16 %v88
  %v289 = vpack.c.b16 %v199, %v193
  %v290 = vpack.c.b16 %v200, %v194
  %v291 = vpack.c.b16 %v201, %v195
  %v292 = vpack.c.b16 %v202, %v196
  %v293 = vpack.c.b16 %v203, %v197
  %v294 = vpack.c.b16 %v204, %v198
  %v295 = vpack.c.b16 %v211, %v205
  %v296 = vpack.c.b16 %v212, %v206
  %v297 = vpack.c.b16 %v213, %v207
  %v298 = vpack.c.b16 %v214, %v208
  %v299 = vpack.c.b16 %v215, %v209
  %v300 = vpack.c.b16 %v216, %v210
  %v301 = vpack.c.b16 %v223, %v217
  %v302 = vpack.c.b16 %v224, %v218
  %v303 = vpack.c.b16 %v225, %v219
  %v304 = vpack.c.b16 %v226, %v220
  %v305 = vpack.c.b16 %v227, %v221
  %v306 = vpack.c.b16 %v228, %v222
  %v307 = vpack.c.b16 %v235, %v229
  %v308 = vpack.c.b16 %v236, %v230
  %v309 = vpack.c.b16 %v237, %v231
  %v310 = vpack.c.b16 %v238, %v232
  %v311 = vpack.c.b16 %v239, %v233
  %v312 = vpack.c.b16 %v240, %v234
  %v313 = vpack.c.b16 %v247, %v241
  %v314 = vpack.c.b16 %v248, %v242
  %v315 = vpack.c.b16 %v249, %v243
  %v316 = vpack.c.b16 %v250, %v244
  %v317 = vpack.c.b16 %v251, %v245
  %v318 = vpack.c.b16 %v252, %v246
  %v319 = vpack.c.b16 %v259, %v253
  %v320 = vpack.c.b16 %v260, %v254
  %v321 = vpack.c.b16 %v261, %v255
  %v322 = vpack.c.b16 %v262, %v256
  %v323 = vpack.c.b16 %v263, %v257
  %v324 = vpack.c.b16 %v264, %v258
  %v325 = vpack.c.b16 %v271, %v265
  %v326 = vpack.c.b16 %v272, %v266
  %v327 = vpack.c.b16 %v273, %v267
  %v328 = vpack.c.b16 %v274, %v268
  %v329 = vpack.c.b16 %v275, %v269
  %v330 = vpack.c.b16 %v276, %v270
  %v331 = vpack.c.b16 %v283, %v277
  %v332 = vpack.c.b16 %v284, %v278
  %v333 = vpack.c.b16 %v285, %v279
  %v334 = vpack.c.b16 %v286, %v280
  %v335 = vpack.c.b16 %v287, %v281
  %v336 = vpack.c.b16 %v288, %v282
  %385 = vmatprep.subr.bf16.mxu0 %v290
  %386 = vmatpush1.bf16.msra.mxu0 %v289
  %387 = vmatprep.subr.bf16.mxu0 %v296
  %388 = vmatpush1.bf16.msra.mxu0 %v295
  %389 = vmatprep.subr.bf16.mxu0 %v302
  %390 = vmatpush1.bf16.msra.mxu0 %v301
  %391 = vmatprep.subr.bf16.mxu0 %v308
  %392 = vmatpush1.bf16.msra.mxu0 %v307
  %393 = vmatprep.subr.bf16.mxu0 %v314
  %394 = vmatpush1.bf16.msra.mxu0 %v313
  %395 = vmatprep.subr.bf16.mxu0 %v320
  %396 = vmatpush1.bf16.msra.mxu0 %v319
  %397 = vmatprep.subr.bf16.mxu0 %v326
  %398 = vmatpush1.bf16.msra.mxu0 %v325
  %399 = vmatprep.subr.bf16.mxu0 %v332
  %400 = vmatpush1.bf16.msra.mxu0 %v331
  %401 = vmatprep.subr.bf16.mxu0 0
  %402 = vmatpush1.bf16.msra.mxu0 0
  %403 = vmatprep.subr.bf16.mxu0 0
  %404 = vmatpush1.bf16.msra.mxu0 0
  %405 = vmatprep.subr.bf16.mxu0 0
  %406 = vmatpush1.bf16.msra.mxu0 0
  %407 = vmatprep.subr.bf16.mxu0 0
  %408 = vmatpush1.bf16.msra.mxu0 0
  %409 = vmatprep.subr.bf16.mxu0 0
  %410 = vmatpush1.bf16.msra.mxu0 0
  %411 = vmatprep.subr.bf16.mxu0 0
  %412 = vmatpush1.bf16.msra.mxu0 0
  %413 = vmatprep.subr.bf16.mxu0 0
  %414 = vmatpush1.bf16.msra.mxu0 0
  %415 = vmatprep.subr.bf16.mxu0 0
  %416 = vmatpush1.bf16.msra.mxu0 0
  %417 = vmatprep.mubr.bf16.mxu0 0
  %418 = vmatmul.mubr.bf16.gmra.mrb[0].mxu0 %v137
  %v419 = vpop.f32.mrb[0].mxu0
  %v420 = vadd.f32 %v94, %v419
  %v421 = vpop.f32.mrb[0].mxu0
  %v422 = vadd.f32 %v98, %v421
  %v423 = vpop.f32.mrb[0].mxu0
  %v424 = vadd.f32 %v94, %v423
  %v425 = vpop.f32.mrb[0].mxu0
  %v426 = vadd.f32 %v98, %v425
  %427 = vmatprep.mubr.bf16.mxu0 0
  %428 = vmatmul.mubr.bf16.gmra.mrb[0].mxu0 %v138
  %v429 = vpop.f32.mrb[0].mxu0
  %v430 = vadd.f32 %v94, %v429
  %v431 = vpop.f32.mrb[0].mxu0
  %v432 = vadd.f32 %v98, %v431
  %v433 = vpop.f32.mrb[0].mxu0
  %v434 = vadd.f32 %v94, %v433
  %v435 = vpop.f32.mrb[0].mxu0
  %v436 = vadd.f32 %v98, %v435
  %437 = vmatprep.mubr.bf16.mxu0 0
  %438 = vmatmul.mubr.bf16.gmra.mrb[0].mxu0 %v139
  %v439 = vpop.f32.mrb[0].mxu0
  %v440 = vadd.f32 %v94, %v439
  %v441 = vpop.f32.mrb[0].mxu0
  %v442 = vadd.f32 %v98, %v441
  %v443 = vpop.f32.mrb[0].mxu0
  %v444 = vadd.f32 %v94, %v443
  %v445 = vpop.f32.mrb[0].mxu0
  %v446 = vadd.f32 %v98, %v445
  %447 = vmatprep.mubr.bf16.mxu0 0
  %448 = vmatmul.mubr.bf16.gmra.mrb[0].mxu0 %v140
  %v449 = vpop.f32.mrb[0].mxu0
  %v450 = vadd.f32 %v94, %v449
  %v451 = vpop.f32.mrb[0].mxu0
  %v452 = vadd.f32 %v98, %v451
  %v453 = vpop.f32.mrb[0].mxu0
  %v454 = vadd.f32 %v94, %v453
  %v455 = vpop.f32.mrb[0].mxu0
  %v456 = vadd.f32 %v98, %v455
  %457 = vdwg.mxu0
  %458 = vmatprep.subr.bf16.mxu0 %v292
  %459 = vmatpush1.bf16.msra.mxu0 %v291
  %460 = vmatprep.subr.bf16.mxu0 %v298
  %461 = vmatpush1.bf16.msra.mxu0 %v297
  %462 = vmatprep.subr.bf16.mxu0 %v304
  %463 = vmatpush1.bf16.msra.mxu0 %v303
  %464 = vmatprep.subr.bf16.mxu0 %v310
  %465 = vmatpush1.bf16.msra.mxu0 %v309
  %466 = vmatprep.subr.bf16.mxu0 %v316
  %467 = vmatpush1.bf16.msra.mxu0 %v315
  %468 = vmatprep.subr.bf16.mxu0 %v322
  %469 = vmatpush1.bf16.msra.mxu0 %v321
  %470 = vmatprep.subr.bf16.mxu0 %v328
  %471 = vmatpush1.bf16.msra.mxu0 %v327
  %472 = vmatprep.subr.bf16.mxu0 %v334
  %473 = vmatpush1.bf16.msra.mxu0 %v333
  %474 = vmatprep.subr.bf16.mxu0 0
  %475 = vmatpush1.bf16.msra.mxu0 0
  %476 = vmatprep.subr.bf16.mxu0 0
  %477 = vmatpush1.bf16.msra.mxu0 0
  %478 = vmatprep.subr.bf16.mxu0 0
  %479 = vmatpush1.bf16.msra.mxu0 0
  %480 = vmatprep.subr.bf16.mxu0 0
  %481 = vmatpush1.bf16.msra.mxu0 0
  %482 = vmatprep.subr.bf16.mxu0 0
  %483 = vmatpush1.bf16.msra.mxu0 0
  %484 = vmatprep.subr.bf16.mxu0 0
  %485 = vmatpush1.bf16.msra.mxu0 0
  %486 = vmatprep.subr.bf16.mxu0 0
  %487 = vmatpush1.bf16.msra.mxu0 0
  %488 = vmatprep.subr.bf16.mxu0 0
  %489 = vmatpush1.bf16.msra.mxu0 0
  %490 = vmatprep.mubr.bf16.mxu0 0
  %491 = vmatmul.mubr.bf16.gmra.mrb[0].mxu0 %v137
  %v492 = vpop.f32.mrb[0].mxu0
  %v493 = vadd.f32 %v102, %v492
  %v494 = vpop.f32.mrb[0].mxu0
  %v495 = vadd.f32 %v106, %v494
  %v496 = vpop.f32.mrb[0].mxu0
  %v497 = vadd.f32 %v102, %v496
  %v498 = vpop.f32.mrb[0].mxu0
  %v499 = vadd.f32 %v106, %v498
  %500 = vmatprep.mubr.bf16.mxu0 0
  %501 = vmatmul.mubr.bf16.gmra.mrb[0].mxu0 %v138
  %v502 = vpop.f32.mrb[0].mxu0
  %v503 = vadd.f32 %v102, %v502
  %v504 = vpop.f32.mrb[0].mxu0
  %v505 = vadd.f32 %v106, %v504
  %v506 = vpop.f32.mrb[0].mxu0
  %v507 = vadd.f32 %v102, %v506
  %v508 = vpop.f32.mrb[0].mxu0
  %v509 = vadd.f32 %v106, %v508
  %510 = vmatprep.mubr.bf16.mxu0 0
  %511 = vmatmul.mubr.bf16.gmra.mrb[0].mxu0 %v139
  %v512 = vpop.f32.mrb[0].mxu0
  %v513 = vadd.f32 %v102, %v512
  %v514 = vpop.f32.mrb[0].mxu0
  %v515 = vadd.f32 %v106, %v514
  %v516 = vpop.f32.mrb[0].mxu0
  %v517 = vadd.f32 %v102, %v516
  %v518 = vpop.f32.mrb[0].mxu0
  %v519 = vadd.f32 %v106, %v518
  %520 = vmatprep.mubr.bf16.mxu0 0
  %521 = vmatmul.mubr.bf16.gmra.mrb[0].mxu0 %v140
  %v522 = vpop.f32.mrb[0].mxu0
  %v523 = vadd.f32 %v102, %v522
  %v524 = vpop.f32.mrb[0].mxu0
  %v525 = vadd.f32 %v106, %v524
  %v526 = vpop.f32.mrb[0].mxu0
  %v527 = vadd.f32 %v102, %v526
  %v528 = vpop.f32.mrb[0].mxu0
  %v529 = vadd.f32 %v106, %v528
  %530 = vdwg.mxu0
  %531 = vmatprep.subr.bf16.mxu0 %v294
  %532 = vmatpush1.bf16.msra.mxu0 %v293
  %533 = vmatprep.subr.bf16.mxu0 %v300
  %534 = vmatpush1.bf16.msra.mxu0 %v299
  %535 = vmatprep.subr.bf16.mxu0 %v306
  %536 = vmatpush1.bf16.msra.mxu0 %v305
  %537 = vmatprep.subr.bf16.mxu0 %v312
  %538 = vmatpush1.bf16.msra.mxu0 %v311
  %539 = vmatprep.subr.bf16.mxu0 %v318
  %540 = vmatpush1.bf16.msra.mxu0 %v317
  %541 = vmatprep.subr.bf16.mxu0 %v324
  %542 = vmatpush1.bf16.msra.mxu0 %v323
  %543 = vmatprep.subr.bf16.mxu0 %v330
  %544 = vmatpush1.bf16.msra.mxu0 %v329
  %545 = vmatprep.subr.bf16.mxu0 %v336
  %546 = vmatpush1.bf16.msra.mxu0 %v335
  %547 = vmatprep.subr.bf16.mxu0 0
  %548 = vmatpush1.bf16.msra.mxu0 0
  %549 = vmatprep.subr.bf16.mxu0 0
  %550 = vmatpush1.bf16.msra.mxu0 0
  %551 = vmatprep.subr.bf16.mxu0 0
  %552 = vmatpush1.bf16.msra.mxu0 0
  %553 = vmatprep.subr.bf16.mxu0 0
  %554 = vmatpush1.bf16.msra.mxu0 0
  %555 = vmatprep.subr.bf16.mxu0 0
  %556 = vmatpush1.bf16.msra.mxu0 0
  %557 = vmatprep.subr.bf16.mxu0 0
  %558 = vmatpush1.bf16.msra.mxu0 0
  %559 = vmatprep.subr.bf16.mxu0 0
  %560 = vmatpush1.bf16.msra.mxu0 0
  %561 = vmatprep.subr.bf16.mxu0 0
  %562 = vmatpush1.bf16.msra.mxu0 0
  %563 = vmatprep.mubr.bf16.mxu0 0
  %564 = vmatmul.mubr.bf16.gmra.mrb[0].mxu0 %v137
  %v565 = vpop.f32.mrb[0].mxu0
  %v566 = vadd.f32 %v110, %v565
  %v567 = vpop.f32.mrb[0].mxu0
  %v568 = vadd.f32 %v114, %v567
  %v569 = vpop.f32.mrb[0].mxu0
  %v570 = vadd.f32 %v110, %v569
  %v571 = vpop.f32.mrb[0].mxu0
  %v572 = vadd.f32 %v114, %v571
  %573 = vmatprep.mubr.bf16.mxu0 0
  %574 = vmatmul.mubr.bf16.gmra.mrb[0].mxu0 %v138
  %v575 = vpop.f32.mrb[0].mxu0
  %v576 = vadd.f32 %v110, %v575
  %v577 = vpop.f32.mrb[0].mxu0
  %v578 = vadd.f32 %v114, %v577
  %v579 = vpop.f32.mrb[0].mxu0
  %v580 = vadd.f32 %v110, %v579
  %v581 = vpop.f32.mrb[0].mxu0
  %v582 = vadd.f32 %v114, %v581
  %583 = vmatprep.mubr.bf16.mxu0 0
  %584 = vmatmul.mubr.bf16.gmra.mrb[0].mxu0 %v139
  %v585 = vpop.f32.mrb[0].mxu0
  %v586 = vadd.f32 %v110, %v585
  %v587 = vpop.f32.mrb[0].mxu0
  %v588 = vadd.f32 %v114, %v587
  %v589 = vpop.f32.mrb[0].mxu0
  %v590 = vadd.f32 %v110, %v589
  %v591 = vpop.f32.mrb[0].mxu0
  %v592 = vadd.f32 %v114, %v591
  %593 = vmatprep.mubr.bf16.mxu0 0
  %594 = vmatmul.mubr.bf16.gmra.mrb[0].mxu0 %v140
  %v595 = vpop.f32.mrb[0].mxu0
  %v596 = vadd.f32 %v110, %v595
  %v597 = vpop.f32.mrb[0].mxu0
  %v598 = vadd.f32 %v114, %v597
  %v599 = vpop.f32.mrb[0].mxu0
  %v600 = vadd.f32 %v110, %v599
  %v601 = vpop.f32.mrb[0].mxu0
  %v602 = vadd.f32 %v114, %v601
  %603 = vdwg.mxu0
  %604 = vst [vmem:[#allocation2] sm:$0xff] %v420
  %605 = vst [vmem:[#allocation2 + $0x8] sm:$0xff] %v422
  %606 = vst [vmem:[#allocation2 + $0x10] sm:$0xff] %v493
  %607 = vst [vmem:[#allocation2 + $0x18] sm:$0xff] %v495
  %608 = vst [vmem:[#allocation2 + $0x20] sm:$0xff] %v566
  %609 = vst [vmem:[#allocation2 + $0x28] sm:$0xff] %v568
  %610 = vst [vmem:[#allocation2 + $0x30] sm:$0xff] %v424
  %611 = vst [vmem:[#allocation2 + $0x38] sm:$0xff] %v426
  %612 = vst [vmem:[#allocation2 + $0x40] sm:$0xff] %v497
  %613 = vst [vmem:[#allocation2 + $0x48] sm:$0xff] %v499
  %614 = vst [vmem:[#allocation2 + $0x50] sm:$0xff] %v570
  %615 = vst [vmem:[#allocation2 + $0x58] sm:$0xff] %v572
  %616 = vst [vmem:[#allocation2 + $0x60] sm:$0xff] %v430
  %617 = vst [vmem:[#allocation2 + $0x68] sm:$0xff] %v432
  %618 = vst [vmem:[#allocation2 + $0x70] sm:$0xff] %v503
  %619 = vst [vmem:[#allocation2 + $0x78] sm:$0xff] %v505
  %620 = vst [vmem:[#allocation2 + $0x80] sm:$0xff] %v576
  %621 = vst [vmem:[#allocation2 + $0x88] sm:$0xff] %v578
  %622 = vst [vmem:[#allocation2 + $0x90] sm:$0xff] %v434
  %623 = vst [vmem:[#allocation2 + $0x98] sm:$0xff] %v436
  %624 = vst [vmem:[#allocation2 + $0xa0] sm:$0xff] %v507
  %625 = vst [vmem:[#allocation2 + $0xa8] sm:$0xff] %v509
  %626 = vst [vmem:[#allocation2 + $0xb0] sm:$0xff] %v580
  %627 = vst [vmem:[#allocation2 + $0xb8] sm:$0xff] %v582
  %628 = vst [vmem:[#allocation2 + $0xc0] sm:$0xff] %v440
  %629 = vst [vmem:[#allocation2 + $0xc8] sm:$0xff] %v442
  %630 = vst [vmem:[#allocation2 + $0xd0] sm:$0xff] %v513
  %631 = vst [vmem:[#allocation2 + $0xd8] sm:$0xff] %v515
  %632 = vst [vmem:[#allocation2 + $0xe0] sm:$0xff] %v586
  %633 = vst [vmem:[#allocation2 + $0xe8] sm:$0xff] %v588
  %634 = vst [vmem:[#allocation2 + $0xf0] sm:$0xff] %v444
  %635 = vst [vmem:[#allocation2 + $0xf8] sm:$0xff] %v446
  %636 = vst [vmem:[#allocation2 + $0x100] sm:$0xff] %v517
  %637 = vst [vmem:[#allocation2 + $0x108] sm:$0xff] %v519
  %638 = vst [vmem:[#allocation2 + $0x110] sm:$0xff] %v590
  %639 = vst [vmem:[#allocation2 + $0x118] sm:$0xff] %v592
  %640 = vst [vmem:[#allocation2 + $0x120] sm:$0xff] %v450
  %641 = vst [vmem:[#allocation2 + $0x128] sm:$0xff] %v452
  %642 = vst [vmem:[#allocation2 + $0x130] sm:$0xff] %v523
  %643 = vst [vmem:[#allocation2 + $0x138] sm:$0xff] %v525
  %644 = vst [vmem:[#allocation2 + $0x140] sm:$0xff] %v596
  %645 = vst [vmem:[#allocation2 + $0x148] sm:$0xff] %v598
  %646 = vst [vmem:[#allocation2 + $0x150] sm:$0xff] %v454
  %647 = vst [vmem:[#allocation2 + $0x158] sm:$0xff] %v456
  %648 = vst [vmem:[#allocation2 + $0x160] sm:$0xff] %v527
  %649 = vst [vmem:[#allocation2 + $0x168] sm:$0xff] %v529
  %650 = vst [vmem:[#allocation2 + $0x170] sm:$0xff] %v600
  %651 = vst [vmem:[#allocation2 + $0x178] sm:$0xff] %v602
  %v652 = vld [vmem:[%s5] sm:$0xff]
  %v653 = vld [vmem:[%s5 + $0x8] sm:$0xf]
  %v654 = vld [vmem:[%s5 + $0xc] sm:$0xff]
  %v655 = vld [vmem:[%s5 + $0x14] sm:$0xf]
  %v656 = vld [vmem:[%s5 + $0x18] sm:$0xff]
  %v657 = vld [vmem:[%s5 + $0x20] sm:$0xf]
  %v658 = vld [vmem:[%s5 + $0x24] sm:$0xff]
  %v659 = vld [vmem:[%s5 + $0x2c] sm:$0xf]
  %v660 = vld [vmem:[%s5 + $0x30] sm:$0xff]
  %v661 = vld [vmem:[%s5 + $0x38] sm:$0xf]
  %v662 = vld [vmem:[%s5 + $0x3c] sm:$0xff]
  %v663 = vld [vmem:[%s5 + $0x44] sm:$0xf]
  %v664 = vld [vmem:[%s5 + $0x48] sm:$0xff]
  %v665 = vld [vmem:[%s5 + $0x50] sm:$0xf]
  %v666 = vld [vmem:[%s5 + $0x54] sm:$0xff]
  %v667 = vld [vmem:[%s5 + $0x5c] sm:$0xf]
  %v668 = vld [vmem:[%s5 + $0x60] sm:$0xff]
  %v669 = vld [vmem:[%s5 + $0x68] sm:$0xf]
  %v670 = vld [vmem:[%s5 + $0x6c] sm:$0xff]
  %v671 = vld [vmem:[%s5 + $0x74] sm:$0xf]
  %v672 = vld [vmem:[%s5 + $0x78] sm:$0xff]
  %v673 = vld [vmem:[%s5 + $0x80] sm:$0xf]
  %v674 = vld [vmem:[%s5 + $0x84] sm:$0xff]
  %v675 = vld [vmem:[%s5 + $0x8c] sm:$0xf]
  %v676 = vld [vmem:[%s5 + $0x90] sm:$0xff]
  %v677 = vld [vmem:[%s5 + $0x98] sm:$0xf]
  %v678 = vld [vmem:[%s5 + $0x9c] sm:$0xff]
  %v679 = vld [vmem:[%s5 + $0xa4] sm:$0xf]
  %v680 = vld [vmem:[%s5 + $0xa8] sm:$0xff]
  %v681 = vld [vmem:[%s5 + $0xb0] sm:$0xf]
  %v682 = vld [vmem:[%s5 + $0xb4] sm:$0xff]
  %v683 = vld [vmem:[%s5 + $0xbc] sm:$0xf]
  %v684 = vld [vmem:[%s7] sm:$0xff]
  %v685 = vld [vmem:[%s7 + $0x8] sm:$0xf]
  %v686 = vld [vmem:[%s7 + $0xc] sm:$0xff]
  %v687 = vld [vmem:[%s7 + $0x14] sm:$0xf]
  %v688 = vld [vmem:[%s7 + $0x18] sm:$0xff]
  %v689 = vld [vmem:[%s7 + $0x20] sm:$0xf]
  %v690 = vld [vmem:[%s7 + $0x24] sm:$0xff]
  %v691 = vld [vmem:[%s7 + $0x2c] sm:$0xf]
  %v692 = vld [vmem:[%s7 + $0x30] sm:$0xff]
  %v693 = vld [vmem:[%s7 + $0x38] sm:$0xf]
  %v694 = vld [vmem:[%s7 + $0x3c] sm:$0xff]
  %v695 = vld [vmem:[%s7 + $0x44] sm:$0xf]
  %v696 = vld [vmem:[%s7 + $0x48] sm:$0xff]
  %v697 = vld [vmem:[%s7 + $0x50] sm:$0xf]
  %v698 = vld [vmem:[%s7 + $0x54] sm:$0xff]
  %v699 = vld [vmem:[%s7 + $0x5c] sm:$0xf]
  %v700 = vld [vmem:[%s7 + $0x60] sm:$0xff]
  %v701 = vld [vmem:[%s7 + $0x68] sm:$0xf]
  %v702 = vld [vmem:[%s7 + $0x6c] sm:$0xff]
  %v703 = vld [vmem:[%s7 + $0x74] sm:$0xf]
  %v704 = vld [vmem:[%s7 + $0x78] sm:$0xff]
  %v705 = vld [vmem:[%s7 + $0x80] sm:$0xf]
  %v706 = vld [vmem:[%s7 + $0x84] sm:$0xff]
  %v707 = vld [vmem:[%s7 + $0x8c] sm:$0xf]
  %v708 = vld [vmem:[%s7 + $0x90] sm:$0xff]
  %v709 = vld [vmem:[%s7 + $0x98] sm:$0xf]
  %v710 = vld [vmem:[%s7 + $0x9c] sm:$0xff]
  %v711 = vld [vmem:[%s7 + $0xa4] sm:$0xf]
  %v712 = vld [vmem:[%s7 + $0xa8] sm:$0xff]
  %v713 = vld [vmem:[%s7 + $0xb0] sm:$0xf]
  %v714 = vld [vmem:[%s7 + $0xb4] sm:$0xff]
  %v715 = vld [vmem:[%s7 + $0xbc] sm:$0xf]
  %v716 = vld [vmem:[%s6] sm:$0x7]
  %v717 = vld [vmem:[%s8] sm:$0x7]
  %v718 = vld [vmem:[%s1] sm:$0xff]
  %v719 = vld [vmem:[%s2] sm:$0xff]
  %v720 = vpack.c.bf16 %v718, %v718
  %v722 = vlaneseq
  %v723 = vshrl.u32 %v722, 7
  %v724 = vsub.s32 0, %v723
  %v725 = vrot.slane %v716, %v724
  %v726 = vlaneseq
  %v727 = vshrl.u32 %v726, 7
  %v728 = vsub.s32 1, %v727
  %v729 = vrot.slane %v716, %v728
  %v730 = vlaneseq
  %v731 = vshrl.u32 %v730, 7
  %v732 = vsub.s32 2, %v731
  %v733 = vrot.slane %v716, %v732
  %v769 = vunpack.c.l.b16 %v652
  %v770 = vunpack.c.h.b16 %v652
  %v771 = vunpack.c.l.b16 %v653
  %v772 = vunpack.c.l.b16 %v654
  %v773 = vunpack.c.h.b16 %v654
  %v774 = vunpack.c.l.b16 %v655
  %v775 = vunpack.c.l.b16 %v656
  %v776 = vunpack.c.h.b16 %v656
  %v777 = vunpack.c.l.b16 %v657
  %v778 = vunpack.c.l.b16 %v658
  %v779 = vunpack.c.h.b16 %v658
  %v780 = vunpack.c.l.b16 %v659
  %v781 = vunpack.c.l.b16 %v660
  %v782 = vunpack.c.h.b16 %v660
  %v783 = vunpack.c.l.b16 %v661
  %v784 = vunpack.c.l.b16 %v662
  %v785 = vunpack.c.h.b16 %v662
  %v786 = vunpack.c.l.b16 %v663
  %v787 = vunpack.c.l.b16 %v664
  %v788 = vunpack.c.h.b16 %v664
  %v789 = vunpack.c.l.b16 %v665
  %v790 = vunpack.c.l.b16 %v666
  %v791 = vunpack.c.h.b16 %v666
  %v792 = vunpack.c.l.b16 %v667
  %v793 = vunpack.c.l.b16 %v668
  %v794 = vunpack.c.h.b16 %v668
  %v795 = vunpack.c.l.b16 %v669
  %v796 = vunpack.c.l.b16 %v670
  %v797 = vunpack.c.h.b16 %v670
  %v798 = vunpack.c.l.b16 %v671
  %v799 = vunpack.c.l.b16 %v672
  %v800 = vunpack.c.h.b16 %v672
  %v801 = vunpack.c.l.b16 %v673
  %v802 = vunpack.c.l.b16 %v674
  %v803 = vunpack.c.h.b16 %v674
  %v804 = vunpack.c.l.b16 %v675
  %v805 = vunpack.c.l.b16 %v676
  %v806 = vunpack.c.h.b16 %v676
  %v807 = vunpack.c.l.b16 %v677
  %v808 = vunpack.c.l.b16 %v678
  %v809 = vunpack.c.h.b16 %v678
  %v810 = vunpack.c.l.b16 %v679
  %v811 = vunpack.c.l.b16 %v680
  %v812 = vunpack.c.h.b16 %v680
  %v813 = vunpack.c.l.b16 %v681
  %v814 = vunpack.c.l.b16 %v682
  %v815 = vunpack.c.h.b16 %v682
  %v816 = vunpack.c.l.b16 %v683
  %v817 = vpack.c.b16 %v772, %v769
  %v818 = vpack.c.b16 %v773, %v770
  %v819 = vpack.c.b16 %v774, %v771
  %v820 = vpack.c.b16 %v778, %v775
  %v821 = vpack.c.b16 %v779, %v776
  %v822 = vpack.c.b16 %v780, %v777
  %v823 = vpack.c.b16 %v784, %v781
  %v824 = vpack.c.b16 %v785, %v782
  %v825 = vpack.c.b16 %v786, %v783
  %v826 = vpack.c.b16 %v790, %v787
  %v827 = vpack.c.b16 %v791, %v788
  %v828 = vpack.c.b16 %v792, %v789
  %v829 = vpack.c.b16 %v796, %v793
  %v830 = vpack.c.b16 %v797, %v794
  %v831 = vpack.c.b16 %v798, %v795
  %v832 = vpack.c.b16 %v802, %v799
  %v833 = vpack.c.b16 %v803, %v800
  %v834 = vpack.c.b16 %v804, %v801
  %v835 = vpack.c.b16 %v808, %v805
  %v836 = vpack.c.b16 %v809, %v806
  %v837 = vpack.c.b16 %v810, %v807
  %v838 = vpack.c.b16 %v814, %v811
  %v839 = vpack.c.b16 %v815, %v812
  %v840 = vpack.c.b16 %v816, %v813
  %865 = vmatprep.subr.bf16.mxu0 %v818
  %866 = vmatpush1.bf16.msra.mxu0 %v817
  %867 = vmatprep.subr.bf16.mxu0 %v821
  %868 = vmatpush1.bf16.msra.mxu0 %v820
  %869 = vmatprep.subr.bf16.mxu0 %v824
  %870 = vmatpush1.bf16.msra.mxu0 %v823
  %871 = vmatprep.subr.bf16.mxu0 %v827
  %872 = vmatpush1.bf16.msra.mxu0 %v826
  %873 = vmatprep.subr.bf16.mxu0 %v830
  %874 = vmatpush1.bf16.msra.mxu0 %v829
  %875 = vmatprep.subr.bf16.mxu0 %v833
  %876 = vmatpush1.bf16.msra.mxu0 %v832
  %877 = vmatprep.subr.bf16.mxu0 %v836
  %878 = vmatpush1.bf16.msra.mxu0 %v835
  %879 = vmatprep.subr.bf16.mxu0 %v839
  %880 = vmatpush1.bf16.msra.mxu0 %v838
  %881 = vmatprep.subr.bf16.mxu0 0
  %882 = vmatpush1.bf16.msra.mxu0 0
  %883 = vmatprep.subr.bf16.mxu0 0
  %884 = vmatpush1.bf16.msra.mxu0 0
  %885 = vmatprep.subr.bf16.mxu0 0
  %886 = vmatpush1.bf16.msra.mxu0 0
  %887 = vmatprep.subr.bf16.mxu0 0
  %888 = vmatpush1.bf16.msra.mxu0 0
  %889 = vmatprep.subr.bf16.mxu0 0
  %890 = vmatpush1.bf16.msra.mxu0 0
  %891 = vmatprep.subr.bf16.mxu0 0
  %892 = vmatpush1.bf16.msra.mxu0 0
  %893 = vmatprep.subr.bf16.mxu0 0
  %894 = vmatpush1.bf16.msra.mxu0 0
  %895 = vmatprep.subr.bf16.mxu0 0
  %896 = vmatpush1.bf16.msra.mxu0 0
  %897 = vmatprep.mubr.bf16.mxu0 0
  %898 = vmatmul.mubr.bf16.gmra.mrb[0].mxu0 %v720
  %v899 = vpop.f32.mrb[0].mxu0
  %v900 = vadd.f32 %v725, %v899
  %v901 = vpop.f32.mrb[0].mxu0
  %v902 = vadd.f32 %v729, %v901
  %v903 = vpop.f32.mrb[0].mxu0
  %v904 = vpop.f32.mrb[0].mxu0
  %905 = vdwg.mxu0
  %906 = vmatprep.subr.bf16.mxu0 0
  %907 = vmatpush1.bf16.msra.mxu0 %v819
  %908 = vmatprep.subr.bf16.mxu0 0
  %909 = vmatpush1.bf16.msra.mxu0 %v822
  %910 = vmatprep.subr.bf16.mxu0 0
  %911 = vmatpush1.bf16.msra.mxu0 %v825
  %912 = vmatprep.subr.bf16.mxu0 0
  %913 = vmatpush1.bf16.msra.mxu0 %v828
  %914 = vmatprep.subr.bf16.mxu0 0
  %915 = vmatpush1.bf16.msra.mxu0 %v831
  %916 = vmatprep.subr.bf16.mxu0 0
  %917 = vmatpush1.bf16.msra.mxu0 %v834
  %918 = vmatprep.subr.bf16.mxu0 0
  %919 = vmatpush1.bf16.msra.mxu0 %v837
  %920 = vmatprep.subr.bf16.mxu0 0
  %921 = vmatpush1.bf16.msra.mxu0 %v840
  %922 = vmatprep.subr.bf16.mxu0 0
  %923 = vmatpush1.bf16.msra.mxu0 0
  %924 = vmatprep.subr.bf16.mxu0 0
  %925 = vmatpush1.bf16.msra.mxu0 0
  %926 = vmatprep.subr.bf16.mxu0 0
  %927 = vmatpush1.bf16.msra.mxu0 0
  %928 = vmatprep.subr.bf16.mxu0 0
  %929 = vmatpush1.bf16.msra.mxu0 0
  %930 = vmatprep.subr.bf16.mxu0 0
  %931 = vmatpush1.bf16.msra.mxu0 0
  %932 = vmatprep.subr.bf16.mxu0 0
  %933 = vmatpush1.bf16.msra.mxu0 0
  %934 = vmatprep.subr.bf16.mxu0 0
  %935 = vmatpush1.bf16.msra.mxu0 0
  %936 = vmatprep.subr.bf16.mxu0 0
  %937 = vmatpush1.bf16.msra.mxu0 0
  %938 = vmatprep.mubr.bf16.mxu0 0
  %939 = vmatmul.mubr.bf16.gmra.mrb[0].mxu0 %v720
  %v940 = vpop.f32.mrb[0].mxu0
  %v941 = vadd.f32 %v733, %v940
  %v942 = vpop.f32.mrb[0].mxu0
  %v943 = vpop.f32.mrb[0].mxu0
  %v944 = vpop.f32.mrb[0].mxu0
  %945 = vdwg.mxu0
  %v946 = vpack.c.bf16 %v719, %v719
  %v948 = vlaneseq
  %v949 = vshrl.u32 %v948, 7
  %v950 = vsub.s32 0, %v949
  %v951 = vrot.slane %v717, %v950
  %v952 = vlaneseq
  %v953 = vshrl.u32 %v952, 7
  %v954 = vsub.s32 1, %v953
  %v955 = vrot.slane %v717, %v954
  %v956 = vlaneseq
  %v957 = vshrl.u32 %v956, 7
  %v958 = vsub.s32 2, %v957
  %v959 = vrot.slane %v717, %v958
  %v995 = vunpack.c.l.b16 %v684
  %v996 = vunpack.c.h.b16 %v684
  %v997 = vunpack.c.l.b16 %v685
  %v998 = vunpack.c.l.b16 %v686
  %v999 = vunpack.c.h.b16 %v686
  %v1000 = vunpack.c.l.b16 %v687
  %v1001 = vunpack.c.l.b16 %v688
  %v1002 = vunpack.c.h.b16 %v688
  %v1003 = vunpack.c.l.b16 %v689
  %v1004 = vunpack.c.l.b16 %v690
  %v1005 = vunpack.c.h.b16 %v690
  %v1006 = vunpack.c.l.b16 %v691
  %v1007 = vunpack.c.l.b16 %v692
  %v1008 = vunpack.c.h.b16 %v692
  %v1009 = vunpack.c.l.b16 %v693
  %v1010 = vunpack.c.l.b16 %v694
  %v1011 = vunpack.c.h.b16 %v694
  %v1012 = vunpack.c.l.b16 %v695
  %v1013 = vunpack.c.l.b16 %v696
  %v1014 = vunpack.c.h.b16 %v696
  %v1015 = vunpack.c.l.b16 %v697
  %v1016 = vunpack.c.l.b16 %v698
  %v1017 = vunpack.c.h.b16 %v698
  %v1018 = vunpack.c.l.b16 %v699
  %v1019 = vunpack.c.l.b16 %v700
  %v1020 = vunpack.c.h.b16 %v700
  %v1021 = vunpack.c.l.b16 %v701
  %v1022 = vunpack.c.l.b16 %v702
  %v1023 = vunpack.c.h.b16 %v702
  %v1024 = vunpack.c.l.b16 %v703
  %v1025 = vunpack.c.l.b16 %v704
  %v1026 = vunpack.c.h.b16 %v704
  %v1027 = vunpack.c.l.b16 %v705
  %v1028 = vunpack.c.l.b16 %v706
  %v1029 = vunpack.c.h.b16 %v706
  %v1030 = vunpack.c.l.b16 %v707
  %v1031 = vunpack.c.l.b16 %v708
  %v1032 = vunpack.c.h.b16 %v708
  %v1033 = vunpack.c.l.b16 %v709
  %v1034 = vunpack.c.l.b16 %v710
  %v1035 = vunpack.c.h.b16 %v710
  %v1036 = vunpack.c.l.b16 %v711
  %v1037 = vunpack.c.l.b16 %v712
  %v1038 = vunpack.c.h.b16 %v712
  %v1039 = vunpack.c.l.b16 %v713
  %v1040 = vunpack.c.l.b16 %v714
  %v1041 = vunpack.c.h.b16 %v714
  %v1042 = vunpack.c.l.b16 %v715
  %v1043 = vpack.c.b16 %v998, %v995
  %v1044 = vpack.c.b16 %v999, %v996
  %v1045 = vpack.c.b16 %v1000, %v997
  %v1046 = vpack.c.b16 %v1004, %v1001
  %v1047 = vpack.c.b16 %v1005, %v1002
  %v1048 = vpack.c.b16 %v1006, %v1003
  %v1049 = vpack.c.b16 %v1010, %v1007
  %v1050 = vpack.c.b16 %v1011, %v1008
  %v1051 = vpack.c.b16 %v1012, %v1009
  %v1052 = vpack.c.b16 %v1016, %v1013
  %v1053 = vpack.c.b16 %v1017, %v1014
  %v1054 = vpack.c.b16 %v1018, %v1015
  %v1055 = vpack.c.b16 %v1022, %v1019
  %v1056 = vpack.c.b16 %v1023, %v1020
  %v1057 = vpack.c.b16 %v1024, %v1021
  %v1058 = vpack.c.b16 %v1028, %v1025
  %v1059 = vpack.c.b16 %v1029, %v1026
  %v1060 = vpack.c.b16 %v1030, %v1027
  %v1061 = vpack.c.b16 %v1034, %v1031
  %v1062 = vpack.c.b16 %v1035, %v1032
  %v1063 = vpack.c.b16 %v1036, %v1033
  %v1064 = vpack.c.b16 %v1040, %v1037
  %v1065 = vpack.c.b16 %v1041, %v1038
  %v1066 = vpack.c.b16 %v1042, %v1039
  %1091 = vmatprep.subr.bf16.mxu0 %v1044
  %1092 = vmatpush1.bf16.msra.mxu0 %v1043
  %1093 = vmatprep.subr.bf16.mxu0 %v1047
  %1094 = vmatpush1.bf16.msra.mxu0 %v1046
  %1095 = vmatprep.subr.bf16.mxu0 %v1050
  %1096 = vmatpush1.bf16.msra.mxu0 %v1049
  %1097 = vmatprep.subr.bf16.mxu0 %v1053
  %1098 = vmatpush1.bf16.msra.mxu0 %v1052
  %1099 = vmatprep.subr.bf16.mxu0 %v1056
  %1100 = vmatpush1.bf16.msra.mxu0 %v1055
  %1101 = vmatprep.subr.bf16.mxu0 %v1059
  %1102 = vmatpush1.bf16.msra.mxu0 %v1058
  %1103 = vmatprep.subr.bf16.mxu0 %v1062
  %1104 = vmatpush1.bf16.msra.mxu0 %v1061
  %1105 = vmatprep.subr.bf16.mxu0 %v1065
  %1106 = vmatpush1.bf16.msra.mxu0 %v1064
  %1107 = vmatprep.subr.bf16.mxu0 0
  %1108 = vmatpush1.bf16.msra.mxu0 0
  %1109 = vmatprep.subr.bf16.mxu0 0
  %1110 = vmatpush1.bf16.msra.mxu0 0
  %1111 = vmatprep.subr.bf16.mxu0 0
  %1112 = vmatpush1.bf16.msra.mxu0 0
  %1113 = vmatprep.subr.bf16.mxu0 0
  %1114 = vmatpush1.bf16.msra.mxu0 0
  %1115 = vmatprep.subr.bf16.mxu0 0
  %1116 = vmatpush1.bf16.msra.mxu0 0
  %1117 = vmatprep.subr.bf16.mxu0 0
  %1118 = vmatpush1.bf16.msra.mxu0 0
  %1119 = vmatprep.subr.bf16.mxu0 0
  %1120 = vmatpush1.bf16.msra.mxu0 0
  %1121 = vmatprep.subr.bf16.mxu0 0
  %1122 = vmatpush1.bf16.msra.mxu0 0
  %1123 = vmatprep.mubr.bf16.mxu0 0
  %1124 = vmatmul.mubr.bf16.gmra.mrb[0].mxu0 %v946
  %v1125 = vpop.f32.mrb[0].mxu0
  %v1126 = vadd.f32 %v951, %v1125
  %v1127 = vpop.f32.mrb[0].mxu0
  %v1128 = vadd.f32 %v955, %v1127
  %v1129 = vpop.f32.mrb[0].mxu0
  %v1130 = vpop.f32.mrb[0].mxu0
  %1131 = vdwg.mxu0
  %1132 = vmatprep.subr.bf16.mxu0 0
  %1133 = vmatpush1.bf16.msra.mxu0 %v1045
  %1134 = vmatprep.subr.bf16.mxu0 0
  %1135 = vmatpush1.bf16.msra.mxu0 %v1048
  %1136 = vmatprep.subr.bf16.mxu0 0
  %1137 = vmatpush1.bf16.msra.mxu0 %v1051
  %1138 = vmatprep.subr.bf16.mxu0 0
  %1139 = vmatpush1.bf16.msra.mxu0 %v1054
  %1140 = vmatprep.subr.bf16.mxu0 0
  %1141 = vmatpush1.bf16.msra.mxu0 %v1057
  %1142 = vmatprep.subr.bf16.mxu0 0
  %1143 = vmatpush1.bf16.msra.mxu0 %v1060
  %1144 = vmatprep.subr.bf16.mxu0 0
  %1145 = vmatpush1.bf16.msra.mxu0 %v1063
  %1146 = vmatprep.subr.bf16.mxu0 0
  %1147 = vmatpush1.bf16.msra.mxu0 %v1066
  %1148 = vmatprep.subr.bf16.mxu0 0
  %1149 = vmatpush1.bf16.msra.mxu0 0
  %1150 = vmatprep.subr.bf16.mxu0 0
  %1151 = vmatpush1.bf16.msra.mxu0 0
  %1152 = vmatprep.subr.bf16.mxu0 0
  %1153 = vmatpush1.bf16.msra.mxu0 0
  %1154 = vmatprep.subr.bf16.mxu0 0
  %1155 = vmatpush1.bf16.msra.mxu0 0
  %1156 = vmatprep.subr.bf16.mxu0 0
  %1157 = vmatpush1.bf16.msra.mxu0 0
  %1158 = vmatprep.subr.bf16.mxu0 0
  %1159 = vmatpush1.bf16.msra.mxu0 0
  %1160 = vmatprep.subr.bf16.mxu0 0
  %1161 = vmatpush1.bf16.msra.mxu0 0
  %1162 = vmatprep.subr.bf16.mxu0 0
  %1163 = vmatpush1.bf16.msra.mxu0 0
  %1164 = vmatprep.mubr.bf16.mxu0 0
  %1165 = vmatmul.mubr.bf16.gmra.mrb[0].mxu0 %v946
  %v1166 = vpop.f32.mrb[0].mxu0
  %v1167 = vadd.f32 %v959, %v1166
  %v1168 = vpop.f32.mrb[0].mxu0
  %v1169 = vpop.f32.mrb[0].mxu0
  %v1170 = vpop.f32.mrb[0].mxu0
  %1171 = vdwg.mxu0
  %s1172 = smul.u32 0, 6
  %s1173 = smul.addr %s1172, 8
  %s1174 = scalar_lea.vmem [#allocation2], %s1173
  %v1175 = vld [vmem:[%s1174] sm:$0xff]
  %v1176 = vld [vmem:[%s1174 + $0x8] sm:$0xff]
  %v1177 = vld [vmem:[%s1174 + $0x10] sm:$0xff]
  %s1178 = smul.u32 7, 6
  %s1179 = smul.addr %s1178, 8
  %s1180 = scalar_lea.vmem [#allocation2], %s1179
  %v1181 = vld [vmem:[%s1180 + $0x18] sm:$0xff]
  %v1182 = vld [vmem:[%s1180 + $0x20] sm:$0xff]
  %v1183 = vld [vmem:[%s1180 + $0x28] sm:$0xff]
  %v1184 = vadd.f32 %v1175, %v900
  %v1185 = vxor.u32 %v1184, 2147483648
  %v1186 = vmul.f32 %v1185, 1.442695
  %v1187 = vpow.pop %v1186
  %v1188 = vadd.f32 %v1187, 1.0
  %v1189 = vrcp.pop %v1188
  %v1190 = vmul.f32 1.0, %v1189
  %v1191 = vadd.f32 %v1176, %v902
  %v1192 = vxor.u32 %v1191, 2147483648
  %v1193 = vmul.f32 %v1192, 1.442695
  %v1194 = vpow.pop %v1193
  %v1195 = vadd.f32 %v1194, 1.0
  %v1196 = vrcp.pop %v1195
  %v1197 = vmul.f32 1.0, %v1196
  %v1198 = vmul.f32 %v1190, %v941
  %v1199 = vadd.f32 %v1177, %v1198
  %v1200 = vtanh.pop %v1199
  %v1201 = vsub.f32 1.0, %v1197
  %v1202 = vmul.f32 %v1201, %v1200
  %v1203 = vmul.f32 %v1197, %v718
  %v1204 = vadd.f32 %v1202, %v1203
  %v1205 = vadd.f32 %v1181, %v1126
  %v1206 = vxor.u32 %v1205, 2147483648
  %v1207 = vmul.f32 %v1206, 1.442695
  %v1208 = vpow.pop %v1207
  %v1209 = vadd.f32 %v1208, 1.0
  %v1210 = vrcp.pop %v1209
  %v1211 = vmul.f32 1.0, %v1210
  %v1212 = vadd.f32 %v1182, %v1128
  %v1213 = vxor.u32 %v1212, 2147483648
  %v1214 = vmul.f32 %v1213, 1.442695
  %v1215 = vpow.pop %v1214
  %v1216 = vadd.f32 %v1215, 1.0
  %v1217 = vrcp.pop %v1216
  %v1218 = vmul.f32 1.0, %v1217
  %v1219 = vmul.f32 %v1211, %v1167
  %v1220 = vadd.f32 %v1183, %v1219
  %v1221 = vtanh.pop %v1220
  %v1222 = vsub.f32 1.0, %v1218
  %v1223 = vmul.f32 %v1222, %v1221
  %v1224 = vmul.f32 %v1218, %v719
  %v1225 = vadd.f32 %v1223, %v1224
  %s1226 = smul.u32 0, 2
  %s1227 = smul.addr %s1226, 8
  %s1228 = scalar_lea.vmem %s9, %s1227
  %1229 = vst [vmem:[%s1228] sm:$0xff] %v1204
  %s1230 = smul.u32 7, 2
  %s1231 = smul.addr %s1230, 8
  %s1232 = scalar_lea.vmem %s9, %s1231
  %1233 = vst [vmem:[%s1232 + $0x8] sm:$0xff] %v1225
  %v1234 = vpack.c.bf16 %v1204, %v1204
  %1235 = vmatprep.subr.bf16.mxu0 %v818
  %1236 = vmatpush1.bf16.msra.mxu0 %v817
  %1237 = vmatprep.subr.bf16.mxu0 %v821
  %1238 = vmatpush1.bf16.msra.mxu0 %v820
  %1239 = vmatprep.subr.bf16.mxu0 %v824
  %1240 = vmatpush1.bf16.msra.mxu0 %v823
  %1241 = vmatprep.subr.bf16.mxu0 %v827
  %1242 = vmatpush1.bf16.msra.mxu0 %v826
  %1243 = vmatprep.subr.bf16.mxu0 %v830
  %1244 = vmatpush1.bf16.msra.mxu0 %v829
  %1245 = vmatprep.subr.bf16.mxu0 %v833
  %1246 = vmatpush1.bf16.msra.mxu0 %v832
  %1247 = vmatprep.subr.bf16.mxu0 %v836
  %1248 = vmatpush1.bf16.msra.mxu0 %v835
  %1249 = vmatprep.subr.bf16.mxu0 %v839
  %1250 = vmatpush1.bf16.msra.mxu0 %v838
  %1251 = vmatprep.subr.bf16.mxu0 0
  %1252 = vmatpush1.bf16.msra.mxu0 0
  %1253 = vmatprep.subr.bf16.mxu0 0
  %1254 = vmatpush1.bf16.msra.mxu0 0
  %1255 = vmatprep.subr.bf16.mxu0 0
  %1256 = vmatpush1.bf16.msra.mxu0 0
  %1257 = vmatprep.subr.bf16.mxu0 0
  %1258 = vmatpush1.bf16.msra.mxu0 0
  %1259 = vmatprep.subr.bf16.mxu0 0
  %1260 = vmatpush1.bf16.msra.mxu0 0
  %1261 = vmatprep.subr.bf16.mxu0 0
  %1262 = vmatpush1.bf16.msra.mxu0 0
  %1263 = vmatprep.subr.bf16.mxu0 0
  %1264 = vmatpush1.bf16.msra.mxu0 0
  %1265 = vmatprep.subr.bf16.mxu0 0
  %1266 = vmatpush1.bf16.msra.mxu0 0
  %1267 = vmatprep.mubr.bf16.mxu0 0
  %1268 = vmatmul.mubr.bf16.gmra.mrb[0].mxu0 %v1234
  %v1269 = vpop.f32.mrb[0].mxu0
  %v1270 = vadd.f32 %v725, %v1269
  %v1271 = vpop.f32.mrb[0].mxu0
  %v1272 = vadd.f32 %v729, %v1271
  %v1273 = vpop.f32.mrb[0].mxu0
  %v1274 = vpop.f32.mrb[0].mxu0
  %1275 = vdwg.mxu0
  %1276 = vmatprep.subr.bf16.mxu0 0
  %1277 = vmatpush1.bf16.msra.mxu0 %v819
  %1278 = vmatprep.subr.bf16.mxu0 0
  %1279 = vmatpush1.bf16.msra.mxu0 %v822
  %1280 = vmatprep.subr.bf16.mxu0 0
  %1281 = vmatpush1.bf16.msra.mxu0 %v825
  %1282 = vmatprep.subr.bf16.mxu0 0
  %1283 = vmatpush1.bf16.msra.mxu0 %v828
  %1284 = vmatprep.subr.bf16.mxu0 0
  %1285 = vmatpush1.bf16.msra.mxu0 %v831
  %1286 = vmatprep.subr.bf16.mxu0 0
  %1287 = vmatpush1.bf16.msra.mxu0 %v834
  %1288 = vmatprep.subr.bf16.mxu0 0
  %1289 = vmatpush1.bf16.msra.mxu0 %v837
  %1290 = vmatprep.subr.bf16.mxu0 0
  %1291 = vmatpush1.bf16.msra.mxu0 %v840
  %1292 = vmatprep.subr.bf16.mxu0 0
  %1293 = vmatpush1.bf16.msra.mxu0 0
  %1294 = vmatprep.subr.bf16.mxu0 0
  %1295 = vmatpush1.bf16.msra.mxu0 0
  %1296 = vmatprep.subr.bf16.mxu0 0
  %1297 = vmatpush1.bf16.msra.mxu0 0
  %1298 = vmatprep.subr.bf16.mxu0 0
  %1299 = vmatpush1.bf16.msra.mxu0 0
  %1300 = vmatprep.subr.bf16.mxu0 0
  %1301 = vmatpush1.bf16.msra.mxu0 0
  %1302 = vmatprep.subr.bf16.mxu0 0
  %1303 = vmatpush1.bf16.msra.mxu0 0
  %1304 = vmatprep.subr.bf16.mxu0 0
  %1305 = vmatpush1.bf16.msra.mxu0 0
  %1306 = vmatprep.subr.bf16.mxu0 0
  %1307 = vmatpush1.bf16.msra.mxu0 0
  %1308 = vmatprep.mubr.bf16.mxu0 0
  %1309 = vmatmul.mubr.bf16.gmra.mrb[0].mxu0 %v1234
  %v1310 = vpop.f32.mrb[0].mxu0
  %v1311 = vadd.f32 %v733, %v1310
  %v1312 = vpop.f32.mrb[0].mxu0
  %v1313 = vpop.f32.mrb[0].mxu0
  %v1314 = vpop.f32.mrb[0].mxu0
  %1315 = vdwg.mxu0
  %v1316 = vpack.c.bf16 %v1225, %v1225
  %1317 = vmatprep.subr.bf16.mxu0 %v1044
  %1318 = vmatpush1.bf16.msra.mxu0 %v1043
  %1319 = vmatprep.subr.bf16.mxu0 %v1047
  %1320 = vmatpush1.bf16.msra.mxu0 %v1046
  %1321 = vmatprep.subr.bf16.mxu0 %v1050
  %1322 = vmatpush1.bf16.msra.mxu0 %v1049
  %1323 = vmatprep.subr.bf16.mxu0 %v1053
  %1324 = vmatpush1.bf16.msra.mxu0 %v1052
  %1325 = vmatprep.subr.bf16.mxu0 %v1056
  %1326 = vmatpush1.bf16.msra.mxu0 %v1055
  %1327 = vmatprep.subr.bf16.mxu0 %v1059
  %1328 = vmatpush1.bf16.msra.mxu0 %v1058
  %1329 = vmatprep.subr.bf16.mxu0 %v1062
  %1330 = vmatpush1.bf16.msra.mxu0 %v1061
  %1331 = vmatprep.subr.bf16.mxu0 %v1065
  %1332 = vmatpush1.bf16.msra.mxu0 %v1064
  %1333 = vmatprep.subr.bf16.mxu0 0
  %1334 = vmatpush1.bf16.msra.mxu0 0
  %1335 = vmatprep.subr.bf16.mxu0 0
  %1336 = vmatpush1.bf16.msra.mxu0 0
  %1337 = vmatprep.subr.bf16.mxu0 0
  %1338 = vmatpush1.bf16.msra.mxu0 0
  %1339 = vmatprep.subr.bf16.mxu0 0
  %1340 = vmatpush1.bf16.msra.mxu0 0
  %1341 = vmatprep.subr.bf16.mxu0 0
  %1342 = vmatpush1.bf16.msra.mxu0 0
  %1343 = vmatprep.subr.bf16.mxu0 0
  %1344 = vmatpush1.bf16.msra.mxu0 0
  %1345 = vmatprep.subr.bf16.mxu0 0
  %1346 = vmatpush1.bf16.msra.mxu0 0
  %1347 = vmatprep.subr.bf16.mxu0 0
  %1348 = vmatpush1.bf16.msra.mxu0 0
  %1349 = vmatprep.mubr.bf16.mxu0 0
  %1350 = vmatmul.mubr.bf16.gmra.mrb[0].mxu0 %v1316
  %v1351 = vpop.f32.mrb[0].mxu0
  %v1352 = vadd.f32 %v951, %v1351
  %v1353 = vpop.f32.mrb[0].mxu0
  %v1354 = vadd.f32 %v955, %v1353
  %v1355 = vpop.f32.mrb[0].mxu0
  %v1356 = vpop.f32.mrb[0].mxu0
  %1357 = vdwg.mxu0
  %1358 = vmatprep.subr.bf16.mxu0 0
  %1359 = vmatpush1.bf16.msra.mxu0 %v1045
  %1360 = vmatprep.subr.bf16.mxu0 0
  %1361 = vmatpush1.bf16.msra.mxu0 %v1048
  %1362 = vmatprep.subr.bf16.mxu0 0
  %1363 = vmatpush1.bf16.msra.mxu0 %v1051
  %1364 = vmatprep.subr.bf16.mxu0 0
  %1365 = vmatpush1.bf16.msra.mxu0 %v1054
  %1366 = vmatprep.subr.bf16.mxu0 0
  %1367 = vmatpush1.bf16.msra.mxu0 %v1057
  %1368 = vmatprep.subr.bf16.mxu0 0
  %1369 = vmatpush1.bf16.msra.mxu0 %v1060
  %1370 = vmatprep.subr.bf16.mxu0 0
  %1371 = vmatpush1.bf16.msra.mxu0 %v1063
  %1372 = vmatprep.subr.bf16.mxu0 0
  %1373 = vmatpush1.bf16.msra.mxu0 %v1066
  %1374 = vmatprep.subr.bf16.mxu0 0
  %1375 = vmatpush1.bf16.msra.mxu0 0
  %1376 = vmatprep.subr.bf16.mxu0 0
  %1377 = vmatpush1.bf16.msra.mxu0 0
  %1378 = vmatprep.subr.bf16.mxu0 0
  %1379 = vmatpush1.bf16.msra.mxu0 0
  %1380 = vmatprep.subr.bf16.mxu0 0
  %1381 = vmatpush1.bf16.msra.mxu0 0
  %1382 = vmatprep.subr.bf16.mxu0 0
  %1383 = vmatpush1.bf16.msra.mxu0 0
  %1384 = vmatprep.subr.bf16.mxu0 0
  %1385 = vmatpush1.bf16.msra.mxu0 0
  %1386 = vmatprep.subr.bf16.mxu0 0
  %1387 = vmatpush1.bf16.msra.mxu0 0
  %1388 = vmatprep.subr.bf16.mxu0 0
  %1389 = vmatpush1.bf16.msra.mxu0 0
  %1390 = vmatprep.mubr.bf16.mxu0 0
  %1391 = vmatmul.mubr.bf16.gmra.mrb[0].mxu0 %v1316
  %v1392 = vpop.f32.mrb[0].mxu0
  %v1393 = vadd.f32 %v959, %v1392
  %v1394 = vpop.f32.mrb[0].mxu0
  %v1395 = vpop.f32.mrb[0].mxu0
  %v1396 = vpop.f32.mrb[0].mxu0
  %1397 = vdwg.mxu0
  %s1398 = smul.u32 1, 6
  %s1399 = smul.addr %s1398, 8
  %s1400 = scalar_lea.vmem [#allocation2], %s1399
  %v1401 = vld [vmem:[%s1400] sm:$0xff]
  %v1402 = vld [vmem:[%s1400 + $0x8] sm:$0xff]
  %v1403 = vld [vmem:[%s1400 + $0x10] sm:$0xff]
  %s1404 = smul.u32 6, 6
  %s1405 = smul.addr %s1404, 8
  %s1406 = scalar_lea.vmem [#allocation2], %s1405
  %v1407 = vld [vmem:[%s1406 + $0x18] sm:$0xff]
  %v1408 = vld [vmem:[%s1406 + $0x20] sm:$0xff]
  %v1409 = vld [vmem:[%s1406 + $0x28] sm:$0xff]
  %v1410 = vadd.f32 %v1401, %v1270
  %v1411 = vxor.u32 %v1410, 2147483648
  %v1412 = vmul.f32 %v1411, 1.442695
  %v1413 = vpow.pop %v1412
  %v1414 = vadd.f32 %v1413, 1.0
  %v1415 = vrcp.pop %v1414
  %v1416 = vmul.f32 1.0, %v1415
  %v1417 = vadd.f32 %v1402, %v1272
  %v1418 = vxor.u32 %v1417, 2147483648
  %v1419 = vmul.f32 %v1418, 1.442695
  %v1420 = vpow.pop %v1419
  %v1421 = vadd.f32 %v1420, 1.0
  %v1422 = vrcp.pop %v1421
  %v1423 = vmul.f32 1.0, %v1422
  %v1424 = vmul.f32 %v1416, %v1311
  %v1425 = vadd.f32 %v1403, %v1424
  %v1426 = vtanh.pop %v1425
  %v1427 = vsub.f32 1.0, %v1423
  %v1428 = vmul.f32 %v1427, %v1426
  %v1429 = vmul.f32 %v1423, %v1204
  %v1430 = vadd.f32 %v1428, %v1429
  %v1431 = vadd.f32 %v1407, %v1352
  %v1432 = vxor.u32 %v1431, 2147483648
  %v1433 = vmul.f32 %v1432, 1.442695
  %v1434 = vpow.pop %v1433
  %v1435 = vadd.f32 %v1434, 1.0
  %v1436 = vrcp.pop %v1435
  %v1437 = vmul.f32 1.0, %v1436
  %v1438 = vadd.f32 %v1408, %v1354
  %v1439 = vxor.u32 %v1438, 2147483648
  %v1440 = vmul.f32 %v1439, 1.442695
  %v1441 = vpow.pop %v1440
  %v1442 = vadd.f32 %v1441, 1.0
  %v1443 = vrcp.pop %v1442
  %v1444 = vmul.f32 1.0, %v1443
  %v1445 = vmul.f32 %v1437, %v1393
  %v1446 = vadd.f32 %v1409, %v1445
  %v1447 = vtanh.pop %v1446
  %v1448 = vsub.f32 1.0, %v1444
  %v1449 = vmul.f32 %v1448, %v1447
  %v1450 = vmul.f32 %v1444, %v1225
  %v1451 = vadd.f32 %v1449, %v1450
  %s1452 = smul.u32 1, 2
  %s1453 = smul.addr %s1452, 8
  %s1454 = scalar_lea.vmem %s9, %s1453
  %1455 = vst [vmem:[%s1454] sm:$0xff] %v1430
  %s1456 = smul.u32 6, 2
  %s1457 = smul.addr %s1456, 8
  %s1458 = scalar_lea.vmem %s9, %s1457
  %1459 = vst [vmem:[%s1458 + $0x8] sm:$0xff] %v1451
  %v1460 = vpack.c.bf16 %v1430, %v1430
  %1461 = vmatprep.subr.bf16.mxu0 %v818
  %1462 = vmatpush1.bf16.msra.mxu0 %v817
  %1463 = vmatprep.subr.bf16.mxu0 %v821
  %1464 = vmatpush1.bf16.msra.mxu0 %v820
  %1465 = vmatprep.subr.bf16.mxu0 %v824
  %1466 = vmatpush1.bf16.msra.mxu0 %v823
  %1467 = vmatprep.subr.bf16.mxu0 %v827
  %1468 = vmatpush1.bf16.msra.mxu0 %v826
  %1469 = vmatprep.subr.bf16.mxu0 %v830
  %1470 = vmatpush1.bf16.msra.mxu0 %v829
  %1471 = vmatprep.subr.bf16.mxu0 %v833
  %1472 = vmatpush1.bf16.msra.mxu0 %v832
  %1473 = vmatprep.subr.bf16.mxu0 %v836
  %1474 = vmatpush1.bf16.msra.mxu0 %v835
  %1475 = vmatprep.subr.bf16.mxu0 %v839
  %1476 = vmatpush1.bf16.msra.mxu0 %v838
  %1477 = vmatprep.subr.bf16.mxu0 0
  %1478 = vmatpush1.bf16.msra.mxu0 0
  %1479 = vmatprep.subr.bf16.mxu0 0
  %1480 = vmatpush1.bf16.msra.mxu0 0
  %1481 = vmatprep.subr.bf16.mxu0 0
  %1482 = vmatpush1.bf16.msra.mxu0 0
  %1483 = vmatprep.subr.bf16.mxu0 0
  %1484 = vmatpush1.bf16.msra.mxu0 0
  %1485 = vmatprep.subr.bf16.mxu0 0
  %1486 = vmatpush1.bf16.msra.mxu0 0
  %1487 = vmatprep.subr.bf16.mxu0 0
  %1488 = vmatpush1.bf16.msra.mxu0 0
  %1489 = vmatprep.subr.bf16.mxu0 0
  %1490 = vmatpush1.bf16.msra.mxu0 0
  %1491 = vmatprep.subr.bf16.mxu0 0
  %1492 = vmatpush1.bf16.msra.mxu0 0
  %1493 = vmatprep.mubr.bf16.mxu0 0
  %1494 = vmatmul.mubr.bf16.gmra.mrb[0].mxu0 %v1460
  %v1495 = vpop.f32.mrb[0].mxu0
  %v1496 = vadd.f32 %v725, %v1495
  %v1497 = vpop.f32.mrb[0].mxu0
  %v1498 = vadd.f32 %v729, %v1497
  %v1499 = vpop.f32.mrb[0].mxu0
  %v1500 = vpop.f32.mrb[0].mxu0
  %1501 = vdwg.mxu0
  %1502 = vmatprep.subr.bf16.mxu0 0
  %1503 = vmatpush1.bf16.msra.mxu0 %v819
  %1504 = vmatprep.subr.bf16.mxu0 0
  %1505 = vmatpush1.bf16.msra.mxu0 %v822
  %1506 = vmatprep.subr.bf16.mxu0 0
  %1507 = vmatpush1.bf16.msra.mxu0 %v825
  %1508 = vmatprep.subr.bf16.mxu0 0
  %1509 = vmatpush1.bf16.msra.mxu0 %v828
  %1510 = vmatprep.subr.bf16.mxu0 0
  %1511 = vmatpush1.bf16.msra.mxu0 %v831
  %1512 = vmatprep.subr.bf16.mxu0 0
  %1513 = vmatpush1.bf16.msra.mxu0 %v834
  %1514 = vmatprep.subr.bf16.mxu0 0
  %1515 = vmatpush1.bf16.msra.mxu0 %v837
  %1516 = vmatprep.subr.bf16.mxu0 0
  %1517 = vmatpush1.bf16.msra.mxu0 %v840
  %1518 = vmatprep.subr.bf16.mxu0 0
  %1519 = vmatpush1.bf16.msra.mxu0 0
  %1520 = vmatprep.subr.bf16.mxu0 0
  %1521 = vmatpush1.bf16.msra.mxu0 0
  %1522 = vmatprep.subr.bf16.mxu0 0
  %1523 = vmatpush1.bf16.msra.mxu0 0
  %1524 = vmatprep.subr.bf16.mxu0 0
  %1525 = vmatpush1.bf16.msra.mxu0 0
  %1526 = vmatprep.subr.bf16.mxu0 0
  %1527 = vmatpush1.bf16.msra.mxu0 0
  %1528 = vmatprep.subr.bf16.mxu0 0
  %1529 = vmatpush1.bf16.msra.mxu0 0
  %1530 = vmatprep.subr.bf16.mxu0 0
  %1531 = vmatpush1.bf16.msra.mxu0 0
  %1532 = vmatprep.subr.bf16.mxu0 0
  %1533 = vmatpush1.bf16.msra.mxu0 0
  %1534 = vmatprep.mubr.bf16.mxu0 0
  %1535 = vmatmul.mubr.bf16.gmra.mrb[0].mxu0 %v1460
  %v1536 = vpop.f32.mrb[0].mxu0
  %v1537 = vadd.f32 %v733, %v1536
  %v1538 = vpop.f32.mrb[0].mxu0
  %v1539 = vpop.f32.mrb[0].mxu0
  %v1540 = vpop.f32.mrb[0].mxu0
  %1541 = vdwg.mxu0
  %v1542 = vpack.c.bf16 %v1451, %v1451
  %1543 = vmatprep.subr.bf16.mxu0 %v1044
  %1544 = vmatpush1.bf16.msra.mxu0 %v1043
  %1545 = vmatprep.subr.bf16.mxu0 %v1047
  %1546 = vmatpush1.bf16.msra.mxu0 %v1046
  %1547 = vmatprep.subr.bf16.mxu0 %v1050
  %1548 = vmatpush1.bf16.msra.mxu0 %v1049
  %1549 = vmatprep.subr.bf16.mxu0 %v1053
  %1550 = vmatpush1.bf16.msra.mxu0 %v1052
  %1551 = vmatprep.subr.bf16.mxu0 %v1056
  %1552 = vmatpush1.bf16.msra.mxu0 %v1055
  %1553 = vmatprep.subr.bf16.mxu0 %v1059
  %1554 = vmatpush1.bf16.msra.mxu0 %v1058
  %1555 = vmatprep.subr.bf16.mxu0 %v1062
  %1556 = vmatpush1.bf16.msra.mxu0 %v1061
  %1557 = vmatprep.subr.bf16.mxu0 %v1065
  %1558 = vmatpush1.bf16.msra.mxu0 %v1064
  %1559 = vmatprep.subr.bf16.mxu0 0
  %1560 = vmatpush1.bf16.msra.mxu0 0
  %1561 = vmatprep.subr.bf16.mxu0 0
  %1562 = vmatpush1.bf16.msra.mxu0 0
  %1563 = vmatprep.subr.bf16.mxu0 0
  %1564 = vmatpush1.bf16.msra.mxu0 0
  %1565 = vmatprep.subr.bf16.mxu0 0
  %1566 = vmatpush1.bf16.msra.mxu0 0
  %1567 = vmatprep.subr.bf16.mxu0 0
  %1568 = vmatpush1.bf16.msra.mxu0 0
  %1569 = vmatprep.subr.bf16.mxu0 0
  %1570 = vmatpush1.bf16.msra.mxu0 0
  %1571 = vmatprep.subr.bf16.mxu0 0
  %1572 = vmatpush1.bf16.msra.mxu0 0
  %1573 = vmatprep.subr.bf16.mxu0 0
  %1574 = vmatpush1.bf16.msra.mxu0 0
  %1575 = vmatprep.mubr.bf16.mxu0 0
  %1576 = vmatmul.mubr.bf16.gmra.mrb[0].mxu0 %v1542
  %v1577 = vpop.f32.mrb[0].mxu0
  %v1578 = vadd.f32 %v951, %v1577
  %v1579 = vpop.f32.mrb[0].mxu0
  %v1580 = vadd.f32 %v955, %v1579
  %v1581 = vpop.f32.mrb[0].mxu0
  %v1582 = vpop.f32.mrb[0].mxu0
  %1583 = vdwg.mxu0
  %1584 = vmatprep.subr.bf16.mxu0 0
  %1585 = vmatpush1.bf16.msra.mxu0 %v1045
  %1586 = vmatprep.subr.bf16.mxu0 0
  %1587 = vmatpush1.bf16.msra.mxu0 %v1048
  %1588 = vmatprep.subr.bf16.mxu0 0
  %1589 = vmatpush1.bf16.msra.mxu0 %v1051
  %1590 = vmatprep.subr.bf16.mxu0 0
  %1591 = vmatpush1.bf16.msra.mxu0 %v1054
  %1592 = vmatprep.subr.bf16.mxu0 0
  %1593 = vmatpush1.bf16.msra.mxu0 %v1057
  %1594 = vmatprep.subr.bf16.mxu0 0
  %1595 = vmatpush1.bf16.msra.mxu0 %v1060
  %1596 = vmatprep.subr.bf16.mxu0 0
  %1597 = vmatpush1.bf16.msra.mxu0 %v1063
  %1598 = vmatprep.subr.bf16.mxu0 0
  %1599 = vmatpush1.bf16.msra.mxu0 %v1066
  %1600 = vmatprep.subr.bf16.mxu0 0
  %1601 = vmatpush1.bf16.msra.mxu0 0
  %1602 = vmatprep.subr.bf16.mxu0 0
  %1603 = vmatpush1.bf16.msra.mxu0 0
  %1604 = vmatprep.subr.bf16.mxu0 0
  %1605 = vmatpush1.bf16.msra.mxu0 0
  %1606 = vmatprep.subr.bf16.mxu0 0
  %1607 = vmatpush1.bf16.msra.mxu0 0
  %1608 = vmatprep.subr.bf16.mxu0 0
  %1609 = vmatpush1.bf16.msra.mxu0 0
  %1610 = vmatprep.subr.bf16.mxu0 0
  %1611 = vmatpush1.bf16.msra.mxu0 0
  %1612 = vmatprep.subr.bf16.mxu0 0
  %1613 = vmatpush1.bf16.msra.mxu0 0
  %1614 = vmatprep.subr.bf16.mxu0 0
  %1615 = vmatpush1.bf16.msra.mxu0 0
  %1616 = vmatprep.mubr.bf16.mxu0 0
  %1617 = vmatmul.mubr.bf16.gmra.mrb[0].mxu0 %v1542
  %v1618 = vpop.f32.mrb[0].mxu0
  %v1619 = vadd.f32 %v959, %v1618
  %v1620 = vpop.f32.mrb[0].mxu0
  %v1621 = vpop.f32.mrb[0].mxu0
  %v1622 = vpop.f32.mrb[0].mxu0
  %1623 = vdwg.mxu0
  %s1624 = smul.u32 2, 6
  %s1625 = smul.addr %s1624, 8
  %s1626 = scalar_lea.vmem [#allocation2], %s1625
  %v1627 = vld [vmem:[%s1626] sm:$0xff]
  %v1628 = vld [vmem:[%s1626 + $0x8] sm:$0xff]
  %v1629 = vld [vmem:[%s1626 + $0x10] sm:$0xff]
  %s1630 = smul.u32 5, 6
  %s1631 = smul.addr %s1630, 8
  %s1632 = scalar_lea.vmem [#allocation2], %s1631
  %v1633 = vld [vmem:[%s1632 + $0x18] sm:$0xff]
  %v1634 = vld [vmem:[%s1632 + $0x20] sm:$0xff]
  %v1635 = vld [vmem:[%s1632 + $0x28] sm:$0xff]
  %v1636 = vadd.f32 %v1627, %v1496
  %v1637 = vxor.u32 %v1636, 2147483648
  %v1638 = vmul.f32 %v1637, 1.442695
  %v1639 = vpow.pop %v1638
  %v1640 = vadd.f32 %v1639, 1.0
  %v1641 = vrcp.pop %v1640
  %v1642 = vmul.f32 1.0, %v1641
  %v1643 = vadd.f32 %v1628, %v1498
  %v1644 = vxor.u32 %v1643, 2147483648
  %v1645 = vmul.f32 %v1644, 1.442695
  %v1646 = vpow.pop %v1645
  %v1647 = vadd.f32 %v1646, 1.0
  %v1648 = vrcp.pop %v1647
  %v1649 = vmul.f32 1.0, %v1648
  %v1650 = vmul.f32 %v1642, %v1537
  %v1651 = vadd.f32 %v1629, %v1650
  %v1652 = vtanh.pop %v1651
  %v1653 = vsub.f32 1.0, %v1649
  %v1654 = vmul.f32 %v1653, %v1652
  %v1655 = vmul.f32 %v1649, %v1430
  %v1656 = vadd.f32 %v1654, %v1655
  %v1657 = vadd.f32 %v1633, %v1578
  %v1658 = vxor.u32 %v1657, 2147483648
  %v1659 = vmul.f32 %v1658, 1.442695
  %v1660 = vpow.pop %v1659
  %v1661 = vadd.f32 %v1660, 1.0
  %v1662 = vrcp.pop %v1661
  %v1663 = vmul.f32 1.0, %v1662
  %v1664 = vadd.f32 %v1634, %v1580
  %v1665 = vxor.u32 %v1664, 2147483648
  %v1666 = vmul.f32 %v1665, 1.442695
  %v1667 = vpow.pop %v1666
  %v1668 = vadd.f32 %v1667, 1.0
  %v1669 = vrcp.pop %v1668
  %v1670 = vmul.f32 1.0, %v1669
  %v1671 = vmul.f32 %v1663, %v1619
  %v1672 = vadd.f32 %v1635, %v1671
  %v1673 = vtanh.pop %v1672
  %v1674 = vsub.f32 1.0, %v1670
  %v1675 = vmul.f32 %v1674, %v1673
  %v1676 = vmul.f32 %v1670, %v1451
  %v1677 = vadd.f32 %v1675, %v1676
  %s1678 = smul.u32 2, 2
  %s1679 = smul.addr %s1678, 8
  %s1680 = scalar_lea.vmem %s9, %s1679
  %1681 = vst [vmem:[%s1680] sm:$0xff] %v1656
  %s1682 = smul.u32 5, 2
  %s1683 = smul.addr %s1682, 8
  %s1684 = scalar_lea.vmem %s9, %s1683
  %1685 = vst [vmem:[%s1684 + $0x8] sm:$0xff] %v1677
  %v1686 = vpack.c.bf16 %v1656, %v1656
  %1687 = vmatprep.subr.bf16.mxu0 %v818
  %1688 = vmatpush1.bf16.msra.mxu0 %v817
  %1689 = vmatprep.subr.bf16.mxu0 %v821
  %1690 = vmatpush1.bf16.msra.mxu0 %v820
  %1691 = vmatprep.subr.bf16.mxu0 %v824
  %1692 = vmatpush1.bf16.msra.mxu0 %v823
  %1693 = vmatprep.subr.bf16.mxu0 %v827
  %1694 = vmatpush1.bf16.msra.mxu0 %v826
  %1695 = vmatprep.subr.bf16.mxu0 %v830
  %1696 = vmatpush1.bf16.msra.mxu0 %v829
  %1697 = vmatprep.subr.bf16.mxu0 %v833
  %1698 = vmatpush1.bf16.msra.mxu0 %v832
  %1699 = vmatprep.subr.bf16.mxu0 %v836
  %1700 = vmatpush1.bf16.msra.mxu0 %v835
  %1701 = vmatprep.subr.bf16.mxu0 %v839
  %1702 = vmatpush1.bf16.msra.mxu0 %v838
  %1703 = vmatprep.subr.bf16.mxu0 0
  %1704 = vmatpush1.bf16.msra.mxu0 0
  %1705 = vmatprep.subr.bf16.mxu0 0
  %1706 = vmatpush1.bf16.msra.mxu0 0
  %1707 = vmatprep.subr.bf16.mxu0 0
  %1708 = vmatpush1.bf16.msra.mxu0 0
  %1709 = vmatprep.subr.bf16.mxu0 0
  %1710 = vmatpush1.bf16.msra.mxu0 0
  %1711 = vmatprep.subr.bf16.mxu0 0
  %1712 = vmatpush1.bf16.msra.mxu0 0
  %1713 = vmatprep.subr.bf16.mxu0 0
  %1714 = vmatpush1.bf16.msra.mxu0 0
  %1715 = vmatprep.subr.bf16.mxu0 0
  %1716 = vmatpush1.bf16.msra.mxu0 0
  %1717 = vmatprep.subr.bf16.mxu0 0
  %1718 = vmatpush1.bf16.msra.mxu0 0
  %1719 = vmatprep.mubr.bf16.mxu0 0
  %1720 = vmatmul.mubr.bf16.gmra.mrb[0].mxu0 %v1686
  %v1721 = vpop.f32.mrb[0].mxu0
  %v1722 = vadd.f32 %v725, %v1721
  %v1723 = vpop.f32.mrb[0].mxu0
  %v1724 = vadd.f32 %v729, %v1723
  %v1725 = vpop.f32.mrb[0].mxu0
  %v1726 = vpop.f32.mrb[0].mxu0
  %1727 = vdwg.mxu0
  %1728 = vmatprep.subr.bf16.mxu0 0
  %1729 = vmatpush1.bf16.msra.mxu0 %v819
  %1730 = vmatprep.subr.bf16.mxu0 0
  %1731 = vmatpush1.bf16.msra.mxu0 %v822
  %1732 = vmatprep.subr.bf16.mxu0 0
  %1733 = vmatpush1.bf16.msra.mxu0 %v825
  %1734 = vmatprep.subr.bf16.mxu0 0
  %1735 = vmatpush1.bf16.msra.mxu0 %v828
  %1736 = vmatprep.subr.bf16.mxu0 0
  %1737 = vmatpush1.bf16.msra.mxu0 %v831
  %1738 = vmatprep.subr.bf16.mxu0 0
  %1739 = vmatpush1.bf16.msra.mxu0 %v834
  %1740 = vmatprep.subr.bf16.mxu0 0
  %1741 = vmatpush1.bf16.msra.mxu0 %v837
  %1742 = vmatprep.subr.bf16.mxu0 0
  %1743 = vmatpush1.bf16.msra.mxu0 %v840
  %1744 = vmatprep.subr.bf16.mxu0 0
  %1745 = vmatpush1.bf16.msra.mxu0 0
  %1746 = vmatprep.subr.bf16.mxu0 0
  %1747 = vmatpush1.bf16.msra.mxu0 0
  %1748 = vmatprep.subr.bf16.mxu0 0
  %1749 = vmatpush1.bf16.msra.mxu0 0
  %1750 = vmatprep.subr.bf16.mxu0 0
  %1751 = vmatpush1.bf16.msra.mxu0 0
  %1752 = vmatprep.subr.bf16.mxu0 0
  %1753 = vmatpush1.bf16.msra.mxu0 0
  %1754 = vmatprep.subr.bf16.mxu0 0
  %1755 = vmatpush1.bf16.msra.mxu0 0
  %1756 = vmatprep.subr.bf16.mxu0 0
  %1757 = vmatpush1.bf16.msra.mxu0 0
  %1758 = vmatprep.subr.bf16.mxu0 0
  %1759 = vmatpush1.bf16.msra.mxu0 0
  %1760 = vmatprep.mubr.bf16.mxu0 0
  %1761 = vmatmul.mubr.bf16.gmra.mrb[0].mxu0 %v1686
  %v1762 = vpop.f32.mrb[0].mxu0
  %v1763 = vadd.f32 %v733, %v1762
  %v1764 = vpop.f32.mrb[0].mxu0
  %v1765 = vpop.f32.mrb[0].mxu0
  %v1766 = vpop.f32.mrb[0].mxu0
  %1767 = vdwg.mxu0
  %v1768 = vpack.c.bf16 %v1677, %v1677
  %1769 = vmatprep.subr.bf16.mxu0 %v1044
  %1770 = vmatpush1.bf16.msra.mxu0 %v1043
  %1771 = vmatprep.subr.bf16.mxu0 %v1047
  %1772 = vmatpush1.bf16.msra.mxu0 %v1046
  %1773 = vmatprep.subr.bf16.mxu0 %v1050
  %1774 = vmatpush1.bf16.msra.mxu0 %v1049
  %1775 = vmatprep.subr.bf16.mxu0 %v1053
  %1776 = vmatpush1.bf16.msra.mxu0 %v1052
  %1777 = vmatprep.subr.bf16.mxu0 %v1056
  %1778 = vmatpush1.bf16.msra.mxu0 %v1055
  %1779 = vmatprep.subr.bf16.mxu0 %v1059
  %1780 = vmatpush1.bf16.msra.mxu0 %v1058
  %1781 = vmatprep.subr.bf16.mxu0 %v1062
  %1782 = vmatpush1.bf16.msra.mxu0 %v1061
  %1783 = vmatprep.subr.bf16.mxu0 %v1065
  %1784 = vmatpush1.bf16.msra.mxu0 %v1064
  %1785 = vmatprep.subr.bf16.mxu0 0
  %1786 = vmatpush1.bf16.msra.mxu0 0
  %1787 = vmatprep.subr.bf16.mxu0 0
  %1788 = vmatpush1.bf16.msra.mxu0 0
  %1789 = vmatprep.subr.bf16.mxu0 0
  %1790 = vmatpush1.bf16.msra.mxu0 0
  %1791 = vmatprep.subr.bf16.mxu0 0
  %1792 = vmatpush1.bf16.msra.mxu0 0
  %1793 = vmatprep.subr.bf16.mxu0 0
  %1794 = vmatpush1.bf16.msra.mxu0 0
  %1795 = vmatprep.subr.bf16.mxu0 0
  %1796 = vmatpush1.bf16.msra.mxu0 0
  %1797 = vmatprep.subr.bf16.mxu0 0
  %1798 = vmatpush1.bf16.msra.mxu0 0
  %1799 = vmatprep.subr.bf16.mxu0 0
  %1800 = vmatpush1.bf16.msra.mxu0 0
  %1801 = vmatprep.mubr.bf16.mxu0 0
  %1802 = vmatmul.mubr.bf16.gmra.mrb[0].mxu0 %v1768
  %v1803 = vpop.f32.mrb[0].mxu0
  %v1804 = vadd.f32 %v951, %v1803
  %v1805 = vpop.f32.mrb[0].mxu0
  %v1806 = vadd.f32 %v955, %v1805
  %v1807 = vpop.f32.mrb[0].mxu0
  %v1808 = vpop.f32.mrb[0].mxu0
  %1809 = vdwg.mxu0
  %1810 = vmatprep.subr.bf16.mxu0 0
  %1811 = vmatpush1.bf16.msra.mxu0 %v1045
  %1812 = vmatprep.subr.bf16.mxu0 0
  %1813 = vmatpush1.bf16.msra.mxu0 %v1048
  %1814 = vmatprep.subr.bf16.mxu0 0
  %1815 = vmatpush1.bf16.msra.mxu0 %v1051
  %1816 = vmatprep.subr.bf16.mxu0 0
  %1817 = vmatpush1.bf16.msra.mxu0 %v1054
  %1818 = vmatprep.subr.bf16.mxu0 0
  %1819 = vmatpush1.bf16.msra.mxu0 %v1057
  %1820 = vmatprep.subr.bf16.mxu0 0
  %1821 = vmatpush1.bf16.msra.mxu0 %v1060
  %1822 = vmatprep.subr.bf16.mxu0 0
  %1823 = vmatpush1.bf16.msra.mxu0 %v1063
  %1824 = vmatprep.subr.bf16.mxu0 0
  %1825 = vmatpush1.bf16.msra.mxu0 %v1066
  %1826 = vmatprep.subr.bf16.mxu0 0
  %1827 = vmatpush1.bf16.msra.mxu0 0
  %1828 = vmatprep.subr.bf16.mxu0 0
  %1829 = vmatpush1.bf16.msra.mxu0 0
  %1830 = vmatprep.subr.bf16.mxu0 0
  %1831 = vmatpush1.bf16.msra.mxu0 0
  %1832 = vmatprep.subr.bf16.mxu0 0
  %1833 = vmatpush1.bf16.msra.mxu0 0
  %1834 = vmatprep.subr.bf16.mxu0 0
  %1835 = vmatpush1.bf16.msra.mxu0 0
  %1836 = vmatprep.subr.bf16.mxu0 0
  %1837 = vmatpush1.bf16.msra.mxu0 0
  %1838 = vmatprep.subr.bf16.mxu0 0
  %1839 = vmatpush1.bf16.msra.mxu0 0
  %1840 = vmatprep.subr.bf16.mxu0 0
  %1841 = vmatpush1.bf16.msra.mxu0 0
  %1842 = vmatprep.mubr.bf16.mxu0 0
  %1843 = vmatmul.mubr.bf16.gmra.mrb[0].mxu0 %v1768
  %v1844 = vpop.f32.mrb[0].mxu0
  %v1845 = vadd.f32 %v959, %v1844
  %v1846 = vpop.f32.mrb[0].mxu0
  %v1847 = vpop.f32.mrb[0].mxu0
  %v1848 = vpop.f32.mrb[0].mxu0
  %1849 = vdwg.mxu0
  %s1850 = smul.u32 3, 6
  %s1851 = smul.addr %s1850, 8
  %s1852 = scalar_lea.vmem [#allocation2], %s1851
  %v1853 = vld [vmem:[%s1852] sm:$0xff]
  %v1854 = vld [vmem:[%s1852 + $0x8] sm:$0xff]
  %v1855 = vld [vmem:[%s1852 + $0x10] sm:$0xff]
  %s1856 = smul.u32 4, 6
  %s1857 = smul.addr %s1856, 8
  %s1858 = scalar_lea.vmem [#allocation2], %s1857
  %v1859 = vld [vmem:[%s1858 + $0x18] sm:$0xff]
  %v1860 = vld [vmem:[%s1858 + $0x20] sm:$0xff]
  %v1861 = vld [vmem:[%s1858 + $0x28] sm:$0xff]
  %v1862 = vadd.f32 %v1853, %v1722
  %v1863 = vxor.u32 %v1862, 2147483648
  %v1864 = vmul.f32 %v1863, 1.442695
  %v1865 = vpow.pop %v1864
  %v1866 = vadd.f32 %v1865, 1.0
  %v1867 = vrcp.pop %v1866
  %v1868 = vmul.f32 1.0, %v1867
  %v1869 = vadd.f32 %v1854, %v1724
  %v1870 = vxor.u32 %v1869, 2147483648
  %v1871 = vmul.f32 %v1870, 1.442695
  %v1872 = vpow.pop %v1871
  %v1873 = vadd.f32 %v1872, 1.0
  %v1874 = vrcp.pop %v1873
  %v1875 = vmul.f32 1.0, %v1874
  %v1876 = vmul.f32 %v1868, %v1763
  %v1877 = vadd.f32 %v1855, %v1876
  %v1878 = vtanh.pop %v1877
  %v1879 = vsub.f32 1.0, %v1875
  %v1880 = vmul.f32 %v1879, %v1878
  %v1881 = vmul.f32 %v1875, %v1656
  %v1882 = vadd.f32 %v1880, %v1881
  %v1883 = vadd.f32 %v1859, %v1804
  %v1884 = vxor.u32 %v1883, 2147483648
  %v1885 = vmul.f32 %v1884, 1.442695
  %v1886 = vpow.pop %v1885
  %v1887 = vadd.f32 %v1886, 1.0
  %v1888 = vrcp.pop %v1887
  %v1889 = vmul.f32 1.0, %v1888
  %v1890 = vadd.f32 %v1860, %v1806
  %v1891 = vxor.u32 %v1890, 2147483648
  %v1892 = vmul.f32 %v1891, 1.442695
  %v1893 = vpow.pop %v1892
  %v1894 = vadd.f32 %v1893, 1.0
  %v1895 = vrcp.pop %v1894
  %v1896 = vmul.f32 1.0, %v1895
  %v1897 = vmul.f32 %v1889, %v1845
  %v1898 = vadd.f32 %v1861, %v1897
  %v1899 = vtanh.pop %v1898
  %v1900 = vsub.f32 1.0, %v1896
  %v1901 = vmul.f32 %v1900, %v1899
  %v1902 = vmul.f32 %v1896, %v1677
  %v1903 = vadd.f32 %v1901, %v1902
  %s1904 = smul.u32 3, 2
  %s1905 = smul.addr %s1904, 8
  %s1906 = scalar_lea.vmem %s9, %s1905
  %1907 = vst [vmem:[%s1906] sm:$0xff] %v1882
  %s1908 = smul.u32 4, 2
  %s1909 = smul.addr %s1908, 8
  %s1910 = scalar_lea.vmem %s9, %s1909
  %1911 = vst [vmem:[%s1910 + $0x8] sm:$0xff] %v1903
  %v1912 = vpack.c.bf16 %v1882, %v1882
  %1913 = vmatprep.subr.bf16.mxu0 %v818
  %1914 = vmatpush1.bf16.msra.mxu0 %v817
  %1915 = vmatprep.subr.bf16.mxu0 %v821
  %1916 = vmatpush1.bf16.msra.mxu0 %v820
  %1917 = vmatprep.subr.bf16.mxu0 %v824
  %1918 = vmatpush1.bf16.msra.mxu0 %v823
  %1919 = vmatprep.subr.bf16.mxu0 %v827
  %1920 = vmatpush1.bf16.msra.mxu0 %v826
  %1921 = vmatprep.subr.bf16.mxu0 %v830
  %1922 = vmatpush1.bf16.msra.mxu0 %v829
  %1923 = vmatprep.subr.bf16.mxu0 %v833
  %1924 = vmatpush1.bf16.msra.mxu0 %v832
  %1925 = vmatprep.subr.bf16.mxu0 %v836
  %1926 = vmatpush1.bf16.msra.mxu0 %v835
  %1927 = vmatprep.subr.bf16.mxu0 %v839
  %1928 = vmatpush1.bf16.msra.mxu0 %v838
  %1929 = vmatprep.subr.bf16.mxu0 0
  %1930 = vmatpush1.bf16.msra.mxu0 0
  %1931 = vmatprep.subr.bf16.mxu0 0
  %1932 = vmatpush1.bf16.msra.mxu0 0
  %1933 = vmatprep.subr.bf16.mxu0 0
  %1934 = vmatpush1.bf16.msra.mxu0 0
  %1935 = vmatprep.subr.bf16.mxu0 0
  %1936 = vmatpush1.bf16.msra.mxu0 0
  %1937 = vmatprep.subr.bf16.mxu0 0
  %1938 = vmatpush1.bf16.msra.mxu0 0
  %1939 = vmatprep.subr.bf16.mxu0 0
  %1940 = vmatpush1.bf16.msra.mxu0 0
  %1941 = vmatprep.subr.bf16.mxu0 0
  %1942 = vmatpush1.bf16.msra.mxu0 0
  %1943 = vmatprep.subr.bf16.mxu0 0
  %1944 = vmatpush1.bf16.msra.mxu0 0
  %1945 = vmatprep.mubr.bf16.mxu0 0
  %1946 = vmatmul.mubr.bf16.gmra.mrb[0].mxu0 %v1912
  %v1947 = vpop.f32.mrb[0].mxu0
  %v1948 = vadd.f32 %v725, %v1947
  %v1949 = vpop.f32.mrb[0].mxu0
  %v1950 = vadd.f32 %v729, %v1949
  %v1951 = vpop.f32.mrb[0].mxu0
  %v1952 = vpop.f32.mrb[0].mxu0
  %1953 = vdwg.mxu0
  %1954 = vmatprep.subr.bf16.mxu0 0
  %1955 = vmatpush1.bf16.msra.mxu0 %v819
  %1956 = vmatprep.subr.bf16.mxu0 0
  %1957 = vmatpush1.bf16.msra.mxu0 %v822
  %1958 = vmatprep.subr.bf16.mxu0 0
  %1959 = vmatpush1.bf16.msra.mxu0 %v825
  %1960 = vmatprep.subr.bf16.mxu0 0
  %1961 = vmatpush1.bf16.msra.mxu0 %v828
  %1962 = vmatprep.subr.bf16.mxu0 0
  %1963 = vmatpush1.bf16.msra.mxu0 %v831
  %1964 = vmatprep.subr.bf16.mxu0 0
  %1965 = vmatpush1.bf16.msra.mxu0 %v834
  %1966 = vmatprep.subr.bf16.mxu0 0
  %1967 = vmatpush1.bf16.msra.mxu0 %v837
  %1968 = vmatprep.subr.bf16.mxu0 0
  %1969 = vmatpush1.bf16.msra.mxu0 %v840
  %1970 = vmatprep.subr.bf16.mxu0 0
  %1971 = vmatpush1.bf16.msra.mxu0 0
  %1972 = vmatprep.subr.bf16.mxu0 0
  %1973 = vmatpush1.bf16.msra.mxu0 0
  %1974 = vmatprep.subr.bf16.mxu0 0
  %1975 = vmatpush1.bf16.msra.mxu0 0
  %1976 = vmatprep.subr.bf16.mxu0 0
  %1977 = vmatpush1.bf16.msra.mxu0 0
  %1978 = vmatprep.subr.bf16.mxu0 0
  %1979 = vmatpush1.bf16.msra.mxu0 0
  %1980 = vmatprep.subr.bf16.mxu0 0
  %1981 = vmatpush1.bf16.msra.mxu0 0
  %1982 = vmatprep.subr.bf16.mxu0 0
  %1983 = vmatpush1.bf16.msra.mxu0 0
  %1984 = vmatprep.subr.bf16.mxu0 0
  %1985 = vmatpush1.bf16.msra.mxu0 0
  %1986 = vmatprep.mubr.bf16.mxu0 0
  %1987 = vmatmul.mubr.bf16.gmra.mrb[0].mxu0 %v1912
  %v1988 = vpop.f32.mrb[0].mxu0
  %v1989 = vadd.f32 %v733, %v1988
  %v1990 = vpop.f32.mrb[0].mxu0
  %v1991 = vpop.f32.mrb[0].mxu0
  %v1992 = vpop.f32.mrb[0].mxu0
  %1993 = vdwg.mxu0
  %v1994 = vpack.c.bf16 %v1903, %v1903
  %1995 = vmatprep.subr.bf16.mxu0 %v1044
  %1996 = vmatpush1.bf16.msra.mxu0 %v1043
  %1997 = vmatprep.subr.bf16.mxu0 %v1047
  %1998 = vmatpush1.bf16.msra.mxu0 %v1046
  %1999 = vmatprep.subr.bf16.mxu0 %v1050
  %2000 = vmatpush1.bf16.msra.mxu0 %v1049
  %2001 = vmatprep.subr.bf16.mxu0 %v1053
  %2002 = vmatpush1.bf16.msra.mxu0 %v1052
  %2003 = vmatprep.subr.bf16.mxu0 %v1056
  %2004 = vmatpush1.bf16.msra.mxu0 %v1055
  %2005 = vmatprep.subr.bf16.mxu0 %v1059
  %2006 = vmatpush1.bf16.msra.mxu0 %v1058
  %2007 = vmatprep.subr.bf16.mxu0 %v1062
  %2008 = vmatpush1.bf16.msra.mxu0 %v1061
  %2009 = vmatprep.subr.bf16.mxu0 %v1065
  %2010 = vmatpush1.bf16.msra.mxu0 %v1064
  %2011 = vmatprep.subr.bf16.mxu0 0
  %2012 = vmatpush1.bf16.msra.mxu0 0
  %2013 = vmatprep.subr.bf16.mxu0 0
  %2014 = vmatpush1.bf16.msra.mxu0 0
  %2015 = vmatprep.subr.bf16.mxu0 0
  %2016 = vmatpush1.bf16.msra.mxu0 0
  %2017 = vmatprep.subr.bf16.mxu0 0
  %2018 = vmatpush1.bf16.msra.mxu0 0
  %2019 = vmatprep.subr.bf16.mxu0 0
  %2020 = vmatpush1.bf16.msra.mxu0 0
  %2021 = vmatprep.subr.bf16.mxu0 0
  %2022 = vmatpush1.bf16.msra.mxu0 0
  %2023 = vmatprep.subr.bf16.mxu0 0
  %2024 = vmatpush1.bf16.msra.mxu0 0
  %2025 = vmatprep.subr.bf16.mxu0 0
  %2026 = vmatpush1.bf16.msra.mxu0 0
  %2027 = vmatprep.mubr.bf16.mxu0 0
  %2028 = vmatmul.mubr.bf16.gmra.mrb[0].mxu0 %v1994
  %v2029 = vpop.f32.mrb[0].mxu0
  %v2030 = vadd.f32 %v951, %v2029
  %v2031 = vpop.f32.mrb[0].mxu0
  %v2032 = vadd.f32 %v955, %v2031
  %v2033 = vpop.f32.mrb[0].mxu0
  %v2034 = vpop.f32.mrb[0].mxu0
  %2035 = vdwg.mxu0
  %2036 = vmatprep.subr.bf16.mxu0 0
  %2037 = vmatpush1.bf16.msra.mxu0 %v1045
  %2038 = vmatprep.subr.bf16.mxu0 0
  %2039 = vmatpush1.bf16.msra.mxu0 %v1048
  %2040 = vmatprep.subr.bf16.mxu0 0
  %2041 = vmatpush1.bf16.msra.mxu0 %v1051
  %2042 = vmatprep.subr.bf16.mxu0 0
  %2043 = vmatpush1.bf16.msra.mxu0 %v1054
  %2044 = vmatprep.subr.bf16.mxu0 0
  %2045 = vmatpush1.bf16.msra.mxu0 %v1057
  %2046 = vmatprep.subr.bf16.mxu0 0
  %2047 = vmatpush1.bf16.msra.mxu0 %v1060
  %2048 = vmatprep.subr.bf16.mxu0 0
  %2049 = vmatpush1.bf16.msra.mxu0 %v1063
  %2050 = vmatprep.subr.bf16.mxu0 0
  %2051 = vmatpush1.bf16.msra.mxu0 %v1066
  %2052 = vmatprep.subr.bf16.mxu0 0
  %2053 = vmatpush1.bf16.msra.mxu0 0
  %2054 = vmatprep.subr.bf16.mxu0 0
  %2055 = vmatpush1.bf16.msra.mxu0 0
  %2056 = vmatprep.subr.bf16.mxu0 0
  %2057 = vmatpush1.bf16.msra.mxu0 0
  %2058 = vmatprep.subr.bf16.mxu0 0
  %2059 = vmatpush1.bf16.msra.mxu0 0
  %2060 = vmatprep.subr.bf16.mxu0 0
  %2061 = vmatpush1.bf16.msra.mxu0 0
  %2062 = vmatprep.subr.bf16.mxu0 0
  %2063 = vmatpush1.bf16.msra.mxu0 0
  %2064 = vmatprep.subr.bf16.mxu0 0
  %2065 = vmatpush1.bf16.msra.mxu0 0
  %2066 = vmatprep.subr.bf16.mxu0 0
  %2067 = vmatpush1.bf16.msra.mxu0 0
  %2068 = vmatprep.mubr.bf16.mxu0 0
  %2069 = vmatmul.mubr.bf16.gmra.mrb[0].mxu0 %v1994
  %v2070 = vpop.f32.mrb[0].mxu0
  %v2071 = vadd.f32 %v959, %v2070
  %v2072 = vpop.f32.mrb[0].mxu0
  %v2073 = vpop.f32.mrb[0].mxu0
  %v2074 = vpop.f32.mrb[0].mxu0
  %2075 = vdwg.mxu0
  %v2076 = vld [vmem:[%s1858] sm:$0xff]
  %v2077 = vld [vmem:[%s1858 + $0x8] sm:$0xff]
  %v2078 = vld [vmem:[%s1858 + $0x10] sm:$0xff]
  %v2079 = vld [vmem:[%s1852 + $0x18] sm:$0xff]
  %v2080 = vld [vmem:[%s1852 + $0x20] sm:$0xff]
  %v2081 = vld [vmem:[%s1852 + $0x28] sm:$0xff]
  %v2082 = vadd.f32 %v2076, %v1948
  %v2083 = vxor.u32 %v2082, 2147483648
  %v2084 = vmul.f32 %v2083, 1.442695
  %v2085 = vpow.pop %v2084
  %v2086 = vadd.f32 %v2085, 1.0
  %v2087 = vrcp.pop %v2086
  %v2088 = vmul.f32 1.0, %v2087
  %v2089 = vadd.f32 %v2077, %v1950
  %v2090 = vxor.u32 %v2089, 2147483648
  %v2091 = vmul.f32 %v2090, 1.442695
  %v2092 = vpow.pop %v2091
  %v2093 = vadd.f32 %v2092, 1.0
  %v2094 = vrcp.pop %v2093
  %v2095 = vmul.f32 1.0, %v2094
  %v2096 = vmul.f32 %v2088, %v1989
  %v2097 = vadd.f32 %v2078, %v2096
  %v2098 = vtanh.pop %v2097
  %v2099 = vsub.f32 1.0, %v2095
  %v2100 = vmul.f32 %v2099, %v2098
  %v2101 = vmul.f32 %v2095, %v1882
  %v2102 = vadd.f32 %v2100, %v2101
  %v2103 = vadd.f32 %v2079, %v2030
  %v2104 = vxor.u32 %v2103, 2147483648
  %v2105 = vmul.f32 %v2104, 1.442695
  %v2106 = vpow.pop %v2105
  %v2107 = vadd.f32 %v2106, 1.0
  %v2108 = vrcp.pop %v2107
  %v2109 = vmul.f32 1.0, %v2108
  %v2110 = vadd.f32 %v2080, %v2032
  %v2111 = vxor.u32 %v2110, 2147483648
  %v2112 = vmul.f32 %v2111, 1.442695
  %v2113 = vpow.pop %v2112
  %v2114 = vadd.f32 %v2113, 1.0
  %v2115 = vrcp.pop %v2114
  %v2116 = vmul.f32 1.0, %v2115
  %v2117 = vmul.f32 %v2109, %v2071
  %v2118 = vadd.f32 %v2081, %v2117
  %v2119 = vtanh.pop %v2118
  %v2120 = vsub.f32 1.0, %v2116
  %v2121 = vmul.f32 %v2120, %v2119
  %v2122 = vmul.f32 %v2116, %v1903
  %v2123 = vadd.f32 %v2121, %v2122
  %2124 = vst [vmem:[%s1910] sm:$0xff] %v2102
  %2125 = vst [vmem:[%s1906 + $0x8] sm:$0xff] %v2123
  %v2126 = vpack.c.bf16 %v2102, %v2102
  %2127 = vmatprep.subr.bf16.mxu0 %v818
  %2128 = vmatpush1.bf16.msra.mxu0 %v817
  %2129 = vmatprep.subr.bf16.mxu0 %v821
  %2130 = vmatpush1.bf16.msra.mxu0 %v820
  %2131 = vmatprep.subr.bf16.mxu0 %v824
  %2132 = vmatpush1.bf16.msra.mxu0 %v823
  %2133 = vmatprep.subr.bf16.mxu0 %v827
  %2134 = vmatpush1.bf16.msra.mxu0 %v826
  %2135 = vmatprep.subr.bf16.mxu0 %v830
  %2136 = vmatpush1.bf16.msra.mxu0 %v829
  %2137 = vmatprep.subr.bf16.mxu0 %v833
  %2138 = vmatpush1.bf16.msra.mxu0 %v832
  %2139 = vmatprep.subr.bf16.mxu0 %v836
  %2140 = vmatpush1.bf16.msra.mxu0 %v835
  %2141 = vmatprep.subr.bf16.mxu0 %v839
  %2142 = vmatpush1.bf16.msra.mxu0 %v838
  %2143 = vmatprep.subr.bf16.mxu0 0
  %2144 = vmatpush1.bf16.msra.mxu0 0
  %2145 = vmatprep.subr.bf16.mxu0 0
  %2146 = vmatpush1.bf16.msra.mxu0 0
  %2147 = vmatprep.subr.bf16.mxu0 0
  %2148 = vmatpush1.bf16.msra.mxu0 0
  %2149 = vmatprep.subr.bf16.mxu0 0
  %2150 = vmatpush1.bf16.msra.mxu0 0
  %2151 = vmatprep.subr.bf16.mxu0 0
  %2152 = vmatpush1.bf16.msra.mxu0 0
  %2153 = vmatprep.subr.bf16.mxu0 0
  %2154 = vmatpush1.bf16.msra.mxu0 0
  %2155 = vmatprep.subr.bf16.mxu0 0
  %2156 = vmatpush1.bf16.msra.mxu0 0
  %2157 = vmatprep.subr.bf16.mxu0 0
  %2158 = vmatpush1.bf16.msra.mxu0 0
  %2159 = vmatprep.mubr.bf16.mxu0 0
  %2160 = vmatmul.mubr.bf16.gmra.mrb[0].mxu0 %v2126
  %v2161 = vpop.f32.mrb[0].mxu0
  %v2162 = vadd.f32 %v725, %v2161
  %v2163 = vpop.f32.mrb[0].mxu0
  %v2164 = vadd.f32 %v729, %v2163
  %v2165 = vpop.f32.mrb[0].mxu0
  %v2166 = vpop.f32.mrb[0].mxu0
  %2167 = vdwg.mxu0
  %2168 = vmatprep.subr.bf16.mxu0 0
  %2169 = vmatpush1.bf16.msra.mxu0 %v819
  %2170 = vmatprep.subr.bf16.mxu0 0
  %2171 = vmatpush1.bf16.msra.mxu0 %v822
  %2172 = vmatprep.subr.bf16.mxu0 0
  %2173 = vmatpush1.bf16.msra.mxu0 %v825
  %2174 = vmatprep.subr.bf16.mxu0 0
  %2175 = vmatpush1.bf16.msra.mxu0 %v828
  %2176 = vmatprep.subr.bf16.mxu0 0
  %2177 = vmatpush1.bf16.msra.mxu0 %v831
  %2178 = vmatprep.subr.bf16.mxu0 0
  %2179 = vmatpush1.bf16.msra.mxu0 %v834
  %2180 = vmatprep.subr.bf16.mxu0 0
  %2181 = vmatpush1.bf16.msra.mxu0 %v837
  %2182 = vmatprep.subr.bf16.mxu0 0
  %2183 = vmatpush1.bf16.msra.mxu0 %v840
  %2184 = vmatprep.subr.bf16.mxu0 0
  %2185 = vmatpush1.bf16.msra.mxu0 0
  %2186 = vmatprep.subr.bf16.mxu0 0
  %2187 = vmatpush1.bf16.msra.mxu0 0
  %2188 = vmatprep.subr.bf16.mxu0 0
  %2189 = vmatpush1.bf16.msra.mxu0 0
  %2190 = vmatprep.subr.bf16.mxu0 0
  %2191 = vmatpush1.bf16.msra.mxu0 0
  %2192 = vmatprep.subr.bf16.mxu0 0
  %2193 = vmatpush1.bf16.msra.mxu0 0
  %2194 = vmatprep.subr.bf16.mxu0 0
  %2195 = vmatpush1.bf16.msra.mxu0 0
  %2196 = vmatprep.subr.bf16.mxu0 0
  %2197 = vmatpush1.bf16.msra.mxu0 0
  %2198 = vmatprep.subr.bf16.mxu0 0
  %2199 = vmatpush1.bf16.msra.mxu0 0
  %2200 = vmatprep.mubr.bf16.mxu0 0
  %2201 = vmatmul.mubr.bf16.gmra.mrb[0].mxu0 %v2126
  %v2202 = vpop.f32.mrb[0].mxu0
  %v2203 = vadd.f32 %v733, %v2202
  %v2204 = vpop.f32.mrb[0].mxu0
  %v2205 = vpop.f32.mrb[0].mxu0
  %v2206 = vpop.f32.mrb[0].mxu0
  %2207 = vdwg.mxu0
  %v2208 = vpack.c.bf16 %v2123, %v2123
  %2209 = vmatprep.subr.bf16.mxu0 %v1044
  %2210 = vmatpush1.bf16.msra.mxu0 %v1043
  %2211 = vmatprep.subr.bf16.mxu0 %v1047
  %2212 = vmatpush1.bf16.msra.mxu0 %v1046
  %2213 = vmatprep.subr.bf16.mxu0 %v1050
  %2214 = vmatpush1.bf16.msra.mxu0 %v1049
  %2215 = vmatprep.subr.bf16.mxu0 %v1053
  %2216 = vmatpush1.bf16.msra.mxu0 %v1052
  %2217 = vmatprep.subr.bf16.mxu0 %v1056
  %2218 = vmatpush1.bf16.msra.mxu0 %v1055
  %2219 = vmatprep.subr.bf16.mxu0 %v1059
  %2220 = vmatpush1.bf16.msra.mxu0 %v1058
  %2221 = vmatprep.subr.bf16.mxu0 %v1062
  %2222 = vmatpush1.bf16.msra.mxu0 %v1061
  %2223 = vmatprep.subr.bf16.mxu0 %v1065
  %2224 = vmatpush1.bf16.msra.mxu0 %v1064
  %2225 = vmatprep.subr.bf16.mxu0 0
  %2226 = vmatpush1.bf16.msra.mxu0 0
  %2227 = vmatprep.subr.bf16.mxu0 0
  %2228 = vmatpush1.bf16.msra.mxu0 0
  %2229 = vmatprep.subr.bf16.mxu0 0
  %2230 = vmatpush1.bf16.msra.mxu0 0
  %2231 = vmatprep.subr.bf16.mxu0 0
  %2232 = vmatpush1.bf16.msra.mxu0 0
  %2233 = vmatprep.subr.bf16.mxu0 0
  %2234 = vmatpush1.bf16.msra.mxu0 0
  %2235 = vmatprep.subr.bf16.mxu0 0
  %2236 = vmatpush1.bf16.msra.mxu0 0
  %2237 = vmatprep.subr.bf16.mxu0 0
  %2238 = vmatpush1.bf16.msra.mxu0 0
  %2239 = vmatprep.subr.bf16.mxu0 0
  %2240 = vmatpush1.bf16.msra.mxu0 0
  %2241 = vmatprep.mubr.bf16.mxu0 0
  %2242 = vmatmul.mubr.bf16.gmra.mrb[0].mxu0 %v2208
  %v2243 = vpop.f32.mrb[0].mxu0
  %v2244 = vadd.f32 %v951, %v2243
  %v2245 = vpop.f32.mrb[0].mxu0
  %v2246 = vadd.f32 %v955, %v2245
  %v2247 = vpop.f32.mrb[0].mxu0
  %v2248 = vpop.f32.mrb[0].mxu0
  %2249 = vdwg.mxu0
  %2250 = vmatprep.subr.bf16.mxu0 0
  %2251 = vmatpush1.bf16.msra.mxu0 %v1045
  %2252 = vmatprep.subr.bf16.mxu0 0
  %2253 = vmatpush1.bf16.msra.mxu0 %v1048
  %2254 = vmatprep.subr.bf16.mxu0 0
  %2255 = vmatpush1.bf16.msra.mxu0 %v1051
  %2256 = vmatprep.subr.bf16.mxu0 0
  %2257 = vmatpush1.bf16.msra.mxu0 %v1054
  %2258 = vmatprep.subr.bf16.mxu0 0
  %2259 = vmatpush1.bf16.msra.mxu0 %v1057
  %2260 = vmatprep.subr.bf16.mxu0 0
  %2261 = vmatpush1.bf16.msra.mxu0 %v1060
  %2262 = vmatprep.subr.bf16.mxu0 0
  %2263 = vmatpush1.bf16.msra.mxu0 %v1063
  %2264 = vmatprep.subr.bf16.mxu0 0
  %2265 = vmatpush1.bf16.msra.mxu0 %v1066
  %2266 = vmatprep.subr.bf16.mxu0 0
  %2267 = vmatpush1.bf16.msra.mxu0 0
  %2268 = vmatprep.subr.bf16.mxu0 0
  %2269 = vmatpush1.bf16.msra.mxu0 0
  %2270 = vmatprep.subr.bf16.mxu0 0
  %2271 = vmatpush1.bf16.msra.mxu0 0
  %2272 = vmatprep.subr.bf16.mxu0 0
  %2273 = vmatpush1.bf16.msra.mxu0 0
  %2274 = vmatprep.subr.bf16.mxu0 0
  %2275 = vmatpush1.bf16.msra.mxu0 0
  %2276 = vmatprep.subr.bf16.mxu0 0
  %2277 = vmatpush1.bf16.msra.mxu0 0
  %2278 = vmatprep.subr.bf16.mxu0 0
  %2279 = vmatpush1.bf16.msra.mxu0 0
  %2280 = vmatprep.subr.bf16.mxu0 0
  %2281 = vmatpush1.bf16.msra.mxu0 0
  %2282 = vmatprep.mubr.bf16.mxu0 0
  %2283 = vmatmul.mubr.bf16.gmra.mrb[0].mxu0 %v2208
  %v2284 = vpop.f32.mrb[0].mxu0
  %v2285 = vadd.f32 %v959, %v2284
  %v2286 = vpop.f32.mrb[0].mxu0
  %v2287 = vpop.f32.mrb[0].mxu0
  %v2288 = vpop.f32.mrb[0].mxu0
  %2289 = vdwg.mxu0
  %v2290 = vld [vmem:[%s1632] sm:$0xff]
  %v2291 = vld [vmem:[%s1632 + $0x8] sm:$0xff]
  %v2292 = vld [vmem:[%s1632 + $0x10] sm:$0xff]
  %v2293 = vld [vmem:[%s1626 + $0x18] sm:$0xff]
  %v2294 = vld [vmem:[%s1626 + $0x20] sm:$0xff]
  %v2295 = vld [vmem:[%s1626 + $0x28] sm:$0xff]
  %v2296 = vadd.f32 %v2290, %v2162
  %v2297 = vxor.u32 %v2296, 2147483648
  %v2298 = vmul.f32 %v2297, 1.442695
  %v2299 = vpow.pop %v2298
  %v2300 = vadd.f32 %v2299, 1.0
  %v2301 = vrcp.pop %v2300
  %v2302 = vmul.f32 1.0, %v2301
  %v2303 = vadd.f32 %v2291, %v2164
  %v2304 = vxor.u32 %v2303, 2147483648
  %v2305 = vmul.f32 %v2304, 1.442695
  %v2306 = vpow.pop %v2305
  %v2307 = vadd.f32 %v2306, 1.0
  %v2308 = vrcp.pop %v2307
  %v2309 = vmul.f32 1.0, %v2308
  %v2310 = vmul.f32 %v2302, %v2203
  %v2311 = vadd.f32 %v2292, %v2310
  %v2312 = vtanh.pop %v2311
  %v2313 = vsub.f32 1.0, %v2309
  %v2314 = vmul.f32 %v2313, %v2312
  %v2315 = vmul.f32 %v2309, %v2102
  %v2316 = vadd.f32 %v2314, %v2315
  %v2317 = vadd.f32 %v2293, %v2244
  %v2318 = vxor.u32 %v2317, 2147483648
  %v2319 = vmul.f32 %v2318, 1.442695
  %v2320 = vpow.pop %v2319
  %v2321 = vadd.f32 %v2320, 1.0
  %v2322 = vrcp.pop %v2321
  %v2323 = vmul.f32 1.0, %v2322
  %v2324 = vadd.f32 %v2294, %v2246
  %v2325 = vxor.u32 %v2324, 2147483648
  %v2326 = vmul.f32 %v2325, 1.442695
  %v2327 = vpow.pop %v2326
  %v2328 = vadd.f32 %v2327, 1.0
  %v2329 = vrcp.pop %v2328
  %v2330 = vmul.f32 1.0, %v2329
  %v2331 = vmul.f32 %v2323, %v2285
  %v2332 = vadd.f32 %v2295, %v2331
  %v2333 = vtanh.pop %v2332
  %v2334 = vsub.f32 1.0, %v2330
  %v2335 = vmul.f32 %v2334, %v2333
  %v2336 = vmul.f32 %v2330, %v2123
  %v2337 = vadd.f32 %v2335, %v2336
  %2338 = vst [vmem:[%s1684] sm:$0xff] %v2316
  %2339 = vst [vmem:[%s1680 + $0x8] sm:$0xff] %v2337
  %v2340 = vpack.c.bf16 %v2316, %v2316
  %2341 = vmatprep.subr.bf16.mxu0 %v818
  %2342 = vmatpush1.bf16.msra.mxu0 %v817
  %2343 = vmatprep.subr.bf16.mxu0 %v821
  %2344 = vmatpush1.bf16.msra.mxu0 %v820
  %2345 = vmatprep.subr.bf16.mxu0 %v824
  %2346 = vmatpush1.bf16.msra.mxu0 %v823
  %2347 = vmatprep.subr.bf16.mxu0 %v827
  %2348 = vmatpush1.bf16.msra.mxu0 %v826
  %2349 = vmatprep.subr.bf16.mxu0 %v830
  %2350 = vmatpush1.bf16.msra.mxu0 %v829
  %2351 = vmatprep.subr.bf16.mxu0 %v833
  %2352 = vmatpush1.bf16.msra.mxu0 %v832
  %2353 = vmatprep.subr.bf16.mxu0 %v836
  %2354 = vmatpush1.bf16.msra.mxu0 %v835
  %2355 = vmatprep.subr.bf16.mxu0 %v839
  %2356 = vmatpush1.bf16.msra.mxu0 %v838
  %2357 = vmatprep.subr.bf16.mxu0 0
  %2358 = vmatpush1.bf16.msra.mxu0 0
  %2359 = vmatprep.subr.bf16.mxu0 0
  %2360 = vmatpush1.bf16.msra.mxu0 0
  %2361 = vmatprep.subr.bf16.mxu0 0
  %2362 = vmatpush1.bf16.msra.mxu0 0
  %2363 = vmatprep.subr.bf16.mxu0 0
  %2364 = vmatpush1.bf16.msra.mxu0 0
  %2365 = vmatprep.subr.bf16.mxu0 0
  %2366 = vmatpush1.bf16.msra.mxu0 0
  %2367 = vmatprep.subr.bf16.mxu0 0
  %2368 = vmatpush1.bf16.msra.mxu0 0
  %2369 = vmatprep.subr.bf16.mxu0 0
  %2370 = vmatpush1.bf16.msra.mxu0 0
  %2371 = vmatprep.subr.bf16.mxu0 0
  %2372 = vmatpush1.bf16.msra.mxu0 0
  %2373 = vmatprep.mubr.bf16.mxu0 0
  %2374 = vmatmul.mubr.bf16.gmra.mrb[0].mxu0 %v2340
  %v2375 = vpop.f32.mrb[0].mxu0
  %v2376 = vadd.f32 %v725, %v2375
  %v2377 = vpop.f32.mrb[0].mxu0
  %v2378 = vadd.f32 %v729, %v2377
  %v2379 = vpop.f32.mrb[0].mxu0
  %v2380 = vpop.f32.mrb[0].mxu0
  %2381 = vdwg.mxu0
  %2382 = vmatprep.subr.bf16.mxu0 0
  %2383 = vmatpush1.bf16.msra.mxu0 %v819
  %2384 = vmatprep.subr.bf16.mxu0 0
  %2385 = vmatpush1.bf16.msra.mxu0 %v822
  %2386 = vmatprep.subr.bf16.mxu0 0
  %2387 = vmatpush1.bf16.msra.mxu0 %v825
  %2388 = vmatprep.subr.bf16.mxu0 0
  %2389 = vmatpush1.bf16.msra.mxu0 %v828
  %2390 = vmatprep.subr.bf16.mxu0 0
  %2391 = vmatpush1.bf16.msra.mxu0 %v831
  %2392 = vmatprep.subr.bf16.mxu0 0
  %2393 = vmatpush1.bf16.msra.mxu0 %v834
  %2394 = vmatprep.subr.bf16.mxu0 0
  %2395 = vmatpush1.bf16.msra.mxu0 %v837
  %2396 = vmatprep.subr.bf16.mxu0 0
  %2397 = vmatpush1.bf16.msra.mxu0 %v840
  %2398 = vmatprep.subr.bf16.mxu0 0
  %2399 = vmatpush1.bf16.msra.mxu0 0
  %2400 = vmatprep.subr.bf16.mxu0 0
  %2401 = vmatpush1.bf16.msra.mxu0 0
  %2402 = vmatprep.subr.bf16.mxu0 0
  %2403 = vmatpush1.bf16.msra.mxu0 0
  %2404 = vmatprep.subr.bf16.mxu0 0
  %2405 = vmatpush1.bf16.msra.mxu0 0
  %2406 = vmatprep.subr.bf16.mxu0 0
  %2407 = vmatpush1.bf16.msra.mxu0 0
  %2408 = vmatprep.subr.bf16.mxu0 0
  %2409 = vmatpush1.bf16.msra.mxu0 0
  %2410 = vmatprep.subr.bf16.mxu0 0
  %2411 = vmatpush1.bf16.msra.mxu0 0
  %2412 = vmatprep.subr.bf16.mxu0 0
  %2413 = vmatpush1.bf16.msra.mxu0 0
  %2414 = vmatprep.mubr.bf16.mxu0 0
  %2415 = vmatmul.mubr.bf16.gmra.mrb[0].mxu0 %v2340
  %v2416 = vpop.f32.mrb[0].mxu0
  %v2417 = vadd.f32 %v733, %v2416
  %v2418 = vpop.f32.mrb[0].mxu0
  %v2419 = vpop.f32.mrb[0].mxu0
  %v2420 = vpop.f32.mrb[0].mxu0
  %2421 = vdwg.mxu0
  %v2422 = vpack.c.bf16 %v2337, %v2337
  %2423 = vmatprep.subr.bf16.mxu0 %v1044
  %2424 = vmatpush1.bf16.msra.mxu0 %v1043
  %2425 = vmatprep.subr.bf16.mxu0 %v1047
  %2426 = vmatpush1.bf16.msra.mxu0 %v1046
  %2427 = vmatprep.subr.bf16.mxu0 %v1050
  %2428 = vmatpush1.bf16.msra.mxu0 %v1049
  %2429 = vmatprep.subr.bf16.mxu0 %v1053
  %2430 = vmatpush1.bf16.msra.mxu0 %v1052
  %2431 = vmatprep.subr.bf16.mxu0 %v1056
  %2432 = vmatpush1.bf16.msra.mxu0 %v1055
  %2433 = vmatprep.subr.bf16.mxu0 %v1059
  %2434 = vmatpush1.bf16.msra.mxu0 %v1058
  %2435 = vmatprep.subr.bf16.mxu0 %v1062
  %2436 = vmatpush1.bf16.msra.mxu0 %v1061
  %2437 = vmatprep.subr.bf16.mxu0 %v1065
  %2438 = vmatpush1.bf16.msra.mxu0 %v1064
  %2439 = vmatprep.subr.bf16.mxu0 0
  %2440 = vmatpush1.bf16.msra.mxu0 0
  %2441 = vmatprep.subr.bf16.mxu0 0
  %2442 = vmatpush1.bf16.msra.mxu0 0
  %2443 = vmatprep.subr.bf16.mxu0 0
  %2444 = vmatpush1.bf16.msra.mxu0 0
  %2445 = vmatprep.subr.bf16.mxu0 0
  %2446 = vmatpush1.bf16.msra.mxu0 0
  %2447 = vmatprep.subr.bf16.mxu0 0
  %2448 = vmatpush1.bf16.msra.mxu0 0
  %2449 = vmatprep.subr.bf16.mxu0 0
  %2450 = vmatpush1.bf16.msra.mxu0 0
  %2451 = vmatprep.subr.bf16.mxu0 0
  %2452 = vmatpush1.bf16.msra.mxu0 0
  %2453 = vmatprep.subr.bf16.mxu0 0
  %2454 = vmatpush1.bf16.msra.mxu0 0
  %2455 = vmatprep.mubr.bf16.mxu0 0
  %2456 = vmatmul.mubr.bf16.gmra.mrb[0].mxu0 %v2422
  %v2457 = vpop.f32.mrb[0].mxu0
  %v2458 = vadd.f32 %v951, %v2457
  %v2459 = vpop.f32.mrb[0].mxu0
  %v2460 = vadd.f32 %v955, %v2459
  %v2461 = vpop.f32.mrb[0].mxu0
  %v2462 = vpop.f32.mrb[0].mxu0
  %2463 = vdwg.mxu0
  %2464 = vmatprep.subr.bf16.mxu0 0
  %2465 = vmatpush1.bf16.msra.mxu0 %v1045
  %2466 = vmatprep.subr.bf16.mxu0 0
  %2467 = vmatpush1.bf16.msra.mxu0 %v1048
  %2468 = vmatprep.subr.bf16.mxu0 0
  %2469 = vmatpush1.bf16.msra.mxu0 %v1051
  %2470 = vmatprep.subr.bf16.mxu0 0
  %2471 = vmatpush1.bf16.msra.mxu0 %v1054
  %2472 = vmatprep.subr.bf16.mxu0 0
  %2473 = vmatpush1.bf16.msra.mxu0 %v1057
  %2474 = vmatprep.subr.bf16.mxu0 0
  %2475 = vmatpush1.bf16.msra.mxu0 %v1060
  %2476 = vmatprep.subr.bf16.mxu0 0
  %2477 = vmatpush1.bf16.msra.mxu0 %v1063
  %2478 = vmatprep.subr.bf16.mxu0 0
  %2479 = vmatpush1.bf16.msra.mxu0 %v1066
  %2480 = vmatprep.subr.bf16.mxu0 0
  %2481 = vmatpush1.bf16.msra.mxu0 0
  %2482 = vmatprep.subr.bf16.mxu0 0
  %2483 = vmatpush1.bf16.msra.mxu0 0
  %2484 = vmatprep.subr.bf16.mxu0 0
  %2485 = vmatpush1.bf16.msra.mxu0 0
  %2486 = vmatprep.subr.bf16.mxu0 0
  %2487 = vmatpush1.bf16.msra.mxu0 0
  %2488 = vmatprep.subr.bf16.mxu0 0
  %2489 = vmatpush1.bf16.msra.mxu0 0
  %2490 = vmatprep.subr.bf16.mxu0 0
  %2491 = vmatpush1.bf16.msra.mxu0 0
  %2492 = vmatprep.subr.bf16.mxu0 0
  %2493 = vmatpush1.bf16.msra.mxu0 0
  %2494 = vmatprep.subr.bf16.mxu0 0
  %2495 = vmatpush1.bf16.msra.mxu0 0
  %2496 = vmatprep.mubr.bf16.mxu0 0
  %2497 = vmatmul.mubr.bf16.gmra.mrb[0].mxu0 %v2422
  %v2498 = vpop.f32.mrb[0].mxu0
  %v2499 = vadd.f32 %v959, %v2498
  %v2500 = vpop.f32.mrb[0].mxu0
  %v2501 = vpop.f32.mrb[0].mxu0
  %v2502 = vpop.f32.mrb[0].mxu0
  %2503 = vdwg.mxu0
  %v2504 = vld [vmem:[%s1406] sm:$0xff]
  %v2505 = vld [vmem:[%s1406 + $0x8] sm:$0xff]
  %v2506 = vld [vmem:[%s1406 + $0x10] sm:$0xff]
  %v2507 = vld [vmem:[%s1400 + $0x18] sm:$0xff]
  %v2508 = vld [vmem:[%s1400 + $0x20] sm:$0xff]
  %v2509 = vld [vmem:[%s1400 + $0x28] sm:$0xff]
  %v2510 = vadd.f32 %v2504, %v2376
  %v2511 = vxor.u32 %v2510, 2147483648
  %v2512 = vmul.f32 %v2511, 1.442695
  %v2513 = vpow.pop %v2512
  %v2514 = vadd.f32 %v2513, 1.0
  %v2515 = vrcp.pop %v2514
  %v2516 = vmul.f32 1.0, %v2515
  %v2517 = vadd.f32 %v2505, %v2378
  %v2518 = vxor.u32 %v2517, 2147483648
  %v2519 = vmul.f32 %v2518, 1.442695
  %v2520 = vpow.pop %v2519
  %v2521 = vadd.f32 %v2520, 1.0
  %v2522 = vrcp.pop %v2521
  %v2523 = vmul.f32 1.0, %v2522
  %v2524 = vmul.f32 %v2516, %v2417
  %v2525 = vadd.f32 %v2506, %v2524
  %v2526 = vtanh.pop %v2525
  %v2527 = vsub.f32 1.0, %v2523
  %v2528 = vmul.f32 %v2527, %v2526
  %v2529 = vmul.f32 %v2523, %v2316
  %v2530 = vadd.f32 %v2528, %v2529
  %v2531 = vadd.f32 %v2507, %v2458
  %v2532 = vxor.u32 %v2531, 2147483648
  %v2533 = vmul.f32 %v2532, 1.442695
  %v2534 = vpow.pop %v2533
  %v2535 = vadd.f32 %v2534, 1.0
  %v2536 = vrcp.pop %v2535
  %v2537 = vmul.f32 1.0, %v2536
  %v2538 = vadd.f32 %v2508, %v2460
  %v2539 = vxor.u32 %v2538, 2147483648
  %v2540 = vmul.f32 %v2539, 1.442695
  %v2541 = vpow.pop %v2540
  %v2542 = vadd.f32 %v2541, 1.0
  %v2543 = vrcp.pop %v2542
  %v2544 = vmul.f32 1.0, %v2543
  %v2545 = vmul.f32 %v2537, %v2499
  %v2546 = vadd.f32 %v2509, %v2545
  %v2547 = vtanh.pop %v2546
  %v2548 = vsub.f32 1.0, %v2544
  %v2549 = vmul.f32 %v2548, %v2547
  %v2550 = vmul.f32 %v2544, %v2337
  %v2551 = vadd.f32 %v2549, %v2550
  %2552 = vst [vmem:[%s1458] sm:$0xff] %v2530
  %2553 = vst [vmem:[%s1454 + $0x8] sm:$0xff] %v2551
  %v2554 = vpack.c.bf16 %v2530, %v2530
  %2555 = vmatprep.subr.bf16.mxu0 %v818
  %2556 = vmatpush1.bf16.msra.mxu0 %v817
  %2557 = vmatprep.subr.bf16.mxu0 %v821
  %2558 = vmatpush1.bf16.msra.mxu0 %v820
  %2559 = vmatprep.subr.bf16.mxu0 %v824
  %2560 = vmatpush1.bf16.msra.mxu0 %v823
  %2561 = vmatprep.subr.bf16.mxu0 %v827
  %2562 = vmatpush1.bf16.msra.mxu0 %v826
  %2563 = vmatprep.subr.bf16.mxu0 %v830
  %2564 = vmatpush1.bf16.msra.mxu0 %v829
  %2565 = vmatprep.subr.bf16.mxu0 %v833
  %2566 = vmatpush1.bf16.msra.mxu0 %v832
  %2567 = vmatprep.subr.bf16.mxu0 %v836
  %2568 = vmatpush1.bf16.msra.mxu0 %v835
  %2569 = vmatprep.subr.bf16.mxu0 %v839
  %2570 = vmatpush1.bf16.msra.mxu0 %v838
  %2571 = vmatprep.subr.bf16.mxu0 0
  %2572 = vmatpush1.bf16.msra.mxu0 0
  %2573 = vmatprep.subr.bf16.mxu0 0
  %2574 = vmatpush1.bf16.msra.mxu0 0
  %2575 = vmatprep.subr.bf16.mxu0 0
  %2576 = vmatpush1.bf16.msra.mxu0 0
  %2577 = vmatprep.subr.bf16.mxu0 0
  %2578 = vmatpush1.bf16.msra.mxu0 0
  %2579 = vmatprep.subr.bf16.mxu0 0
  %2580 = vmatpush1.bf16.msra.mxu0 0
  %2581 = vmatprep.subr.bf16.mxu0 0
  %2582 = vmatpush1.bf16.msra.mxu0 0
  %2583 = vmatprep.subr.bf16.mxu0 0
  %2584 = vmatpush1.bf16.msra.mxu0 0
  %2585 = vmatprep.subr.bf16.mxu0 0
  %2586 = vmatpush1.bf16.msra.mxu0 0
  %2587 = vmatprep.mubr.bf16.mxu0 0
  %2588 = vmatmul.mubr.bf16.gmra.mrb[0].mxu0 %v2554
  %v2589 = vpop.f32.mrb[0].mxu0
  %v2590 = vadd.f32 %v725, %v2589
  %v2591 = vpop.f32.mrb[0].mxu0
  %v2592 = vadd.f32 %v729, %v2591
  %v2593 = vpop.f32.mrb[0].mxu0
  %v2594 = vpop.f32.mrb[0].mxu0
  %2595 = vdwg.mxu0
  %2596 = vmatprep.subr.bf16.mxu0 0
  %2597 = vmatpush1.bf16.msra.mxu0 %v819
  %2598 = vmatprep.subr.bf16.mxu0 0
  %2599 = vmatpush1.bf16.msra.mxu0 %v822
  %2600 = vmatprep.subr.bf16.mxu0 0
  %2601 = vmatpush1.bf16.msra.mxu0 %v825
  %2602 = vmatprep.subr.bf16.mxu0 0
  %2603 = vmatpush1.bf16.msra.mxu0 %v828
  %2604 = vmatprep.subr.bf16.mxu0 0
  %2605 = vmatpush1.bf16.msra.mxu0 %v831
  %2606 = vmatprep.subr.bf16.mxu0 0
  %2607 = vmatpush1.bf16.msra.mxu0 %v834
  %2608 = vmatprep.subr.bf16.mxu0 0
  %2609 = vmatpush1.bf16.msra.mxu0 %v837
  %2610 = vmatprep.subr.bf16.mxu0 0
  %2611 = vmatpush1.bf16.msra.mxu0 %v840
  %2612 = vmatprep.subr.bf16.mxu0 0
  %2613 = vmatpush1.bf16.msra.mxu0 0
  %2614 = vmatprep.subr.bf16.mxu0 0
  %2615 = vmatpush1.bf16.msra.mxu0 0
  %2616 = vmatprep.subr.bf16.mxu0 0
  %2617 = vmatpush1.bf16.msra.mxu0 0
  %2618 = vmatprep.subr.bf16.mxu0 0
  %2619 = vmatpush1.bf16.msra.mxu0 0
  %2620 = vmatprep.subr.bf16.mxu0 0
  %2621 = vmatpush1.bf16.msra.mxu0 0
  %2622 = vmatprep.subr.bf16.mxu0 0
  %2623 = vmatpush1.bf16.msra.mxu0 0
  %2624 = vmatprep.subr.bf16.mxu0 0
  %2625 = vmatpush1.bf16.msra.mxu0 0
  %2626 = vmatprep.subr.bf16.mxu0 0
  %2627 = vmatpush1.bf16.msra.mxu0 0
  %2628 = vmatprep.mubr.bf16.mxu0 0
  %2629 = vmatmul.mubr.bf16.gmra.mrb[0].mxu0 %v2554
  %v2630 = vpop.f32.mrb[0].mxu0
  %v2631 = vadd.f32 %v733, %v2630
  %v2632 = vpop.f32.mrb[0].mxu0
  %v2633 = vpop.f32.mrb[0].mxu0
  %v2634 = vpop.f32.mrb[0].mxu0
  %2635 = vdwg.mxu0
  %v2636 = vpack.c.bf16 %v2551, %v2551
  %2637 = vmatprep.subr.bf16.mxu0 %v1044
  %2638 = vmatpush1.bf16.msra.mxu0 %v1043
  %2639 = vmatprep.subr.bf16.mxu0 %v1047
  %2640 = vmatpush1.bf16.msra.mxu0 %v1046
  %2641 = vmatprep.subr.bf16.mxu0 %v1050
  %2642 = vmatpush1.bf16.msra.mxu0 %v1049
  %2643 = vmatprep.subr.bf16.mxu0 %v1053
  %2644 = vmatpush1.bf16.msra.mxu0 %v1052
  %2645 = vmatprep.subr.bf16.mxu0 %v1056
  %2646 = vmatpush1.bf16.msra.mxu0 %v1055
  %2647 = vmatprep.subr.bf16.mxu0 %v1059
  %2648 = vmatpush1.bf16.msra.mxu0 %v1058
  %2649 = vmatprep.subr.bf16.mxu0 %v1062
  %2650 = vmatpush1.bf16.msra.mxu0 %v1061
  %2651 = vmatprep.subr.bf16.mxu0 %v1065
  %2652 = vmatpush1.bf16.msra.mxu0 %v1064
  %2653 = vmatprep.subr.bf16.mxu0 0
  %2654 = vmatpush1.bf16.msra.mxu0 0
  %2655 = vmatprep.subr.bf16.mxu0 0
  %2656 = vmatpush1.bf16.msra.mxu0 0
  %2657 = vmatprep.subr.bf16.mxu0 0
  %2658 = vmatpush1.bf16.msra.mxu0 0
  %2659 = vmatprep.subr.bf16.mxu0 0
  %2660 = vmatpush1.bf16.msra.mxu0 0
  %2661 = vmatprep.subr.bf16.mxu0 0
  %2662 = vmatpush1.bf16.msra.mxu0 0
  %2663 = vmatprep.subr.bf16.mxu0 0
  %2664 = vmatpush1.bf16.msra.mxu0 0
  %2665 = vmatprep.subr.bf16.mxu0 0
  %2666 = vmatpush1.bf16.msra.mxu0 0
  %2667 = vmatprep.subr.bf16.mxu0 0
  %2668 = vmatpush1.bf16.msra.mxu0 0
  %2669 = vmatprep.mubr.bf16.mxu0 0
  %2670 = vmatmul.mubr.bf16.gmra.mrb[0].mxu0 %v2636
  %v2671 = vpop.f32.mrb[0].mxu0
  %v2672 = vadd.f32 %v951, %v2671
  %v2673 = vpop.f32.mrb[0].mxu0
  %v2674 = vadd.f32 %v955, %v2673
  %v2675 = vpop.f32.mrb[0].mxu0
  %v2676 = vpop.f32.mrb[0].mxu0
  %2677 = vdwg.mxu0
  %2678 = vmatprep.subr.bf16.mxu0 0
  %2679 = vmatpush1.bf16.msra.mxu0 %v1045
  %2680 = vmatprep.subr.bf16.mxu0 0
  %2681 = vmatpush1.bf16.msra.mxu0 %v1048
  %2682 = vmatprep.subr.bf16.mxu0 0
  %2683 = vmatpush1.bf16.msra.mxu0 %v1051
  %2684 = vmatprep.subr.bf16.mxu0 0
  %2685 = vmatpush1.bf16.msra.mxu0 %v1054
  %2686 = vmatprep.subr.bf16.mxu0 0
  %2687 = vmatpush1.bf16.msra.mxu0 %v1057
  %2688 = vmatprep.subr.bf16.mxu0 0
  %2689 = vmatpush1.bf16.msra.mxu0 %v1060
  %2690 = vmatprep.subr.bf16.mxu0 0
  %2691 = vmatpush1.bf16.msra.mxu0 %v1063
  %2692 = vmatprep.subr.bf16.mxu0 0
  %2693 = vmatpush1.bf16.msra.mxu0 %v1066
  %2694 = vmatprep.subr.bf16.mxu0 0
  %2695 = vmatpush1.bf16.msra.mxu0 0
  %2696 = vmatprep.subr.bf16.mxu0 0
  %2697 = vmatpush1.bf16.msra.mxu0 0
  %2698 = vmatprep.subr.bf16.mxu0 0
  %2699 = vmatpush1.bf16.msra.mxu0 0
  %2700 = vmatprep.subr.bf16.mxu0 0
  %2701 = vmatpush1.bf16.msra.mxu0 0
  %2702 = vmatprep.subr.bf16.mxu0 0
  %2703 = vmatpush1.bf16.msra.mxu0 0
  %2704 = vmatprep.subr.bf16.mxu0 0
  %2705 = vmatpush1.bf16.msra.mxu0 0
  %2706 = vmatprep.subr.bf16.mxu0 0
  %2707 = vmatpush1.bf16.msra.mxu0 0
  %2708 = vmatprep.subr.bf16.mxu0 0
  %2709 = vmatpush1.bf16.msra.mxu0 0
  %2710 = vmatprep.mubr.bf16.mxu0 0
  %2711 = vmatmul.mubr.bf16.gmra.mrb[0].mxu0 %v2636
  %v2712 = vpop.f32.mrb[0].mxu0
  %v2713 = vadd.f32 %v959, %v2712
  %v2714 = vpop.f32.mrb[0].mxu0
  %v2715 = vpop.f32.mrb[0].mxu0
  %v2716 = vpop.f32.mrb[0].mxu0
  %2717 = vdwg.mxu0
  %v2718 = vld [vmem:[%s1180] sm:$0xff]
  %v2719 = vld [vmem:[%s1180 + $0x8] sm:$0xff]
  %v2720 = vld [vmem:[%s1180 + $0x10] sm:$0xff]
  %v2721 = vld [vmem:[%s1174 + $0x18] sm:$0xff]
  %v2722 = vld [vmem:[%s1174 + $0x20] sm:$0xff]
  %v2723 = vld [vmem:[%s1174 + $0x28] sm:$0xff]
  %v2724 = vadd.f32 %v2718, %v2590
  %v2725 = vxor.u32 %v2724, 2147483648
  %v2726 = vmul.f32 %v2725, 1.442695
  %v2727 = vpow.pop %v2726
  %v2728 = vadd.f32 %v2727, 1.0
  %v2729 = vrcp.pop %v2728
  %v2730 = vmul.f32 1.0, %v2729
  %v2731 = vadd.f32 %v2719, %v2592
  %v2732 = vxor.u32 %v2731, 2147483648
  %v2733 = vmul.f32 %v2732, 1.442695
  %v2734 = vpow.pop %v2733
  %v2735 = vadd.f32 %v2734, 1.0
  %v2736 = vrcp.pop %v2735
  %v2737 = vmul.f32 1.0, %v2736
  %v2738 = vmul.f32 %v2730, %v2631
  %v2739 = vadd.f32 %v2720, %v2738
  %v2740 = vtanh.pop %v2739
  %v2741 = vsub.f32 1.0, %v2737
  %v2742 = vmul.f32 %v2741, %v2740
  %v2743 = vmul.f32 %v2737, %v2530
  %v2744 = vadd.f32 %v2742, %v2743
  %v2745 = vadd.f32 %v2721, %v2672
  %v2746 = vxor.u32 %v2745, 2147483648
  %v2747 = vmul.f32 %v2746, 1.442695
  %v2748 = vpow.pop %v2747
  %v2749 = vadd.f32 %v2748, 1.0
  %v2750 = vrcp.pop %v2749
  %v2751 = vmul.f32 1.0, %v2750
  %v2752 = vadd.f32 %v2722, %v2674
  %v2753 = vxor.u32 %v2752, 2147483648
  %v2754 = vmul.f32 %v2753, 1.442695
  %v2755 = vpow.pop %v2754
  %v2756 = vadd.f32 %v2755, 1.0
  %v2757 = vrcp.pop %v2756
  %v2758 = vmul.f32 1.0, %v2757
  %v2759 = vmul.f32 %v2751, %v2713
  %v2760 = vadd.f32 %v2723, %v2759
  %v2761 = vtanh.pop %v2760
  %v2762 = vsub.f32 1.0, %v2758
  %v2763 = vmul.f32 %v2762, %v2761
  %v2764 = vmul.f32 %v2758, %v2551
  %v2765 = vadd.f32 %v2763, %v2764
  %2766 = vst [vmem:[%s1232] sm:$0xff] %v2744
  %2767 = vst [vmem:[%s1228 + $0x8] sm:$0xff] %v2765
  // Predicated region
  $region38: #{forward.4} parent=0 // pred_check
    _
  $region39: #{forward.4} parent=0 // pred_check_branch
    %2769 = sbr.rel (0) target = $region41
  $region40: #{forward.4} parent=0 // pred_region
    _
  $region41: #{forward.4} parent=0 // pred_fallthru
    _
  // Predicated region
  $region42: #{forward.4} parent=0 // pred_check
    _
  $region43: #{forward.4} parent=0 // pred_check_branch
    %2771 = sbr.rel (0) target = $region45
  $region44: #{forward.4} parent=0 // pred_region
    _
  $region45: #{forward.4} parent=0 // pred_fallthru
    _

</llo_original>
